<compile_context>
chip_gen: v7x
topology: tpu7x:2x2x1
jax: 0.10.0
libtpu: 0.0.40
codegen_flags: <defaults>
</compile_context>

<pallas_src>
import functools

import jax
import jax.numpy as jnp
from jax.experimental import pallas as pl
from jax.experimental.pallas import tpu as pltpu

VMEM_LIMIT = 32 * 1024 * 1024   # explicit scoped-VMEM budget, safe on v5e/v6e/v7x


# ----------------------------- tiling helpers --------------------------------

@functools.cache
def _num_parallel_cores():
    # TODO(synk): switch to pltpu.get_tpu_info() once chip-version fields are stable;
    #             device_kind parsing is enough to pick 1 vs 2 TensorCores per chip.
    try:
        kind = jax.devices()[0].device_kind.lower()
        if "v7" in kind or "7x" in kind:
            return 2
    except Exception:
        pass
    return 1


def _lane_tile(m):
    """Lane tile: full M on single-TC chips (v5e/v6e -> one grid step, no per-step
    overhead); M/2 on v7x so both TensorCores get a 'parallel' grid step."""
    if m % 128 != 0:
        return m                       # full-extent block is always legal
    if _num_parallel_cores() >= 2 and m % 256 == 0:
        return m // 2
    return m


def _cparams():
    return pltpu.CompilerParams(dimension_semantics=("parallel",),
                                vmem_limit_bytes=VMEM_LIMIT)


# ----------------------------- Pallas kernels --------------------------------

def _mm_kernel(w_ref, a_ref, o_ref):
    # out(Cout, TL) = W(Cout, K) @ A(K, TL); lane-dense store.
    o_ref[...] = jnp.dot(w_ref[...], a_ref[...],
                         preferred_element_type=jnp.float32).astype(o_ref.dtype)


def _mm_bnrelu_kernel(w_ref, a_ref, bn_ref, o_ref):
    # matmul + next-layer's BN+ReLU as an epilogue (applied once per voxel).
    y = jnp.dot(w_ref[...], a_ref[...], preferred_element_type=jnp.float32)
    o_ref[...] = jnp.maximum(y * bn_ref[0] + bn_ref[1], 0.0).astype(o_ref.dtype)


def _mm_add_kernel(w_ref, a_ref, r_ref, o_ref):
    # matmul + residual-add epilogue (h4 + shortcut).
    y = jnp.dot(w_ref[...], a_ref[...], preferred_element_type=jnp.float32)
    o_ref[...] = (y + r_ref[...]).astype(o_ref.dtype)


def _enc1_kernel(w_ref, a_ref, bn_ref, x1_ref, a1_ref):
    # enc1 conv; emits raw x1 (for the decoder concat) and relu(enc2_bn(x1)) (for enc2).
    y = jnp.dot(w_ref[...], a_ref[...], preferred_element_type=jnp.float32)
    x1_ref[...] = y.astype(x1_ref.dtype)
    a1_ref[...] = jnp.maximum(y * bn_ref[0] + bn_ref[1], 0.0).astype(a1_ref.dtype)


def _mfunit_front_kernel(x1_ref, ux2_ref,
                         bn1a_ref, bn1b_ref, w1a_ref, w1b_ref,
                         bn2_ref, w2_ref, bn3_ref,
                         bnsa_ref, bnsb_ref, wsa_ref, wsb_ref,
                         a2_ref, sc_ref):
    # MFunit front: split-K fusion of the channel concat; bn1 + 1x1x1 bottleneck,
    # bn2 + 1x1x1, bn3 epilogue, bn_sc + 1x1x1 shortcut — x1 / up(x2) loaded once.
    x1 = x1_ref[...].astype(jnp.float32)
    ux2 = ux2_ref[...].astype(jnp.float32)

    a1a = jnp.maximum(x1 * bn1a_ref[0] + bn1a_ref[1], 0.0)
    a1b = jnp.maximum(ux2 * bn1b_ref[0] + bn1b_ref[1], 0.0)
    h1 = (jnp.dot(w1a_ref[...], a1a.astype(jnp.bfloat16),
                  preferred_element_type=jnp.float32)
          + jnp.dot(w1b_ref[...], a1b.astype(jnp.bfloat16),
                    preferred_element_type=jnp.float32))

    ah1 = jnp.maximum(h1 * bn2_ref[0] + bn2_ref[1], 0.0)
    h2 = jnp.dot(w2_ref[...], ah1.astype(jnp.bfloat16),
                 preferred_element_type=jnp.float32)
    a2_ref[...] = jnp.maximum(h2 * bn3_ref[0] + bn3_ref[1], 0.0).astype(a2_ref.dtype)

    asa = jnp.maximum(x1 * bnsa_ref[0] + bnsa_ref[1], 0.0)
    asb = jnp.maximum(ux2 * bnsb_ref[0] + bnsb_ref[1], 0.0)
    sc_ref[...] = (jnp.dot(wsa_ref[...], asa.astype(jnp.bfloat16),
                           preferred_element_type=jnp.float32)
                   + jnp.dot(wsb_ref[...], asb.astype(jnp.bfloat16),
                             preferred_element_type=jnp.float32))


def _seg_softmax_kernel(w_ref, x_ref, o_ref):
    # seg 1x1x1 conv (Cin -> num_class, bias-free) + softmax over classes, lane-dense.
    logits = jnp.dot(w_ref[...], x_ref[...], preferred_element_type=jnp.float32)
    m = jnp.max(logits, axis=0, keepdims=True)
    e = jnp.exp(logits - m)
    o_ref[...] = e / jnp.sum(e, axis=0, keepdims=True)


# ----------------------------- pallas_call wrappers ---------------------------

def _conv_call(w_cm, a_cm, *, bn=None, residual=None, out_dtype=jnp.bfloat16):
    """out(Cout, M) = w_cm(Cout, K) @ a_cm(K, M), optional BN+ReLU epilogue
    (next layer's BN, once per voxel) or residual-add epilogue."""
    cout, k = w_cm.shape
    m = a_cm.shape[1]
    tl = _lane_tile(m)
    grid = (m // tl,)
    w_spec = pl.BlockSpec((cout, k), lambda i: (0, 0))
    a_spec = pl.BlockSpec((k, tl), lambda i: (0, i))
    o_spec = pl.BlockSpec((cout, tl), lambda i: (0, i))
    out_shape = jax.ShapeDtypeStruct((cout, m), out_dtype)

    if bn is not None:
        bn_spec = pl.BlockSpec((2, cout, 1), lambda i: (0, 0, 0))
        return pl.pallas_call(
            _mm_bnrelu_kernel, out_shape=out_shape, grid=grid,
            in_specs=[w_spec, a_spec, bn_spec], out_specs=o_spec,
            compiler_params=_cparams())(w_cm, a_cm, bn)
    if residual is not None:
        r_spec = pl.BlockSpec((cout, tl), lambda i: (0, i))
        return pl.pallas_call(
            _mm_add_kernel, out_shape=out_shape, grid=grid,
            in_specs=[w_spec, a_spec, r_spec], out_specs=o_spec,
            compiler_params=_cparams())(w_cm, a_cm, residual)
    return pl.pallas_call(
        _mm_kernel, out_shape=out_shape, grid=grid,
        in_specs=[w_spec, a_spec], out_specs=o_spec,
        compiler_params=_cparams())(w_cm, a_cm)


def _enc1_call(w_cm, a_cm, bn_next):
    cout, k = w_cm.shape
    m = a_cm.shape[1]
    tl = _lane_tile(m)
    o_spec = pl.BlockSpec((cout, tl), lambda i: (0, i))
    return pl.pallas_call(
        _enc1_kernel,
        out_shape=(jax.ShapeDtypeStruct((cout, m), jnp.bfloat16),
                   jax.ShapeDtypeStruct((cout, m), jnp.bfloat16)),
        grid=(m // tl,),
        in_specs=[pl.BlockSpec((cout, k), lambda i: (0, 0)),
                  pl.BlockSpec((k, tl), lambda i: (0, i)),
                  pl.BlockSpec((2, cout, 1), lambda i: (0, 0, 0))],
        out_specs=(o_spec, o_spec),
        compiler_params=_cparams())(w_cm, a_cm, bn_next)


def _mfunit_front_call(x1_cm, ux2_cm, bn1a, bn1b, w1a, w1b, bn2, w2, bn3,
                       bnsa, bnsb, wsa, wsb):
    ch, m = x1_cm.shape
    c1 = w1a.shape[0]
    cmid = w2.shape[0]
    cout = wsa.shape[0]
    tl = _lane_tile(m)

    def vspec(c):
        return pl.BlockSpec((2, c, 1), lambda i: (0, 0, 0))

    def wspec(r, c):
        return pl.BlockSpec((r, c), lambda i: (0, 0))

    xspec = pl.BlockSpec((ch, tl), lambda i: (0, i))
    return pl.pallas_call(
        _mfunit_front_kernel,
        out_shape=(jax.ShapeDtypeStruct((cmid, m), jnp.bfloat16),
                   jax.ShapeDtypeStruct((cout, m), jnp.float32)),
        grid=(m // tl,),
        in_specs=[xspec, xspec,
                  vspec(ch), vspec(ch), wspec(c1, ch), wspec(c1, ch),
                  vspec(c1), wspec(cmid, c1), vspec(cmid),
                  vspec(ch), vspec(ch), wspec(cout, ch), wspec(cout, ch)],
        out_specs=(pl.BlockSpec((cmid, tl), lambda i: (0, i)),
                   pl.BlockSpec((cout, tl), lambda i: (0, i))),
        compiler_params=_cparams(),
    )(x1_cm, ux2_cm, bn1a, bn1b, w1a, w1b, bn2, w2, bn3, bnsa, bnsb, wsa, wsb)


def _seg_softmax_call(w_cm, x_cm):
    ncls, cin = w_cm.shape
    m = x_cm.shape[1]
    tl = _lane_tile(m)
    return pl.pallas_call(
        _seg_softmax_kernel,
        out_shape=jax.ShapeDtypeStruct((ncls, m), jnp.float32),
        grid=(m // tl,),
        in_specs=[pl.BlockSpec((ncls, cin), lambda i: (0, 0)),
                  pl.BlockSpec((cin, tl), lambda i: (0, i))],
        out_specs=pl.BlockSpec((ncls, tl), lambda i: (0, i)),
        compiler_params=_cparams())(w_cm, x_cm)


# ----------------------------- XLA glue (layout / taps / upsample) ------------

def _im2col_cm(a, ksize, stride, dilation, padding):
    """a: (C, N, D, H, W) already-activated bf16.  Returns the (taps*C, M) patch
    matrix (K on sublanes, spatial on lanes) and the output spatial dims.
    TODO(synk): move this tap gather into the conv kernel (halo'd VMEM block)."""
    c, n, d, h, w = a.shape
    kd, kh, kw = ksize
    sd, sh, sw = stride
    dd, dh, dw = dilation
    pd, ph, pw = padding
    ap = jnp.pad(a, ((0, 0), (0, 0), (pd, pd), (ph, ph), (pw, pw)))
    do = (d + 2 * pd - dd * (kd - 1) - 1) // sd + 1
    ho = (h + 2 * ph - dh * (kh - 1) - 1) // sh + 1
    wo = (w + 2 * pw - dw * (kw - 1) - 1) // sw + 1
    parts = []
    for i in range(kd):
        for j in range(kh):
            for kk in range(kw):
                sl = ap[:, :,
                        i * dd: i * dd + (do - 1) * sd + 1: sd,
                        j * dh: j * dh + (ho - 1) * sh + 1: sh,
                        kk * dw: kk * dw + (wo - 1) * sw + 1: sw]
                parts.append(sl.reshape(c, n * do * ho * wo))
    patches = parts[0] if len(parts) == 1 else jnp.concatenate(parts, axis=0)
    return patches, (do, ho, wo)


def _w_cm(w):
    """PyTorch (Cout, Cin, kd, kh, kw) -> (Cout, taps*Cin) bf16, tap-major columns
    matching the _im2col_cm row order."""
    cout, cin, kd, kh, kw = w.shape
    return jnp.transpose(w, (0, 2, 3, 4, 1)).reshape(cout, kd * kh * kw * cin
                                                     ).astype(jnp.bfloat16)


def _bn_pack(scale, shift):
    c = scale.shape[0]
    return jnp.stack([scale, shift]).reshape(2, c, 1).astype(jnp.float32)


def _upsample2x(a):
    # trilinear, half-pixel centers == PyTorch align_corners=False.
    # TODO(synk): fuse the fixed {0.25, 0.75} taps into the consuming kernel.
    c, n, d, h, w = a.shape
    out = jax.image.resize(a.astype(jnp.float32), (c, n, 2 * d, 2 * h, 2 * w),
                           method="trilinear")
    return out.astype(jnp.bfloat16)


# ----------------------------- parameters -------------------------------------

def make_bn(c, eps=1e-5):
    gamma = jnp.ones((c,), jnp.float32)
    beta = jnp.zeros((c,), jnp.float32)
    mean = jnp.zeros((c,), jnp.float32)
    var = jnp.ones((c,), jnp.float32)
    scale = gamma / jnp.sqrt(var + eps)
    shift = beta - mean * scale
    return scale, shift


def init_params(key, c=1, channels=16, num_class=2):
    ks = jax.random.split(key, 8)

    def w(k, shape):
        return 0.1 * jax.random.normal(k, shape, dtype=jnp.float32)

    ch = channels
    num_in = 2 * ch                      # decoder_block1 input channels (cat)
    num_out = ch
    num_mid = num_in if num_in <= num_out else num_out   # = ch
    return {
        "enc1_w": w(ks[0], (ch, c, 3, 3, 3)),
        "enc2_bn": make_bn(ch),
        "enc2_w": w(ks[1], (ch, ch, 3, 3, 3)),
        "dec1": {
            "bn1": make_bn(num_in),
            "w1": w(ks[2], (num_in // 4, num_in, 1, 1, 1)),
            "bn2": make_bn(num_in // 4),
            "w2": w(ks[3], (num_mid, num_in // 4, 1, 1, 1)),
            "bn3": make_bn(num_mid),
            "w3": w(ks[4], (num_out, num_mid, 3, 3, 3)),
            "bn4": make_bn(num_out),
            "w4": w(ks[5], (num_out, num_out, 3, 3, 1)),
            "bn_sc": make_bn(num_in),
            "w_sc": w(ks[6], (num_out, num_in, 1, 1, 1)),
        },
        "seg_w": w(ks[7], (num_class, ch, 1, 1, 1)),
    }


# ----------------------------- Net.forward ------------------------------------

def net_forward(params, x_ncdhw):
    n = x_ncdhw.shape[0]
    ch = params["enc1_w"].shape[0]
    # NCDHW -> channels-first (C, N, D, H, W), bf16 MXU operands throughout.
    x = jnp.transpose(x_ncdhw, (1, 0, 2, 3, 4)).astype(jnp.bfloat16)

    # encoder_block1: Conv3d(c -> ch, k=3, pad=1, stride=2, bias=False).
    a0, (d1, h1s, w1s) = _im2col_cm(x, (3, 3, 3), (2, 2, 2), (1, 1, 1), (1, 1, 1))
    # One kernel emits raw x1 (decoder concat) and relu(enc2_bn(x1)) (enc2 input);
    # BN+ReLU once per voxel, before enc2's zero padding (exact for any BN stats).
    x1_cm, a1_cm = _enc1_call(_w_cm(params["enc1_w"]), a0,
                              _bn_pack(*params["enc2_bn"]))
    a1 = a1_cm.reshape(ch, n, d1, h1s, w1s)

    # encoder_block2: (BN+ReLU already applied) conv k=3, d=3, pad=3, stride=2.
    a_e2, (d2, h2s, w2s) = _im2col_cm(a1, (3, 3, 3), (2, 2, 2), (3, 3, 3), (3, 3, 3))
    x2_cm = _conv_call(_w_cm(params["enc2_w"]), a_e2)
    x2 = x2_cm.reshape(ch, n, d2, h2s, w2s)

    # upsample1 (trilinear x2) — concat with x1 is fused as split-K downstream.
    ux2 = _upsample2x(x2)                                       # (ch, n, d1, h1s, w1s)

    # decoder_block1 = MFunit(2ch -> ch, stride=1): one fused "front" kernel.
    p = params["dec1"]
    s1, t1 = p["bn1"]
    ss, ts = p["bn_sc"]
    w1 = _w_cm(p["w1"])                    # (num_in//4, 2ch)
    wsc = _w_cm(p["w_sc"])                 # (ch, 2ch)
    m1 = n * d1 * h1s * w1s
    a2_cm, sc_cm = _mfunit_front_call(
        x1_cm, ux2.reshape(ch, m1),
        _bn_pack(s1[:ch], t1[:ch]), _bn_pack(s1[ch:], t1[ch:]),
        w1[:, :ch], w1[:, ch:],
        _bn_pack(*p["bn2"]), _w_cm(p["w2"]), _bn_pack(*p["bn3"]),
        _bn_pack(ss[:ch], ts[:ch]), _bn_pack(ss[ch:], ts[ch:]),
        wsc[:, :ch], wsc[:, ch:])
    a2 = a2_cm.reshape(ch, n, d1, h1s, w1s)        # = relu(bn3(h2))

    # 3x3x3, pad 1, stride 1; bn4+ReLU fused into the epilogue.
    a_m1, _ = _im2col_cm(a2, (3, 3, 3), (1, 1, 1), (1, 1, 1), (1, 1, 1))
    a3_cm = _conv_call(_w_cm(p["w3"]), a_m1, bn=_bn_pack(*p["bn4"]))
    a3 = a3_cm.reshape(ch, n, d1, h1s, w1s)        # = relu(bn4(h3))

    # 3x3x1, pad (1,1,0), stride 1; residual add (h4 + shortcut) fused.
    a_m2, _ = _im2col_cm(a3, (3, 3, 1), (1, 1, 1), (1, 1, 1), (1, 1, 0))
    y1_cm = _conv_call(_w_cm(p["w4"]), a_m2, residual=sc_cm)
    y1 = y1_cm.reshape(ch, n, d1, h1s, w1s)

    # upsample2 + seg (1x1x1, bias-free) + softmax over classes (fused, lane-dense).
    uy = _upsample2x(y1)                                        # (ch, n, 2d1, 2h1s, 2w1s)
    do, ho, wo = uy.shape[2], uy.shape[3], uy.shape[4]
    probs = _seg_softmax_call(_w_cm(params["seg_w"]), uy.reshape(ch, n * do * ho * wo))
    ncls = params["seg_w"].shape[0]
    out = probs.reshape(ncls, n, do, ho, wo)
    return jnp.transpose(out, (1, 0, 2, 3, 4))                  # -> NCDHW


# ----------------------------- main --------------------------------------------

if __name__ == "__main__":
    key = jax.random.PRNGKey(0)
    kx, kp = jax.random.split(key)
    # NCDHW input, matching nn.Conv3d convention: batch=2, c=1, spatial=16^3.
    x = jax.random.normal(kx, (2, 1, 16, 16, 16), dtype=jnp.float32)
    params = init_params(kp, c=1, channels=16, num_class=2)

    fwd = jax.jit(net_forward)
    y = fwd(params, x)
    jax.block_until_ready(y)

    assert y.shape == (2, 2, 16, 16, 16), y.shape
    # softmax over dim=1 should sum to 1
    assert bool(jnp.allclose(jnp.sum(y, axis=1), 1.0, atol=1e-4))
    print("KERNEL_OK")
</pallas_src>

<mosaic_0001>
module attributes {stable_mosaic.version = 11 : i64} {
  func.func @_enc1_kernel(%arg0: i32, %arg1: memref<16x27xbf16, #tpu.memory_space<vmem>>, %arg2: memref<27x1024xbf16, #tpu.memory_space<vmem>>, %arg3: memref<2x16x1xf32, #tpu.memory_space<vmem>>, %arg4: memref<16x1024xbf16, #tpu.memory_space<vmem>>, %arg5: memref<16x1024xbf16, #tpu.memory_space<vmem>>) attributes {dimension_semantics = [#tpu.dimension_semantics<parallel>], iteration_bounds = array<i64: 1>, scalar_prefetch = 0 : i64, scratch_operands = 0 : i64, tpu.core_type = #tpu.core_type<tc>, window_params = [{pipeline_mode = #tpu.pipeline_mode<synchronous>, transform_indices = @transform_0, window_bounds = array<i64: 16, 27>}, {transform_indices = @transform_1, window_bounds = array<i64: 27, 1024>}, {pipeline_mode = #tpu.pipeline_mode<synchronous>, transform_indices = @transform_2, window_bounds = array<i64: 2, 16, 1>}, {transform_indices = @transform_3, window_bounds = array<i64: 16, 1024>}, {transform_indices = @transform_4, window_bounds = array<i64: 16, 1024>}]} {
    %c0 = arith.constant 0 : index
    %c0_0 = arith.constant 0 : index
    %0 = vector.load %arg1[%c0, %c0_0] : memref<16x27xbf16, #tpu.memory_space<vmem>>, vector<16x27xbf16>
    %c0_1 = arith.constant 0 : index
    %c0_2 = arith.constant 0 : index
    %1 = vector.load %arg2[%c0_1, %c0_2] : memref<27x1024xbf16, #tpu.memory_space<vmem>>, vector<27x1024xbf16>
    %cst = arith.constant dense<0.000000e+00> : vector<16x1024xf32>
    %2 = tpu.matmul %0, %1, %cst {dimension_numbers = #tpu.dot_dimension_numbers<[1], [0], [0], [1], [0, 0, 1, 1], [], []>} : vector<16x27xbf16>, vector<27x1024xbf16>, vector<16x1024xf32> -> vector<16x1024xf32>
    %3 = arith.truncf %2 : vector<16x1024xf32> to vector<16x1024xbf16>
    %c0_3 = arith.constant 0 : index
    %c0_4 = arith.constant 0 : index
    %4 = vector.load %arg4[%c0_3, %c0_4] : memref<16x1024xbf16, #tpu.memory_space<vmem>>, vector<16x1024xbf16>
    tpu.vector_store %arg4[%c0_3, %c0_4], %3 {strides = array<i32>} : memref<16x1024xbf16, #tpu.memory_space<vmem>>, vector<16x1024xbf16>,
    %c0_5 = arith.constant 0 : index
    %c0_6 = arith.constant 0 : index
    %c0_7 = arith.constant 0 : index
    %5 = vector.load %arg3[%c0_5, %c0_6, %c0_7] : memref<2x16x1xf32, #tpu.memory_space<vmem>>, vector<1x16x1xf32>
    %6 = vector.shape_cast %5 : vector<1x16x1xf32> to vector<16x1xf32>
    %7 = vector.broadcast %6 : vector<16x1xf32> to vector<16x1024xf32>
    %8 = arith.mulf %2, %7 : vector<16x1024xf32>
    %c1 = arith.constant 1 : index
    %c0_8 = arith.constant 0 : index
    %c0_9 = arith.constant 0 : index
    %9 = vector.load %arg3[%c1, %c0_8, %c0_9] : memref<2x16x1xf32, #tpu.memory_space<vmem>>, vector<1x16x1xf32>
    %10 = vector.shape_cast %9 : vector<1x16x1xf32> to vector<16x1xf32>
    %11 = vector.broadcast %10 : vector<16x1xf32> to vector<16x1024xf32>
    %12 = arith.addf %8, %11 : vector<16x1024xf32>
    %cst_10 = arith.constant 0.000000e+00 : f32
    %13 = vector.broadcast %cst_10 : f32 to vector<16x1024xf32>
    %14 = arith.maximumf %12, %13 : vector<16x1024xf32>
    %15 = arith.truncf %14 : vector<16x1024xf32> to vector<16x1024xbf16>
    %c0_11 = arith.constant 0 : index
    %c0_12 = arith.constant 0 : index
    %16 = vector.load %arg5[%c0_11, %c0_12] : memref<16x1024xbf16, #tpu.memory_space<vmem>>, vector<16x1024xbf16>
    tpu.vector_store %arg5[%c0_11, %c0_12], %15 {strides = array<i32>} : memref<16x1024xbf16, #tpu.memory_space<vmem>>, vector<16x1024xbf16>,
    return
  }
  func.func @transform_0(%arg0: i32) -> (i32, i32) {
    %c0_i32 = arith.constant 0 : i32
    %c0_i32_0 = arith.constant 0 : i32
    %c0_i32_1 = arith.constant 0 : i32
    return %c0_i32, %c0_i32_0 : i32, i32
  }
  func.func @transform_1(%arg0: i32) -> (i32, i32) {
    %c0_i32 = arith.constant 0 : i32
    %c0_i32_0 = arith.constant 0 : i32
    return %c0_i32, %arg0 : i32, i32
  }
  func.func @transform_2(%arg0: i32) -> (i32, i32, i32) {
    %c0_i32 = arith.constant 0 : i32
    %c0_i32_0 = arith.constant 0 : i32
    %c0_i32_1 = arith.constant 0 : i32
    %c0_i32_2 = arith.constant 0 : i32
    return %c0_i32, %c0_i32_0, %c0_i32_1 : i32, i32, i32
  }
  func.func @transform_3(%arg0: i32) -> (i32, i32) {
    %c0_i32 = arith.constant 0 : i32
    %c0_i32_0 = arith.constant 0 : i32
    return %c0_i32, %arg0 : i32, i32
  }
  func.func @transform_4(%arg0: i32) -> (i32, i32) {
    %c0_i32 = arith.constant 0 : i32
    %c0_i32_0 = arith.constant 0 : i32
    return %c0_i32, %arg0 : i32, i32
  }
}

module attributes {stable_mosaic.version = 11 : i64} {
  func.func @_mm_kernel(%arg0: i32, %arg1: memref<16x432xbf16, #tpu.memory_space<vmem>>, %arg2: memref<432x128xbf16, #tpu.memory_space<vmem>>, %arg3: memref<16x128xbf16, #tpu.memory_space<vmem>>) attributes {dimension_semantics = [#tpu.dimension_semantics<parallel>], iteration_bounds = array<i64: 1>, scalar_prefetch = 0 : i64, scratch_operands = 0 : i64, tpu.core_type = #tpu.core_type<tc>, window_params = [{pipeline_mode = #tpu.pipeline_mode<synchronous>, transform_indices = @transform_0, window_bounds = array<i64: 16, 432>}, {transform_indices = @transform_1, window_bounds = array<i64: 432, 128>}, {transform_indices = @transform_2, window_bounds = array<i64: 16, 128>}]} {
    %c0 = arith.constant 0 : index
    %c0_0 = arith.constant 0 : index
    %0 = vector.load %arg1[%c0, %c0_0] : memref<16x432xbf16, #tpu.memory_space<vmem>>, vector<16x432xbf16>
    %c0_1 = arith.constant 0 : index
    %c0_2 = arith.constant 0 : index
    %1 = vector.load %arg2[%c0_1, %c0_2] : memref<432x128xbf16, #tpu.memory_space<vmem>>, vector<432x128xbf16>
    %cst = arith.constant dense<0.000000e+00> : vector<16x128xf32>
    %2 = tpu.matmul %0, %1, %cst {dimension_numbers = #tpu.dot_dimension_numbers<[1], [0], [0], [1], [0, 0, 1, 1], [], []>} : vector<16x432xbf16>, vector<432x128xbf16>, vector<16x128xf32> -> vector<16x128xf32>
    %3 = arith.truncf %2 : vector<16x128xf32> to vector<16x128xbf16>
    %c0_3 = arith.constant 0 : index
    %c0_4 = arith.constant 0 : index
    %4 = vector.load %arg3[%c0_3, %c0_4] : memref<16x128xbf16, #tpu.memory_space<vmem>>, vector<16x128xbf16>
    tpu.vector_store %arg3[%c0_3, %c0_4], %3 {strides = array<i32>} : memref<16x128xbf16, #tpu.memory_space<vmem>>, vector<16x128xbf16>,
    return
  }
  func.func @transform_0(%arg0: i32) -> (i32, i32) {
    %c0_i32 = arith.constant 0 : i32
    %c0_i32_0 = arith.constant 0 : i32
    %c0_i32_1 = arith.constant 0 : i32
    return %c0_i32, %c0_i32_0 : i32, i32
  }
  func.func @transform_1(%arg0: i32) -> (i32, i32) {
    %c0_i32 = arith.constant 0 : i32
    %c0_i32_0 = arith.constant 0 : i32
    return %c0_i32, %arg0 : i32, i32
  }
  func.func @transform_2(%arg0: i32) -> (i32, i32) {
    %c0_i32 = arith.constant 0 : i32
    %c0_i32_0 = arith.constant 0 : i32
    return %c0_i32, %arg0 : i32, i32
  }
}

module attributes {stable_mosaic.version = 11 : i64} {
  func.func @_mfunit_front_kernel(%arg0: i32, %arg1: memref<16x1024xbf16, #tpu.memory_space<vmem>>, %arg2: memref<16x1024xbf16, #tpu.memory_space<vmem>>, %arg3: memref<2x16x1xf32, #tpu.memory_space<vmem>>, %arg4: memref<2x16x1xf32, #tpu.memory_space<vmem>>, %arg5: memref<8x16xbf16, #tpu.memory_space<vmem>>, %arg6: memref<8x16xbf16, #tpu.memory_space<vmem>>, %arg7: memref<2x8x1xf32, #tpu.memory_space<vmem>>, %arg8: memref<16x8xbf16, #tpu.memory_space<vmem>>, %arg9: memref<2x16x1xf32, #tpu.memory_space<vmem>>, %arg10: memref<2x16x1xf32, #tpu.memory_space<vmem>>, %arg11: memref<2x16x1xf32, #tpu.memory_space<vmem>>, %arg12: memref<16x16xbf16, #tpu.memory_space<vmem>>, %arg13: memref<16x16xbf16, #tpu.memory_space<vmem>>, %arg14: memref<16x1024xbf16, #tpu.memory_space<vmem>>, %arg15: memref<16x1024xf32, #tpu.memory_space<vmem>>) attributes {dimension_semantics = [#tpu.dimension_semantics<parallel>], iteration_bounds = array<i64: 1>, scalar_prefetch = 0 : i64, scratch_operands = 0 : i64, tpu.core_type = #tpu.core_type<tc>, window_params = [{transform_indices = @transform_0, window_bounds = array<i64: 16, 1024>}, {transform_indices = @transform_1, window_bounds = array<i64: 16, 1024>}, {pipeline_mode = #tpu.pipeline_mode<synchronous>, transform_indices = @transform_2, window_bounds = array<i64: 2, 16, 1>}, {pipeline_mode = #tpu.pipeline_mode<synchronous>, transform_indices = @transform_3, window_bounds = array<i64: 2, 16, 1>}, {pipeline_mode = #tpu.pipeline_mode<synchronous>, transform_indices = @transform_4, window_bounds = array<i64: 8, 16>}, {pipeline_mode = #tpu.pipeline_mode<synchronous>, transform_indices = @transform_5, window_bounds = array<i64: 8, 16>}, {pipeline_mode = #tpu.pipeline_mode<synchronous>, transform_indices = @transform_6, window_bounds = array<i64: 2, 8, 1>}, {pipeline_mode = #tpu.pipeline_mode<synchronous>, transform_indices = @transform_7, window_bounds = array<i64: 16, 8>}, {pipeline_mode = #tpu.pipeline_mode<synchronous>, transform_indices = @transform_8, window_bounds = array<i64: 2, 16, 1>}, {pipeline_mode = #tpu.pipeline_mode<synchronous>, transform_indices = @transform_9, window_bounds = array<i64: 2, 16, 1>}, {pipeline_mode = #tpu.pipeline_mode<synchronous>, transform_indices = @transform_10, window_bounds = array<i64: 2, 16, 1>}, {pipeline_mode = #tpu.pipeline_mode<synchronous>, transform_indices = @transform_11, window_bounds = array<i64: 16, 16>}, {pipeline_mode = #tpu.pipeline_mode<synchronous>, transform_indices = @transform_12, window_bounds = array<i64: 16, 16>}, {transform_indices = @transform_13, window_bounds = array<i64: 16, 1024>}, {transform_indices = @transform_14, window_bounds = array<i64: 16, 1024>}]} {
    %c0 = arith.constant 0 : index
    %c0_0 = arith.constant 0 : index
    %0 = vector.load %arg1[%c0, %c0_0] : memref<16x1024xbf16, #tpu.memory_space<vmem>>, vector<16x1024xbf16>
    %1 = arith.extf %0 : vector<16x1024xbf16> to vector<16x1024xf32>
    %c0_1 = arith.constant 0 : index
    %c0_2 = arith.constant 0 : index
    %2 = vector.load %arg2[%c0_1, %c0_2] : memref<16x1024xbf16, #tpu.memory_space<vmem>>, vector<16x1024xbf16>
    %3 = arith.extf %2 : vector<16x1024xbf16> to vector<16x1024xf32>
    %c0_3 = arith.constant 0 : index
    %c0_4 = arith.constant 0 : index
    %c0_5 = arith.constant 0 : index
    %4 = vector.load %arg3[%c0_3, %c0_4, %c0_5] : memref<2x16x1xf32, #tpu.memory_space<vmem>>, vector<1x16x1xf32>
    %5 = vector.shape_cast %4 : vector<1x16x1xf32> to vector<16x1xf32>
    %6 = vector.broadcast %5 : vector<16x1xf32> to vector<16x1024xf32>
    %7 = arith.mulf %1, %6 : vector<16x1024xf32>
    %c1 = arith.constant 1 : index
    %c0_6 = arith.constant 0 : index
    %c0_7 = arith.constant 0 : index
    %8 = vector.load %arg3[%c1, %c0_6, %c0_7] : memref<2x16x1xf32, #tpu.memory_space<vmem>>, vector<1x16x1xf32>
    %9 = vector.shape_cast %8 : vector<1x16x1xf32> to vector<16x1xf32>
    %10 = vector.broadcast %9 : vector<16x1xf32> to vector<16x1024xf32>
    %11 = arith.addf %7, %10 : vector<16x1024xf32>
    %cst = arith.constant 0.000000e+00 : f32
    %12 = vector.broadcast %cst : f32 to vector<16x1024xf32>
    %13 = arith.maximumf %11, %12 : vector<16x1024xf32>
    %c0_8 = arith.constant 0 : index
    %c0_9 = arith.constant 0 : index
    %c0_10 = arith.constant 0 : index
    %14 = vector.load %arg4[%c0_8, %c0_9, %c0_10] : memref<2x16x1xf32, #tpu.memory_space<vmem>>, vector<1x16x1xf32>
    %15 = vector.shape_cast %14 : vector<1x16x1xf32> to vector<16x1xf32>
    %16 = vector.broadcast %15 : vector<16x1xf32> to vector<16x1024xf32>
    %17 = arith.mulf %3, %16 : vector<16x1024xf32>
    %c1_11 = arith.constant 1 : index
    %c0_12 = arith.constant 0 : index
    %c0_13 = arith.constant 0 : index
    %18 = vector.load %arg4[%c1_11, %c0_12, %c0_13] : memref<2x16x1xf32, #tpu.memory_space<vmem>>, vector<1x16x1xf32>
    %19 = vector.shape_cast %18 : vector<1x16x1xf32> to vector<16x1xf32>
    %20 = vector.broadcast %19 : vector<16x1xf32> to vector<16x1024xf32>
    %21 = arith.addf %17, %20 : vector<16x1024xf32>
    %cst_14 = arith.constant 0.000000e+00 : f32
    %22 = vector.broadcast %cst_14 : f32 to vector<16x1024xf32>
    %23 = arith.maximumf %21, %22 : vector<16x1024xf32>
    %c0_15 = arith.constant 0 : index
    %c0_16 = arith.constant 0 : index
    %24 = vector.load %arg5[%c0_15, %c0_16] : memref<8x16xbf16, #tpu.memory_space<vmem>>, vector<8x16xbf16>
    %25 = arith.truncf %13 : vector<16x1024xf32> to vector<16x1024xbf16>
    %cst_17 = arith.constant dense<0.000000e+00> : vector<8x1024xf32>
    %26 = tpu.matmul %24, %25, %cst_17 {dimension_numbers = #tpu.dot_dimension_numbers<[1], [0], [0], [1], [0, 0, 1, 1], [], []>} : vector<8x16xbf16>, vector<16x1024xbf16>, vector<8x1024xf32> -> vector<8x1024xf32>
    %c0_18 = arith.constant 0 : index
    %c0_19 = arith.constant 0 : index
    %27 = vector.load %arg6[%c0_18, %c0_19] : memref<8x16xbf16, #tpu.memory_space<vmem>>, vector<8x16xbf16>
    %28 = arith.truncf %23 : vector<16x1024xf32> to vector<16x1024xbf16>
    %cst_20 = arith.constant dense<0.000000e+00> : vector<8x1024xf32>
    %29 = tpu.matmul %27, %28, %cst_20 {dimension_numbers = #tpu.dot_dimension_numbers<[1], [0], [0], [1], [0, 0, 1, 1], [], []>} : vector<8x16xbf16>, vector<16x1024xbf16>, vector<8x1024xf32> -> vector<8x1024xf32>
    %30 = arith.addf %26, %29 : vector<8x1024xf32>
    %c0_21 = arith.constant 0 : index
    %c0_22 = arith.constant 0 : index
    %c0_23 = arith.constant 0 : index
    %31 = vector.load %arg7[%c0_21, %c0_22, %c0_23] : memref<2x8x1xf32, #tpu.memory_space<vmem>>, vector<1x8x1xf32>
    %32 = vector.shape_cast %31 : vector<1x8x1xf32> to vector<8x1xf32>
    %33 = vector.broadcast %32 : vector<8x1xf32> to vector<8x1024xf32>
    %34 = arith.mulf %30, %33 : vector<8x1024xf32>
    %c1_24 = arith.constant 1 : index
    %c0_25 = arith.constant 0 : index
    %c0_26 = arith.constant 0 : index
    %35 = vector.load %arg7[%c1_24, %c0_25, %c0_26] : memref<2x8x1xf32, #tpu.memory_space<vmem>>, vector<1x8x1xf32>
    %36 = vector.shape_cast %35 : vector<1x8x1xf32> to vector<8x1xf32>
    %37 = vector.broadcast %36 : vector<8x1xf32> to vector<8x1024xf32>
    %38 = arith.addf %34, %37 : vector<8x1024xf32>
    %cst_27 = arith.constant 0.000000e+00 : f32
    %39 = vector.broadcast %cst_27 : f32 to vector<8x1024xf32>
    %40 = arith.maximumf %38, %39 : vector<8x1024xf32>
    %c0_28 = arith.constant 0 : index
    %c0_29 = arith.constant 0 : index
    %41 = vector.load %arg8[%c0_28, %c0_29] : memref<16x8xbf16, #tpu.memory_space<vmem>>, vector<16x8xbf16>
    %42 = arith.truncf %40 : vector<8x1024xf32> to vector<8x1024xbf16>
    %cst_30 = arith.constant dense<0.000000e+00> : vector<16x1024xf32>
    %43 = tpu.matmul %41, %42, %cst_30 {dimension_numbers = #tpu.dot_dimension_numbers<[1], [0], [0], [1], [0, 0, 1, 1], [], []>} : vector<16x8xbf16>, vector<8x1024xbf16>, vector<16x1024xf32> -> vector<16x1024xf32>
    %c0_31 = arith.constant 0 : index
    %c0_32 = arith.constant 0 : index
    %c0_33 = arith.constant 0 : index
    %44 = vector.load %arg9[%c0_31, %c0_32, %c0_33] : memref<2x16x1xf32, #tpu.memory_space<vmem>>, vector<1x16x1xf32>
    %45 = vector.shape_cast %44 : vector<1x16x1xf32> to vector<16x1xf32>
    %46 = vector.broadcast %45 : vector<16x1xf32> to vector<16x1024xf32>
    %47 = arith.mulf %43, %46 : vector<16x1024xf32>
    %c1_34 = arith.constant 1 : index
    %c0_35 = arith.constant 0 : index
    %c0_36 = arith.constant 0 : index
    %48 = vector.load %arg9[%c1_34, %c0_35, %c0_36] : memref<2x16x1xf32, #tpu.memory_space<vmem>>, vector<1x16x1xf32>
    %49 = vector.shape_cast %48 : vector<1x16x1xf32> to vector<16x1xf32>
    %50 = vector.broadcast %49 : vector<16x1xf32> to vector<16x1024xf32>
    %51 = arith.addf %47, %50 : vector<16x1024xf32>
    %cst_37 = arith.constant 0.000000e+00 : f32
    %52 = vector.broadcast %cst_37 : f32 to vector<16x1024xf32>
    %53 = arith.maximumf %51, %52 : vector<16x1024xf32>
    %54 = arith.truncf %53 : vector<16x1024xf32> to vector<16x1024xbf16>
    %c0_38 = arith.constant 0 : index
    %c0_39 = arith.constant 0 : index
    %55 = vector.load %arg14[%c0_38, %c0_39] : memref<16x1024xbf16, #tpu.memory_space<vmem>>, vector<16x1024xbf16>
    tpu.vector_store %arg14[%c0_38, %c0_39], %54 {strides = array<i32>} : memref<16x1024xbf16, #tpu.memory_space<vmem>>, vector<16x1024xbf16>,
    %c0_40 = arith.constant 0 : index
    %c0_41 = arith.constant 0 : index
    %c0_42 = arith.constant 0 : index
    %56 = vector.load %arg10[%c0_40, %c0_41, %c0_42] : memref<2x16x1xf32, #tpu.memory_space<vmem>>, vector<1x16x1xf32>
    %57 = vector.shape_cast %56 : vector<1x16x1xf32> to vector<16x1xf32>
    %58 = vector.broadcast %57 : vector<16x1xf32> to vector<16x1024xf32>
    %59 = arith.mulf %1, %58 : vector<16x1024xf32>
    %c1_43 = arith.constant 1 : index
    %c0_44 = arith.constant 0 : index
    %c0_45 = arith.constant 0 : index
    %60 = vector.load %arg10[%c1_43, %c0_44, %c0_45] : memref<2x16x1xf32, #tpu.memory_space<vmem>>, vector<1x16x1xf32>
    %61 = vector.shape_cast %60 : vector<1x16x1xf32> to vector<16x1xf32>
    %62 = vector.broadcast %61 : vector<16x1xf32> to vector<16x1024xf32>
    %63 = arith.addf %59, %62 : vector<16x1024xf32>
    %cst_46 = arith.constant 0.000000e+00 : f32
    %64 = vector.broadcast %cst_46 : f32 to vector<16x1024xf32>
    %65 = arith.maximumf %63, %64 : vector<16x1024xf32>
    %c0_47 = arith.constant 0 : index
    %c0_48 = arith.constant 0 : index
    %c0_49 = arith.constant 0 : index
    %66 = vector.load %arg11[%c0_47, %c0_48, %c0_49] : memref<2x16x1xf32, #tpu.memory_space<vmem>>, vector<1x16x1xf32>
    %67 = vector.shape_cast %66 : vector<1x16x1xf32> to vector<16x1xf32>
    %68 = vector.broadcast %67 : vector<16x1xf32> to vector<16x1024xf32>
    %69 = arith.mulf %3, %68 : vector<16x1024xf32>
    %c1_50 = arith.constant 1 : index
    %c0_51 = arith.constant 0 : index
    %c0_52 = arith.constant 0 : index
    %70 = vector.load %arg11[%c1_50, %c0_51, %c0_52] : memref<2x16x1xf32, #tpu.memory_space<vmem>>, vector<1x16x1xf32>
    %71 = vector.shape_cast %70 : vector<1x16x1xf32> to vector<16x1xf32>
    %72 = vector.broadcast %71 : vector<16x1xf32> to vector<16x1024xf32>
    %73 = arith.addf %69, %72 : vector<16x1024xf32>
    %cst_53 = arith.constant 0.000000e+00 : f32
    %74 = vector.broadcast %cst_53 : f32 to vector<16x1024xf32>
    %75 = arith.maximumf %73, %74 : vector<16x1024xf32>
    %c0_54 = arith.constant 0 : index
    %c0_55 = arith.constant 0 : index
    %76 = vector.load %arg12[%c0_54, %c0_55] : memref<16x16xbf16, #tpu.memory_space<vmem>>, vector<16x16xbf16>
    %77 = arith.truncf %65 : vector<16x1024xf32> to vector<16x1024xbf16>
    %cst_56 = arith.constant dense<0.000000e+00> : vector<16x1024xf32>
    %78 = tpu.matmul %76, %77, %cst_56 {dimension_numbers = #tpu.dot_dimension_numbers<[1], [0], [0], [1], [0, 0, 1, 1], [], []>} : vector<16x16xbf16>, vector<16x1024xbf16>, vector<16x1024xf32> -> vector<16x1024xf32>
    %c0_57 = arith.constant 0 : index
    %c0_58 = arith.constant 0 : index
    %79 = vector.load %arg13[%c0_57, %c0_58] : memref<16x16xbf16, #tpu.memory_space<vmem>>, vector<16x16xbf16>
    %80 = arith.truncf %75 : vector<16x1024xf32> to vector<16x1024xbf16>
    %cst_59 = arith.constant dense<0.000000e+00> : vector<16x1024xf32>
    %81 = tpu.matmul %79, %80, %cst_59 {dimension_numbers = #tpu.dot_dimension_numbers<[1], [0], [0], [1], [0, 0, 1, 1], [], []>} : vector<16x16xbf16>, vector<16x1024xbf16>, vector<16x1024xf32> -> vector<16x1024xf32>
    %82 = arith.addf %78, %81 : vector<16x1024xf32>
    %c0_60 = arith.constant 0 : index
    %c0_61 = arith.constant 0 : index
    %83 = vector.load %arg15[%c0_60, %c0_61] : memref<16x1024xf32, #tpu.memory_space<vmem>>, vector<16x1024xf32>
    tpu.vector_store %arg15[%c0_60, %c0_61], %82 {strides = array<i32>} : memref<16x1024xf32, #tpu.memory_space<vmem>>, vector<16x1024xf32>,
    return
  }
  func.func @transform_0(%arg0: i32) -> (i32, i32) {
    %c0_i32 = arith.constant 0 : i32
    %c0_i32_0 = arith.constant 0 : i32
    return %c0_i32, %arg0 : i32, i32
  }
  func.func @transform_1(%arg0: i32) -> (i32, i32) {
    %c0_i32 = arith.constant 0 : i32
    %c0_i32_0 = arith.constant 0 : i32
    return %c0_i32, %arg0 : i32, i32
  }
  func.func @transform_2(%arg0: i32) -> (i32, i32, i32) {
    %c0_i32 = arith.constant 0 : i32
    %c0_i32_0 = arith.constant 0 : i32
    %c0_i32_1 = arith.constant 0 : i32
    %c0_i32_2 = arith.constant 0 : i32
    return %c0_i32, %c0_i32_0, %c0_i32_1 : i32, i32, i32
  }
  func.func @transform_3(%arg0: i32) -> (i32, i32, i32) {
    %c0_i32 = arith.constant 0 : i32
    %c0_i32_0 = arith.constant 0 : i32
    %c0_i32_1 = arith.constant 0 : i32
    %c0_i32_2 = arith.constant 0 : i32
    return %c0_i32, %c0_i32_0, %c0_i32_1 : i32, i32, i32
  }
  func.func @transform_4(%arg0: i32) -> (i32, i32) {
    %c0_i32 = arith.constant 0 : i32
    %c0_i32_0 = arith.constant 0 : i32
    %c0_i32_1 = arith.constant 0 : i32
    return %c0_i32, %c0_i32_0 : i32, i32
  }
  func.func @transform_5(%arg0: i32) -> (i32, i32) {
    %c0_i32 = arith.constant 0 : i32
    %c0_i32_0 = arith.constant 0 : i32
    %c0_i32_1 = arith.constant 0 : i32
    return %c0_i32, %c0_i32_0 : i32, i32
  }
  func.func @transform_6(%arg0: i32) -> (i32, i32, i32) {
    %c0_i32 = arith.constant 0 : i32
    %c0_i32_0 = arith.constant 0 : i32
    %c0_i32_1 = arith.constant 0 : i32
    %c0_i32_2 = arith.constant 0 : i32
    return %c0_i32, %c0_i32_0, %c0_i32_1 : i32, i32, i32
  }
  func.func @transform_7(%arg0: i32) -> (i32, i32) {
    %c0_i32 = arith.constant 0 : i32
    %c0_i32_0 = arith.constant 0 : i32
    %c0_i32_1 = arith.constant 0 : i32
    return %c0_i32, %c0_i32_0 : i32, i32
  }
  func.func @transform_8(%arg0: i32) -> (i32, i32, i32) {
    %c0_i32 = arith.constant 0 : i32
    %c0_i32_0 = arith.constant 0 : i32
    %c0_i32_1 = arith.constant 0 : i32
    %c0_i32_2 = arith.constant 0 : i32
    return %c0_i32, %c0_i32_0, %c0_i32_1 : i32, i32, i32
  }
  func.func @transform_9(%arg0: i32) -> (i32, i32, i32) {
    %c0_i32 = arith.constant 0 : i32
    %c0_i32_0 = arith.constant 0 : i32
    %c0_i32_1 = arith.constant 0 : i32
    %c0_i32_2 = arith.constant 0 : i32
    return %c0_i32, %c0_i32_0, %c0_i32_1 : i32, i32, i32
  }
  func.func @transform_10(%arg0: i32) -> (i32, i32, i32) {
    %c0_i32 = arith.constant 0 : i32
    %c0_i32_0 = arith.constant 0 : i32
    %c0_i32_1 = arith.constant 0 : i32
    %c0_i32_2 = arith.constant 0 : i32
    return %c0_i32, %c0_i32_0, %c0_i32_1 : i32, i32, i32
  }
  func.func @transform_11(%arg0: i32) -> (i32, i32) {
    %c0_i32 = arith.constant 0 : i32
    %c0_i32_0 = arith.constant 0 : i32
    %c0_i32_1 = arith.constant 0 : i32
    return %c0_i32, %c0_i32_0 : i32, i32
  }
  func.func @transform_12(%arg0: i32) -> (i32, i32) {
    %c0_i32 = arith.constant 0 : i32
    %c0_i32_0 = arith.constant 0 : i32
    %c0_i32_1 = arith.constant 0 : i32
    return %c0_i32, %c0_i32_0 : i32, i32
  }
  func.func @transform_13(%arg0: i32) -> (i32, i32) {
    %c0_i32 = arith.constant 0 : i32
    %c0_i32_0 = arith.constant 0 : i32
    return %c0_i32, %arg0 : i32, i32
  }
  func.func @transform_14(%arg0: i32) -> (i32, i32) {
    %c0_i32 = arith.constant 0 : i32
    %c0_i32_0 = arith.constant 0 : i32
    return %c0_i32, %arg0 : i32, i32
  }
}

module attributes {stable_mosaic.version = 11 : i64} {
  func.func @_mm_bnrelu_kernel(%arg0: i32, %arg1: memref<16x432xbf16, #tpu.memory_space<vmem>>, %arg2: memref<432x1024xbf16, #tpu.memory_space<vmem>>, %arg3: memref<2x16x1xf32, #tpu.memory_space<vmem>>, %arg4: memref<16x1024xbf16, #tpu.memory_space<vmem>>) attributes {dimension_semantics = [#tpu.dimension_semantics<parallel>], iteration_bounds = array<i64: 1>, scalar_prefetch = 0 : i64, scratch_operands = 0 : i64, tpu.core_type = #tpu.core_type<tc>, window_params = [{pipeline_mode = #tpu.pipeline_mode<synchronous>, transform_indices = @transform_0, window_bounds = array<i64: 16, 432>}, {transform_indices = @transform_1, window_bounds = array<i64: 432, 1024>}, {pipeline_mode = #tpu.pipeline_mode<synchronous>, transform_indices = @transform_2, window_bounds = array<i64: 2, 16, 1>}, {transform_indices = @transform_3, window_bounds = array<i64: 16, 1024>}]} {
    %c0 = arith.constant 0 : index
    %c0_0 = arith.constant 0 : index
    %0 = vector.load %arg1[%c0, %c0_0] : memref<16x432xbf16, #tpu.memory_space<vmem>>, vector<16x432xbf16>
    %c0_1 = arith.constant 0 : index
    %c0_2 = arith.constant 0 : index
    %1 = vector.load %arg2[%c0_1, %c0_2] : memref<432x1024xbf16, #tpu.memory_space<vmem>>, vector<432x1024xbf16>
    %cst = arith.constant dense<0.000000e+00> : vector<16x1024xf32>
    %2 = tpu.matmul %0, %1, %cst {dimension_numbers = #tpu.dot_dimension_numbers<[1], [0], [0], [1], [0, 0, 1, 1], [], []>} : vector<16x432xbf16>, vector<432x1024xbf16>, vector<16x1024xf32> -> vector<16x1024xf32>
    %c0_3 = arith.constant 0 : index
    %c0_4 = arith.constant 0 : index
    %c0_5 = arith.constant 0 : index
    %3 = vector.load %arg3[%c0_3, %c0_4, %c0_5] : memref<2x16x1xf32, #tpu.memory_space<vmem>>, vector<1x16x1xf32>
    %4 = vector.shape_cast %3 : vector<1x16x1xf32> to vector<16x1xf32>
    %5 = vector.broadcast %4 : vector<16x1xf32> to vector<16x1024xf32>
    %6 = arith.mulf %2, %5 : vector<16x1024xf32>
    %c1 = arith.constant 1 : index
    %c0_6 = arith.constant 0 : index
    %c0_7 = arith.constant 0 : index
    %7 = vector.load %arg3[%c1, %c0_6, %c0_7] : memref<2x16x1xf32, #tpu.memory_space<vmem>>, vector<1x16x1xf32>
    %8 = vector.shape_cast %7 : vector<1x16x1xf32> to vector<16x1xf32>
    %9 = vector.broadcast %8 : vector<16x1xf32> to vector<16x1024xf32>
    %10 = arith.addf %6, %9 : vector<16x1024xf32>
    %cst_8 = arith.constant 0.000000e+00 : f32
    %11 = vector.broadcast %cst_8 : f32 to vector<16x1024xf32>
    %12 = arith.maximumf %10, %11 : vector<16x1024xf32>
    %13 = arith.truncf %12 : vector<16x1024xf32> to vector<16x1024xbf16>
    %c0_9 = arith.constant 0 : index
    %c0_10 = arith.constant 0 : index
    %14 = vector.load %arg4[%c0_9, %c0_10] : memref<16x1024xbf16, #tpu.memory_space<vmem>>, vector<16x1024xbf16>
    tpu.vector_store %arg4[%c0_9, %c0_10], %13 {strides = array<i32>} : memref<16x1024xbf16, #tpu.memory_space<vmem>>, vector<16x1024xbf16>,
    return
  }
  func.func @transform_0(%arg0: i32) -> (i32, i32) {
    %c0_i32 = arith.constant 0 : i32
    %c0_i32_0 = arith.constant 0 : i32
    %c0_i32_1 = arith.constant 0 : i32
    return %c0_i32, %c0_i32_0 : i32, i32
  }
  func.func @transform_1(%arg0: i32) -> (i32, i32) {
    %c0_i32 = arith.constant 0 : i32
    %c0_i32_0 = arith.constant 0 : i32
    return %c0_i32, %arg0 : i32, i32
  }
  func.func @transform_2(%arg0: i32) -> (i32, i32, i32) {
    %c0_i32 = arith.constant 0 : i32
    %c0_i32_0 = arith.constant 0 : i32
    %c0_i32_1 = arith.constant 0 : i32
    %c0_i32_2 = arith.constant 0 : i32
    return %c0_i32, %c0_i32_0, %c0_i32_1 : i32, i32, i32
  }
  func.func @transform_3(%arg0: i32) -> (i32, i32) {
    %c0_i32 = arith.constant 0 : i32
    %c0_i32_0 = arith.constant 0 : i32
    return %c0_i32, %arg0 : i32, i32
  }
}

module attributes {stable_mosaic.version = 11 : i64} {
  func.func @_mm_add_kernel(%arg0: i32, %arg1: memref<16x144xbf16, #tpu.memory_space<vmem>>, %arg2: memref<144x1024xbf16, #tpu.memory_space<vmem>>, %arg3: memref<16x1024xf32, #tpu.memory_space<vmem>>, %arg4: memref<16x1024xbf16, #tpu.memory_space<vmem>>) attributes {dimension_semantics = [#tpu.dimension_semantics<parallel>], iteration_bounds = array<i64: 1>, scalar_prefetch = 0 : i64, scratch_operands = 0 : i64, tpu.core_type = #tpu.core_type<tc>, window_params = [{pipeline_mode = #tpu.pipeline_mode<synchronous>, transform_indices = @transform_0, window_bounds = array<i64: 16, 144>}, {transform_indices = @transform_1, window_bounds = array<i64: 144, 1024>}, {transform_indices = @transform_2, window_bounds = array<i64: 16, 1024>}, {transform_indices = @transform_3, window_bounds = array<i64: 16, 1024>}]} {
    %c0 = arith.constant 0 : index
    %c0_0 = arith.constant 0 : index
    %0 = vector.load %arg1[%c0, %c0_0] : memref<16x144xbf16, #tpu.memory_space<vmem>>, vector<16x144xbf16>
    %c0_1 = arith.constant 0 : index
    %c0_2 = arith.constant 0 : index
    %1 = vector.load %arg2[%c0_1, %c0_2] : memref<144x1024xbf16, #tpu.memory_space<vmem>>, vector<144x1024xbf16>
    %cst = arith.constant dense<0.000000e+00> : vector<16x1024xf32>
    %2 = tpu.matmul %0, %1, %cst {dimension_numbers = #tpu.dot_dimension_numbers<[1], [0], [0], [1], [0, 0, 1, 1], [], []>} : vector<16x144xbf16>, vector<144x1024xbf16>, vector<16x1024xf32> -> vector<16x1024xf32>
    %c0_3 = arith.constant 0 : index
    %c0_4 = arith.constant 0 : index
    %3 = vector.load %arg3[%c0_3, %c0_4] : memref<16x1024xf32, #tpu.memory_space<vmem>>, vector<16x1024xf32>
    %4 = arith.addf %2, %3 : vector<16x1024xf32>
    %5 = arith.truncf %4 : vector<16x1024xf32> to vector<16x1024xbf16>
    %c0_5 = arith.constant 0 : index
    %c0_6 = arith.constant 0 : index
    %6 = vector.load %arg4[%c0_5, %c0_6] : memref<16x1024xbf16, #tpu.memory_space<vmem>>, vector<16x1024xbf16>
    tpu.vector_store %arg4[%c0_5, %c0_6], %5 {strides = array<i32>} : memref<16x1024xbf16, #tpu.memory_space<vmem>>, vector<16x1024xbf16>,
    return
  }
  func.func @transform_0(%arg0: i32) -> (i32, i32) {
    %c0_i32 = arith.constant 0 : i32
    %c0_i32_0 = arith.constant 0 : i32
    %c0_i32_1 = arith.constant 0 : i32
    return %c0_i32, %c0_i32_0 : i32, i32
  }
  func.func @transform_1(%arg0: i32) -> (i32, i32) {
    %c0_i32 = arith.constant 0 : i32
    %c0_i32_0 = arith.constant 0 : i32
    return %c0_i32, %arg0 : i32, i32
  }
  func.func @transform_2(%arg0: i32) -> (i32, i32) {
    %c0_i32 = arith.constant 0 : i32
    %c0_i32_0 = arith.constant 0 : i32
    return %c0_i32, %arg0 : i32, i32
  }
  func.func @transform_3(%arg0: i32) -> (i32, i32) {
    %c0_i32 = arith.constant 0 : i32
    %c0_i32_0 = arith.constant 0 : i32
    return %c0_i32, %arg0 : i32, i32
  }
}

module attributes {stable_mosaic.version = 11 : i64} {
  func.func @_seg_softmax_kernel(%arg0: i32, %arg1: memref<2x16xbf16, #tpu.memory_space<vmem>>, %arg2: memref<16x8192xbf16, #tpu.memory_space<vmem>>, %arg3: memref<2x8192xf32, #tpu.memory_space<vmem>>) attributes {dimension_semantics = [#tpu.dimension_semantics<parallel>], iteration_bounds = array<i64: 1>, scalar_prefetch = 0 : i64, scratch_operands = 0 : i64, tpu.core_type = #tpu.core_type<tc>, window_params = [{pipeline_mode = #tpu.pipeline_mode<synchronous>, transform_indices = @transform_0, window_bounds = array<i64: 2, 16>}, {transform_indices = @transform_1, window_bounds = array<i64: 16, 8192>}, {transform_indices = @transform_2, window_bounds = array<i64: 2, 8192>}]} {
    %c0 = arith.constant 0 : index
    %c0_0 = arith.constant 0 : index
    %0 = vector.load %arg1[%c0, %c0_0] : memref<2x16xbf16, #tpu.memory_space<vmem>>, vector<2x16xbf16>
    %c0_1 = arith.constant 0 : index
    %c0_2 = arith.constant 0 : index
    %1 = vector.load %arg2[%c0_1, %c0_2] : memref<16x8192xbf16, #tpu.memory_space<vmem>>, vector<16x8192xbf16>
    %cst = arith.constant dense<0.000000e+00> : vector<2x8192xf32>
    %2 = tpu.matmul %0, %1, %cst {dimension_numbers = #tpu.dot_dimension_numbers<[1], [0], [0], [1], [0, 0, 1, 1], [], []>} : vector<2x16xbf16>, vector<16x8192xbf16>, vector<2x8192xf32> -> vector<2x8192xf32>
    %cst_3 = arith.constant dense<0xFF800000> : vector<8192xf32>
    %3 = vector.multi_reduction <maximumf>, %2, %cst_3 [0] : vector<2x8192xf32> to vector<8192xf32>
    %4 = vector.shape_cast %3 : vector<8192xf32> to vector<1x8192xf32>
    %5 = vector.broadcast %4 : vector<1x8192xf32> to vector<2x8192xf32>
    %6 = arith.subf %2, %5 : vector<2x8192xf32>
    %7 = math.exp %6 : vector<2x8192xf32>
    %cst_4 = arith.constant dense<0.000000e+00> : vector<8192xf32>
    %8 = vector.multi_reduction <add>, %7, %cst_4 [0] : vector<2x8192xf32> to vector<8192xf32>
    %9 = vector.shape_cast %8 : vector<8192xf32> to vector<1x8192xf32>
    %10 = vector.broadcast %9 : vector<1x8192xf32> to vector<2x8192xf32>
    %11 = arith.divf %7, %10 : vector<2x8192xf32>
    %c0_5 = arith.constant 0 : index
    %c0_6 = arith.constant 0 : index
    %12 = vector.load %arg3[%c0_5, %c0_6] : memref<2x8192xf32, #tpu.memory_space<vmem>>, vector<2x8192xf32>
    tpu.vector_store %arg3[%c0_5, %c0_6], %11 {strides = array<i32>} : memref<2x8192xf32, #tpu.memory_space<vmem>>, vector<2x8192xf32>,
    return
  }
  func.func @transform_0(%arg0: i32) -> (i32, i32) {
    %c0_i32 = arith.constant 0 : i32
    %c0_i32_0 = arith.constant 0 : i32
    %c0_i32_1 = arith.constant 0 : i32
    return %c0_i32, %c0_i32_0 : i32, i32
  }
  func.func @transform_1(%arg0: i32) -> (i32, i32) {
    %c0_i32 = arith.constant 0 : i32
    %c0_i32_0 = arith.constant 0 : i32
    return %c0_i32, %arg0 : i32, i32
  }
  func.func @transform_2(%arg0: i32) -> (i32, i32) {
    %c0_i32 = arith.constant 0 : i32
    %c0_i32_0 = arith.constant 0 : i32
    return %c0_i32, %arg0 : i32, i32
  }
}

</mosaic_0001>

<llo_original>
// kernel: net_forward.6
$region0: #{net_forward.6}
  #allocation0 [shape = 'u32[]', space=smem, size = 0x4, offset = 0x4, fixed_abs, tag = 'smem constant byte address 0x4 - core index']
  #allocation1 [shape = 'u32[144,128]{1,0:T(1,128)}', space=vmem, size = 0x12000, scoped, tag = 'internal scratch']
  %s0 = inlined_call_operand.vmem [shape: bf16[16,27], index: 0, kind: input, shape index: {}]
  %s1 = inlined_call_operand.vmem [shape: bf16[27,1024], index: 1, kind: input, shape index: {}]
  %s2 = inlined_call_operand.vmem [shape: f32[2,16,1], index: 2, kind: input, shape index: {}]
  %s3 = inlined_call_operand.vmem [shape: bf16[16,1024], index: 3, kind: output, shape index: {0}]
  %s4 = inlined_call_operand.vmem [shape: bf16[16,1024], index: 4, kind: output, shape index: {1}]
  %5 = xla_tuple %s3, %s4
  %s6 = sld [smem:[#allocation0]]
  $region30: #{net_forward.6} parent=0
    _
  %s8 = ssub.s32 1, %s6
  %s9 = scalar_select 0, %s8, %s6
  // Predicated region
  $region2: #{net_forward.6} parent=0 // pred_check
    _
  $region3: #{net_forward.6} parent=0 // pred_check_branch
    %11 = sbr.rel (0) target = $region5
  $region4: #{net_forward.6} parent=0 // pred_region
    _
  $region5: #{net_forward.6} parent=0 // pred_fallthru
    _
  // Predicated region
  $region6: #{net_forward.6} parent=0 // pred_check
    _
  $region7: #{net_forward.6} parent=0 // pred_check_branch
    %13 = sbr.rel (0) target = $region9
  $region8: #{net_forward.6} parent=0 // pred_region
    _
  $region9: #{net_forward.6} parent=0 // pred_fallthru
    _
  // Predicated region
  $region10: #{net_forward.6} parent=0 // pred_check
    _
  $region11: #{net_forward.6} parent=0 // pred_check_branch
    %15 = sbr.rel (0) target = $region13
  $region12: #{net_forward.6} parent=0 // pred_region
    _
  $region13: #{net_forward.6} parent=0 // pred_fallthru
    _
  %v17 = vld [vmem:[%s0] sm:$0xf]
  %v18 = vld [vmem:[%s0 + $0x4] sm:$0xf]
  %v19 = vld [vmem:[%s1] sm:$0xff]
  %v20 = vld [vmem:[%s1 + $0x8] sm:$0xff]
  %v21 = vld [vmem:[%s1 + $0x10] sm:$0xff]
  %v22 = vld [vmem:[%s1 + $0x18] sm:$0xff]
  %v23 = vld [vmem:[%s1 + $0x20] sm:$0xff]
  %v24 = vld [vmem:[%s1 + $0x28] sm:$0xff]
  %v25 = vld [vmem:[%s1 + $0x30] sm:$0xff]
  %v26 = vld [vmem:[%s1 + $0x38] sm:$0xff]
  %v27 = vld [vmem:[%s1 + $0x40] sm:$0xff]
  %v28 = vld [vmem:[%s1 + $0x48] sm:$0xff]
  %v29 = vld [vmem:[%s1 + $0x50] sm:$0xff]
  %v30 = vld [vmem:[%s1 + $0x58] sm:$0xff]
  %v31 = vld [vmem:[%s1 + $0x60] sm:$0x33]
  %v32 = vld [vmem:[%s1 + $0x68] sm:$0x33]
  %v33 = vld [vmem:[%s1 + $0x70] sm:$0x33]
  %v34 = vld [vmem:[%s1 + $0x78] sm:$0x33]
  %v37 = vunpack.c.l.b16 %v17
  %v38 = vunpack.c.l.b16 %v18
  %v39 = vpack.c.b16 %v38, %v37
  %v56 = vunpack.c.l.b16 %v19
  %v57 = vunpack.c.h.b16 %v19
  %v58 = vunpack.c.l.b16 %v20
  %v59 = vunpack.c.h.b16 %v20
  %v60 = vunpack.c.l.b16 %v21
  %v61 = vunpack.c.h.b16 %v21
  %v62 = vunpack.c.l.b16 %v22
  %v63 = vunpack.c.h.b16 %v22
  %v64 = vunpack.c.l.b16 %v23
  %v65 = vunpack.c.h.b16 %v23
  %v66 = vunpack.c.l.b16 %v24
  %v67 = vunpack.c.h.b16 %v24
  %v68 = vunpack.c.l.b16 %v25
  %v69 = vunpack.c.h.b16 %v25
  %v70 = vunpack.c.l.b16 %v26
  %v71 = vunpack.c.h.b16 %v26
  %v72 = vunpack.c.l.b16 %v27
  %v73 = vunpack.c.h.b16 %v27
  %v74 = vunpack.c.l.b16 %v28
  %v75 = vunpack.c.h.b16 %v28
  %v76 = vunpack.c.l.b16 %v29
  %v77 = vunpack.c.h.b16 %v29
  %v78 = vunpack.c.l.b16 %v30
  %v79 = vunpack.c.h.b16 %v30
  %v80 = vunpack.c.l.b16 %v31
  %v81 = vunpack.c.h.b16 %v31
  %v82 = vunpack.c.l.b16 %v32
  %v83 = vunpack.c.h.b16 %v32
  %v84 = vunpack.c.l.b16 %v33
  %v85 = vunpack.c.h.b16 %v33
  %v86 = vunpack.c.l.b16 %v34
  %v87 = vunpack.c.h.b16 %v34
  %v88 = vpack.c.b16 %v64, %v56
  %v89 = vpack.c.b16 %v65, %v57
  %v90 = vpack.c.b16 %v66, %v58
  %v91 = vpack.c.b16 %v67, %v59
  %v92 = vpack.c.b16 %v68, %v60
  %v93 = vpack.c.b16 %v69, %v61
  %v94 = vpack.c.b16 %v70, %v62
  %v95 = vpack.c.b16 %v71, %v63
  %v96 = vpack.c.b16 %v80, %v72
  %v97 = vpack.c.b16 %v81, %v73
  %v98 = vpack.c.b16 %v82, %v74
  %v99 = vpack.c.b16 %v83, %v75
  %v100 = vpack.c.b16 %v84, %v76
  %v101 = vpack.c.b16 %v85, %v77
  %v102 = vpack.c.b16 %v86, %v78
  %v103 = vpack.c.b16 %v87, %v79
  %vm112 = vcmask 220160
  %v114 = vsel %vm112, %v39, 0
  %vm116 = vcmask 1044480
  %vm117 = vcmask 1045504
  %v118 = vsel %vm116, 4294967295, 65535
  %v119 = vsel %vm117, %v118, 0
  %v121 = vand.u32 %v96, %v119
  %v124 = vand.u32 %v97, %v119
  %v127 = vand.u32 %v98, %v119
  %v130 = vand.u32 %v99, %v119
  %v133 = vand.u32 %v100, %v119
  %v136 = vand.u32 %v101, %v119
  %v139 = vand.u32 %v102, %v119
  %v142 = vand.u32 %v103, %v119
  %144 = vmatprep.subr.bf16.mxu0 %v89
  %145 = vmatpush1.bf16.msra.mxu0 %v88
  %146 = vmatprep.subr.bf16.mxu0 %v124
  %147 = vmatpush1.bf16.msra.mxu0 %v121
  %148 = vmatprep.subr.bf16.mxu0 0
  %149 = vmatpush1.bf16.msra.mxu0 0
  %150 = vmatprep.subr.bf16.mxu0 0
  %151 = vmatpush1.bf16.msra.mxu0 0
  %152 = vmatprep.subr.bf16.mxu0 0
  %153 = vmatpush1.bf16.msra.mxu0 0
  %154 = vmatprep.subr.bf16.mxu0 0
  %155 = vmatpush1.bf16.msra.mxu0 0
  %156 = vmatprep.subr.bf16.mxu0 0
  %157 = vmatpush1.bf16.msra.mxu0 0
  %158 = vmatprep.subr.bf16.mxu0 0
  %159 = vmatpush1.bf16.msra.mxu0 0
  %160 = vmatprep.subr.bf16.mxu0 0
  %161 = vmatpush1.bf16.msra.mxu0 0
  %162 = vmatprep.subr.bf16.mxu0 0
  %163 = vmatpush1.bf16.msra.mxu0 0
  %164 = vmatprep.subr.bf16.mxu0 0
  %165 = vmatpush1.bf16.msra.mxu0 0
  %166 = vmatprep.subr.bf16.mxu0 0
  %167 = vmatpush1.bf16.msra.mxu0 0
  %168 = vmatprep.subr.bf16.mxu0 0
  %169 = vmatpush1.bf16.msra.mxu0 0
  %170 = vmatprep.subr.bf16.mxu0 0
  %171 = vmatpush1.bf16.msra.mxu0 0
  %172 = vmatprep.subr.bf16.mxu0 0
  %173 = vmatpush1.bf16.msra.mxu0 0
  %174 = vmatprep.subr.bf16.mxu0 0
  %175 = vmatpush1.bf16.msra.mxu0 0
  %176 = vmatprep.mubr.bf16.mxu0 0
  %177 = vmatmul.mubr.bf16.gmra.mrb[0].mxu0 %v114
  %v178 = vpop.f32.mrb[0].mxu0
  %v179 = vadd.f32 0.0, %v178
  %v180 = vpop.f32.mrb[0].mxu0
  %v181 = vadd.f32 0.0, %v180
  %v182 = vpop.f32.mrb[0].mxu0
  %v183 = vadd.f32 0.0, %v182
  %v184 = vpop.f32.mrb[0].mxu0
  %v185 = vadd.f32 0.0, %v184
  %186 = vdwg.mxu0
  %187 = vmatprep.subr.bf16.mxu0 %v91
  %188 = vmatpush1.bf16.msra.mxu0 %v90
  %189 = vmatprep.subr.bf16.mxu0 %v130
  %190 = vmatpush1.bf16.msra.mxu0 %v127
  %191 = vmatprep.subr.bf16.mxu0 0
  %192 = vmatpush1.bf16.msra.mxu0 0
  %193 = vmatprep.subr.bf16.mxu0 0
  %194 = vmatpush1.bf16.msra.mxu0 0
  %195 = vmatprep.subr.bf16.mxu0 0
  %196 = vmatpush1.bf16.msra.mxu0 0
  %197 = vmatprep.subr.bf16.mxu0 0
  %198 = vmatpush1.bf16.msra.mxu0 0
  %199 = vmatprep.subr.bf16.mxu0 0
  %200 = vmatpush1.bf16.msra.mxu0 0
  %201 = vmatprep.subr.bf16.mxu0 0
  %202 = vmatpush1.bf16.msra.mxu0 0
  %203 = vmatprep.subr.bf16.mxu0 0
  %204 = vmatpush1.bf16.msra.mxu0 0
  %205 = vmatprep.subr.bf16.mxu0 0
  %206 = vmatpush1.bf16.msra.mxu0 0
  %207 = vmatprep.subr.bf16.mxu0 0
  %208 = vmatpush1.bf16.msra.mxu0 0
  %209 = vmatprep.subr.bf16.mxu0 0
  %210 = vmatpush1.bf16.msra.mxu0 0
  %211 = vmatprep.subr.bf16.mxu0 0
  %212 = vmatpush1.bf16.msra.mxu0 0
  %213 = vmatprep.subr.bf16.mxu0 0
  %214 = vmatpush1.bf16.msra.mxu0 0
  %215 = vmatprep.subr.bf16.mxu0 0
  %216 = vmatpush1.bf16.msra.mxu0 0
  %217 = vmatprep.subr.bf16.mxu0 0
  %218 = vmatpush1.bf16.msra.mxu0 0
  %219 = vmatprep.mubr.bf16.mxu0 0
  %220 = vmatmul.mubr.bf16.gmra.mrb[0].mxu0 %v114
  %v221 = vpop.f32.mrb[0].mxu0
  %v222 = vadd.f32 0.0, %v221
  %v223 = vpop.f32.mrb[0].mxu0
  %v224 = vadd.f32 0.0, %v223
  %v225 = vpop.f32.mrb[0].mxu0
  %v226 = vadd.f32 0.0, %v225
  %v227 = vpop.f32.mrb[0].mxu0
  %v228 = vadd.f32 0.0, %v227
  %229 = vdwg.mxu0
  %230 = vmatprep.subr.bf16.mxu0 %v93
  %231 = vmatpush1.bf16.msra.mxu0 %v92
  %232 = vmatprep.subr.bf16.mxu0 %v136
  %233 = vmatpush1.bf16.msra.mxu0 %v133
  %234 = vmatprep.subr.bf16.mxu0 0
  %235 = vmatpush1.bf16.msra.mxu0 0
  %236 = vmatprep.subr.bf16.mxu0 0
  %237 = vmatpush1.bf16.msra.mxu0 0
  %238 = vmatprep.subr.bf16.mxu0 0
  %239 = vmatpush1.bf16.msra.mxu0 0
  %240 = vmatprep.subr.bf16.mxu0 0
  %241 = vmatpush1.bf16.msra.mxu0 0
  %242 = vmatprep.subr.bf16.mxu0 0
  %243 = vmatpush1.bf16.msra.mxu0 0
  %244 = vmatprep.subr.bf16.mxu0 0
  %245 = vmatpush1.bf16.msra.mxu0 0
  %246 = vmatprep.subr.bf16.mxu0 0
  %247 = vmatpush1.bf16.msra.mxu0 0
  %248 = vmatprep.subr.bf16.mxu0 0
  %249 = vmatpush1.bf16.msra.mxu0 0
  %250 = vmatprep.subr.bf16.mxu0 0
  %251 = vmatpush1.bf16.msra.mxu0 0
  %252 = vmatprep.subr.bf16.mxu0 0
  %253 = vmatpush1.bf16.msra.mxu0 0
  %254 = vmatprep.subr.bf16.mxu0 0
  %255 = vmatpush1.bf16.msra.mxu0 0
  %256 = vmatprep.subr.bf16.mxu0 0
  %257 = vmatpush1.bf16.msra.mxu0 0
  %258 = vmatprep.subr.bf16.mxu0 0
  %259 = vmatpush1.bf16.msra.mxu0 0
  %260 = vmatprep.subr.bf16.mxu0 0
  %261 = vmatpush1.bf16.msra.mxu0 0
  %262 = vmatprep.mubr.bf16.mxu0 0
  %263 = vmatmul.mubr.bf16.gmra.mrb[0].mxu0 %v114
  %v264 = vpop.f32.mrb[0].mxu0
  %v265 = vadd.f32 0.0, %v264
  %v266 = vpop.f32.mrb[0].mxu0
  %v267 = vadd.f32 0.0, %v266
  %v268 = vpop.f32.mrb[0].mxu0
  %v269 = vadd.f32 0.0, %v268
  %v270 = vpop.f32.mrb[0].mxu0
  %v271 = vadd.f32 0.0, %v270
  %272 = vdwg.mxu0
  %273 = vmatprep.subr.bf16.mxu0 %v95
  %274 = vmatpush1.bf16.msra.mxu0 %v94
  %275 = vmatprep.subr.bf16.mxu0 %v142
  %276 = vmatpush1.bf16.msra.mxu0 %v139
  %277 = vmatprep.subr.bf16.mxu0 0
  %278 = vmatpush1.bf16.msra.mxu0 0
  %279 = vmatprep.subr.bf16.mxu0 0
  %280 = vmatpush1.bf16.msra.mxu0 0
  %281 = vmatprep.subr.bf16.mxu0 0
  %282 = vmatpush1.bf16.msra.mxu0 0
  %283 = vmatprep.subr.bf16.mxu0 0
  %284 = vmatpush1.bf16.msra.mxu0 0
  %285 = vmatprep.subr.bf16.mxu0 0
  %286 = vmatpush1.bf16.msra.mxu0 0
  %287 = vmatprep.subr.bf16.mxu0 0
  %288 = vmatpush1.bf16.msra.mxu0 0
  %289 = vmatprep.subr.bf16.mxu0 0
  %290 = vmatpush1.bf16.msra.mxu0 0
  %291 = vmatprep.subr.bf16.mxu0 0
  %292 = vmatpush1.bf16.msra.mxu0 0
  %293 = vmatprep.subr.bf16.mxu0 0
  %294 = vmatpush1.bf16.msra.mxu0 0
  %295 = vmatprep.subr.bf16.mxu0 0
  %296 = vmatpush1.bf16.msra.mxu0 0
  %297 = vmatprep.subr.bf16.mxu0 0
  %298 = vmatpush1.bf16.msra.mxu0 0
  %299 = vmatprep.subr.bf16.mxu0 0
  %300 = vmatpush1.bf16.msra.mxu0 0
  %301 = vmatprep.subr.bf16.mxu0 0
  %302 = vmatpush1.bf16.msra.mxu0 0
  %303 = vmatprep.subr.bf16.mxu0 0
  %304 = vmatpush1.bf16.msra.mxu0 0
  %305 = vmatprep.mubr.bf16.mxu0 0
  %306 = vmatmul.mubr.bf16.gmra.mrb[0].mxu0 %v114
  %v307 = vpop.f32.mrb[0].mxu0
  %v308 = vadd.f32 0.0, %v307
  %v309 = vpop.f32.mrb[0].mxu0
  %v310 = vadd.f32 0.0, %v309
  %v311 = vpop.f32.mrb[0].mxu0
  %v312 = vadd.f32 0.0, %v311
  %v313 = vpop.f32.mrb[0].mxu0
  %v314 = vadd.f32 0.0, %v313
  %315 = vdwg.mxu0
  %v316 = vpack.c.bf16 %v183, %v179
  %v317 = vpack.c.bf16 %v185, %v181
  %v318 = vpack.c.bf16 %v226, %v222
  %v319 = vpack.c.bf16 %v228, %v224
  %v320 = vpack.c.bf16 %v269, %v265
  %v321 = vpack.c.bf16 %v271, %v267
  %v322 = vpack.c.bf16 %v312, %v308
  %v323 = vpack.c.bf16 %v314, %v310
  %v332 = vunpack.c.l.b16 %v316
  %v333 = vunpack.c.l.b16 %v317
  %v334 = vunpack.c.l.b16 %v318
  %v335 = vunpack.c.l.b16 %v319
  %v336 = vunpack.c.l.b16 %v320
  %v337 = vunpack.c.l.b16 %v321
  %v338 = vunpack.c.l.b16 %v322
  %v339 = vunpack.c.l.b16 %v323
  %v340 = vunpack.c.h.b16 %v316
  %v341 = vunpack.c.h.b16 %v317
  %v342 = vunpack.c.h.b16 %v318
  %v343 = vunpack.c.h.b16 %v319
  %v344 = vunpack.c.h.b16 %v320
  %v345 = vunpack.c.h.b16 %v321
  %v346 = vunpack.c.h.b16 %v322
  %v347 = vunpack.c.h.b16 %v323
  %v348 = vpack.c.b16 %v333, %v332
  %v349 = vpack.c.b16 %v335, %v334
  %v350 = vpack.c.b16 %v337, %v336
  %v351 = vpack.c.b16 %v339, %v338
  %v352 = vpack.c.b16 %v341, %v340
  %v353 = vpack.c.b16 %v343, %v342
  %v354 = vpack.c.b16 %v345, %v344
  %v355 = vpack.c.b16 %v347, %v346
  %364 = vst [vmem:[%s3] sm:$0xff] %v348
  %365 = vst [vmem:[%s3 + $0x8] sm:$0xff] %v349
  %366 = vst [vmem:[%s3 + $0x10] sm:$0xff] %v350
  %367 = vst [vmem:[%s3 + $0x18] sm:$0xff] %v351
  %368 = vst [vmem:[%s3 + $0x20] sm:$0xff] %v352
  %369 = vst [vmem:[%s3 + $0x28] sm:$0xff] %v353
  %370 = vst [vmem:[%s3 + $0x30] sm:$0xff] %v354
  %371 = vst [vmem:[%s3 + $0x38] sm:$0xff] %v355
  %v372 = vld [vmem:[%s2] sm:$0xff]
  %v373 = vld [vmem:[%s2 + $0x8] sm:$0xff]
  %375 = vset.pattern.permute.xlu0 0
  %376 = vperm.xlu0 %375, %v372
  %v377 = vpop.permute.xlu0 %376
  %380 = vset.pattern.permute.xlu0 0
  %381 = vperm.xlu0 %380, %v373
  %v382 = vpop.permute.xlu0 %381
  %v384 = vmul.f32 %v179, %v377
  %v385 = vmul.f32 %v181, %v377
  %v386 = vmul.f32 %v222, %v377
  %v387 = vmul.f32 %v224, %v377
  %v388 = vmul.f32 %v265, %v377
  %v389 = vmul.f32 %v267, %v377
  %v390 = vmul.f32 %v308, %v377
  %v391 = vmul.f32 %v310, %v377
  %v392 = vmul.f32 %v183, %v382
  %v393 = vmul.f32 %v185, %v382
  %v394 = vmul.f32 %v226, %v382
  %v395 = vmul.f32 %v228, %v382
  %v396 = vmul.f32 %v269, %v382
  %v397 = vmul.f32 %v271, %v382
  %v398 = vmul.f32 %v312, %v382
  %v399 = vmul.f32 %v314, %v382
  %s400 = scalar_lea.vmem %s2, 16
  %v401 = vld [vmem:[%s400] sm:$0xff]
  %v402 = vld [vmem:[%s400 + $0x8] sm:$0xff]
  %404 = vset.pattern.permute.xlu0 0
  %405 = vperm.xlu0 %404, %v401
  %v406 = vpop.permute.xlu0 %405
  %409 = vset.pattern.permute.xlu0 0
  %410 = vperm.xlu0 %409, %v402
  %v411 = vpop.permute.xlu0 %410
  %v413 = vadd.f32 %v384, %v406
  %v414 = vadd.f32 %v385, %v406
  %v415 = vadd.f32 %v386, %v406
  %v416 = vadd.f32 %v387, %v406
  %v417 = vadd.f32 %v388, %v406
  %v418 = vadd.f32 %v389, %v406
  %v419 = vadd.f32 %v390, %v406
  %v420 = vadd.f32 %v391, %v406
  %v421 = vadd.f32 %v392, %v411
  %v422 = vadd.f32 %v393, %v411
  %v423 = vadd.f32 %v394, %v411
  %v424 = vadd.f32 %v395, %v411
  %v425 = vadd.f32 %v396, %v411
  %v426 = vadd.f32 %v397, %v411
  %v427 = vadd.f32 %v398, %v411
  %v428 = vadd.f32 %v399, %v411
  %v429 = vmax.f32 %v413, 0.0
  %v430 = vmax.f32 %v414, 0.0
  %v431 = vmax.f32 %v415, 0.0
  %v432 = vmax.f32 %v416, 0.0
  %v433 = vmax.f32 %v417, 0.0
  %v434 = vmax.f32 %v418, 0.0
  %v435 = vmax.f32 %v419, 0.0
  %v436 = vmax.f32 %v420, 0.0
  %v437 = vmax.f32 %v421, 0.0
  %v438 = vmax.f32 %v422, 0.0
  %v439 = vmax.f32 %v423, 0.0
  %v440 = vmax.f32 %v424, 0.0
  %v441 = vmax.f32 %v425, 0.0
  %v442 = vmax.f32 %v426, 0.0
  %v443 = vmax.f32 %v427, 0.0
  %v444 = vmax.f32 %v428, 0.0
  %v445 = vpack.c.bf16 %v437, %v429
  %v446 = vpack.c.bf16 %v438, %v430
  %v447 = vpack.c.bf16 %v439, %v431
  %v448 = vpack.c.bf16 %v440, %v432
  %v449 = vpack.c.bf16 %v441, %v433
  %v450 = vpack.c.bf16 %v442, %v434
  %v451 = vpack.c.bf16 %v443, %v435
  %v452 = vpack.c.bf16 %v444, %v436
  %v461 = vunpack.c.l.b16 %v445
  %v462 = vunpack.c.l.b16 %v446
  %v463 = vunpack.c.l.b16 %v447
  %v464 = vunpack.c.l.b16 %v448
  %v465 = vunpack.c.l.b16 %v449
  %v466 = vunpack.c.l.b16 %v450
  %v467 = vunpack.c.l.b16 %v451
  %v468 = vunpack.c.l.b16 %v452
  %v469 = vunpack.c.h.b16 %v445
  %v470 = vunpack.c.h.b16 %v446
  %v471 = vunpack.c.h.b16 %v447
  %v472 = vunpack.c.h.b16 %v448
  %v473 = vunpack.c.h.b16 %v449
  %v474 = vunpack.c.h.b16 %v450
  %v475 = vunpack.c.h.b16 %v451
  %v476 = vunpack.c.h.b16 %v452
  %v477 = vpack.c.b16 %v462, %v461
  %v478 = vpack.c.b16 %v464, %v463
  %v479 = vpack.c.b16 %v466, %v465
  %v480 = vpack.c.b16 %v468, %v467
  %v481 = vpack.c.b16 %v470, %v469
  %v482 = vpack.c.b16 %v472, %v471
  %v483 = vpack.c.b16 %v474, %v473
  %v484 = vpack.c.b16 %v476, %v475
  %493 = vst [vmem:[%s4] sm:$0xff] %v477
  %494 = vst [vmem:[%s4 + $0x8] sm:$0xff] %v478
  %495 = vst [vmem:[%s4 + $0x10] sm:$0xff] %v479
  %496 = vst [vmem:[%s4 + $0x18] sm:$0xff] %v480
  %497 = vst [vmem:[%s4 + $0x20] sm:$0xff] %v481
  %498 = vst [vmem:[%s4 + $0x28] sm:$0xff] %v482
  %499 = vst [vmem:[%s4 + $0x30] sm:$0xff] %v483
  %500 = vst [vmem:[%s4 + $0x38] sm:$0xff] %v484
  // Predicated region
  $region14: #{net_forward.6} parent=0 // pred_check
    _
  $region15: #{net_forward.6} parent=0 // pred_check_branch
    %502 = sbr.rel (0) target = $region17
  $region16: #{net_forward.6} parent=0 // pred_region
    _
  $region17: #{net_forward.6} parent=0 // pred_fallthru
    _
  // Predicated region
  $region18: #{net_forward.6} parent=0 // pred_check
    _
  $region19: #{net_forward.6} parent=0 // pred_check_branch
    %504 = sbr.rel (0) target = $region21
  $region20: #{net_forward.6} parent=0 // pred_region
    _
  $region21: #{net_forward.6} parent=0 // pred_fallthru
    _
  // Predicated region
  $region22: #{net_forward.6} parent=0 // pred_check
    _
  $region23: #{net_forward.6} parent=0 // pred_check_branch
    %506 = sbr.rel (0) target = $region25
  $region24: #{net_forward.6} parent=0 // pred_region
    _
  $region25: #{net_forward.6} parent=0 // pred_fallthru
    _
  // Predicated region
  $region26: #{net_forward.6} parent=0 // pred_check
    _
  $region27: #{net_forward.6} parent=0 // pred_check_branch
    %508 = sbr.rel (0) target = $region29
  $region28: #{net_forward.6} parent=0 // pred_region
    _
  $region29: #{net_forward.6} parent=0 // pred_fallthru
    _

// kernel: net_forward.7
$region0: #{net_forward.7}
  #allocation0 [shape = 'u32[]', space=smem, size = 0x4, offset = 0x4, fixed_abs, tag = 'smem constant byte address 0x4 - core index']
  #allocation1 [shape = 'u32[144,128]{1,0:T(1,128)}', space=vmem, size = 0x12000, scoped, tag = 'internal scratch']
  %s0 = inlined_call_operand.vmem [shape: bf16[16,432], index: 0, kind: input, shape index: {}]
  %s1 = inlined_call_operand.vmem [shape: bf16[432,128], index: 1, kind: input, shape index: {}]
  %s2 = inlined_call_operand.vmem [shape: bf16[16,128], index: 2, kind: output, shape index: {}]
  %s3 = sld [smem:[#allocation0]]
  $region18: #{net_forward.7} parent=0
    _
  %s5 = ssub.s32 1, %s3
  %s6 = scalar_select 0, %s5, %s3
  // Predicated region
  $region2: #{net_forward.7} parent=0 // pred_check
    _
  $region3: #{net_forward.7} parent=0 // pred_check_branch
    %8 = sbr.rel (0) target = $region5
  $region4: #{net_forward.7} parent=0 // pred_region
    _
  $region5: #{net_forward.7} parent=0 // pred_fallthru
    _
  // Predicated region
  $region6: #{net_forward.7} parent=0 // pred_check
    _
  $region7: #{net_forward.7} parent=0 // pred_check_branch
    %10 = sbr.rel (0) target = $region9
  $region8: #{net_forward.7} parent=0 // pred_region
    _
  $region9: #{net_forward.7} parent=0 // pred_fallthru
    _
  %v12 = vld [vmem:[%s0] sm:$0xff]
  %v13 = vld [vmem:[%s0 + $0x8] sm:$0xff]
  %v14 = vld [vmem:[%s0 + $0x10] sm:$0xff]
  %v15 = vld [vmem:[%s0 + $0x18] sm:$0xff]
  %v16 = vld [vmem:[%s1] sm:$0xf]
  %v17 = vld [vmem:[%s1 + $0x4] sm:$0xf]
  %v18 = vld [vmem:[%s1 + $0x8] sm:$0xf]
  %v19 = vld [vmem:[%s1 + $0xc] sm:$0xf]
  %v20 = vld [vmem:[%s1 + $0x10] sm:$0xf]
  %v21 = vld [vmem:[%s1 + $0x14] sm:$0xf]
  %v22 = vld [vmem:[%s1 + $0x18] sm:$0xf]
  %v23 = vld [vmem:[%s1 + $0x1c] sm:$0xf]
  %v24 = vld [vmem:[%s1 + $0x20] sm:$0xf]
  %v25 = vld [vmem:[%s1 + $0x24] sm:$0xf]
  %v26 = vld [vmem:[%s1 + $0x28] sm:$0xf]
  %v27 = vld [vmem:[%s1 + $0x2c] sm:$0xf]
  %v28 = vld [vmem:[%s1 + $0x30] sm:$0xf]
  %v29 = vld [vmem:[%s1 + $0x34] sm:$0xf]
  %v30 = vld [vmem:[%s1 + $0x38] sm:$0xf]
  %v31 = vld [vmem:[%s1 + $0x3c] sm:$0xf]
  %v32 = vld [vmem:[%s1 + $0x40] sm:$0xf]
  %v33 = vld [vmem:[%s1 + $0x44] sm:$0xf]
  %v34 = vld [vmem:[%s1 + $0x48] sm:$0xf]
  %v35 = vld [vmem:[%s1 + $0x4c] sm:$0xf]
  %v36 = vld [vmem:[%s1 + $0x50] sm:$0xf]
  %v37 = vld [vmem:[%s1 + $0x54] sm:$0xf]
  %v38 = vld [vmem:[%s1 + $0x58] sm:$0xf]
  %v39 = vld [vmem:[%s1 + $0x5c] sm:$0xf]
  %v40 = vld [vmem:[%s1 + $0x60] sm:$0xf]
  %v41 = vld [vmem:[%s1 + $0x64] sm:$0xf]
  %v42 = vld [vmem:[%s1 + $0x68] sm:$0xf]
  %v43 = vld [vmem:[%s1 + $0x6c] sm:$0xf]
  %v44 = vld [vmem:[%s1 + $0x70] sm:$0xf]
  %v45 = vld [vmem:[%s1 + $0x74] sm:$0xf]
  %v46 = vld [vmem:[%s1 + $0x78] sm:$0xf]
  %v47 = vld [vmem:[%s1 + $0x7c] sm:$0xf]
  %v48 = vld [vmem:[%s1 + $0x80] sm:$0xf]
  %v49 = vld [vmem:[%s1 + $0x84] sm:$0xf]
  %v50 = vld [vmem:[%s1 + $0x88] sm:$0xf]
  %v51 = vld [vmem:[%s1 + $0x8c] sm:$0xf]
  %v52 = vld [vmem:[%s1 + $0x90] sm:$0xf]
  %v53 = vld [vmem:[%s1 + $0x94] sm:$0xf]
  %v54 = vld [vmem:[%s1 + $0x98] sm:$0xf]
  %v55 = vld [vmem:[%s1 + $0x9c] sm:$0xf]
  %v56 = vld [vmem:[%s1 + $0xa0] sm:$0xf]
  %v57 = vld [vmem:[%s1 + $0xa4] sm:$0xf]
  %v58 = vld [vmem:[%s1 + $0xa8] sm:$0xf]
  %v59 = vld [vmem:[%s1 + $0xac] sm:$0xf]
  %v60 = vld [vmem:[%s1 + $0xb0] sm:$0xf]
  %v61 = vld [vmem:[%s1 + $0xb4] sm:$0xf]
  %v62 = vld [vmem:[%s1 + $0xb8] sm:$0xf]
  %v63 = vld [vmem:[%s1 + $0xbc] sm:$0xf]
  %v64 = vld [vmem:[%s1 + $0xc0] sm:$0xf]
  %v65 = vld [vmem:[%s1 + $0xc4] sm:$0xf]
  %v66 = vld [vmem:[%s1 + $0xc8] sm:$0xf]
  %v67 = vld [vmem:[%s1 + $0xcc] sm:$0xf]
  %v68 = vld [vmem:[%s1 + $0xd0] sm:$0xf]
  %v69 = vld [vmem:[%s1 + $0xd4] sm:$0xf]
  %v74 = vunpack.c.l.b16 %v12
  %v75 = vunpack.c.h.b16 %v12
  %v76 = vunpack.c.l.b16 %v13
  %v77 = vunpack.c.h.b16 %v13
  %v78 = vunpack.c.l.b16 %v14
  %v79 = vunpack.c.h.b16 %v14
  %v80 = vunpack.c.l.b16 %v15
  %v81 = vunpack.c.h.b16 %v15
  %v82 = vpack.c.b16 %v78, %v74
  %v83 = vpack.c.b16 %v79, %v75
  %v84 = vpack.c.b16 %v80, %v76
  %v85 = vpack.c.b16 %v81, %v77
  %v143 = vunpack.c.l.b16 %v16
  %v144 = vunpack.c.l.b16 %v17
  %v145 = vunpack.c.l.b16 %v18
  %v146 = vunpack.c.l.b16 %v19
  %v147 = vunpack.c.l.b16 %v20
  %v148 = vunpack.c.l.b16 %v21
  %v149 = vunpack.c.l.b16 %v22
  %v150 = vunpack.c.l.b16 %v23
  %v151 = vunpack.c.l.b16 %v24
  %v152 = vunpack.c.l.b16 %v25
  %v153 = vunpack.c.l.b16 %v26
  %v154 = vunpack.c.l.b16 %v27
  %v155 = vunpack.c.l.b16 %v28
  %v156 = vunpack.c.l.b16 %v29
  %v157 = vunpack.c.l.b16 %v30
  %v158 = vunpack.c.l.b16 %v31
  %v159 = vunpack.c.l.b16 %v32
  %v160 = vunpack.c.l.b16 %v33
  %v161 = vunpack.c.l.b16 %v34
  %v162 = vunpack.c.l.b16 %v35
  %v163 = vunpack.c.l.b16 %v36
  %v164 = vunpack.c.l.b16 %v37
  %v165 = vunpack.c.l.b16 %v38
  %v166 = vunpack.c.l.b16 %v39
  %v167 = vunpack.c.l.b16 %v40
  %v168 = vunpack.c.l.b16 %v41
  %v169 = vunpack.c.l.b16 %v42
  %v170 = vunpack.c.l.b16 %v43
  %v171 = vunpack.c.l.b16 %v44
  %v172 = vunpack.c.l.b16 %v45
  %v173 = vunpack.c.l.b16 %v46
  %v174 = vunpack.c.l.b16 %v47
  %v175 = vunpack.c.l.b16 %v48
  %v176 = vunpack.c.l.b16 %v49
  %v177 = vunpack.c.l.b16 %v50
  %v178 = vunpack.c.l.b16 %v51
  %v179 = vunpack.c.l.b16 %v52
  %v180 = vunpack.c.l.b16 %v53
  %v181 = vunpack.c.l.b16 %v54
  %v182 = vunpack.c.l.b16 %v55
  %v183 = vunpack.c.l.b16 %v56
  %v184 = vunpack.c.l.b16 %v57
  %v185 = vunpack.c.l.b16 %v58
  %v186 = vunpack.c.l.b16 %v59
  %v187 = vunpack.c.l.b16 %v60
  %v188 = vunpack.c.l.b16 %v61
  %v189 = vunpack.c.l.b16 %v62
  %v190 = vunpack.c.l.b16 %v63
  %v191 = vunpack.c.l.b16 %v64
  %v192 = vunpack.c.l.b16 %v65
  %v193 = vunpack.c.l.b16 %v66
  %v194 = vunpack.c.l.b16 %v67
  %v195 = vunpack.c.l.b16 %v68
  %v196 = vunpack.c.l.b16 %v69
  %v197 = vpack.c.b16 %v144, %v143
  %v198 = vpack.c.b16 %v146, %v145
  %v199 = vpack.c.b16 %v148, %v147
  %v200 = vpack.c.b16 %v150, %v149
  %v201 = vpack.c.b16 %v152, %v151
  %v202 = vpack.c.b16 %v154, %v153
  %v203 = vpack.c.b16 %v156, %v155
  %v204 = vpack.c.b16 %v158, %v157
  %v205 = vpack.c.b16 %v160, %v159
  %v206 = vpack.c.b16 %v162, %v161
  %v207 = vpack.c.b16 %v164, %v163
  %v208 = vpack.c.b16 %v166, %v165
  %v209 = vpack.c.b16 %v168, %v167
  %v210 = vpack.c.b16 %v170, %v169
  %v211 = vpack.c.b16 %v172, %v171
  %v212 = vpack.c.b16 %v174, %v173
  %v213 = vpack.c.b16 %v176, %v175
  %v214 = vpack.c.b16 %v178, %v177
  %v215 = vpack.c.b16 %v180, %v179
  %v216 = vpack.c.b16 %v182, %v181
  %v217 = vpack.c.b16 %v184, %v183
  %v218 = vpack.c.b16 %v186, %v185
  %v219 = vpack.c.b16 %v188, %v187
  %v220 = vpack.c.b16 %v190, %v189
  %v221 = vpack.c.b16 %v192, %v191
  %v222 = vpack.c.b16 %v194, %v193
  %v223 = vpack.c.b16 %v196, %v195
  %vm251 = vcmask 392192
  %v253 = vsel %vm251, %v85, 0
  %255 = vmatprep.subr.bf16.mxu0 0
  %256 = vmatpush1.bf16.msra.mxu0 %v197
  %257 = vmatprep.subr.bf16.mxu0 0
  %258 = vmatpush1.bf16.msra.mxu0 %v198
  %259 = vmatprep.subr.bf16.mxu0 0
  %260 = vmatpush1.bf16.msra.mxu0 %v199
  %261 = vmatprep.subr.bf16.mxu0 0
  %262 = vmatpush1.bf16.msra.mxu0 %v200
  %263 = vmatprep.subr.bf16.mxu0 0
  %264 = vmatpush1.bf16.msra.mxu0 %v201
  %265 = vmatprep.subr.bf16.mxu0 0
  %266 = vmatpush1.bf16.msra.mxu0 %v202
  %267 = vmatprep.subr.bf16.mxu0 0
  %268 = vmatpush1.bf16.msra.mxu0 %v203
  %269 = vmatprep.subr.bf16.mxu0 0
  %270 = vmatpush1.bf16.msra.mxu0 %v204
  %271 = vmatprep.subr.bf16.mxu0 0
  %272 = vmatpush1.bf16.msra.mxu0 %v205
  %273 = vmatprep.subr.bf16.mxu0 0
  %274 = vmatpush1.bf16.msra.mxu0 %v206
  %275 = vmatprep.subr.bf16.mxu0 0
  %276 = vmatpush1.bf16.msra.mxu0 %v207
  %277 = vmatprep.subr.bf16.mxu0 0
  %278 = vmatpush1.bf16.msra.mxu0 %v208
  %279 = vmatprep.subr.bf16.mxu0 0
  %280 = vmatpush1.bf16.msra.mxu0 %v209
  %281 = vmatprep.subr.bf16.mxu0 0
  %282 = vmatpush1.bf16.msra.mxu0 %v210
  %283 = vmatprep.subr.bf16.mxu0 0
  %284 = vmatpush1.bf16.msra.mxu0 %v211
  %285 = vmatprep.subr.bf16.mxu0 0
  %286 = vmatpush1.bf16.msra.mxu0 %v212
  %287 = vmatprep.mubr.bf16.mxu0 %v83
  %288 = vmatmul.mubr.bf16.gmra.mrb[0].mxu0 %v82
  %v289 = vpop.f32.mrb[0].mxu0
  %v290 = vadd.f32 0.0, %v289
  %v291 = vpop.f32.mrb[0].mxu0
  %v292 = vpop.f32.mrb[0].mxu0
  %v293 = vadd.f32 0.0, %v292
  %v294 = vpop.f32.mrb[0].mxu0
  %295 = vdwg.mxu0
  %296 = vmatprep.subr.bf16.mxu0 0
  %297 = vmatpush1.bf16.msra.mxu0 %v213
  %298 = vmatprep.subr.bf16.mxu0 0
  %299 = vmatpush1.bf16.msra.mxu0 %v214
  %300 = vmatprep.subr.bf16.mxu0 0
  %301 = vmatpush1.bf16.msra.mxu0 %v215
  %302 = vmatprep.subr.bf16.mxu0 0
  %303 = vmatpush1.bf16.msra.mxu0 %v216
  %304 = vmatprep.subr.bf16.mxu0 0
  %305 = vmatpush1.bf16.msra.mxu0 %v217
  %306 = vmatprep.subr.bf16.mxu0 0
  %307 = vmatpush1.bf16.msra.mxu0 %v218
  %308 = vmatprep.subr.bf16.mxu0 0
  %309 = vmatpush1.bf16.msra.mxu0 %v219
  %310 = vmatprep.subr.bf16.mxu0 0
  %311 = vmatpush1.bf16.msra.mxu0 %v220
  %312 = vmatprep.subr.bf16.mxu0 0
  %313 = vmatpush1.bf16.msra.mxu0 %v221
  %314 = vmatprep.subr.bf16.mxu0 0
  %315 = vmatpush1.bf16.msra.mxu0 %v222
  %316 = vmatprep.subr.bf16.mxu0 0
  %317 = vmatpush1.bf16.msra.mxu0 %v223
  %318 = vmatprep.subr.bf16.mxu0 0
  %319 = vmatpush1.bf16.msra.mxu0 0
  %320 = vmatprep.subr.bf16.mxu0 0
  %321 = vmatpush1.bf16.msra.mxu0 0
  %322 = vmatprep.subr.bf16.mxu0 0
  %323 = vmatpush1.bf16.msra.mxu0 0
  %324 = vmatprep.subr.bf16.mxu0 0
  %325 = vmatpush1.bf16.msra.mxu0 0
  %326 = vmatprep.subr.bf16.mxu0 0
  %327 = vmatpush1.bf16.msra.mxu0 0
  %328 = vmatprep.mubr.bf16.mxu0 %v253
  %329 = vmatmul.mubr.bf16.gmra.mrb[0].mxu0 %v84
  %v330 = vpop.f32.mrb[0].mxu0
  %v331 = vadd.f32 %v290, %v330
  %v332 = vpop.f32.mrb[0].mxu0
  %v333 = vpop.f32.mrb[0].mxu0
  %v334 = vadd.f32 %v293, %v333
  %v335 = vpop.f32.mrb[0].mxu0
  %336 = vdwg.mxu0
  %v337 = vpack.c.bf16 %v334, %v331
  %v339 = vunpack.c.l.b16 %v337
  %v340 = vunpack.c.h.b16 %v337
  %v341 = vpack.c.b16 %v339, %v339
  %v342 = vpack.c.b16 %v340, %v340
  %345 = vst [vmem:[%s2] sm:$0xf] %v341
  %346 = vst [vmem:[%s2 + $0x4] sm:$0xf] %v342
  // Predicated region
  $region10: #{net_forward.7} parent=0 // pred_check
    _
  $region11: #{net_forward.7} parent=0 // pred_check_branch
    %348 = sbr.rel (0) target = $region13
  $region12: #{net_forward.7} parent=0 // pred_region
    _
  $region13: #{net_forward.7} parent=0 // pred_fallthru
    _
  // Predicated region
  $region14: #{net_forward.7} parent=0 // pred_check
    _
  $region15: #{net_forward.7} parent=0 // pred_check_branch
    %350 = sbr.rel (0) target = $region17
  $region16: #{net_forward.7} parent=0 // pred_region
    _
  $region17: #{net_forward.7} parent=0 // pred_fallthru
    _

// kernel: net_forward.8
$region0: #{net_forward.8}
  #allocation0 [shape = 'u32[]', space=smem, size = 0x4, offset = 0x4, fixed_abs, tag = 'smem constant byte address 0x4 - core index']
  #allocation1 [shape = 'u32[144,128]{1,0:T(1,128)}', space=vmem, size = 0x12000, scoped, tag = 'internal scratch']
  %s0 = inlined_call_operand.vmem [shape: bf16[16,1024], index: 0, kind: input, shape index: {}]
  %s1 = inlined_call_operand.vmem [shape: bf16[16,1024], index: 1, kind: input, shape index: {}]
  %s2 = inlined_call_operand.vmem [shape: f32[2,16,1], index: 2, kind: input, shape index: {}]
  %s3 = inlined_call_operand.vmem [shape: f32[2,16,1], index: 3, kind: input, shape index: {}]
  %s4 = inlined_call_operand.vmem [shape: bf16[8,16], index: 4, kind: input, shape index: {}]
  %s5 = inlined_call_operand.vmem [shape: bf16[8,16], index: 5, kind: input, shape index: {}]
  %s6 = inlined_call_operand.vmem [shape: f32[2,8,1], index: 6, kind: input, shape index: {}]
  %s7 = inlined_call_operand.vmem [shape: bf16[16,8], index: 7, kind: input, shape index: {}]
  %s8 = inlined_call_operand.vmem [shape: f32[2,16,1], index: 8, kind: input, shape index: {}]
  %s9 = inlined_call_operand.vmem [shape: f32[2,16,1], index: 9, kind: input, shape index: {}]
  %s10 = inlined_call_operand.vmem [shape: f32[2,16,1], index: 10, kind: input, shape index: {}]
  %s11 = inlined_call_operand.vmem [shape: bf16[16,16], index: 11, kind: input, shape index: {}]
  %s12 = inlined_call_operand.vmem [shape: bf16[16,16], index: 12, kind: input, shape index: {}]
  %s13 = inlined_call_operand.vmem [shape: bf16[16,1024], index: 13, kind: output, shape index: {0}]
  %s14 = inlined_call_operand.vmem [shape: f32[16,1024], index: 14, kind: output, shape index: {1}]
  %15 = xla_tuple %s13, %s14
  %s16 = sld [smem:[#allocation0]]
  $region70: #{net_forward.8} parent=0
    _
  %s18 = ssub.s32 1, %s16
  %s19 = scalar_select 0, %s18, %s16
  // Predicated region
  $region2: #{net_forward.8} parent=0 // pred_check
    _
  $region3: #{net_forward.8} parent=0 // pred_check_branch
    %21 = sbr.rel (0) target = $region5
  $region4: #{net_forward.8} parent=0 // pred_region
    _
  $region5: #{net_forward.8} parent=0 // pred_fallthru
    _
  // Predicated region
  $region6: #{net_forward.8} parent=0 // pred_check
    _
  $region7: #{net_forward.8} parent=0 // pred_check_branch
    %23 = sbr.rel (0) target = $region9
  $region8: #{net_forward.8} parent=0 // pred_region
    _
  $region9: #{net_forward.8} parent=0 // pred_fallthru
    _
  // Predicated region
  $region10: #{net_forward.8} parent=0 // pred_check
    _
  $region11: #{net_forward.8} parent=0 // pred_check_branch
    %25 = sbr.rel (0) target = $region13
  $region12: #{net_forward.8} parent=0 // pred_region
    _
  $region13: #{net_forward.8} parent=0 // pred_fallthru
    _
  // Predicated region
  $region14: #{net_forward.8} parent=0 // pred_check
    _
  $region15: #{net_forward.8} parent=0 // pred_check_branch
    %27 = sbr.rel (0) target = $region17
  $region16: #{net_forward.8} parent=0 // pred_region
    _
  $region17: #{net_forward.8} parent=0 // pred_fallthru
    _
  // Predicated region
  $region18: #{net_forward.8} parent=0 // pred_check
    _
  $region19: #{net_forward.8} parent=0 // pred_check_branch
    %29 = sbr.rel (0) target = $region21
  $region20: #{net_forward.8} parent=0 // pred_region
    _
  $region21: #{net_forward.8} parent=0 // pred_fallthru
    _
  // Predicated region
  $region22: #{net_forward.8} parent=0 // pred_check
    _
  $region23: #{net_forward.8} parent=0 // pred_check_branch
    %31 = sbr.rel (0) target = $region25
  $region24: #{net_forward.8} parent=0 // pred_region
    _
  $region25: #{net_forward.8} parent=0 // pred_fallthru
    _
  // Predicated region
  $region26: #{net_forward.8} parent=0 // pred_check
    _
  $region27: #{net_forward.8} parent=0 // pred_check_branch
    %33 = sbr.rel (0) target = $region29
  $region28: #{net_forward.8} parent=0 // pred_region
    _
  $region29: #{net_forward.8} parent=0 // pred_fallthru
    _
  // Predicated region
  $region30: #{net_forward.8} parent=0 // pred_check
    _
  $region31: #{net_forward.8} parent=0 // pred_check_branch
    %35 = sbr.rel (0) target = $region33
  $region32: #{net_forward.8} parent=0 // pred_region
    _
  $region33: #{net_forward.8} parent=0 // pred_fallthru
    _
  // Predicated region
  $region34: #{net_forward.8} parent=0 // pred_check
    _
  $region35: #{net_forward.8} parent=0 // pred_check_branch
    %37 = sbr.rel (0) target = $region37
  $region36: #{net_forward.8} parent=0 // pred_region
    _
  $region37: #{net_forward.8} parent=0 // pred_fallthru
    _
  // Predicated region
  $region38: #{net_forward.8} parent=0 // pred_check
    _
  $region39: #{net_forward.8} parent=0 // pred_check_branch
    %39 = sbr.rel (0) target = $region41
  $region40: #{net_forward.8} parent=0 // pred_region
    _
  $region41: #{net_forward.8} parent=0 // pred_fallthru
    _
  // Predicated region
  $region42: #{net_forward.8} parent=0 // pred_check
    _
  $region43: #{net_forward.8} parent=0 // pred_check_branch
    %41 = sbr.rel (0) target = $region45
  $region44: #{net_forward.8} parent=0 // pred_region
    _
  $region45: #{net_forward.8} parent=0 // pred_fallthru
    _
  // Predicated region
  $region46: #{net_forward.8} parent=0 // pred_check
    _
  $region47: #{net_forward.8} parent=0 // pred_check_branch
    %43 = sbr.rel (0) target = $region49
  $region48: #{net_forward.8} parent=0 // pred_region
    _
  $region49: #{net_forward.8} parent=0 // pred_fallthru
    _
  // Predicated region
  $region50: #{net_forward.8} parent=0 // pred_check
    _
  $region51: #{net_forward.8} parent=0 // pred_check_branch
    %45 = sbr.rel (0) target = $region53
  $region52: #{net_forward.8} parent=0 // pred_region
    _
  $region53: #{net_forward.8} parent=0 // pred_fallthru
    _
  %v47 = vld [vmem:[%s0] sm:$0xff]
  %v48 = vld [vmem:[%s0 + $0x8] sm:$0xff]
  %v49 = vld [vmem:[%s0 + $0x10] sm:$0xff]
  %v50 = vld [vmem:[%s0 + $0x18] sm:$0xff]
  %v51 = vld [vmem:[%s0 + $0x20] sm:$0xff]
  %v52 = vld [vmem:[%s0 + $0x28] sm:$0xff]
  %v53 = vld [vmem:[%s0 + $0x30] sm:$0xff]
  %v54 = vld [vmem:[%s0 + $0x38] sm:$0xff]
  %v55 = vunpack.c.l.bf16 %v47
  %v56 = vunpack.c.h.bf16 %v47
  %v57 = vunpack.c.l.bf16 %v48
  %v58 = vunpack.c.h.bf16 %v48
  %v59 = vunpack.c.l.bf16 %v49
  %v60 = vunpack.c.h.bf16 %v49
  %v61 = vunpack.c.l.bf16 %v50
  %v62 = vunpack.c.h.bf16 %v50
  %v63 = vunpack.c.l.bf16 %v51
  %v64 = vunpack.c.h.bf16 %v51
  %v65 = vunpack.c.l.bf16 %v52
  %v66 = vunpack.c.h.bf16 %v52
  %v67 = vunpack.c.l.bf16 %v53
  %v68 = vunpack.c.h.bf16 %v53
  %v69 = vunpack.c.l.bf16 %v54
  %v70 = vunpack.c.h.bf16 %v54
  %v71 = vld [vmem:[%s1] sm:$0xff]
  %v72 = vld [vmem:[%s1 + $0x8] sm:$0xff]
  %v73 = vld [vmem:[%s1 + $0x10] sm:$0xff]
  %v74 = vld [vmem:[%s1 + $0x18] sm:$0xff]
  %v75 = vld [vmem:[%s1 + $0x20] sm:$0xff]
  %v76 = vld [vmem:[%s1 + $0x28] sm:$0xff]
  %v77 = vld [vmem:[%s1 + $0x30] sm:$0xff]
  %v78 = vld [vmem:[%s1 + $0x38] sm:$0xff]
  %v79 = vunpack.c.l.bf16 %v71
  %v80 = vunpack.c.h.bf16 %v71
  %v81 = vunpack.c.l.bf16 %v72
  %v82 = vunpack.c.h.bf16 %v72
  %v83 = vunpack.c.l.bf16 %v73
  %v84 = vunpack.c.h.bf16 %v73
  %v85 = vunpack.c.l.bf16 %v74
  %v86 = vunpack.c.h.bf16 %v74
  %v87 = vunpack.c.l.bf16 %v75
  %v88 = vunpack.c.h.bf16 %v75
  %v89 = vunpack.c.l.bf16 %v76
  %v90 = vunpack.c.h.bf16 %v76
  %v91 = vunpack.c.l.bf16 %v77
  %v92 = vunpack.c.h.bf16 %v77
  %v93 = vunpack.c.l.bf16 %v78
  %v94 = vunpack.c.h.bf16 %v78
  %v95 = vld [vmem:[%s2] sm:$0xff]
  %v96 = vld [vmem:[%s2 + $0x8] sm:$0xff]
  %98 = vset.pattern.permute.xlu0 0
  %99 = vperm.xlu0 %98, %v95
  %v100 = vpop.permute.xlu0 %99
  %103 = vset.pattern.permute.xlu0 0
  %104 = vperm.xlu0 %103, %v96
  %v105 = vpop.permute.xlu0 %104
  %v107 = vmul.f32 %v55, %v100
  %v108 = vmul.f32 %v56, %v100
  %v109 = vmul.f32 %v57, %v100
  %v110 = vmul.f32 %v58, %v100
  %v111 = vmul.f32 %v59, %v100
  %v112 = vmul.f32 %v60, %v100
  %v113 = vmul.f32 %v61, %v100
  %v114 = vmul.f32 %v62, %v100
  %v115 = vmul.f32 %v63, %v105
  %v116 = vmul.f32 %v64, %v105
  %v117 = vmul.f32 %v65, %v105
  %v118 = vmul.f32 %v66, %v105
  %v119 = vmul.f32 %v67, %v105
  %v120 = vmul.f32 %v68, %v105
  %v121 = vmul.f32 %v69, %v105
  %v122 = vmul.f32 %v70, %v105
  %s123 = scalar_lea.vmem %s2, 16
  %v124 = vld [vmem:[%s123] sm:$0xff]
  %v125 = vld [vmem:[%s123 + $0x8] sm:$0xff]
  %127 = vset.pattern.permute.xlu0 0
  %128 = vperm.xlu0 %127, %v124
  %v129 = vpop.permute.xlu0 %128
  %132 = vset.pattern.permute.xlu0 0
  %133 = vperm.xlu0 %132, %v125
  %v134 = vpop.permute.xlu0 %133
  %v136 = vadd.f32 %v107, %v129
  %v137 = vadd.f32 %v108, %v129
  %v138 = vadd.f32 %v109, %v129
  %v139 = vadd.f32 %v110, %v129
  %v140 = vadd.f32 %v111, %v129
  %v141 = vadd.f32 %v112, %v129
  %v142 = vadd.f32 %v113, %v129
  %v143 = vadd.f32 %v114, %v129
  %v144 = vadd.f32 %v115, %v134
  %v145 = vadd.f32 %v116, %v134
  %v146 = vadd.f32 %v117, %v134
  %v147 = vadd.f32 %v118, %v134
  %v148 = vadd.f32 %v119, %v134
  %v149 = vadd.f32 %v120, %v134
  %v150 = vadd.f32 %v121, %v134
  %v151 = vadd.f32 %v122, %v134
  %v152 = vmax.f32 %v136, 0.0
  %v153 = vmax.f32 %v137, 0.0
  %v154 = vmax.f32 %v138, 0.0
  %v155 = vmax.f32 %v139, 0.0
  %v156 = vmax.f32 %v140, 0.0
  %v157 = vmax.f32 %v141, 0.0
  %v158 = vmax.f32 %v142, 0.0
  %v159 = vmax.f32 %v143, 0.0
  %v160 = vmax.f32 %v144, 0.0
  %v161 = vmax.f32 %v145, 0.0
  %v162 = vmax.f32 %v146, 0.0
  %v163 = vmax.f32 %v147, 0.0
  %v164 = vmax.f32 %v148, 0.0
  %v165 = vmax.f32 %v149, 0.0
  %v166 = vmax.f32 %v150, 0.0
  %v167 = vmax.f32 %v151, 0.0
  %v168 = vld [vmem:[%s3] sm:$0xff]
  %v169 = vld [vmem:[%s3 + $0x8] sm:$0xff]
  %171 = vset.pattern.permute.xlu0 0
  %172 = vperm.xlu0 %171, %v168
  %v173 = vpop.permute.xlu0 %172
  %176 = vset.pattern.permute.xlu0 0
  %177 = vperm.xlu0 %176, %v169
  %v178 = vpop.permute.xlu0 %177
  %v180 = vmul.f32 %v79, %v173
  %v181 = vmul.f32 %v80, %v173
  %v182 = vmul.f32 %v81, %v173
  %v183 = vmul.f32 %v82, %v173
  %v184 = vmul.f32 %v83, %v173
  %v185 = vmul.f32 %v84, %v173
  %v186 = vmul.f32 %v85, %v173
  %v187 = vmul.f32 %v86, %v173
  %v188 = vmul.f32 %v87, %v178
  %v189 = vmul.f32 %v88, %v178
  %v190 = vmul.f32 %v89, %v178
  %v191 = vmul.f32 %v90, %v178
  %v192 = vmul.f32 %v91, %v178
  %v193 = vmul.f32 %v92, %v178
  %v194 = vmul.f32 %v93, %v178
  %v195 = vmul.f32 %v94, %v178
  %s196 = scalar_lea.vmem %s3, 16
  %v197 = vld [vmem:[%s196] sm:$0xff]
  %v198 = vld [vmem:[%s196 + $0x8] sm:$0xff]
  %200 = vset.pattern.permute.xlu0 0
  %201 = vperm.xlu0 %200, %v197
  %v202 = vpop.permute.xlu0 %201
  %205 = vset.pattern.permute.xlu0 0
  %206 = vperm.xlu0 %205, %v198
  %v207 = vpop.permute.xlu0 %206
  %v209 = vadd.f32 %v180, %v202
  %v210 = vadd.f32 %v181, %v202
  %v211 = vadd.f32 %v182, %v202
  %v212 = vadd.f32 %v183, %v202
  %v213 = vadd.f32 %v184, %v202
  %v214 = vadd.f32 %v185, %v202
  %v215 = vadd.f32 %v186, %v202
  %v216 = vadd.f32 %v187, %v202
  %v217 = vadd.f32 %v188, %v207
  %v218 = vadd.f32 %v189, %v207
  %v219 = vadd.f32 %v190, %v207
  %v220 = vadd.f32 %v191, %v207
  %v221 = vadd.f32 %v192, %v207
  %v222 = vadd.f32 %v193, %v207
  %v223 = vadd.f32 %v194, %v207
  %v224 = vadd.f32 %v195, %v207
  %v225 = vmax.f32 %v209, 0.0
  %v226 = vmax.f32 %v210, 0.0
  %v227 = vmax.f32 %v211, 0.0
  %v228 = vmax.f32 %v212, 0.0
  %v229 = vmax.f32 %v213, 0.0
  %v230 = vmax.f32 %v214, 0.0
  %v231 = vmax.f32 %v215, 0.0
  %v232 = vmax.f32 %v216, 0.0
  %v233 = vmax.f32 %v217, 0.0
  %v234 = vmax.f32 %v218, 0.0
  %v235 = vmax.f32 %v219, 0.0
  %v236 = vmax.f32 %v220, 0.0
  %v237 = vmax.f32 %v221, 0.0
  %v238 = vmax.f32 %v222, 0.0
  %v239 = vmax.f32 %v223, 0.0
  %v240 = vmax.f32 %v224, 0.0
  %v241 = vld [vmem:[%s4] sm:$0xf]
  %v242 = vpack.c.bf16 %v160, %v152
  %v243 = vpack.c.bf16 %v161, %v153
  %v244 = vpack.c.bf16 %v162, %v154
  %v245 = vpack.c.bf16 %v163, %v155
  %v246 = vpack.c.bf16 %v164, %v156
  %v247 = vpack.c.bf16 %v165, %v157
  %v248 = vpack.c.bf16 %v166, %v158
  %v249 = vpack.c.bf16 %v167, %v159
  %v250 = vld [vmem:[%s5] sm:$0xf]
  %v251 = vpack.c.bf16 %v233, %v225
  %v252 = vpack.c.bf16 %v234, %v226
  %v253 = vpack.c.bf16 %v235, %v227
  %v254 = vpack.c.bf16 %v236, %v228
  %v255 = vpack.c.bf16 %v237, %v229
  %v256 = vpack.c.bf16 %v238, %v230
  %v257 = vpack.c.bf16 %v239, %v231
  %v258 = vpack.c.bf16 %v240, %v232
  %vm259 = vcmask 130048
  %v261 = vsel %vm259, %v250, 0
  %263 = vmatprep.subr.bf16.mxu0 %v252
  %264 = vmatpush1.bf16.msra.mxu0 %v251
  %265 = vmatprep.subr.bf16.mxu0 0
  %266 = vmatpush1.bf16.msra.mxu0 0
  %267 = vmatprep.subr.bf16.mxu0 0
  %268 = vmatpush1.bf16.msra.mxu0 0
  %269 = vmatprep.subr.bf16.mxu0 0
  %270 = vmatpush1.bf16.msra.mxu0 0
  %271 = vmatprep.subr.bf16.mxu0 0
  %272 = vmatpush1.bf16.msra.mxu0 0
  %273 = vmatprep.subr.bf16.mxu0 0
  %274 = vmatpush1.bf16.msra.mxu0 0
  %275 = vmatprep.subr.bf16.mxu0 0
  %276 = vmatpush1.bf16.msra.mxu0 0
  %277 = vmatprep.subr.bf16.mxu0 0
  %278 = vmatpush1.bf16.msra.mxu0 0
  %279 = vmatprep.subr.bf16.mxu0 0
  %280 = vmatpush1.bf16.msra.mxu0 0
  %281 = vmatprep.subr.bf16.mxu0 0
  %282 = vmatpush1.bf16.msra.mxu0 0
  %283 = vmatprep.subr.bf16.mxu0 0
  %284 = vmatpush1.bf16.msra.mxu0 0
  %285 = vmatprep.subr.bf16.mxu0 0
  %286 = vmatpush1.bf16.msra.mxu0 0
  %287 = vmatprep.subr.bf16.mxu0 0
  %288 = vmatpush1.bf16.msra.mxu0 0
  %289 = vmatprep.subr.bf16.mxu0 0
  %290 = vmatpush1.bf16.msra.mxu0 0
  %291 = vmatprep.subr.bf16.mxu0 0
  %292 = vmatpush1.bf16.msra.mxu0 0
  %293 = vmatprep.subr.bf16.mxu0 0
  %294 = vmatpush1.bf16.msra.mxu0 0
  %295 = vmatprep.mubr.bf16.mxu0 0
  %296 = vmatmul.mubr.bf16.gmra.mrb[0].mxu0 %v261
  %v297 = vpop.f32.mrb[0].mxu0
  %v298 = vadd.f32 0.0, %v297
  %v299 = vpop.f32.mrb[0].mxu0
  %v300 = vadd.f32 0.0, %v299
  %v301 = vpop.f32.mrb[0].mxu0
  %v302 = vpop.f32.mrb[0].mxu0
  %303 = vdwg.mxu0
  %304 = vmatprep.subr.bf16.mxu0 %v254
  %305 = vmatpush1.bf16.msra.mxu0 %v253
  %306 = vmatprep.subr.bf16.mxu0 0
  %307 = vmatpush1.bf16.msra.mxu0 0
  %308 = vmatprep.subr.bf16.mxu0 0
  %309 = vmatpush1.bf16.msra.mxu0 0
  %310 = vmatprep.subr.bf16.mxu0 0
  %311 = vmatpush1.bf16.msra.mxu0 0
  %312 = vmatprep.subr.bf16.mxu0 0
  %313 = vmatpush1.bf16.msra.mxu0 0
  %314 = vmatprep.subr.bf16.mxu0 0
  %315 = vmatpush1.bf16.msra.mxu0 0
  %316 = vmatprep.subr.bf16.mxu0 0
  %317 = vmatpush1.bf16.msra.mxu0 0
  %318 = vmatprep.subr.bf16.mxu0 0
  %319 = vmatpush1.bf16.msra.mxu0 0
  %320 = vmatprep.subr.bf16.mxu0 0
  %321 = vmatpush1.bf16.msra.mxu0 0
  %322 = vmatprep.subr.bf16.mxu0 0
  %323 = vmatpush1.bf16.msra.mxu0 0
  %324 = vmatprep.subr.bf16.mxu0 0
  %325 = vmatpush1.bf16.msra.mxu0 0
  %326 = vmatprep.subr.bf16.mxu0 0
  %327 = vmatpush1.bf16.msra.mxu0 0
  %328 = vmatprep.subr.bf16.mxu0 0
  %329 = vmatpush1.bf16.msra.mxu0 0
  %330 = vmatprep.subr.bf16.mxu0 0
  %331 = vmatpush1.bf16.msra.mxu0 0
  %332 = vmatprep.subr.bf16.mxu0 0
  %333 = vmatpush1.bf16.msra.mxu0 0
  %334 = vmatprep.subr.bf16.mxu0 0
  %335 = vmatpush1.bf16.msra.mxu0 0
  %336 = vmatprep.mubr.bf16.mxu0 0
  %337 = vmatmul.mubr.bf16.gmra.mrb[0].mxu0 %v261
  %v338 = vpop.f32.mrb[0].mxu0
  %v339 = vadd.f32 0.0, %v338
  %v340 = vpop.f32.mrb[0].mxu0
  %v341 = vadd.f32 0.0, %v340
  %v342 = vpop.f32.mrb[0].mxu0
  %v343 = vpop.f32.mrb[0].mxu0
  %344 = vdwg.mxu0
  %345 = vmatprep.subr.bf16.mxu0 %v256
  %346 = vmatpush1.bf16.msra.mxu0 %v255
  %347 = vmatprep.subr.bf16.mxu0 0
  %348 = vmatpush1.bf16.msra.mxu0 0
  %349 = vmatprep.subr.bf16.mxu0 0
  %350 = vmatpush1.bf16.msra.mxu0 0
  %351 = vmatprep.subr.bf16.mxu0 0
  %352 = vmatpush1.bf16.msra.mxu0 0
  %353 = vmatprep.subr.bf16.mxu0 0
  %354 = vmatpush1.bf16.msra.mxu0 0
  %355 = vmatprep.subr.bf16.mxu0 0
  %356 = vmatpush1.bf16.msra.mxu0 0
  %357 = vmatprep.subr.bf16.mxu0 0
  %358 = vmatpush1.bf16.msra.mxu0 0
  %359 = vmatprep.subr.bf16.mxu0 0
  %360 = vmatpush1.bf16.msra.mxu0 0
  %361 = vmatprep.subr.bf16.mxu0 0
  %362 = vmatpush1.bf16.msra.mxu0 0
  %363 = vmatprep.subr.bf16.mxu0 0
  %364 = vmatpush1.bf16.msra.mxu0 0
  %365 = vmatprep.subr.bf16.mxu0 0
  %366 = vmatpush1.bf16.msra.mxu0 0
  %367 = vmatprep.subr.bf16.mxu0 0
  %368 = vmatpush1.bf16.msra.mxu0 0
  %369 = vmatprep.subr.bf16.mxu0 0
  %370 = vmatpush1.bf16.msra.mxu0 0
  %371 = vmatprep.subr.bf16.mxu0 0
  %372 = vmatpush1.bf16.msra.mxu0 0
  %373 = vmatprep.subr.bf16.mxu0 0
  %374 = vmatpush1.bf16.msra.mxu0 0
  %375 = vmatprep.subr.bf16.mxu0 0
  %376 = vmatpush1.bf16.msra.mxu0 0
  %377 = vmatprep.mubr.bf16.mxu0 0
  %378 = vmatmul.mubr.bf16.gmra.mrb[0].mxu0 %v261
  %v379 = vpop.f32.mrb[0].mxu0
  %v380 = vadd.f32 0.0, %v379
  %v381 = vpop.f32.mrb[0].mxu0
  %v382 = vadd.f32 0.0, %v381
  %v383 = vpop.f32.mrb[0].mxu0
  %v384 = vpop.f32.mrb[0].mxu0
  %385 = vdwg.mxu0
  %386 = vmatprep.subr.bf16.mxu0 %v258
  %387 = vmatpush1.bf16.msra.mxu0 %v257
  %388 = vmatprep.subr.bf16.mxu0 0
  %389 = vmatpush1.bf16.msra.mxu0 0
  %390 = vmatprep.subr.bf16.mxu0 0
  %391 = vmatpush1.bf16.msra.mxu0 0
  %392 = vmatprep.subr.bf16.mxu0 0
  %393 = vmatpush1.bf16.msra.mxu0 0
  %394 = vmatprep.subr.bf16.mxu0 0
  %395 = vmatpush1.bf16.msra.mxu0 0
  %396 = vmatprep.subr.bf16.mxu0 0
  %397 = vmatpush1.bf16.msra.mxu0 0
  %398 = vmatprep.subr.bf16.mxu0 0
  %399 = vmatpush1.bf16.msra.mxu0 0
  %400 = vmatprep.subr.bf16.mxu0 0
  %401 = vmatpush1.bf16.msra.mxu0 0
  %402 = vmatprep.subr.bf16.mxu0 0
  %403 = vmatpush1.bf16.msra.mxu0 0
  %404 = vmatprep.subr.bf16.mxu0 0
  %405 = vmatpush1.bf16.msra.mxu0 0
  %406 = vmatprep.subr.bf16.mxu0 0
  %407 = vmatpush1.bf16.msra.mxu0 0
  %408 = vmatprep.subr.bf16.mxu0 0
  %409 = vmatpush1.bf16.msra.mxu0 0
  %410 = vmatprep.subr.bf16.mxu0 0
  %411 = vmatpush1.bf16.msra.mxu0 0
  %412 = vmatprep.subr.bf16.mxu0 0
  %413 = vmatpush1.bf16.msra.mxu0 0
  %414 = vmatprep.subr.bf16.mxu0 0
  %415 = vmatpush1.bf16.msra.mxu0 0
  %416 = vmatprep.subr.bf16.mxu0 0
  %417 = vmatpush1.bf16.msra.mxu0 0
  %418 = vmatprep.mubr.bf16.mxu0 0
  %419 = vmatmul.mubr.bf16.gmra.mrb[0].mxu0 %v261
  %v420 = vpop.f32.mrb[0].mxu0
  %v421 = vadd.f32 0.0, %v420
  %v422 = vpop.f32.mrb[0].mxu0
  %v423 = vadd.f32 0.0, %v422
  %v424 = vpop.f32.mrb[0].mxu0
  %v425 = vpop.f32.mrb[0].mxu0
  %426 = vdwg.mxu0
  %v428 = vsel %vm259, %v241, 0
  %430 = vmatprep.subr.bf16.mxu0 %v243
  %431 = vmatpush1.bf16.msra.mxu0 %v242
  %432 = vmatprep.subr.bf16.mxu0 0
  %433 = vmatpush1.bf16.msra.mxu0 0
  %434 = vmatprep.subr.bf16.mxu0 0
  %435 = vmatpush1.bf16.msra.mxu0 0
  %436 = vmatprep.subr.bf16.mxu0 0
  %437 = vmatpush1.bf16.msra.mxu0 0
  %438 = vmatprep.subr.bf16.mxu0 0
  %439 = vmatpush1.bf16.msra.mxu0 0
  %440 = vmatprep.subr.bf16.mxu0 0
  %441 = vmatpush1.bf16.msra.mxu0 0
  %442 = vmatprep.subr.bf16.mxu0 0
  %443 = vmatpush1.bf16.msra.mxu0 0
  %444 = vmatprep.subr.bf16.mxu0 0
  %445 = vmatpush1.bf16.msra.mxu0 0
  %446 = vmatprep.subr.bf16.mxu0 0
  %447 = vmatpush1.bf16.msra.mxu0 0
  %448 = vmatprep.subr.bf16.mxu0 0
  %449 = vmatpush1.bf16.msra.mxu0 0
  %450 = vmatprep.subr.bf16.mxu0 0
  %451 = vmatpush1.bf16.msra.mxu0 0
  %452 = vmatprep.subr.bf16.mxu0 0
  %453 = vmatpush1.bf16.msra.mxu0 0
  %454 = vmatprep.subr.bf16.mxu0 0
  %455 = vmatpush1.bf16.msra.mxu0 0
  %456 = vmatprep.subr.bf16.mxu0 0
  %457 = vmatpush1.bf16.msra.mxu0 0
  %458 = vmatprep.subr.bf16.mxu0 0
  %459 = vmatpush1.bf16.msra.mxu0 0
  %460 = vmatprep.subr.bf16.mxu0 0
  %461 = vmatpush1.bf16.msra.mxu0 0
  %462 = vmatprep.mubr.bf16.mxu0 0
  %463 = vmatmul.mubr.bf16.gmra.mrb[0].mxu0 %v428
  %v464 = vpop.f32.mrb[0].mxu0
  %v465 = vadd.f32 %v298, %v464
  %v466 = vpop.f32.mrb[0].mxu0
  %v467 = vadd.f32 %v300, %v466
  %v468 = vpop.f32.mrb[0].mxu0
  %v469 = vpop.f32.mrb[0].mxu0
  %470 = vdwg.mxu0
  %471 = vmatprep.subr.bf16.mxu0 %v245
  %472 = vmatpush1.bf16.msra.mxu0 %v244
  %473 = vmatprep.subr.bf16.mxu0 0
  %474 = vmatpush1.bf16.msra.mxu0 0
  %475 = vmatprep.subr.bf16.mxu0 0
  %476 = vmatpush1.bf16.msra.mxu0 0
  %477 = vmatprep.subr.bf16.mxu0 0
  %478 = vmatpush1.bf16.msra.mxu0 0
  %479 = vmatprep.subr.bf16.mxu0 0
  %480 = vmatpush1.bf16.msra.mxu0 0
  %481 = vmatprep.subr.bf16.mxu0 0
  %482 = vmatpush1.bf16.msra.mxu0 0
  %483 = vmatprep.subr.bf16.mxu0 0
  %484 = vmatpush1.bf16.msra.mxu0 0
  %485 = vmatprep.subr.bf16.mxu0 0
  %486 = vmatpush1.bf16.msra.mxu0 0
  %487 = vmatprep.subr.bf16.mxu0 0
  %488 = vmatpush1.bf16.msra.mxu0 0
  %489 = vmatprep.subr.bf16.mxu0 0
  %490 = vmatpush1.bf16.msra.mxu0 0
  %491 = vmatprep.subr.bf16.mxu0 0
  %492 = vmatpush1.bf16.msra.mxu0 0
  %493 = vmatprep.subr.bf16.mxu0 0
  %494 = vmatpush1.bf16.msra.mxu0 0
  %495 = vmatprep.subr.bf16.mxu0 0
  %496 = vmatpush1.bf16.msra.mxu0 0
  %497 = vmatprep.subr.bf16.mxu0 0
  %498 = vmatpush1.bf16.msra.mxu0 0
  %499 = vmatprep.subr.bf16.mxu0 0
  %500 = vmatpush1.bf16.msra.mxu0 0
  %501 = vmatprep.subr.bf16.mxu0 0
  %502 = vmatpush1.bf16.msra.mxu0 0
  %503 = vmatprep.mubr.bf16.mxu0 0
  %504 = vmatmul.mubr.bf16.gmra.mrb[0].mxu0 %v428
  %v505 = vpop.f32.mrb[0].mxu0
  %v506 = vadd.f32 %v339, %v505
  %v507 = vpop.f32.mrb[0].mxu0
  %v508 = vadd.f32 %v341, %v507
  %v509 = vpop.f32.mrb[0].mxu0
  %v510 = vpop.f32.mrb[0].mxu0
  %511 = vdwg.mxu0
  %512 = vmatprep.subr.bf16.mxu0 %v247
  %513 = vmatpush1.bf16.msra.mxu0 %v246
  %514 = vmatprep.subr.bf16.mxu0 0
  %515 = vmatpush1.bf16.msra.mxu0 0
  %516 = vmatprep.subr.bf16.mxu0 0
  %517 = vmatpush1.bf16.msra.mxu0 0
  %518 = vmatprep.subr.bf16.mxu0 0
  %519 = vmatpush1.bf16.msra.mxu0 0
  %520 = vmatprep.subr.bf16.mxu0 0
  %521 = vmatpush1.bf16.msra.mxu0 0
  %522 = vmatprep.subr.bf16.mxu0 0
  %523 = vmatpush1.bf16.msra.mxu0 0
  %524 = vmatprep.subr.bf16.mxu0 0
  %525 = vmatpush1.bf16.msra.mxu0 0
  %526 = vmatprep.subr.bf16.mxu0 0
  %527 = vmatpush1.bf16.msra.mxu0 0
  %528 = vmatprep.subr.bf16.mxu0 0
  %529 = vmatpush1.bf16.msra.mxu0 0
  %530 = vmatprep.subr.bf16.mxu0 0
  %531 = vmatpush1.bf16.msra.mxu0 0
  %532 = vmatprep.subr.bf16.mxu0 0
  %533 = vmatpush1.bf16.msra.mxu0 0
  %534 = vmatprep.subr.bf16.mxu0 0
  %535 = vmatpush1.bf16.msra.mxu0 0
  %536 = vmatprep.subr.bf16.mxu0 0
  %537 = vmatpush1.bf16.msra.mxu0 0
  %538 = vmatprep.subr.bf16.mxu0 0
  %539 = vmatpush1.bf16.msra.mxu0 0
  %540 = vmatprep.subr.bf16.mxu0 0
  %541 = vmatpush1.bf16.msra.mxu0 0
  %542 = vmatprep.subr.bf16.mxu0 0
  %543 = vmatpush1.bf16.msra.mxu0 0
  %544 = vmatprep.mubr.bf16.mxu0 0
  %545 = vmatmul.mubr.bf16.gmra.mrb[0].mxu0 %v428
  %v546 = vpop.f32.mrb[0].mxu0
  %v547 = vadd.f32 %v380, %v546
  %v548 = vpop.f32.mrb[0].mxu0
  %v549 = vadd.f32 %v382, %v548
  %v550 = vpop.f32.mrb[0].mxu0
  %v551 = vpop.f32.mrb[0].mxu0
  %552 = vdwg.mxu0
  %553 = vmatprep.subr.bf16.mxu0 %v249
  %554 = vmatpush1.bf16.msra.mxu0 %v248
  %555 = vmatprep.subr.bf16.mxu0 0
  %556 = vmatpush1.bf16.msra.mxu0 0
  %557 = vmatprep.subr.bf16.mxu0 0
  %558 = vmatpush1.bf16.msra.mxu0 0
  %559 = vmatprep.subr.bf16.mxu0 0
  %560 = vmatpush1.bf16.msra.mxu0 0
  %561 = vmatprep.subr.bf16.mxu0 0
  %562 = vmatpush1.bf16.msra.mxu0 0
  %563 = vmatprep.subr.bf16.mxu0 0
  %564 = vmatpush1.bf16.msra.mxu0 0
  %565 = vmatprep.subr.bf16.mxu0 0
  %566 = vmatpush1.bf16.msra.mxu0 0
  %567 = vmatprep.subr.bf16.mxu0 0
  %568 = vmatpush1.bf16.msra.mxu0 0
  %569 = vmatprep.subr.bf16.mxu0 0
  %570 = vmatpush1.bf16.msra.mxu0 0
  %571 = vmatprep.subr.bf16.mxu0 0
  %572 = vmatpush1.bf16.msra.mxu0 0
  %573 = vmatprep.subr.bf16.mxu0 0
  %574 = vmatpush1.bf16.msra.mxu0 0
  %575 = vmatprep.subr.bf16.mxu0 0
  %576 = vmatpush1.bf16.msra.mxu0 0
  %577 = vmatprep.subr.bf16.mxu0 0
  %578 = vmatpush1.bf16.msra.mxu0 0
  %579 = vmatprep.subr.bf16.mxu0 0
  %580 = vmatpush1.bf16.msra.mxu0 0
  %581 = vmatprep.subr.bf16.mxu0 0
  %582 = vmatpush1.bf16.msra.mxu0 0
  %583 = vmatprep.subr.bf16.mxu0 0
  %584 = vmatpush1.bf16.msra.mxu0 0
  %585 = vmatprep.mubr.bf16.mxu0 0
  %586 = vmatmul.mubr.bf16.gmra.mrb[0].mxu0 %v428
  %v587 = vpop.f32.mrb[0].mxu0
  %v588 = vadd.f32 %v421, %v587
  %v589 = vpop.f32.mrb[0].mxu0
  %v590 = vadd.f32 %v423, %v589
  %v591 = vpop.f32.mrb[0].mxu0
  %v592 = vpop.f32.mrb[0].mxu0
  %593 = vdwg.mxu0
  %v594 = vld [vmem:[%s6] sm:$0xff]
  %596 = vset.pattern.permute.xlu0 0
  %597 = vperm.xlu0 %596, %v594
  %v598 = vpop.permute.xlu0 %597
  %v600 = vmul.f32 %v465, %v598
  %v601 = vmul.f32 %v467, %v598
  %v602 = vmul.f32 %v506, %v598
  %v603 = vmul.f32 %v508, %v598
  %v604 = vmul.f32 %v547, %v598
  %v605 = vmul.f32 %v549, %v598
  %v606 = vmul.f32 %v588, %v598
  %v607 = vmul.f32 %v590, %v598
  %s608 = scalar_lea.vmem %s6, 8
  %v609 = vld [vmem:[%s608] sm:$0xff]
  %611 = vset.pattern.permute.xlu0 0
  %612 = vperm.xlu0 %611, %v609
  %v613 = vpop.permute.xlu0 %612
  %v615 = vadd.f32 %v600, %v613
  %v616 = vadd.f32 %v601, %v613
  %v617 = vadd.f32 %v602, %v613
  %v618 = vadd.f32 %v603, %v613
  %v619 = vadd.f32 %v604, %v613
  %v620 = vadd.f32 %v605, %v613
  %v621 = vadd.f32 %v606, %v613
  %v622 = vadd.f32 %v607, %v613
  %v623 = vmax.f32 %v615, 0.0
  %v624 = vmax.f32 %v616, 0.0
  %v625 = vmax.f32 %v617, 0.0
  %v626 = vmax.f32 %v618, 0.0
  %v627 = vmax.f32 %v619, 0.0
  %v628 = vmax.f32 %v620, 0.0
  %v629 = vmax.f32 %v621, 0.0
  %v630 = vmax.f32 %v622, 0.0
  %v631 = vld [vmem:[%s7] sm:$0xf]
  %v632 = vld [vmem:[%s7 + $0x4] sm:$0xf]
  %v633 = vpack.c.bf16 %v623, %v623
  %v634 = vpack.c.bf16 %v624, %v624
  %v635 = vpack.c.bf16 %v625, %v625
  %v636 = vpack.c.bf16 %v626, %v626
  %v637 = vpack.c.bf16 %v627, %v627
  %v638 = vpack.c.bf16 %v628, %v628
  %v639 = vpack.c.bf16 %v629, %v629
  %v640 = vpack.c.bf16 %v630, %v630
  %v643 = vunpack.c.l.b16 %v631
  %v644 = vunpack.c.l.b16 %v632
  %v645 = vpack.c.b16 %v644, %v643
  %vm646 = vcmask 64512
  %v648 = vsel %vm646, %v645, 0
  %vm650 = vcmask 1043456
  %v652 = vsel %vm650, %v633, 0
  %v655 = vsel %vm650, %v634, 0
  %v658 = vsel %vm650, %v635, 0
  %v661 = vsel %vm650, %v636, 0
  %v664 = vsel %vm650, %v637, 0
  %v667 = vsel %vm650, %v638, 0
  %v670 = vsel %vm650, %v639, 0
  %v673 = vsel %vm650, %v640, 0
  %675 = vmatprep.subr.bf16.mxu0 %v655
  %676 = vmatpush1.bf16.msra.mxu0 %v652
  %677 = vmatprep.subr.bf16.mxu0 0
  %678 = vmatpush1.bf16.msra.mxu0 0
  %679 = vmatprep.subr.bf16.mxu0 0
  %680 = vmatpush1.bf16.msra.mxu0 0
  %681 = vmatprep.subr.bf16.mxu0 0
  %682 = vmatpush1.bf16.msra.mxu0 0
  %683 = vmatprep.subr.bf16.mxu0 0
  %684 = vmatpush1.bf16.msra.mxu0 0
  %685 = vmatprep.subr.bf16.mxu0 0
  %686 = vmatpush1.bf16.msra.mxu0 0
  %687 = vmatprep.subr.bf16.mxu0 0
  %688 = vmatpush1.bf16.msra.mxu0 0
  %689 = vmatprep.subr.bf16.mxu0 0
  %690 = vmatpush1.bf16.msra.mxu0 0
  %691 = vmatprep.subr.bf16.mxu0 0
  %692 = vmatpush1.bf16.msra.mxu0 0
  %693 = vmatprep.subr.bf16.mxu0 0
  %694 = vmatpush1.bf16.msra.mxu0 0
  %695 = vmatprep.subr.bf16.mxu0 0
  %696 = vmatpush1.bf16.msra.mxu0 0
  %697 = vmatprep.subr.bf16.mxu0 0
  %698 = vmatpush1.bf16.msra.mxu0 0
  %699 = vmatprep.subr.bf16.mxu0 0
  %700 = vmatpush1.bf16.msra.mxu0 0
  %701 = vmatprep.subr.bf16.mxu0 0
  %702 = vmatpush1.bf16.msra.mxu0 0
  %703 = vmatprep.subr.bf16.mxu0 0
  %704 = vmatpush1.bf16.msra.mxu0 0
  %705 = vmatprep.subr.bf16.mxu0 0
  %706 = vmatpush1.bf16.msra.mxu0 0
  %707 = vmatprep.mubr.bf16.mxu0 0
  %708 = vmatmul.mubr.bf16.gmra.mrb[0].mxu0 %v648
  %v709 = vpop.f32.mrb[0].mxu0
  %v710 = vadd.f32 0.0, %v709
  %v711 = vpop.f32.mrb[0].mxu0
  %v712 = vadd.f32 0.0, %v711
  %v713 = vpop.f32.mrb[0].mxu0
  %v714 = vadd.f32 0.0, %v713
  %v715 = vpop.f32.mrb[0].mxu0
  %v716 = vadd.f32 0.0, %v715
  %717 = vdwg.mxu0
  %718 = vmatprep.subr.bf16.mxu0 %v661
  %719 = vmatpush1.bf16.msra.mxu0 %v658
  %720 = vmatprep.subr.bf16.mxu0 0
  %721 = vmatpush1.bf16.msra.mxu0 0
  %722 = vmatprep.subr.bf16.mxu0 0
  %723 = vmatpush1.bf16.msra.mxu0 0
  %724 = vmatprep.subr.bf16.mxu0 0
  %725 = vmatpush1.bf16.msra.mxu0 0
  %726 = vmatprep.subr.bf16.mxu0 0
  %727 = vmatpush1.bf16.msra.mxu0 0
  %728 = vmatprep.subr.bf16.mxu0 0
  %729 = vmatpush1.bf16.msra.mxu0 0
  %730 = vmatprep.subr.bf16.mxu0 0
  %731 = vmatpush1.bf16.msra.mxu0 0
  %732 = vmatprep.subr.bf16.mxu0 0
  %733 = vmatpush1.bf16.msra.mxu0 0
  %734 = vmatprep.subr.bf16.mxu0 0
  %735 = vmatpush1.bf16.msra.mxu0 0
  %736 = vmatprep.subr.bf16.mxu0 0
  %737 = vmatpush1.bf16.msra.mxu0 0
  %738 = vmatprep.subr.bf16.mxu0 0
  %739 = vmatpush1.bf16.msra.mxu0 0
  %740 = vmatprep.subr.bf16.mxu0 0
  %741 = vmatpush1.bf16.msra.mxu0 0
  %742 = vmatprep.subr.bf16.mxu0 0
  %743 = vmatpush1.bf16.msra.mxu0 0
  %744 = vmatprep.subr.bf16.mxu0 0
  %745 = vmatpush1.bf16.msra.mxu0 0
  %746 = vmatprep.subr.bf16.mxu0 0
  %747 = vmatpush1.bf16.msra.mxu0 0
  %748 = vmatprep.subr.bf16.mxu0 0
  %749 = vmatpush1.bf16.msra.mxu0 0
  %750 = vmatprep.mubr.bf16.mxu0 0
  %751 = vmatmul.mubr.bf16.gmra.mrb[0].mxu0 %v648
  %v752 = vpop.f32.mrb[0].mxu0
  %v753 = vadd.f32 0.0, %v752
  %v754 = vpop.f32.mrb[0].mxu0
  %v755 = vadd.f32 0.0, %v754
  %v756 = vpop.f32.mrb[0].mxu0
  %v757 = vadd.f32 0.0, %v756
  %v758 = vpop.f32.mrb[0].mxu0
  %v759 = vadd.f32 0.0, %v758
  %760 = vdwg.mxu0
  %761 = vmatprep.subr.bf16.mxu0 %v667
  %762 = vmatpush1.bf16.msra.mxu0 %v664
  %763 = vmatprep.subr.bf16.mxu0 0
  %764 = vmatpush1.bf16.msra.mxu0 0
  %765 = vmatprep.subr.bf16.mxu0 0
  %766 = vmatpush1.bf16.msra.mxu0 0
  %767 = vmatprep.subr.bf16.mxu0 0
  %768 = vmatpush1.bf16.msra.mxu0 0
  %769 = vmatprep.subr.bf16.mxu0 0
  %770 = vmatpush1.bf16.msra.mxu0 0
  %771 = vmatprep.subr.bf16.mxu0 0
  %772 = vmatpush1.bf16.msra.mxu0 0
  %773 = vmatprep.subr.bf16.mxu0 0
  %774 = vmatpush1.bf16.msra.mxu0 0
  %775 = vmatprep.subr.bf16.mxu0 0
  %776 = vmatpush1.bf16.msra.mxu0 0
  %777 = vmatprep.subr.bf16.mxu0 0
  %778 = vmatpush1.bf16.msra.mxu0 0
  %779 = vmatprep.subr.bf16.mxu0 0
  %780 = vmatpush1.bf16.msra.mxu0 0
  %781 = vmatprep.subr.bf16.mxu0 0
  %782 = vmatpush1.bf16.msra.mxu0 0
  %783 = vmatprep.subr.bf16.mxu0 0
  %784 = vmatpush1.bf16.msra.mxu0 0
  %785 = vmatprep.subr.bf16.mxu0 0
  %786 = vmatpush1.bf16.msra.mxu0 0
  %787 = vmatprep.subr.bf16.mxu0 0
  %788 = vmatpush1.bf16.msra.mxu0 0
  %789 = vmatprep.subr.bf16.mxu0 0
  %790 = vmatpush1.bf16.msra.mxu0 0
  %791 = vmatprep.subr.bf16.mxu0 0
  %792 = vmatpush1.bf16.msra.mxu0 0
  %793 = vmatprep.mubr.bf16.mxu0 0
  %794 = vmatmul.mubr.bf16.gmra.mrb[0].mxu0 %v648
  %v795 = vpop.f32.mrb[0].mxu0
  %v796 = vadd.f32 0.0, %v795
  %v797 = vpop.f32.mrb[0].mxu0
  %v798 = vadd.f32 0.0, %v797
  %v799 = vpop.f32.mrb[0].mxu0
  %v800 = vadd.f32 0.0, %v799
  %v801 = vpop.f32.mrb[0].mxu0
  %v802 = vadd.f32 0.0, %v801
  %803 = vdwg.mxu0
  %804 = vmatprep.subr.bf16.mxu0 %v673
  %805 = vmatpush1.bf16.msra.mxu0 %v670
  %806 = vmatprep.subr.bf16.mxu0 0
  %807 = vmatpush1.bf16.msra.mxu0 0
  %808 = vmatprep.subr.bf16.mxu0 0
  %809 = vmatpush1.bf16.msra.mxu0 0
  %810 = vmatprep.subr.bf16.mxu0 0
  %811 = vmatpush1.bf16.msra.mxu0 0
  %812 = vmatprep.subr.bf16.mxu0 0
  %813 = vmatpush1.bf16.msra.mxu0 0
  %814 = vmatprep.subr.bf16.mxu0 0
  %815 = vmatpush1.bf16.msra.mxu0 0
  %816 = vmatprep.subr.bf16.mxu0 0
  %817 = vmatpush1.bf16.msra.mxu0 0
  %818 = vmatprep.subr.bf16.mxu0 0
  %819 = vmatpush1.bf16.msra.mxu0 0
  %820 = vmatprep.subr.bf16.mxu0 0
  %821 = vmatpush1.bf16.msra.mxu0 0
  %822 = vmatprep.subr.bf16.mxu0 0
  %823 = vmatpush1.bf16.msra.mxu0 0
  %824 = vmatprep.subr.bf16.mxu0 0
  %825 = vmatpush1.bf16.msra.mxu0 0
  %826 = vmatprep.subr.bf16.mxu0 0
  %827 = vmatpush1.bf16.msra.mxu0 0
  %828 = vmatprep.subr.bf16.mxu0 0
  %829 = vmatpush1.bf16.msra.mxu0 0
  %830 = vmatprep.subr.bf16.mxu0 0
  %831 = vmatpush1.bf16.msra.mxu0 0
  %832 = vmatprep.subr.bf16.mxu0 0
  %833 = vmatpush1.bf16.msra.mxu0 0
  %834 = vmatprep.subr.bf16.mxu0 0
  %835 = vmatpush1.bf16.msra.mxu0 0
  %836 = vmatprep.mubr.bf16.mxu0 0
  %837 = vmatmul.mubr.bf16.gmra.mrb[0].mxu0 %v648
  %v838 = vpop.f32.mrb[0].mxu0
  %v839 = vadd.f32 0.0, %v838
  %v840 = vpop.f32.mrb[0].mxu0
  %v841 = vadd.f32 0.0, %v840
  %v842 = vpop.f32.mrb[0].mxu0
  %v843 = vadd.f32 0.0, %v842
  %v844 = vpop.f32.mrb[0].mxu0
  %v845 = vadd.f32 0.0, %v844
  %846 = vdwg.mxu0
  %v847 = vld [vmem:[%s8] sm:$0xff]
  %v848 = vld [vmem:[%s8 + $0x8] sm:$0xff]
  %850 = vset.pattern.permute.xlu0 0
  %851 = vperm.xlu0 %850, %v847
  %v852 = vpop.permute.xlu0 %851
  %855 = vset.pattern.permute.xlu0 0
  %856 = vperm.xlu0 %855, %v848
  %v857 = vpop.permute.xlu0 %856
  %v859 = vmul.f32 %v710, %v852
  %v860 = vmul.f32 %v712, %v852
  %v861 = vmul.f32 %v753, %v852
  %v862 = vmul.f32 %v755, %v852
  %v863 = vmul.f32 %v796, %v852
  %v864 = vmul.f32 %v798, %v852
  %v865 = vmul.f32 %v839, %v852
  %v866 = vmul.f32 %v841, %v852
  %v867 = vmul.f32 %v714, %v857
  %v868 = vmul.f32 %v716, %v857
  %v869 = vmul.f32 %v757, %v857
  %v870 = vmul.f32 %v759, %v857
  %v871 = vmul.f32 %v800, %v857
  %v872 = vmul.f32 %v802, %v857
  %v873 = vmul.f32 %v843, %v857
  %v874 = vmul.f32 %v845, %v857
  %s875 = scalar_lea.vmem %s8, 16
  %v876 = vld [vmem:[%s875] sm:$0xff]
  %v877 = vld [vmem:[%s875 + $0x8] sm:$0xff]
  %879 = vset.pattern.permute.xlu0 0
  %880 = vperm.xlu0 %879, %v876
  %v881 = vpop.permute.xlu0 %880
  %884 = vset.pattern.permute.xlu0 0
  %885 = vperm.xlu0 %884, %v877
  %v886 = vpop.permute.xlu0 %885
  %v888 = vadd.f32 %v859, %v881
  %v889 = vadd.f32 %v860, %v881
  %v890 = vadd.f32 %v861, %v881
  %v891 = vadd.f32 %v862, %v881
  %v892 = vadd.f32 %v863, %v881
  %v893 = vadd.f32 %v864, %v881
  %v894 = vadd.f32 %v865, %v881
  %v895 = vadd.f32 %v866, %v881
  %v896 = vadd.f32 %v867, %v886
  %v897 = vadd.f32 %v868, %v886
  %v898 = vadd.f32 %v869, %v886
  %v899 = vadd.f32 %v870, %v886
  %v900 = vadd.f32 %v871, %v886
  %v901 = vadd.f32 %v872, %v886
  %v902 = vadd.f32 %v873, %v886
  %v903 = vadd.f32 %v874, %v886
  %v904 = vmax.f32 %v888, 0.0
  %v905 = vmax.f32 %v889, 0.0
  %v906 = vmax.f32 %v890, 0.0
  %v907 = vmax.f32 %v891, 0.0
  %v908 = vmax.f32 %v892, 0.0
  %v909 = vmax.f32 %v893, 0.0
  %v910 = vmax.f32 %v894, 0.0
  %v911 = vmax.f32 %v895, 0.0
  %v912 = vmax.f32 %v896, 0.0
  %v913 = vmax.f32 %v897, 0.0
  %v914 = vmax.f32 %v898, 0.0
  %v915 = vmax.f32 %v899, 0.0
  %v916 = vmax.f32 %v900, 0.0
  %v917 = vmax.f32 %v901, 0.0
  %v918 = vmax.f32 %v902, 0.0
  %v919 = vmax.f32 %v903, 0.0
  %v920 = vpack.c.bf16 %v912, %v904
  %v921 = vpack.c.bf16 %v913, %v905
  %v922 = vpack.c.bf16 %v914, %v906
  %v923 = vpack.c.bf16 %v915, %v907
  %v924 = vpack.c.bf16 %v916, %v908
  %v925 = vpack.c.bf16 %v917, %v909
  %v926 = vpack.c.bf16 %v918, %v910
  %v927 = vpack.c.bf16 %v919, %v911
  %v936 = vunpack.c.l.b16 %v920
  %v937 = vunpack.c.l.b16 %v921
  %v938 = vunpack.c.l.b16 %v922
  %v939 = vunpack.c.l.b16 %v923
  %v940 = vunpack.c.l.b16 %v924
  %v941 = vunpack.c.l.b16 %v925
  %v942 = vunpack.c.l.b16 %v926
  %v943 = vunpack.c.l.b16 %v927
  %v944 = vunpack.c.h.b16 %v920
  %v945 = vunpack.c.h.b16 %v921
  %v946 = vunpack.c.h.b16 %v922
  %v947 = vunpack.c.h.b16 %v923
  %v948 = vunpack.c.h.b16 %v924
  %v949 = vunpack.c.h.b16 %v925
  %v950 = vunpack.c.h.b16 %v926
  %v951 = vunpack.c.h.b16 %v927
  %v952 = vpack.c.b16 %v937, %v936
  %v953 = vpack.c.b16 %v939, %v938
  %v954 = vpack.c.b16 %v941, %v940
  %v955 = vpack.c.b16 %v943, %v942
  %v956 = vpack.c.b16 %v945, %v944
  %v957 = vpack.c.b16 %v947, %v946
  %v958 = vpack.c.b16 %v949, %v948
  %v959 = vpack.c.b16 %v951, %v950
  %968 = vst [vmem:[%s13] sm:$0xff] %v952
  %969 = vst [vmem:[%s13 + $0x8] sm:$0xff] %v953
  %970 = vst [vmem:[%s13 + $0x10] sm:$0xff] %v954
  %971 = vst [vmem:[%s13 + $0x18] sm:$0xff] %v955
  %972 = vst [vmem:[%s13 + $0x20] sm:$0xff] %v956
  %973 = vst [vmem:[%s13 + $0x28] sm:$0xff] %v957
  %974 = vst [vmem:[%s13 + $0x30] sm:$0xff] %v958
  %975 = vst [vmem:[%s13 + $0x38] sm:$0xff] %v959
  %v976 = vld [vmem:[%s9] sm:$0xff]
  %v977 = vld [vmem:[%s9 + $0x8] sm:$0xff]
  %979 = vset.pattern.permute.xlu0 0
  %980 = vperm.xlu0 %979, %v976
  %v981 = vpop.permute.xlu0 %980
  %984 = vset.pattern.permute.xlu0 0
  %985 = vperm.xlu0 %984, %v977
  %v986 = vpop.permute.xlu0 %985
  %v988 = vmul.f32 %v55, %v981
  %v989 = vmul.f32 %v56, %v981
  %v990 = vmul.f32 %v57, %v981
  %v991 = vmul.f32 %v58, %v981
  %v992 = vmul.f32 %v59, %v981
  %v993 = vmul.f32 %v60, %v981
  %v994 = vmul.f32 %v61, %v981
  %v995 = vmul.f32 %v62, %v981
  %v996 = vmul.f32 %v63, %v986
  %v997 = vmul.f32 %v64, %v986
  %v998 = vmul.f32 %v65, %v986
  %v999 = vmul.f32 %v66, %v986
  %v1000 = vmul.f32 %v67, %v986
  %v1001 = vmul.f32 %v68, %v986
  %v1002 = vmul.f32 %v69, %v986
  %v1003 = vmul.f32 %v70, %v986
  %s1004 = scalar_lea.vmem %s9, 16
  %v1005 = vld [vmem:[%s1004] sm:$0xff]
  %v1006 = vld [vmem:[%s1004 + $0x8] sm:$0xff]
  %1008 = vset.pattern.permute.xlu0 0
  %1009 = vperm.xlu0 %1008, %v1005
  %v1010 = vpop.permute.xlu0 %1009
  %1013 = vset.pattern.permute.xlu0 0
  %1014 = vperm.xlu0 %1013, %v1006
  %v1015 = vpop.permute.xlu0 %1014
  %v1017 = vadd.f32 %v988, %v1010
  %v1018 = vadd.f32 %v989, %v1010
  %v1019 = vadd.f32 %v990, %v1010
  %v1020 = vadd.f32 %v991, %v1010
  %v1021 = vadd.f32 %v992, %v1010
  %v1022 = vadd.f32 %v993, %v1010
  %v1023 = vadd.f32 %v994, %v1010
  %v1024 = vadd.f32 %v995, %v1010
  %v1025 = vadd.f32 %v996, %v1015
  %v1026 = vadd.f32 %v997, %v1015
  %v1027 = vadd.f32 %v998, %v1015
  %v1028 = vadd.f32 %v999, %v1015
  %v1029 = vadd.f32 %v1000, %v1015
  %v1030 = vadd.f32 %v1001, %v1015
  %v1031 = vadd.f32 %v1002, %v1015
  %v1032 = vadd.f32 %v1003, %v1015
  %v1033 = vmax.f32 %v1017, 0.0
  %v1034 = vmax.f32 %v1018, 0.0
  %v1035 = vmax.f32 %v1019, 0.0
  %v1036 = vmax.f32 %v1020, 0.0
  %v1037 = vmax.f32 %v1021, 0.0
  %v1038 = vmax.f32 %v1022, 0.0
  %v1039 = vmax.f32 %v1023, 0.0
  %v1040 = vmax.f32 %v1024, 0.0
  %v1041 = vmax.f32 %v1025, 0.0
  %v1042 = vmax.f32 %v1026, 0.0
  %v1043 = vmax.f32 %v1027, 0.0
  %v1044 = vmax.f32 %v1028, 0.0
  %v1045 = vmax.f32 %v1029, 0.0
  %v1046 = vmax.f32 %v1030, 0.0
  %v1047 = vmax.f32 %v1031, 0.0
  %v1048 = vmax.f32 %v1032, 0.0
  %v1049 = vld [vmem:[%s10] sm:$0xff]
  %v1050 = vld [vmem:[%s10 + $0x8] sm:$0xff]
  %1052 = vset.pattern.permute.xlu0 0
  %1053 = vperm.xlu0 %1052, %v1049
  %v1054 = vpop.permute.xlu0 %1053
  %1057 = vset.pattern.permute.xlu0 0
  %1058 = vperm.xlu0 %1057, %v1050
  %v1059 = vpop.permute.xlu0 %1058
  %v1061 = vmul.f32 %v79, %v1054
  %v1062 = vmul.f32 %v80, %v1054
  %v1063 = vmul.f32 %v81, %v1054
  %v1064 = vmul.f32 %v82, %v1054
  %v1065 = vmul.f32 %v83, %v1054
  %v1066 = vmul.f32 %v84, %v1054
  %v1067 = vmul.f32 %v85, %v1054
  %v1068 = vmul.f32 %v86, %v1054
  %v1069 = vmul.f32 %v87, %v1059
  %v1070 = vmul.f32 %v88, %v1059
  %v1071 = vmul.f32 %v89, %v1059
  %v1072 = vmul.f32 %v90, %v1059
  %v1073 = vmul.f32 %v91, %v1059
  %v1074 = vmul.f32 %v92, %v1059
  %v1075 = vmul.f32 %v93, %v1059
  %v1076 = vmul.f32 %v94, %v1059
  %s1077 = scalar_lea.vmem %s10, 16
  %v1078 = vld [vmem:[%s1077] sm:$0xff]
  %v1079 = vld [vmem:[%s1077 + $0x8] sm:$0xff]
  %1081 = vset.pattern.permute.xlu0 0
  %1082 = vperm.xlu0 %1081, %v1078
  %v1083 = vpop.permute.xlu0 %1082
  %1086 = vset.pattern.permute.xlu0 0
  %1087 = vperm.xlu0 %1086, %v1079
  %v1088 = vpop.permute.xlu0 %1087
  %v1090 = vadd.f32 %v1061, %v1083
  %v1091 = vadd.f32 %v1062, %v1083
  %v1092 = vadd.f32 %v1063, %v1083
  %v1093 = vadd.f32 %v1064, %v1083
  %v1094 = vadd.f32 %v1065, %v1083
  %v1095 = vadd.f32 %v1066, %v1083
  %v1096 = vadd.f32 %v1067, %v1083
  %v1097 = vadd.f32 %v1068, %v1083
  %v1098 = vadd.f32 %v1069, %v1088
  %v1099 = vadd.f32 %v1070, %v1088
  %v1100 = vadd.f32 %v1071, %v1088
  %v1101 = vadd.f32 %v1072, %v1088
  %v1102 = vadd.f32 %v1073, %v1088
  %v1103 = vadd.f32 %v1074, %v1088
  %v1104 = vadd.f32 %v1075, %v1088
  %v1105 = vadd.f32 %v1076, %v1088
  %v1106 = vmax.f32 %v1090, 0.0
  %v1107 = vmax.f32 %v1091, 0.0
  %v1108 = vmax.f32 %v1092, 0.0
  %v1109 = vmax.f32 %v1093, 0.0
  %v1110 = vmax.f32 %v1094, 0.0
  %v1111 = vmax.f32 %v1095, 0.0
  %v1112 = vmax.f32 %v1096, 0.0
  %v1113 = vmax.f32 %v1097, 0.0
  %v1114 = vmax.f32 %v1098, 0.0
  %v1115 = vmax.f32 %v1099, 0.0
  %v1116 = vmax.f32 %v1100, 0.0
  %v1117 = vmax.f32 %v1101, 0.0
  %v1118 = vmax.f32 %v1102, 0.0
  %v1119 = vmax.f32 %v1103, 0.0
  %v1120 = vmax.f32 %v1104, 0.0
  %v1121 = vmax.f32 %v1105, 0.0
  %v1122 = vld [vmem:[%s11] sm:$0xf]
  %v1123 = vld [vmem:[%s11 + $0x4] sm:$0xf]
  %v1124 = vpack.c.bf16 %v1041, %v1033
  %v1125 = vpack.c.bf16 %v1042, %v1034
  %v1126 = vpack.c.bf16 %v1043, %v1035
  %v1127 = vpack.c.bf16 %v1044, %v1036
  %v1128 = vpack.c.bf16 %v1045, %v1037
  %v1129 = vpack.c.bf16 %v1046, %v1038
  %v1130 = vpack.c.bf16 %v1047, %v1039
  %v1131 = vpack.c.bf16 %v1048, %v1040
  %v1132 = vld [vmem:[%s12] sm:$0xf]
  %v1133 = vld [vmem:[%s12 + $0x4] sm:$0xf]
  %v1134 = vpack.c.bf16 %v1114, %v1106
  %v1135 = vpack.c.bf16 %v1115, %v1107
  %v1136 = vpack.c.bf16 %v1116, %v1108
  %v1137 = vpack.c.bf16 %v1117, %v1109
  %v1138 = vpack.c.bf16 %v1118, %v1110
  %v1139 = vpack.c.bf16 %v1119, %v1111
  %v1140 = vpack.c.bf16 %v1120, %v1112
  %v1141 = vpack.c.bf16 %v1121, %v1113
  %v1144 = vunpack.c.l.b16 %v1132
  %v1145 = vunpack.c.l.b16 %v1133
  %v1146 = vpack.c.b16 %v1145, %v1144
  %v1148 = vsel %vm259, %v1146, 0
  %1150 = vmatprep.subr.bf16.mxu0 %v1135
  %1151 = vmatpush1.bf16.msra.mxu0 %v1134
  %1152 = vmatprep.subr.bf16.mxu0 0
  %1153 = vmatpush1.bf16.msra.mxu0 0
  %1154 = vmatprep.subr.bf16.mxu0 0
  %1155 = vmatpush1.bf16.msra.mxu0 0
  %1156 = vmatprep.subr.bf16.mxu0 0
  %1157 = vmatpush1.bf16.msra.mxu0 0
  %1158 = vmatprep.subr.bf16.mxu0 0
  %1159 = vmatpush1.bf16.msra.mxu0 0
  %1160 = vmatprep.subr.bf16.mxu0 0
  %1161 = vmatpush1.bf16.msra.mxu0 0
  %1162 = vmatprep.subr.bf16.mxu0 0
  %1163 = vmatpush1.bf16.msra.mxu0 0
  %1164 = vmatprep.subr.bf16.mxu0 0
  %1165 = vmatpush1.bf16.msra.mxu0 0
  %1166 = vmatprep.subr.bf16.mxu0 0
  %1167 = vmatpush1.bf16.msra.mxu0 0
  %1168 = vmatprep.subr.bf16.mxu0 0
  %1169 = vmatpush1.bf16.msra.mxu0 0
  %1170 = vmatprep.subr.bf16.mxu0 0
  %1171 = vmatpush1.bf16.msra.mxu0 0
  %1172 = vmatprep.subr.bf16.mxu0 0
  %1173 = vmatpush1.bf16.msra.mxu0 0
  %1174 = vmatprep.subr.bf16.mxu0 0
  %1175 = vmatpush1.bf16.msra.mxu0 0
  %1176 = vmatprep.subr.bf16.mxu0 0
  %1177 = vmatpush1.bf16.msra.mxu0 0
  %1178 = vmatprep.subr.bf16.mxu0 0
  %1179 = vmatpush1.bf16.msra.mxu0 0
  %1180 = vmatprep.subr.bf16.mxu0 0
  %1181 = vmatpush1.bf16.msra.mxu0 0
  %1182 = vmatprep.mubr.bf16.mxu0 0
  %1183 = vmatmul.mubr.bf16.gmra.mrb[0].mxu0 %v1148
  %v1184 = vpop.f32.mrb[0].mxu0
  %v1185 = vadd.f32 0.0, %v1184
  %v1186 = vpop.f32.mrb[0].mxu0
  %v1187 = vadd.f32 0.0, %v1186
  %v1188 = vpop.f32.mrb[0].mxu0
  %v1189 = vadd.f32 0.0, %v1188
  %v1190 = vpop.f32.mrb[0].mxu0
  %v1191 = vadd.f32 0.0, %v1190
  %1192 = vdwg.mxu0
  %1193 = vmatprep.subr.bf16.mxu0 %v1137
  %1194 = vmatpush1.bf16.msra.mxu0 %v1136
  %1195 = vmatprep.subr.bf16.mxu0 0
  %1196 = vmatpush1.bf16.msra.mxu0 0
  %1197 = vmatprep.subr.bf16.mxu0 0
  %1198 = vmatpush1.bf16.msra.mxu0 0
  %1199 = vmatprep.subr.bf16.mxu0 0
  %1200 = vmatpush1.bf16.msra.mxu0 0
  %1201 = vmatprep.subr.bf16.mxu0 0
  %1202 = vmatpush1.bf16.msra.mxu0 0
  %1203 = vmatprep.subr.bf16.mxu0 0
  %1204 = vmatpush1.bf16.msra.mxu0 0
  %1205 = vmatprep.subr.bf16.mxu0 0
  %1206 = vmatpush1.bf16.msra.mxu0 0
  %1207 = vmatprep.subr.bf16.mxu0 0
  %1208 = vmatpush1.bf16.msra.mxu0 0
  %1209 = vmatprep.subr.bf16.mxu0 0
  %1210 = vmatpush1.bf16.msra.mxu0 0
  %1211 = vmatprep.subr.bf16.mxu0 0
  %1212 = vmatpush1.bf16.msra.mxu0 0
  %1213 = vmatprep.subr.bf16.mxu0 0
  %1214 = vmatpush1.bf16.msra.mxu0 0
  %1215 = vmatprep.subr.bf16.mxu0 0
  %1216 = vmatpush1.bf16.msra.mxu0 0
  %1217 = vmatprep.subr.bf16.mxu0 0
  %1218 = vmatpush1.bf16.msra.mxu0 0
  %1219 = vmatprep.subr.bf16.mxu0 0
  %1220 = vmatpush1.bf16.msra.mxu0 0
  %1221 = vmatprep.subr.bf16.mxu0 0
  %1222 = vmatpush1.bf16.msra.mxu0 0
  %1223 = vmatprep.subr.bf16.mxu0 0
  %1224 = vmatpush1.bf16.msra.mxu0 0
  %1225 = vmatprep.mubr.bf16.mxu0 0
  %1226 = vmatmul.mubr.bf16.gmra.mrb[0].mxu0 %v1148
  %v1227 = vpop.f32.mrb[0].mxu0
  %v1228 = vadd.f32 0.0, %v1227
  %v1229 = vpop.f32.mrb[0].mxu0
  %v1230 = vadd.f32 0.0, %v1229
  %v1231 = vpop.f32.mrb[0].mxu0
  %v1232 = vadd.f32 0.0, %v1231
  %v1233 = vpop.f32.mrb[0].mxu0
  %v1234 = vadd.f32 0.0, %v1233
  %1235 = vdwg.mxu0
  %1236 = vmatprep.subr.bf16.mxu0 %v1139
  %1237 = vmatpush1.bf16.msra.mxu0 %v1138
  %1238 = vmatprep.subr.bf16.mxu0 0
  %1239 = vmatpush1.bf16.msra.mxu0 0
  %1240 = vmatprep.subr.bf16.mxu0 0
  %1241 = vmatpush1.bf16.msra.mxu0 0
  %1242 = vmatprep.subr.bf16.mxu0 0
  %1243 = vmatpush1.bf16.msra.mxu0 0
  %1244 = vmatprep.subr.bf16.mxu0 0
  %1245 = vmatpush1.bf16.msra.mxu0 0
  %1246 = vmatprep.subr.bf16.mxu0 0
  %1247 = vmatpush1.bf16.msra.mxu0 0
  %1248 = vmatprep.subr.bf16.mxu0 0
  %1249 = vmatpush1.bf16.msra.mxu0 0
  %1250 = vmatprep.subr.bf16.mxu0 0
  %1251 = vmatpush1.bf16.msra.mxu0 0
  %1252 = vmatprep.subr.bf16.mxu0 0
  %1253 = vmatpush1.bf16.msra.mxu0 0
  %1254 = vmatprep.subr.bf16.mxu0 0
  %1255 = vmatpush1.bf16.msra.mxu0 0
  %1256 = vmatprep.subr.bf16.mxu0 0
  %1257 = vmatpush1.bf16.msra.mxu0 0
  %1258 = vmatprep.subr.bf16.mxu0 0
  %1259 = vmatpush1.bf16.msra.mxu0 0
  %1260 = vmatprep.subr.bf16.mxu0 0
  %1261 = vmatpush1.bf16.msra.mxu0 0
  %1262 = vmatprep.subr.bf16.mxu0 0
  %1263 = vmatpush1.bf16.msra.mxu0 0
  %1264 = vmatprep.subr.bf16.mxu0 0
  %1265 = vmatpush1.bf16.msra.mxu0 0
  %1266 = vmatprep.subr.bf16.mxu0 0
  %1267 = vmatpush1.bf16.msra.mxu0 0
  %1268 = vmatprep.mubr.bf16.mxu0 0
  %1269 = vmatmul.mubr.bf16.gmra.mrb[0].mxu0 %v1148
  %v1270 = vpop.f32.mrb[0].mxu0
  %v1271 = vadd.f32 0.0, %v1270
  %v1272 = vpop.f32.mrb[0].mxu0
  %v1273 = vadd.f32 0.0, %v1272
  %v1274 = vpop.f32.mrb[0].mxu0
  %v1275 = vadd.f32 0.0, %v1274
  %v1276 = vpop.f32.mrb[0].mxu0
  %v1277 = vadd.f32 0.0, %v1276
  %1278 = vdwg.mxu0
  %1279 = vmatprep.subr.bf16.mxu0 %v1141
  %1280 = vmatpush1.bf16.msra.mxu0 %v1140
  %1281 = vmatprep.subr.bf16.mxu0 0
  %1282 = vmatpush1.bf16.msra.mxu0 0
  %1283 = vmatprep.subr.bf16.mxu0 0
  %1284 = vmatpush1.bf16.msra.mxu0 0
  %1285 = vmatprep.subr.bf16.mxu0 0
  %1286 = vmatpush1.bf16.msra.mxu0 0
  %1287 = vmatprep.subr.bf16.mxu0 0
  %1288 = vmatpush1.bf16.msra.mxu0 0
  %1289 = vmatprep.subr.bf16.mxu0 0
  %1290 = vmatpush1.bf16.msra.mxu0 0
  %1291 = vmatprep.subr.bf16.mxu0 0
  %1292 = vmatpush1.bf16.msra.mxu0 0
  %1293 = vmatprep.subr.bf16.mxu0 0
  %1294 = vmatpush1.bf16.msra.mxu0 0
  %1295 = vmatprep.subr.bf16.mxu0 0
  %1296 = vmatpush1.bf16.msra.mxu0 0
  %1297 = vmatprep.subr.bf16.mxu0 0
  %1298 = vmatpush1.bf16.msra.mxu0 0
  %1299 = vmatprep.subr.bf16.mxu0 0
  %1300 = vmatpush1.bf16.msra.mxu0 0
  %1301 = vmatprep.subr.bf16.mxu0 0
  %1302 = vmatpush1.bf16.msra.mxu0 0
  %1303 = vmatprep.subr.bf16.mxu0 0
  %1304 = vmatpush1.bf16.msra.mxu0 0
  %1305 = vmatprep.subr.bf16.mxu0 0
  %1306 = vmatpush1.bf16.msra.mxu0 0
  %1307 = vmatprep.subr.bf16.mxu0 0
  %1308 = vmatpush1.bf16.msra.mxu0 0
  %1309 = vmatprep.subr.bf16.mxu0 0
  %1310 = vmatpush1.bf16.msra.mxu0 0
  %1311 = vmatprep.mubr.bf16.mxu0 0
  %1312 = vmatmul.mubr.bf16.gmra.mrb[0].mxu0 %v1148
  %v1313 = vpop.f32.mrb[0].mxu0
  %v1314 = vadd.f32 0.0, %v1313
  %v1315 = vpop.f32.mrb[0].mxu0
  %v1316 = vadd.f32 0.0, %v1315
  %v1317 = vpop.f32.mrb[0].mxu0
  %v1318 = vadd.f32 0.0, %v1317
  %v1319 = vpop.f32.mrb[0].mxu0
  %v1320 = vadd.f32 0.0, %v1319
  %1321 = vdwg.mxu0
  %v1324 = vunpack.c.l.b16 %v1122
  %v1325 = vunpack.c.l.b16 %v1123
  %v1326 = vpack.c.b16 %v1325, %v1324
  %v1328 = vsel %vm259, %v1326, 0
  %1330 = vmatprep.subr.bf16.mxu0 %v1125
  %1331 = vmatpush1.bf16.msra.mxu0 %v1124
  %1332 = vmatprep.subr.bf16.mxu0 0
  %1333 = vmatpush1.bf16.msra.mxu0 0
  %1334 = vmatprep.subr.bf16.mxu0 0
  %1335 = vmatpush1.bf16.msra.mxu0 0
  %1336 = vmatprep.subr.bf16.mxu0 0
  %1337 = vmatpush1.bf16.msra.mxu0 0
  %1338 = vmatprep.subr.bf16.mxu0 0
  %1339 = vmatpush1.bf16.msra.mxu0 0
  %1340 = vmatprep.subr.bf16.mxu0 0
  %1341 = vmatpush1.bf16.msra.mxu0 0
  %1342 = vmatprep.subr.bf16.mxu0 0
  %1343 = vmatpush1.bf16.msra.mxu0 0
  %1344 = vmatprep.subr.bf16.mxu0 0
  %1345 = vmatpush1.bf16.msra.mxu0 0
  %1346 = vmatprep.subr.bf16.mxu0 0
  %1347 = vmatpush1.bf16.msra.mxu0 0
  %1348 = vmatprep.subr.bf16.mxu0 0
  %1349 = vmatpush1.bf16.msra.mxu0 0
  %1350 = vmatprep.subr.bf16.mxu0 0
  %1351 = vmatpush1.bf16.msra.mxu0 0
  %1352 = vmatprep.subr.bf16.mxu0 0
  %1353 = vmatpush1.bf16.msra.mxu0 0
  %1354 = vmatprep.subr.bf16.mxu0 0
  %1355 = vmatpush1.bf16.msra.mxu0 0
  %1356 = vmatprep.subr.bf16.mxu0 0
  %1357 = vmatpush1.bf16.msra.mxu0 0
  %1358 = vmatprep.subr.bf16.mxu0 0
  %1359 = vmatpush1.bf16.msra.mxu0 0
  %1360 = vmatprep.subr.bf16.mxu0 0
  %1361 = vmatpush1.bf16.msra.mxu0 0
  %1362 = vmatprep.mubr.bf16.mxu0 0
  %1363 = vmatmul.mubr.bf16.gmra.mrb[0].mxu0 %v1328
  %v1364 = vpop.f32.mrb[0].mxu0
  %v1365 = vadd.f32 %v1185, %v1364
  %v1366 = vpop.f32.mrb[0].mxu0
  %v1367 = vadd.f32 %v1187, %v1366
  %v1368 = vpop.f32.mrb[0].mxu0
  %v1369 = vadd.f32 %v1189, %v1368
  %v1370 = vpop.f32.mrb[0].mxu0
  %v1371 = vadd.f32 %v1191, %v1370
  %1372 = vdwg.mxu0
  %1373 = vmatprep.subr.bf16.mxu0 %v1127
  %1374 = vmatpush1.bf16.msra.mxu0 %v1126
  %1375 = vmatprep.subr.bf16.mxu0 0
  %1376 = vmatpush1.bf16.msra.mxu0 0
  %1377 = vmatprep.subr.bf16.mxu0 0
  %1378 = vmatpush1.bf16.msra.mxu0 0
  %1379 = vmatprep.subr.bf16.mxu0 0
  %1380 = vmatpush1.bf16.msra.mxu0 0
  %1381 = vmatprep.subr.bf16.mxu0 0
  %1382 = vmatpush1.bf16.msra.mxu0 0
  %1383 = vmatprep.subr.bf16.mxu0 0
  %1384 = vmatpush1.bf16.msra.mxu0 0
  %1385 = vmatprep.subr.bf16.mxu0 0
  %1386 = vmatpush1.bf16.msra.mxu0 0
  %1387 = vmatprep.subr.bf16.mxu0 0
  %1388 = vmatpush1.bf16.msra.mxu0 0
  %1389 = vmatprep.subr.bf16.mxu0 0
  %1390 = vmatpush1.bf16.msra.mxu0 0
  %1391 = vmatprep.subr.bf16.mxu0 0
  %1392 = vmatpush1.bf16.msra.mxu0 0
  %1393 = vmatprep.subr.bf16.mxu0 0
  %1394 = vmatpush1.bf16.msra.mxu0 0
  %1395 = vmatprep.subr.bf16.mxu0 0
  %1396 = vmatpush1.bf16.msra.mxu0 0
  %1397 = vmatprep.subr.bf16.mxu0 0
  %1398 = vmatpush1.bf16.msra.mxu0 0
  %1399 = vmatprep.subr.bf16.mxu0 0
  %1400 = vmatpush1.bf16.msra.mxu0 0
  %1401 = vmatprep.subr.bf16.mxu0 0
  %1402 = vmatpush1.bf16.msra.mxu0 0
  %1403 = vmatprep.subr.bf16.mxu0 0
  %1404 = vmatpush1.bf16.msra.mxu0 0
  %1405 = vmatprep.mubr.bf16.mxu0 0
  %1406 = vmatmul.mubr.bf16.gmra.mrb[0].mxu0 %v1328
  %v1407 = vpop.f32.mrb[0].mxu0
  %v1408 = vadd.f32 %v1228, %v1407
  %v1409 = vpop.f32.mrb[0].mxu0
  %v1410 = vadd.f32 %v1230, %v1409
  %v1411 = vpop.f32.mrb[0].mxu0
  %v1412 = vadd.f32 %v1232, %v1411
  %v1413 = vpop.f32.mrb[0].mxu0
  %v1414 = vadd.f32 %v1234, %v1413
  %1415 = vdwg.mxu0
  %1416 = vmatprep.subr.bf16.mxu0 %v1129
  %1417 = vmatpush1.bf16.msra.mxu0 %v1128
  %1418 = vmatprep.subr.bf16.mxu0 0
  %1419 = vmatpush1.bf16.msra.mxu0 0
  %1420 = vmatprep.subr.bf16.mxu0 0
  %1421 = vmatpush1.bf16.msra.mxu0 0
  %1422 = vmatprep.subr.bf16.mxu0 0
  %1423 = vmatpush1.bf16.msra.mxu0 0
  %1424 = vmatprep.subr.bf16.mxu0 0
  %1425 = vmatpush1.bf16.msra.mxu0 0
  %1426 = vmatprep.subr.bf16.mxu0 0
  %1427 = vmatpush1.bf16.msra.mxu0 0
  %1428 = vmatprep.subr.bf16.mxu0 0
  %1429 = vmatpush1.bf16.msra.mxu0 0
  %1430 = vmatprep.subr.bf16.mxu0 0
  %1431 = vmatpush1.bf16.msra.mxu0 0
  %1432 = vmatprep.subr.bf16.mxu0 0
  %1433 = vmatpush1.bf16.msra.mxu0 0
  %1434 = vmatprep.subr.bf16.mxu0 0
  %1435 = vmatpush1.bf16.msra.mxu0 0
  %1436 = vmatprep.subr.bf16.mxu0 0
  %1437 = vmatpush1.bf16.msra.mxu0 0
  %1438 = vmatprep.subr.bf16.mxu0 0
  %1439 = vmatpush1.bf16.msra.mxu0 0
  %1440 = vmatprep.subr.bf16.mxu0 0
  %1441 = vmatpush1.bf16.msra.mxu0 0
  %1442 = vmatprep.subr.bf16.mxu0 0
  %1443 = vmatpush1.bf16.msra.mxu0 0
  %1444 = vmatprep.subr.bf16.mxu0 0
  %1445 = vmatpush1.bf16.msra.mxu0 0
  %1446 = vmatprep.subr.bf16.mxu0 0
  %1447 = vmatpush1.bf16.msra.mxu0 0
  %1448 = vmatprep.mubr.bf16.mxu0 0
  %1449 = vmatmul.mubr.bf16.gmra.mrb[0].mxu0 %v1328
  %v1450 = vpop.f32.mrb[0].mxu0
  %v1451 = vadd.f32 %v1271, %v1450
  %v1452 = vpop.f32.mrb[0].mxu0
  %v1453 = vadd.f32 %v1273, %v1452
  %v1454 = vpop.f32.mrb[0].mxu0
  %v1455 = vadd.f32 %v1275, %v1454
  %v1456 = vpop.f32.mrb[0].mxu0
  %v1457 = vadd.f32 %v1277, %v1456
  %1458 = vdwg.mxu0
  %1459 = vmatprep.subr.bf16.mxu0 %v1131
  %1460 = vmatpush1.bf16.msra.mxu0 %v1130
  %1461 = vmatprep.subr.bf16.mxu0 0
  %1462 = vmatpush1.bf16.msra.mxu0 0
  %1463 = vmatprep.subr.bf16.mxu0 0
  %1464 = vmatpush1.bf16.msra.mxu0 0
  %1465 = vmatprep.subr.bf16.mxu0 0
  %1466 = vmatpush1.bf16.msra.mxu0 0
  %1467 = vmatprep.subr.bf16.mxu0 0
  %1468 = vmatpush1.bf16.msra.mxu0 0
  %1469 = vmatprep.subr.bf16.mxu0 0
  %1470 = vmatpush1.bf16.msra.mxu0 0
  %1471 = vmatprep.subr.bf16.mxu0 0
  %1472 = vmatpush1.bf16.msra.mxu0 0
  %1473 = vmatprep.subr.bf16.mxu0 0
  %1474 = vmatpush1.bf16.msra.mxu0 0
  %1475 = vmatprep.subr.bf16.mxu0 0
  %1476 = vmatpush1.bf16.msra.mxu0 0
  %1477 = vmatprep.subr.bf16.mxu0 0
  %1478 = vmatpush1.bf16.msra.mxu0 0
  %1479 = vmatprep.subr.bf16.mxu0 0
  %1480 = vmatpush1.bf16.msra.mxu0 0
  %1481 = vmatprep.subr.bf16.mxu0 0
  %1482 = vmatpush1.bf16.msra.mxu0 0
  %1483 = vmatprep.subr.bf16.mxu0 0
  %1484 = vmatpush1.bf16.msra.mxu0 0
  %1485 = vmatprep.subr.bf16.mxu0 0
  %1486 = vmatpush1.bf16.msra.mxu0 0
  %1487 = vmatprep.subr.bf16.mxu0 0
  %1488 = vmatpush1.bf16.msra.mxu0 0
  %1489 = vmatprep.subr.bf16.mxu0 0
  %1490 = vmatpush1.bf16.msra.mxu0 0
  %1491 = vmatprep.mubr.bf16.mxu0 0
  %1492 = vmatmul.mubr.bf16.gmra.mrb[0].mxu0 %v1328
  %v1493 = vpop.f32.mrb[0].mxu0
  %v1494 = vadd.f32 %v1314, %v1493
  %v1495 = vpop.f32.mrb[0].mxu0
  %v1496 = vadd.f32 %v1316, %v1495
  %v1497 = vpop.f32.mrb[0].mxu0
  %v1498 = vadd.f32 %v1318, %v1497
  %v1499 = vpop.f32.mrb[0].mxu0
  %v1500 = vadd.f32 %v1320, %v1499
  %1501 = vdwg.mxu0
  %1502 = vst [vmem:[%s14] sm:$0xff] %v1365
  %1503 = vst [vmem:[%s14 + $0x8] sm:$0xff] %v1367
  %1504 = vst [vmem:[%s14 + $0x10] sm:$0xff] %v1408
  %1505 = vst [vmem:[%s14 + $0x18] sm:$0xff] %v1410
  %1506 = vst [vmem:[%s14 + $0x20] sm:$0xff] %v1451
  %1507 = vst [vmem:[%s14 + $0x28] sm:$0xff] %v1453
  %1508 = vst [vmem:[%s14 + $0x30] sm:$0xff] %v1494
  %1509 = vst [vmem:[%s14 + $0x38] sm:$0xff] %v1496
  %1510 = vst [vmem:[%s14 + $0x40] sm:$0xff] %v1369
  %1511 = vst [vmem:[%s14 + $0x48] sm:$0xff] %v1371
  %1512 = vst [vmem:[%s14 + $0x50] sm:$0xff] %v1412
  %1513 = vst [vmem:[%s14 + $0x58] sm:$0xff] %v1414
  %1514 = vst [vmem:[%s14 + $0x60] sm:$0xff] %v1455
  %1515 = vst [vmem:[%s14 + $0x68] sm:$0xff] %v1457
  %1516 = vst [vmem:[%s14 + $0x70] sm:$0xff] %v1498
  %1517 = vst [vmem:[%s14 + $0x78] sm:$0xff] %v1500
  // Predicated region
  $region54: #{net_forward.8} parent=0 // pred_check
    _
  $region55: #{net_forward.8} parent=0 // pred_check_branch
    %1519 = sbr.rel (0) target = $region57
  $region56: #{net_forward.8} parent=0 // pred_region
    _
  $region57: #{net_forward.8} parent=0 // pred_fallthru
    _
  // Predicated region
  $region58: #{net_forward.8} parent=0 // pred_check
    _
  $region59: #{net_forward.8} parent=0 // pred_check_branch
    %1521 = sbr.rel (0) target = $region61
  $region60: #{net_forward.8} parent=0 // pred_region
    _
  $region61: #{net_forward.8} parent=0 // pred_fallthru
    _
  // Predicated region
  $region62: #{net_forward.8} parent=0 // pred_check
    _
  $region63: #{net_forward.8} parent=0 // pred_check_branch
    %1523 = sbr.rel (0) target = $region65
  $region64: #{net_forward.8} parent=0 // pred_region
    _
  $region65: #{net_forward.8} parent=0 // pred_fallthru
    _
  // Predicated region
  $region66: #{net_forward.8} parent=0 // pred_check
    _
  $region67: #{net_forward.8} parent=0 // pred_check_branch
    %1525 = sbr.rel (0) target = $region69
  $region68: #{net_forward.8} parent=0 // pred_region
    _
  $region69: #{net_forward.8} parent=0 // pred_fallthru
    _

// kernel: net_forward.9
$region0: #{net_forward.9}
  #allocation0 [shape = 'u32[]', space=smem, size = 0x4, offset = 0x4, fixed_abs, tag = 'smem constant byte address 0x4 - core index']
  #allocation1 [shape = 'u32[144,128]{1,0:T(1,128)}', space=vmem, size = 0x12000, scoped, tag = 'internal scratch']
  %s0 = inlined_call_operand.vmem [shape: bf16[16,432], index: 0, kind: input, shape index: {}]
  %s1 = inlined_call_operand.vmem [shape: bf16[432,1024], index: 1, kind: input, shape index: {}]
  %s2 = inlined_call_operand.vmem [shape: f32[2,16,1], index: 2, kind: input, shape index: {}]
  %s3 = inlined_call_operand.vmem [shape: bf16[16,1024], index: 3, kind: output, shape index: {}]
  %s4 = sld [smem:[#allocation0]]
  $region22: #{net_forward.9} parent=0
    _
  %s6 = ssub.s32 1, %s4
  %s7 = scalar_select 0, %s6, %s4
  // Predicated region
  $region2: #{net_forward.9} parent=0 // pred_check
    _
  $region3: #{net_forward.9} parent=0 // pred_check_branch
    %9 = sbr.rel (0) target = $region5
  $region4: #{net_forward.9} parent=0 // pred_region
    _
  $region5: #{net_forward.9} parent=0 // pred_fallthru
    _
  // Predicated region
  $region6: #{net_forward.9} parent=0 // pred_check
    _
  $region7: #{net_forward.9} parent=0 // pred_check_branch
    %11 = sbr.rel (0) target = $region9
  $region8: #{net_forward.9} parent=0 // pred_region
    _
  $region9: #{net_forward.9} parent=0 // pred_fallthru
    _
  // Predicated region
  $region10: #{net_forward.9} parent=0 // pred_check
    _
  $region11: #{net_forward.9} parent=0 // pred_check_branch
    %13 = sbr.rel (0) target = $region13
  $region12: #{net_forward.9} parent=0 // pred_region
    _
  $region13: #{net_forward.9} parent=0 // pred_fallthru
    _
  %v15 = vld [vmem:[%s0] sm:$0xff]
  %v16 = vld [vmem:[%s0 + $0x8] sm:$0xff]
  %v17 = vld [vmem:[%s0 + $0x10] sm:$0xff]
  %v18 = vld [vmem:[%s0 + $0x18] sm:$0xff]
  %v19 = vld [vmem:[%s1] sm:$0xff]
  %v20 = vld [vmem:[%s1 + $0x8] sm:$0xff]
  %v21 = vld [vmem:[%s1 + $0x10] sm:$0xff]
  %v22 = vld [vmem:[%s1 + $0x18] sm:$0xff]
  %v23 = vld [vmem:[%s1 + $0x20] sm:$0xff]
  %v24 = vld [vmem:[%s1 + $0x28] sm:$0xff]
  %v25 = vld [vmem:[%s1 + $0x30] sm:$0xff]
  %v26 = vld [vmem:[%s1 + $0x38] sm:$0xff]
  %v27 = vld [vmem:[%s1 + $0x40] sm:$0xff]
  %v28 = vld [vmem:[%s1 + $0x48] sm:$0xff]
  %v29 = vld [vmem:[%s1 + $0x50] sm:$0xff]
  %v30 = vld [vmem:[%s1 + $0x58] sm:$0xff]
  %v31 = vld [vmem:[%s1 + $0x60] sm:$0xff]
  %v32 = vld [vmem:[%s1 + $0x68] sm:$0xff]
  %v33 = vld [vmem:[%s1 + $0x70] sm:$0xff]
  %v34 = vld [vmem:[%s1 + $0x78] sm:$0xff]
  %v35 = vld [vmem:[%s1 + $0x80] sm:$0xff]
  %v36 = vld [vmem:[%s1 + $0x88] sm:$0xff]
  %v37 = vld [vmem:[%s1 + $0x90] sm:$0xff]
  %v38 = vld [vmem:[%s1 + $0x98] sm:$0xff]
  %v39 = vld [vmem:[%s1 + $0xa0] sm:$0xff]
  %v40 = vld [vmem:[%s1 + $0xa8] sm:$0xff]
  %v41 = vld [vmem:[%s1 + $0xb0] sm:$0xff]
  %v42 = vld [vmem:[%s1 + $0xb8] sm:$0xff]
  %v43 = vld [vmem:[%s1 + $0xc0] sm:$0xff]
  %v44 = vld [vmem:[%s1 + $0xc8] sm:$0xff]
  %v45 = vld [vmem:[%s1 + $0xd0] sm:$0xff]
  %v46 = vld [vmem:[%s1 + $0xd8] sm:$0xff]
  %v47 = vld [vmem:[%s1 + $0xe0] sm:$0xff]
  %v48 = vld [vmem:[%s1 + $0xe8] sm:$0xff]
  %v49 = vld [vmem:[%s1 + $0xf0] sm:$0xff]
  %v50 = vld [vmem:[%s1 + $0xf8] sm:$0xff]
  %v51 = vld [vmem:[%s1 + $0x100] sm:$0xff]
  %v52 = vld [vmem:[%s1 + $0x108] sm:$0xff]
  %v53 = vld [vmem:[%s1 + $0x110] sm:$0xff]
  %v54 = vld [vmem:[%s1 + $0x118] sm:$0xff]
  %v55 = vld [vmem:[%s1 + $0x120] sm:$0xff]
  %v56 = vld [vmem:[%s1 + $0x128] sm:$0xff]
  %v57 = vld [vmem:[%s1 + $0x130] sm:$0xff]
  %v58 = vld [vmem:[%s1 + $0x138] sm:$0xff]
  %v59 = vld [vmem:[%s1 + $0x140] sm:$0xff]
  %v60 = vld [vmem:[%s1 + $0x148] sm:$0xff]
  %v61 = vld [vmem:[%s1 + $0x150] sm:$0xff]
  %v62 = vld [vmem:[%s1 + $0x158] sm:$0xff]
  %v63 = vld [vmem:[%s1 + $0x160] sm:$0xff]
  %v64 = vld [vmem:[%s1 + $0x168] sm:$0xff]
  %v65 = vld [vmem:[%s1 + $0x170] sm:$0xff]
  %v66 = vld [vmem:[%s1 + $0x178] sm:$0xff]
  %v67 = vld [vmem:[%s1 + $0x180] sm:$0xff]
  %v68 = vld [vmem:[%s1 + $0x188] sm:$0xff]
  %v69 = vld [vmem:[%s1 + $0x190] sm:$0xff]
  %v70 = vld [vmem:[%s1 + $0x198] sm:$0xff]
  %v71 = vld [vmem:[%s1 + $0x1a0] sm:$0xff]
  %v72 = vld [vmem:[%s1 + $0x1a8] sm:$0xff]
  %v73 = vld [vmem:[%s1 + $0x1b0] sm:$0xff]
  %v74 = vld [vmem:[%s1 + $0x1b8] sm:$0xff]
  %v75 = vld [vmem:[%s1 + $0x1c0] sm:$0xff]
  %v76 = vld [vmem:[%s1 + $0x1c8] sm:$0xff]
  %v77 = vld [vmem:[%s1 + $0x1d0] sm:$0xff]
  %v78 = vld [vmem:[%s1 + $0x1d8] sm:$0xff]
  %v79 = vld [vmem:[%s1 + $0x1e0] sm:$0xff]
  %v80 = vld [vmem:[%s1 + $0x1e8] sm:$0xff]
  %v81 = vld [vmem:[%s1 + $0x1f0] sm:$0xff]
  %v82 = vld [vmem:[%s1 + $0x1f8] sm:$0xff]
  %v83 = vld [vmem:[%s1 + $0x200] sm:$0xff]
  %v84 = vld [vmem:[%s1 + $0x208] sm:$0xff]
  %v85 = vld [vmem:[%s1 + $0x210] sm:$0xff]
  %v86 = vld [vmem:[%s1 + $0x218] sm:$0xff]
  %v87 = vld [vmem:[%s1 + $0x220] sm:$0xff]
  %v88 = vld [vmem:[%s1 + $0x228] sm:$0xff]
  %v89 = vld [vmem:[%s1 + $0x230] sm:$0xff]
  %v90 = vld [vmem:[%s1 + $0x238] sm:$0xff]
  %v91 = vld [vmem:[%s1 + $0x240] sm:$0xff]
  %v92 = vld [vmem:[%s1 + $0x248] sm:$0xff]
  %v93 = vld [vmem:[%s1 + $0x250] sm:$0xff]
  %v94 = vld [vmem:[%s1 + $0x258] sm:$0xff]
  %v95 = vld [vmem:[%s1 + $0x260] sm:$0xff]
  %v96 = vld [vmem:[%s1 + $0x268] sm:$0xff]
  %v97 = vld [vmem:[%s1 + $0x270] sm:$0xff]
  %v98 = vld [vmem:[%s1 + $0x278] sm:$0xff]
  %v99 = vld [vmem:[%s1 + $0x280] sm:$0xff]
  %v100 = vld [vmem:[%s1 + $0x288] sm:$0xff]
  %v101 = vld [vmem:[%s1 + $0x290] sm:$0xff]
  %v102 = vld [vmem:[%s1 + $0x298] sm:$0xff]
  %v103 = vld [vmem:[%s1 + $0x2a0] sm:$0xff]
  %v104 = vld [vmem:[%s1 + $0x2a8] sm:$0xff]
  %v105 = vld [vmem:[%s1 + $0x2b0] sm:$0xff]
  %v106 = vld [vmem:[%s1 + $0x2b8] sm:$0xff]
  %v107 = vld [vmem:[%s1 + $0x2c0] sm:$0xff]
  %v108 = vld [vmem:[%s1 + $0x2c8] sm:$0xff]
  %v109 = vld [vmem:[%s1 + $0x2d0] sm:$0xff]
  %v110 = vld [vmem:[%s1 + $0x2d8] sm:$0xff]
  %v111 = vld [vmem:[%s1 + $0x2e0] sm:$0xff]
  %v112 = vld [vmem:[%s1 + $0x2e8] sm:$0xff]
  %v113 = vld [vmem:[%s1 + $0x2f0] sm:$0xff]
  %v114 = vld [vmem:[%s1 + $0x2f8] sm:$0xff]
  %v115 = vld [vmem:[%s1 + $0x300] sm:$0xff]
  %v116 = vld [vmem:[%s1 + $0x308] sm:$0xff]
  %v117 = vld [vmem:[%s1 + $0x310] sm:$0xff]
  %v118 = vld [vmem:[%s1 + $0x318] sm:$0xff]
  %v119 = vld [vmem:[%s1 + $0x320] sm:$0xff]
  %v120 = vld [vmem:[%s1 + $0x328] sm:$0xff]
  %v121 = vld [vmem:[%s1 + $0x330] sm:$0xff]
  %v122 = vld [vmem:[%s1 + $0x338] sm:$0xff]
  %v123 = vld [vmem:[%s1 + $0x340] sm:$0xff]
  %v124 = vld [vmem:[%s1 + $0x348] sm:$0xff]
  %v125 = vld [vmem:[%s1 + $0x350] sm:$0xff]
  %v126 = vld [vmem:[%s1 + $0x358] sm:$0xff]
  %v127 = vld [vmem:[%s1 + $0x360] sm:$0xff]
  %v128 = vld [vmem:[%s1 + $0x368] sm:$0xff]
  %v129 = vld [vmem:[%s1 + $0x370] sm:$0xff]
  %v130 = vld [vmem:[%s1 + $0x378] sm:$0xff]
  %v131 = vld [vmem:[%s1 + $0x380] sm:$0xff]
  %v132 = vld [vmem:[%s1 + $0x388] sm:$0xff]
  %v133 = vld [vmem:[%s1 + $0x390] sm:$0xff]
  %v134 = vld [vmem:[%s1 + $0x398] sm:$0xff]
  %v135 = vld [vmem:[%s1 + $0x3a0] sm:$0xff]
  %v136 = vld [vmem:[%s1 + $0x3a8] sm:$0xff]
  %v137 = vld [vmem:[%s1 + $0x3b0] sm:$0xff]
  %v138 = vld [vmem:[%s1 + $0x3b8] sm:$0xff]
  %v139 = vld [vmem:[%s1 + $0x3c0] sm:$0xff]
  %v140 = vld [vmem:[%s1 + $0x3c8] sm:$0xff]
  %v141 = vld [vmem:[%s1 + $0x3d0] sm:$0xff]
  %v142 = vld [vmem:[%s1 + $0x3d8] sm:$0xff]
  %v143 = vld [vmem:[%s1 + $0x3e0] sm:$0xff]
  %v144 = vld [vmem:[%s1 + $0x3e8] sm:$0xff]
  %v145 = vld [vmem:[%s1 + $0x3f0] sm:$0xff]
  %v146 = vld [vmem:[%s1 + $0x3f8] sm:$0xff]
  %v147 = vld [vmem:[%s1 + $0x400] sm:$0xff]
  %v148 = vld [vmem:[%s1 + $0x408] sm:$0xff]
  %v149 = vld [vmem:[%s1 + $0x410] sm:$0xff]
  %v150 = vld [vmem:[%s1 + $0x418] sm:$0xff]
  %v151 = vld [vmem:[%s1 + $0x420] sm:$0xff]
  %v152 = vld [vmem:[%s1 + $0x428] sm:$0xff]
  %v153 = vld [vmem:[%s1 + $0x430] sm:$0xff]
  %v154 = vld [vmem:[%s1 + $0x438] sm:$0xff]
  %v155 = vld [vmem:[%s1 + $0x440] sm:$0xff]
  %v156 = vld [vmem:[%s1 + $0x448] sm:$0xff]
  %v157 = vld [vmem:[%s1 + $0x450] sm:$0xff]
  %v158 = vld [vmem:[%s1 + $0x458] sm:$0xff]
  %v159 = vld [vmem:[%s1 + $0x460] sm:$0xff]
  %v160 = vld [vmem:[%s1 + $0x468] sm:$0xff]
  %v161 = vld [vmem:[%s1 + $0x470] sm:$0xff]
  %v162 = vld [vmem:[%s1 + $0x478] sm:$0xff]
  %v163 = vld [vmem:[%s1 + $0x480] sm:$0xff]
  %v164 = vld [vmem:[%s1 + $0x488] sm:$0xff]
  %v165 = vld [vmem:[%s1 + $0x490] sm:$0xff]
  %v166 = vld [vmem:[%s1 + $0x498] sm:$0xff]
  %v167 = vld [vmem:[%s1 + $0x4a0] sm:$0xff]
  %v168 = vld [vmem:[%s1 + $0x4a8] sm:$0xff]
  %v169 = vld [vmem:[%s1 + $0x4b0] sm:$0xff]
  %v170 = vld [vmem:[%s1 + $0x4b8] sm:$0xff]
  %v171 = vld [vmem:[%s1 + $0x4c0] sm:$0xff]
  %v172 = vld [vmem:[%s1 + $0x4c8] sm:$0xff]
  %v173 = vld [vmem:[%s1 + $0x4d0] sm:$0xff]
  %v174 = vld [vmem:[%s1 + $0x4d8] sm:$0xff]
  %v175 = vld [vmem:[%s1 + $0x4e0] sm:$0xff]
  %v176 = vld [vmem:[%s1 + $0x4e8] sm:$0xff]
  %v177 = vld [vmem:[%s1 + $0x4f0] sm:$0xff]
  %v178 = vld [vmem:[%s1 + $0x4f8] sm:$0xff]
  %v179 = vld [vmem:[%s1 + $0x500] sm:$0xff]
  %v180 = vld [vmem:[%s1 + $0x508] sm:$0xff]
  %v181 = vld [vmem:[%s1 + $0x510] sm:$0xff]
  %v182 = vld [vmem:[%s1 + $0x518] sm:$0xff]
  %v183 = vld [vmem:[%s1 + $0x520] sm:$0xff]
  %v184 = vld [vmem:[%s1 + $0x528] sm:$0xff]
  %v185 = vld [vmem:[%s1 + $0x530] sm:$0xff]
  %v186 = vld [vmem:[%s1 + $0x538] sm:$0xff]
  %v187 = vld [vmem:[%s1 + $0x540] sm:$0xff]
  %v188 = vld [vmem:[%s1 + $0x548] sm:$0xff]
  %v189 = vld [vmem:[%s1 + $0x550] sm:$0xff]
  %v190 = vld [vmem:[%s1 + $0x558] sm:$0xff]
  %v191 = vld [vmem:[%s1 + $0x560] sm:$0xff]
  %v192 = vld [vmem:[%s1 + $0x568] sm:$0xff]
  %v193 = vld [vmem:[%s1 + $0x570] sm:$0xff]
  %v194 = vld [vmem:[%s1 + $0x578] sm:$0xff]
  %v195 = vld [vmem:[%s1 + $0x580] sm:$0xff]
  %v196 = vld [vmem:[%s1 + $0x588] sm:$0xff]
  %v197 = vld [vmem:[%s1 + $0x590] sm:$0xff]
  %v198 = vld [vmem:[%s1 + $0x598] sm:$0xff]
  %v199 = vld [vmem:[%s1 + $0x5a0] sm:$0xff]
  %v200 = vld [vmem:[%s1 + $0x5a8] sm:$0xff]
  %v201 = vld [vmem:[%s1 + $0x5b0] sm:$0xff]
  %v202 = vld [vmem:[%s1 + $0x5b8] sm:$0xff]
  %v203 = vld [vmem:[%s1 + $0x5c0] sm:$0xff]
  %v204 = vld [vmem:[%s1 + $0x5c8] sm:$0xff]
  %v205 = vld [vmem:[%s1 + $0x5d0] sm:$0xff]
  %v206 = vld [vmem:[%s1 + $0x5d8] sm:$0xff]
  %v207 = vld [vmem:[%s1 + $0x5e0] sm:$0xff]
  %v208 = vld [vmem:[%s1 + $0x5e8] sm:$0xff]
  %v209 = vld [vmem:[%s1 + $0x5f0] sm:$0xff]
  %v210 = vld [vmem:[%s1 + $0x5f8] sm:$0xff]
  %v211 = vld [vmem:[%s1 + $0x600] sm:$0xff]
  %v212 = vld [vmem:[%s1 + $0x608] sm:$0xff]
  %v213 = vld [vmem:[%s1 + $0x610] sm:$0xff]
  %v214 = vld [vmem:[%s1 + $0x618] sm:$0xff]
  %v215 = vld [vmem:[%s1 + $0x620] sm:$0xff]
  %v216 = vld [vmem:[%s1 + $0x628] sm:$0xff]
  %v217 = vld [vmem:[%s1 + $0x630] sm:$0xff]
  %v218 = vld [vmem:[%s1 + $0x638] sm:$0xff]
  %v219 = vld [vmem:[%s1 + $0x640] sm:$0xff]
  %v220 = vld [vmem:[%s1 + $0x648] sm:$0xff]
  %v221 = vld [vmem:[%s1 + $0x650] sm:$0xff]
  %v222 = vld [vmem:[%s1 + $0x658] sm:$0xff]
  %v223 = vld [vmem:[%s1 + $0x660] sm:$0xff]
  %v224 = vld [vmem:[%s1 + $0x668] sm:$0xff]
  %v225 = vld [vmem:[%s1 + $0x670] sm:$0xff]
  %v226 = vld [vmem:[%s1 + $0x678] sm:$0xff]
  %v227 = vld [vmem:[%s1 + $0x680] sm:$0xff]
  %v228 = vld [vmem:[%s1 + $0x688] sm:$0xff]
  %v229 = vld [vmem:[%s1 + $0x690] sm:$0xff]
  %v230 = vld [vmem:[%s1 + $0x698] sm:$0xff]
  %v231 = vld [vmem:[%s1 + $0x6a0] sm:$0xff]
  %v232 = vld [vmem:[%s1 + $0x6a8] sm:$0xff]
  %v233 = vld [vmem:[%s1 + $0x6b0] sm:$0xff]
  %v234 = vld [vmem:[%s1 + $0x6b8] sm:$0xff]
  %v239 = vunpack.c.l.b16 %v15
  %v240 = vunpack.c.h.b16 %v15
  %v241 = vunpack.c.l.b16 %v16
  %v242 = vunpack.c.h.b16 %v16
  %v243 = vunpack.c.l.b16 %v17
  %v244 = vunpack.c.h.b16 %v17
  %v245 = vunpack.c.l.b16 %v18
  %v246 = vunpack.c.h.b16 %v18
  %v247 = vpack.c.b16 %v243, %v239
  %v248 = vpack.c.b16 %v244, %v240
  %v249 = vpack.c.b16 %v245, %v241
  %v250 = vpack.c.b16 %v246, %v242
  %v470 = vunpack.c.l.b16 %v19
  %v471 = vunpack.c.h.b16 %v19
  %v472 = vunpack.c.l.b16 %v20
  %v473 = vunpack.c.h.b16 %v20
  %v474 = vunpack.c.l.b16 %v21
  %v475 = vunpack.c.h.b16 %v21
  %v476 = vunpack.c.l.b16 %v22
  %v477 = vunpack.c.h.b16 %v22
  %v478 = vunpack.c.l.b16 %v23
  %v479 = vunpack.c.h.b16 %v23
  %v480 = vunpack.c.l.b16 %v24
  %v481 = vunpack.c.h.b16 %v24
  %v482 = vunpack.c.l.b16 %v25
  %v483 = vunpack.c.h.b16 %v25
  %v484 = vunpack.c.l.b16 %v26
  %v485 = vunpack.c.h.b16 %v26
  %v486 = vunpack.c.l.b16 %v27
  %v487 = vunpack.c.h.b16 %v27
  %v488 = vunpack.c.l.b16 %v28
  %v489 = vunpack.c.h.b16 %v28
  %v490 = vunpack.c.l.b16 %v29
  %v491 = vunpack.c.h.b16 %v29
  %v492 = vunpack.c.l.b16 %v30
  %v493 = vunpack.c.h.b16 %v30
  %v494 = vunpack.c.l.b16 %v31
  %v495 = vunpack.c.h.b16 %v31
  %v496 = vunpack.c.l.b16 %v32
  %v497 = vunpack.c.h.b16 %v32
  %v498 = vunpack.c.l.b16 %v33
  %v499 = vunpack.c.h.b16 %v33
  %v500 = vunpack.c.l.b16 %v34
  %v501 = vunpack.c.h.b16 %v34
  %v502 = vunpack.c.l.b16 %v35
  %v503 = vunpack.c.h.b16 %v35
  %v504 = vunpack.c.l.b16 %v36
  %v505 = vunpack.c.h.b16 %v36
  %v506 = vunpack.c.l.b16 %v37
  %v507 = vunpack.c.h.b16 %v37
  %v508 = vunpack.c.l.b16 %v38
  %v509 = vunpack.c.h.b16 %v38
  %v510 = vunpack.c.l.b16 %v39
  %v511 = vunpack.c.h.b16 %v39
  %v512 = vunpack.c.l.b16 %v40
  %v513 = vunpack.c.h.b16 %v40
  %v514 = vunpack.c.l.b16 %v41
  %v515 = vunpack.c.h.b16 %v41
  %v516 = vunpack.c.l.b16 %v42
  %v517 = vunpack.c.h.b16 %v42
  %v518 = vunpack.c.l.b16 %v43
  %v519 = vunpack.c.h.b16 %v43
  %v520 = vunpack.c.l.b16 %v44
  %v521 = vunpack.c.h.b16 %v44
  %v522 = vunpack.c.l.b16 %v45
  %v523 = vunpack.c.h.b16 %v45
  %v524 = vunpack.c.l.b16 %v46
  %v525 = vunpack.c.h.b16 %v46
  %v526 = vunpack.c.l.b16 %v47
  %v527 = vunpack.c.h.b16 %v47
  %v528 = vunpack.c.l.b16 %v48
  %v529 = vunpack.c.h.b16 %v48
  %v530 = vunpack.c.l.b16 %v49
  %v531 = vunpack.c.h.b16 %v49
  %v532 = vunpack.c.l.b16 %v50
  %v533 = vunpack.c.h.b16 %v50
  %v534 = vunpack.c.l.b16 %v51
  %v535 = vunpack.c.h.b16 %v51
  %v536 = vunpack.c.l.b16 %v52
  %v537 = vunpack.c.h.b16 %v52
  %v538 = vunpack.c.l.b16 %v53
  %v539 = vunpack.c.h.b16 %v53
  %v540 = vunpack.c.l.b16 %v54
  %v541 = vunpack.c.h.b16 %v54
  %v542 = vunpack.c.l.b16 %v55
  %v543 = vunpack.c.h.b16 %v55
  %v544 = vunpack.c.l.b16 %v56
  %v545 = vunpack.c.h.b16 %v56
  %v546 = vunpack.c.l.b16 %v57
  %v547 = vunpack.c.h.b16 %v57
  %v548 = vunpack.c.l.b16 %v58
  %v549 = vunpack.c.h.b16 %v58
  %v550 = vunpack.c.l.b16 %v59
  %v551 = vunpack.c.h.b16 %v59
  %v552 = vunpack.c.l.b16 %v60
  %v553 = vunpack.c.h.b16 %v60
  %v554 = vunpack.c.l.b16 %v61
  %v555 = vunpack.c.h.b16 %v61
  %v556 = vunpack.c.l.b16 %v62
  %v557 = vunpack.c.h.b16 %v62
  %v558 = vunpack.c.l.b16 %v63
  %v559 = vunpack.c.h.b16 %v63
  %v560 = vunpack.c.l.b16 %v64
  %v561 = vunpack.c.h.b16 %v64
  %v562 = vunpack.c.l.b16 %v65
  %v563 = vunpack.c.h.b16 %v65
  %v564 = vunpack.c.l.b16 %v66
  %v565 = vunpack.c.h.b16 %v66
  %v566 = vunpack.c.l.b16 %v67
  %v567 = vunpack.c.h.b16 %v67
  %v568 = vunpack.c.l.b16 %v68
  %v569 = vunpack.c.h.b16 %v68
  %v570 = vunpack.c.l.b16 %v69
  %v571 = vunpack.c.h.b16 %v69
  %v572 = vunpack.c.l.b16 %v70
  %v573 = vunpack.c.h.b16 %v70
  %v574 = vunpack.c.l.b16 %v71
  %v575 = vunpack.c.h.b16 %v71
  %v576 = vunpack.c.l.b16 %v72
  %v577 = vunpack.c.h.b16 %v72
  %v578 = vunpack.c.l.b16 %v73
  %v579 = vunpack.c.h.b16 %v73
  %v580 = vunpack.c.l.b16 %v74
  %v581 = vunpack.c.h.b16 %v74
  %v582 = vunpack.c.l.b16 %v75
  %v583 = vunpack.c.h.b16 %v75
  %v584 = vunpack.c.l.b16 %v76
  %v585 = vunpack.c.h.b16 %v76
  %v586 = vunpack.c.l.b16 %v77
  %v587 = vunpack.c.h.b16 %v77
  %v588 = vunpack.c.l.b16 %v78
  %v589 = vunpack.c.h.b16 %v78
  %v590 = vunpack.c.l.b16 %v79
  %v591 = vunpack.c.h.b16 %v79
  %v592 = vunpack.c.l.b16 %v80
  %v593 = vunpack.c.h.b16 %v80
  %v594 = vunpack.c.l.b16 %v81
  %v595 = vunpack.c.h.b16 %v81
  %v596 = vunpack.c.l.b16 %v82
  %v597 = vunpack.c.h.b16 %v82
  %v598 = vunpack.c.l.b16 %v83
  %v599 = vunpack.c.h.b16 %v83
  %v600 = vunpack.c.l.b16 %v84
  %v601 = vunpack.c.h.b16 %v84
  %v602 = vunpack.c.l.b16 %v85
  %v603 = vunpack.c.h.b16 %v85
  %v604 = vunpack.c.l.b16 %v86
  %v605 = vunpack.c.h.b16 %v86
  %v606 = vunpack.c.l.b16 %v87
  %v607 = vunpack.c.h.b16 %v87
  %v608 = vunpack.c.l.b16 %v88
  %v609 = vunpack.c.h.b16 %v88
  %v610 = vunpack.c.l.b16 %v89
  %v611 = vunpack.c.h.b16 %v89
  %v612 = vunpack.c.l.b16 %v90
  %v613 = vunpack.c.h.b16 %v90
  %v614 = vunpack.c.l.b16 %v91
  %v615 = vunpack.c.h.b16 %v91
  %v616 = vunpack.c.l.b16 %v92
  %v617 = vunpack.c.h.b16 %v92
  %v618 = vunpack.c.l.b16 %v93
  %v619 = vunpack.c.h.b16 %v93
  %v620 = vunpack.c.l.b16 %v94
  %v621 = vunpack.c.h.b16 %v94
  %v622 = vunpack.c.l.b16 %v95
  %v623 = vunpack.c.h.b16 %v95
  %v624 = vunpack.c.l.b16 %v96
  %v625 = vunpack.c.h.b16 %v96
  %v626 = vunpack.c.l.b16 %v97
  %v627 = vunpack.c.h.b16 %v97
  %v628 = vunpack.c.l.b16 %v98
  %v629 = vunpack.c.h.b16 %v98
  %v630 = vunpack.c.l.b16 %v99
  %v631 = vunpack.c.h.b16 %v99
  %v632 = vunpack.c.l.b16 %v100
  %v633 = vunpack.c.h.b16 %v100
  %v634 = vunpack.c.l.b16 %v101
  %v635 = vunpack.c.h.b16 %v101
  %v636 = vunpack.c.l.b16 %v102
  %v637 = vunpack.c.h.b16 %v102
  %v638 = vunpack.c.l.b16 %v103
  %v639 = vunpack.c.h.b16 %v103
  %v640 = vunpack.c.l.b16 %v104
  %v641 = vunpack.c.h.b16 %v104
  %v642 = vunpack.c.l.b16 %v105
  %v643 = vunpack.c.h.b16 %v105
  %v644 = vunpack.c.l.b16 %v106
  %v645 = vunpack.c.h.b16 %v106
  %v646 = vunpack.c.l.b16 %v107
  %v647 = vunpack.c.h.b16 %v107
  %v648 = vunpack.c.l.b16 %v108
  %v649 = vunpack.c.h.b16 %v108
  %v650 = vunpack.c.l.b16 %v109
  %v651 = vunpack.c.h.b16 %v109
  %v652 = vunpack.c.l.b16 %v110
  %v653 = vunpack.c.h.b16 %v110
  %v654 = vunpack.c.l.b16 %v111
  %v655 = vunpack.c.h.b16 %v111
  %v656 = vunpack.c.l.b16 %v112
  %v657 = vunpack.c.h.b16 %v112
  %v658 = vunpack.c.l.b16 %v113
  %v659 = vunpack.c.h.b16 %v113
  %v660 = vunpack.c.l.b16 %v114
  %v661 = vunpack.c.h.b16 %v114
  %v662 = vunpack.c.l.b16 %v115
  %v663 = vunpack.c.h.b16 %v115
  %v664 = vunpack.c.l.b16 %v116
  %v665 = vunpack.c.h.b16 %v116
  %v666 = vunpack.c.l.b16 %v117
  %v667 = vunpack.c.h.b16 %v117
  %v668 = vunpack.c.l.b16 %v118
  %v669 = vunpack.c.h.b16 %v118
  %v670 = vunpack.c.l.b16 %v119
  %v671 = vunpack.c.h.b16 %v119
  %v672 = vunpack.c.l.b16 %v120
  %v673 = vunpack.c.h.b16 %v120
  %v674 = vunpack.c.l.b16 %v121
  %v675 = vunpack.c.h.b16 %v121
  %v676 = vunpack.c.l.b16 %v122
  %v677 = vunpack.c.h.b16 %v122
  %v678 = vunpack.c.l.b16 %v123
  %v679 = vunpack.c.h.b16 %v123
  %v680 = vunpack.c.l.b16 %v124
  %v681 = vunpack.c.h.b16 %v124
  %v682 = vunpack.c.l.b16 %v125
  %v683 = vunpack.c.h.b16 %v125
  %v684 = vunpack.c.l.b16 %v126
  %v685 = vunpack.c.h.b16 %v126
  %v686 = vunpack.c.l.b16 %v127
  %v687 = vunpack.c.h.b16 %v127
  %v688 = vunpack.c.l.b16 %v128
  %v689 = vunpack.c.h.b16 %v128
  %v690 = vunpack.c.l.b16 %v129
  %v691 = vunpack.c.h.b16 %v129
  %v692 = vunpack.c.l.b16 %v130
  %v693 = vunpack.c.h.b16 %v130
  %v694 = vunpack.c.l.b16 %v131
  %v695 = vunpack.c.h.b16 %v131
  %v696 = vunpack.c.l.b16 %v132
  %v697 = vunpack.c.h.b16 %v132
  %v698 = vunpack.c.l.b16 %v133
  %v699 = vunpack.c.h.b16 %v133
  %v700 = vunpack.c.l.b16 %v134
  %v701 = vunpack.c.h.b16 %v134
  %v702 = vunpack.c.l.b16 %v135
  %v703 = vunpack.c.h.b16 %v135
  %v704 = vunpack.c.l.b16 %v136
  %v705 = vunpack.c.h.b16 %v136
  %v706 = vunpack.c.l.b16 %v137
  %v707 = vunpack.c.h.b16 %v137
  %v708 = vunpack.c.l.b16 %v138
  %v709 = vunpack.c.h.b16 %v138
  %v710 = vunpack.c.l.b16 %v139
  %v711 = vunpack.c.h.b16 %v139
  %v712 = vunpack.c.l.b16 %v140
  %v713 = vunpack.c.h.b16 %v140
  %v714 = vunpack.c.l.b16 %v141
  %v715 = vunpack.c.h.b16 %v141
  %v716 = vunpack.c.l.b16 %v142
  %v717 = vunpack.c.h.b16 %v142
  %v718 = vunpack.c.l.b16 %v143
  %v719 = vunpack.c.h.b16 %v143
  %v720 = vunpack.c.l.b16 %v144
  %v721 = vunpack.c.h.b16 %v144
  %v722 = vunpack.c.l.b16 %v145
  %v723 = vunpack.c.h.b16 %v145
  %v724 = vunpack.c.l.b16 %v146
  %v725 = vunpack.c.h.b16 %v146
  %v726 = vunpack.c.l.b16 %v147
  %v727 = vunpack.c.h.b16 %v147
  %v728 = vunpack.c.l.b16 %v148
  %v729 = vunpack.c.h.b16 %v148
  %v730 = vunpack.c.l.b16 %v149
  %v731 = vunpack.c.h.b16 %v149
  %v732 = vunpack.c.l.b16 %v150
  %v733 = vunpack.c.h.b16 %v150
  %v734 = vunpack.c.l.b16 %v151
  %v735 = vunpack.c.h.b16 %v151
  %v736 = vunpack.c.l.b16 %v152
  %v737 = vunpack.c.h.b16 %v152
  %v738 = vunpack.c.l.b16 %v153
  %v739 = vunpack.c.h.b16 %v153
  %v740 = vunpack.c.l.b16 %v154
  %v741 = vunpack.c.h.b16 %v154
  %v742 = vunpack.c.l.b16 %v155
  %v743 = vunpack.c.h.b16 %v155
  %v744 = vunpack.c.l.b16 %v156
  %v745 = vunpack.c.h.b16 %v156
  %v746 = vunpack.c.l.b16 %v157
  %v747 = vunpack.c.h.b16 %v157
  %v748 = vunpack.c.l.b16 %v158
  %v749 = vunpack.c.h.b16 %v158
  %v750 = vunpack.c.l.b16 %v159
  %v751 = vunpack.c.h.b16 %v159
  %v752 = vunpack.c.l.b16 %v160
  %v753 = vunpack.c.h.b16 %v160
  %v754 = vunpack.c.l.b16 %v161
  %v755 = vunpack.c.h.b16 %v161
  %v756 = vunpack.c.l.b16 %v162
  %v757 = vunpack.c.h.b16 %v162
  %v758 = vunpack.c.l.b16 %v163
  %v759 = vunpack.c.h.b16 %v163
  %v760 = vunpack.c.l.b16 %v164
  %v761 = vunpack.c.h.b16 %v164
  %v762 = vunpack.c.l.b16 %v165
  %v763 = vunpack.c.h.b16 %v165
  %v764 = vunpack.c.l.b16 %v166
  %v765 = vunpack.c.h.b16 %v166
  %v766 = vunpack.c.l.b16 %v167
  %v767 = vunpack.c.h.b16 %v167
  %v768 = vunpack.c.l.b16 %v168
  %v769 = vunpack.c.h.b16 %v168
  %v770 = vunpack.c.l.b16 %v169
  %v771 = vunpack.c.h.b16 %v169
  %v772 = vunpack.c.l.b16 %v170
  %v773 = vunpack.c.h.b16 %v170
  %v774 = vunpack.c.l.b16 %v171
  %v775 = vunpack.c.h.b16 %v171
  %v776 = vunpack.c.l.b16 %v172
  %v777 = vunpack.c.h.b16 %v172
  %v778 = vunpack.c.l.b16 %v173
  %v779 = vunpack.c.h.b16 %v173
  %v780 = vunpack.c.l.b16 %v174
  %v781 = vunpack.c.h.b16 %v174
  %v782 = vunpack.c.l.b16 %v175
  %v783 = vunpack.c.h.b16 %v175
  %v784 = vunpack.c.l.b16 %v176
  %v785 = vunpack.c.h.b16 %v176
  %v786 = vunpack.c.l.b16 %v177
  %v787 = vunpack.c.h.b16 %v177
  %v788 = vunpack.c.l.b16 %v178
  %v789 = vunpack.c.h.b16 %v178
  %v790 = vunpack.c.l.b16 %v179
  %v791 = vunpack.c.h.b16 %v179
  %v792 = vunpack.c.l.b16 %v180
  %v793 = vunpack.c.h.b16 %v180
  %v794 = vunpack.c.l.b16 %v181
  %v795 = vunpack.c.h.b16 %v181
  %v796 = vunpack.c.l.b16 %v182
  %v797 = vunpack.c.h.b16 %v182
  %v798 = vunpack.c.l.b16 %v183
  %v799 = vunpack.c.h.b16 %v183
  %v800 = vunpack.c.l.b16 %v184
  %v801 = vunpack.c.h.b16 %v184
  %v802 = vunpack.c.l.b16 %v185
  %v803 = vunpack.c.h.b16 %v185
  %v804 = vunpack.c.l.b16 %v186
  %v805 = vunpack.c.h.b16 %v186
  %v806 = vunpack.c.l.b16 %v187
  %v807 = vunpack.c.h.b16 %v187
  %v808 = vunpack.c.l.b16 %v188
  %v809 = vunpack.c.h.b16 %v188
  %v810 = vunpack.c.l.b16 %v189
  %v811 = vunpack.c.h.b16 %v189
  %v812 = vunpack.c.l.b16 %v190
  %v813 = vunpack.c.h.b16 %v190
  %v814 = vunpack.c.l.b16 %v191
  %v815 = vunpack.c.h.b16 %v191
  %v816 = vunpack.c.l.b16 %v192
  %v817 = vunpack.c.h.b16 %v192
  %v818 = vunpack.c.l.b16 %v193
  %v819 = vunpack.c.h.b16 %v193
  %v820 = vunpack.c.l.b16 %v194
  %v821 = vunpack.c.h.b16 %v194
  %v822 = vunpack.c.l.b16 %v195
  %v823 = vunpack.c.h.b16 %v195
  %v824 = vunpack.c.l.b16 %v196
  %v825 = vunpack.c.h.b16 %v196
  %v826 = vunpack.c.l.b16 %v197
  %v827 = vunpack.c.h.b16 %v197
  %v828 = vunpack.c.l.b16 %v198
  %v829 = vunpack.c.h.b16 %v198
  %v830 = vunpack.c.l.b16 %v199
  %v831 = vunpack.c.h.b16 %v199
  %v832 = vunpack.c.l.b16 %v200
  %v833 = vunpack.c.h.b16 %v200
  %v834 = vunpack.c.l.b16 %v201
  %v835 = vunpack.c.h.b16 %v201
  %v836 = vunpack.c.l.b16 %v202
  %v837 = vunpack.c.h.b16 %v202
  %v838 = vunpack.c.l.b16 %v203
  %v839 = vunpack.c.h.b16 %v203
  %v840 = vunpack.c.l.b16 %v204
  %v841 = vunpack.c.h.b16 %v204
  %v842 = vunpack.c.l.b16 %v205
  %v843 = vunpack.c.h.b16 %v205
  %v844 = vunpack.c.l.b16 %v206
  %v845 = vunpack.c.h.b16 %v206
  %v846 = vunpack.c.l.b16 %v207
  %v847 = vunpack.c.h.b16 %v207
  %v848 = vunpack.c.l.b16 %v208
  %v849 = vunpack.c.h.b16 %v208
  %v850 = vunpack.c.l.b16 %v209
  %v851 = vunpack.c.h.b16 %v209
  %v852 = vunpack.c.l.b16 %v210
  %v853 = vunpack.c.h.b16 %v210
  %v854 = vunpack.c.l.b16 %v211
  %v855 = vunpack.c.h.b16 %v211
  %v856 = vunpack.c.l.b16 %v212
  %v857 = vunpack.c.h.b16 %v212
  %v858 = vunpack.c.l.b16 %v213
  %v859 = vunpack.c.h.b16 %v213
  %v860 = vunpack.c.l.b16 %v214
  %v861 = vunpack.c.h.b16 %v214
  %v862 = vunpack.c.l.b16 %v215
  %v863 = vunpack.c.h.b16 %v215
  %v864 = vunpack.c.l.b16 %v216
  %v865 = vunpack.c.h.b16 %v216
  %v866 = vunpack.c.l.b16 %v217
  %v867 = vunpack.c.h.b16 %v217
  %v868 = vunpack.c.l.b16 %v218
  %v869 = vunpack.c.h.b16 %v218
  %v870 = vunpack.c.l.b16 %v219
  %v871 = vunpack.c.h.b16 %v219
  %v872 = vunpack.c.l.b16 %v220
  %v873 = vunpack.c.h.b16 %v220
  %v874 = vunpack.c.l.b16 %v221
  %v875 = vunpack.c.h.b16 %v221
  %v876 = vunpack.c.l.b16 %v222
  %v877 = vunpack.c.h.b16 %v222
  %v878 = vunpack.c.l.b16 %v223
  %v879 = vunpack.c.h.b16 %v223
  %v880 = vunpack.c.l.b16 %v224
  %v881 = vunpack.c.h.b16 %v224
  %v882 = vunpack.c.l.b16 %v225
  %v883 = vunpack.c.h.b16 %v225
  %v884 = vunpack.c.l.b16 %v226
  %v885 = vunpack.c.h.b16 %v226
  %v886 = vunpack.c.l.b16 %v227
  %v887 = vunpack.c.h.b16 %v227
  %v888 = vunpack.c.l.b16 %v228
  %v889 = vunpack.c.h.b16 %v228
  %v890 = vunpack.c.l.b16 %v229
  %v891 = vunpack.c.h.b16 %v229
  %v892 = vunpack.c.l.b16 %v230
  %v893 = vunpack.c.h.b16 %v230
  %v894 = vunpack.c.l.b16 %v231
  %v895 = vunpack.c.h.b16 %v231
  %v896 = vunpack.c.l.b16 %v232
  %v897 = vunpack.c.h.b16 %v232
  %v898 = vunpack.c.l.b16 %v233
  %v899 = vunpack.c.h.b16 %v233
  %v900 = vunpack.c.l.b16 %v234
  %v901 = vunpack.c.h.b16 %v234
  %v902 = vpack.c.b16 %v478, %v470
  %v903 = vpack.c.b16 %v479, %v471
  %v904 = vpack.c.b16 %v480, %v472
  %v905 = vpack.c.b16 %v481, %v473
  %v906 = vpack.c.b16 %v482, %v474
  %v907 = vpack.c.b16 %v483, %v475
  %v908 = vpack.c.b16 %v484, %v476
  %v909 = vpack.c.b16 %v485, %v477
  %v910 = vpack.c.b16 %v494, %v486
  %v911 = vpack.c.b16 %v495, %v487
  %v912 = vpack.c.b16 %v496, %v488
  %v913 = vpack.c.b16 %v497, %v489
  %v914 = vpack.c.b16 %v498, %v490
  %v915 = vpack.c.b16 %v499, %v491
  %v916 = vpack.c.b16 %v500, %v492
  %v917 = vpack.c.b16 %v501, %v493
  %v918 = vpack.c.b16 %v510, %v502
  %v919 = vpack.c.b16 %v511, %v503
  %v920 = vpack.c.b16 %v512, %v504
  %v921 = vpack.c.b16 %v513, %v505
  %v922 = vpack.c.b16 %v514, %v506
  %v923 = vpack.c.b16 %v515, %v507
  %v924 = vpack.c.b16 %v516, %v508
  %v925 = vpack.c.b16 %v517, %v509
  %v926 = vpack.c.b16 %v526, %v518
  %v927 = vpack.c.b16 %v527, %v519
  %v928 = vpack.c.b16 %v528, %v520
  %v929 = vpack.c.b16 %v529, %v521
  %v930 = vpack.c.b16 %v530, %v522
  %v931 = vpack.c.b16 %v531, %v523
  %v932 = vpack.c.b16 %v532, %v524
  %v933 = vpack.c.b16 %v533, %v525
  %v934 = vpack.c.b16 %v542, %v534
  %v935 = vpack.c.b16 %v543, %v535
  %v936 = vpack.c.b16 %v544, %v536
  %v937 = vpack.c.b16 %v545, %v537
  %v938 = vpack.c.b16 %v546, %v538
  %v939 = vpack.c.b16 %v547, %v539
  %v940 = vpack.c.b16 %v548, %v540
  %v941 = vpack.c.b16 %v549, %v541
  %v942 = vpack.c.b16 %v558, %v550
  %v943 = vpack.c.b16 %v559, %v551
  %v944 = vpack.c.b16 %v560, %v552
  %v945 = vpack.c.b16 %v561, %v553
  %v946 = vpack.c.b16 %v562, %v554
  %v947 = vpack.c.b16 %v563, %v555
  %v948 = vpack.c.b16 %v564, %v556
  %v949 = vpack.c.b16 %v565, %v557
  %v950 = vpack.c.b16 %v574, %v566
  %v951 = vpack.c.b16 %v575, %v567
  %v952 = vpack.c.b16 %v576, %v568
  %v953 = vpack.c.b16 %v577, %v569
  %v954 = vpack.c.b16 %v578, %v570
  %v955 = vpack.c.b16 %v579, %v571
  %v956 = vpack.c.b16 %v580, %v572
  %v957 = vpack.c.b16 %v581, %v573
  %v958 = vpack.c.b16 %v590, %v582
  %v959 = vpack.c.b16 %v591, %v583
  %v960 = vpack.c.b16 %v592, %v584
  %v961 = vpack.c.b16 %v593, %v585
  %v962 = vpack.c.b16 %v594, %v586
  %v963 = vpack.c.b16 %v595, %v587
  %v964 = vpack.c.b16 %v596, %v588
  %v965 = vpack.c.b16 %v597, %v589
  %v966 = vpack.c.b16 %v606, %v598
  %v967 = vpack.c.b16 %v607, %v599
  %v968 = vpack.c.b16 %v608, %v600
  %v969 = vpack.c.b16 %v609, %v601
  %v970 = vpack.c.b16 %v610, %v602
  %v971 = vpack.c.b16 %v611, %v603
  %v972 = vpack.c.b16 %v612, %v604
  %v973 = vpack.c.b16 %v613, %v605
  %v974 = vpack.c.b16 %v622, %v614
  %v975 = vpack.c.b16 %v623, %v615
  %v976 = vpack.c.b16 %v624, %v616
  %v977 = vpack.c.b16 %v625, %v617
  %v978 = vpack.c.b16 %v626, %v618
  %v979 = vpack.c.b16 %v627, %v619
  %v980 = vpack.c.b16 %v628, %v620
  %v981 = vpack.c.b16 %v629, %v621
  %v982 = vpack.c.b16 %v638, %v630
  %v983 = vpack.c.b16 %v639, %v631
  %v984 = vpack.c.b16 %v640, %v632
  %v985 = vpack.c.b16 %v641, %v633
  %v986 = vpack.c.b16 %v642, %v634
  %v987 = vpack.c.b16 %v643, %v635
  %v988 = vpack.c.b16 %v644, %v636
  %v989 = vpack.c.b16 %v645, %v637
  %v990 = vpack.c.b16 %v654, %v646
  %v991 = vpack.c.b16 %v655, %v647
  %v992 = vpack.c.b16 %v656, %v648
  %v993 = vpack.c.b16 %v657, %v649
  %v994 = vpack.c.b16 %v658, %v650
  %v995 = vpack.c.b16 %v659, %v651
  %v996 = vpack.c.b16 %v660, %v652
  %v997 = vpack.c.b16 %v661, %v653
  %v998 = vpack.c.b16 %v670, %v662
  %v999 = vpack.c.b16 %v671, %v663
  %v1000 = vpack.c.b16 %v672, %v664
  %v1001 = vpack.c.b16 %v673, %v665
  %v1002 = vpack.c.b16 %v674, %v666
  %v1003 = vpack.c.b16 %v675, %v667
  %v1004 = vpack.c.b16 %v676, %v668
  %v1005 = vpack.c.b16 %v677, %v669
  %v1006 = vpack.c.b16 %v686, %v678
  %v1007 = vpack.c.b16 %v687, %v679
  %v1008 = vpack.c.b16 %v688, %v680
  %v1009 = vpack.c.b16 %v689, %v681
  %v1010 = vpack.c.b16 %v690, %v682
  %v1011 = vpack.c.b16 %v691, %v683
  %v1012 = vpack.c.b16 %v692, %v684
  %v1013 = vpack.c.b16 %v693, %v685
  %v1014 = vpack.c.b16 %v702, %v694
  %v1015 = vpack.c.b16 %v703, %v695
  %v1016 = vpack.c.b16 %v704, %v696
  %v1017 = vpack.c.b16 %v705, %v697
  %v1018 = vpack.c.b16 %v706, %v698
  %v1019 = vpack.c.b16 %v707, %v699
  %v1020 = vpack.c.b16 %v708, %v700
  %v1021 = vpack.c.b16 %v709, %v701
  %v1022 = vpack.c.b16 %v718, %v710
  %v1023 = vpack.c.b16 %v719, %v711
  %v1024 = vpack.c.b16 %v720, %v712
  %v1025 = vpack.c.b16 %v721, %v713
  %v1026 = vpack.c.b16 %v722, %v714
  %v1027 = vpack.c.b16 %v723, %v715
  %v1028 = vpack.c.b16 %v724, %v716
  %v1029 = vpack.c.b16 %v725, %v717
  %v1030 = vpack.c.b16 %v734, %v726
  %v1031 = vpack.c.b16 %v735, %v727
  %v1032 = vpack.c.b16 %v736, %v728
  %v1033 = vpack.c.b16 %v737, %v729
  %v1034 = vpack.c.b16 %v738, %v730
  %v1035 = vpack.c.b16 %v739, %v731
  %v1036 = vpack.c.b16 %v740, %v732
  %v1037 = vpack.c.b16 %v741, %v733
  %v1038 = vpack.c.b16 %v750, %v742
  %v1039 = vpack.c.b16 %v751, %v743
  %v1040 = vpack.c.b16 %v752, %v744
  %v1041 = vpack.c.b16 %v753, %v745
  %v1042 = vpack.c.b16 %v754, %v746
  %v1043 = vpack.c.b16 %v755, %v747
  %v1044 = vpack.c.b16 %v756, %v748
  %v1045 = vpack.c.b16 %v757, %v749
  %v1046 = vpack.c.b16 %v766, %v758
  %v1047 = vpack.c.b16 %v767, %v759
  %v1048 = vpack.c.b16 %v768, %v760
  %v1049 = vpack.c.b16 %v769, %v761
  %v1050 = vpack.c.b16 %v770, %v762
  %v1051 = vpack.c.b16 %v771, %v763
  %v1052 = vpack.c.b16 %v772, %v764
  %v1053 = vpack.c.b16 %v773, %v765
  %v1054 = vpack.c.b16 %v782, %v774
  %v1055 = vpack.c.b16 %v783, %v775
  %v1056 = vpack.c.b16 %v784, %v776
  %v1057 = vpack.c.b16 %v785, %v777
  %v1058 = vpack.c.b16 %v786, %v778
  %v1059 = vpack.c.b16 %v787, %v779
  %v1060 = vpack.c.b16 %v788, %v780
  %v1061 = vpack.c.b16 %v789, %v781
  %v1062 = vpack.c.b16 %v798, %v790
  %v1063 = vpack.c.b16 %v799, %v791
  %v1064 = vpack.c.b16 %v800, %v792
  %v1065 = vpack.c.b16 %v801, %v793
  %v1066 = vpack.c.b16 %v802, %v794
  %v1067 = vpack.c.b16 %v803, %v795
  %v1068 = vpack.c.b16 %v804, %v796
  %v1069 = vpack.c.b16 %v805, %v797
  %v1070 = vpack.c.b16 %v814, %v806
  %v1071 = vpack.c.b16 %v815, %v807
  %v1072 = vpack.c.b16 %v816, %v808
  %v1073 = vpack.c.b16 %v817, %v809
  %v1074 = vpack.c.b16 %v818, %v810
  %v1075 = vpack.c.b16 %v819, %v811
  %v1076 = vpack.c.b16 %v820, %v812
  %v1077 = vpack.c.b16 %v821, %v813
  %v1078 = vpack.c.b16 %v830, %v822
  %v1079 = vpack.c.b16 %v831, %v823
  %v1080 = vpack.c.b16 %v832, %v824
  %v1081 = vpack.c.b16 %v833, %v825
  %v1082 = vpack.c.b16 %v834, %v826
  %v1083 = vpack.c.b16 %v835, %v827
  %v1084 = vpack.c.b16 %v836, %v828
  %v1085 = vpack.c.b16 %v837, %v829
  %v1086 = vpack.c.b16 %v846, %v838
  %v1087 = vpack.c.b16 %v847, %v839
  %v1088 = vpack.c.b16 %v848, %v840
  %v1089 = vpack.c.b16 %v849, %v841
  %v1090 = vpack.c.b16 %v850, %v842
  %v1091 = vpack.c.b16 %v851, %v843
  %v1092 = vpack.c.b16 %v852, %v844
  %v1093 = vpack.c.b16 %v853, %v845
  %v1094 = vpack.c.b16 %v862, %v854
  %v1095 = vpack.c.b16 %v863, %v855
  %v1096 = vpack.c.b16 %v864, %v856
  %v1097 = vpack.c.b16 %v865, %v857
  %v1098 = vpack.c.b16 %v866, %v858
  %v1099 = vpack.c.b16 %v867, %v859
  %v1100 = vpack.c.b16 %v868, %v860
  %v1101 = vpack.c.b16 %v869, %v861
  %v1102 = vpack.c.b16 %v878, %v870
  %v1103 = vpack.c.b16 %v879, %v871
  %v1104 = vpack.c.b16 %v880, %v872
  %v1105 = vpack.c.b16 %v881, %v873
  %v1106 = vpack.c.b16 %v882, %v874
  %v1107 = vpack.c.b16 %v883, %v875
  %v1108 = vpack.c.b16 %v884, %v876
  %v1109 = vpack.c.b16 %v885, %v877
  %v1110 = vpack.c.b16 %v894, %v886
  %v1111 = vpack.c.b16 %v895, %v887
  %v1112 = vpack.c.b16 %v896, %v888
  %v1113 = vpack.c.b16 %v897, %v889
  %v1114 = vpack.c.b16 %v898, %v890
  %v1115 = vpack.c.b16 %v899, %v891
  %v1116 = vpack.c.b16 %v900, %v892
  %v1117 = vpack.c.b16 %v901, %v893
  %vm1334 = vcmask 392192
  %v1336 = vsel %vm1334, %v250, 0
  %1338 = vmatprep.subr.bf16.mxu0 %v903
  %1339 = vmatpush1.bf16.msra.mxu0 %v902
  %1340 = vmatprep.subr.bf16.mxu0 %v911
  %1341 = vmatpush1.bf16.msra.mxu0 %v910
  %1342 = vmatprep.subr.bf16.mxu0 %v919
  %1343 = vmatpush1.bf16.msra.mxu0 %v918
  %1344 = vmatprep.subr.bf16.mxu0 %v927
  %1345 = vmatpush1.bf16.msra.mxu0 %v926
  %1346 = vmatprep.subr.bf16.mxu0 %v935
  %1347 = vmatpush1.bf16.msra.mxu0 %v934
  %1348 = vmatprep.subr.bf16.mxu0 %v943
  %1349 = vmatpush1.bf16.msra.mxu0 %v942
  %1350 = vmatprep.subr.bf16.mxu0 %v951
  %1351 = vmatpush1.bf16.msra.mxu0 %v950
  %1352 = vmatprep.subr.bf16.mxu0 %v959
  %1353 = vmatpush1.bf16.msra.mxu0 %v958
  %1354 = vmatprep.subr.bf16.mxu0 %v967
  %1355 = vmatpush1.bf16.msra.mxu0 %v966
  %1356 = vmatprep.subr.bf16.mxu0 %v975
  %1357 = vmatpush1.bf16.msra.mxu0 %v974
  %1358 = vmatprep.subr.bf16.mxu0 %v983
  %1359 = vmatpush1.bf16.msra.mxu0 %v982
  %1360 = vmatprep.subr.bf16.mxu0 %v991
  %1361 = vmatpush1.bf16.msra.mxu0 %v990
  %1362 = vmatprep.subr.bf16.mxu0 %v999
  %1363 = vmatpush1.bf16.msra.mxu0 %v998
  %1364 = vmatprep.subr.bf16.mxu0 %v1007
  %1365 = vmatpush1.bf16.msra.mxu0 %v1006
  %1366 = vmatprep.subr.bf16.mxu0 %v1015
  %1367 = vmatpush1.bf16.msra.mxu0 %v1014
  %1368 = vmatprep.subr.bf16.mxu0 %v1023
  %1369 = vmatpush1.bf16.msra.mxu0 %v1022
  %1370 = vmatprep.mubr.bf16.mxu0 %v248
  %1371 = vmatmul.mubr.bf16.gmra.mrb[0].mxu0 %v247
  %v1372 = vpop.f32.mrb[0].mxu0
  %v1373 = vadd.f32 0.0, %v1372
  %v1374 = vpop.f32.mrb[0].mxu0
  %v1375 = vadd.f32 0.0, %v1374
  %v1376 = vpop.f32.mrb[0].mxu0
  %v1377 = vadd.f32 0.0, %v1376
  %v1378 = vpop.f32.mrb[0].mxu0
  %v1379 = vadd.f32 0.0, %v1378
  %1380 = vdwg.mxu0
  %1381 = vmatprep.subr.bf16.mxu0 %v1031
  %1382 = vmatpush1.bf16.msra.mxu0 %v1030
  %1383 = vmatprep.subr.bf16.mxu0 %v1039
  %1384 = vmatpush1.bf16.msra.mxu0 %v1038
  %1385 = vmatprep.subr.bf16.mxu0 %v1047
  %1386 = vmatpush1.bf16.msra.mxu0 %v1046
  %1387 = vmatprep.subr.bf16.mxu0 %v1055
  %1388 = vmatpush1.bf16.msra.mxu0 %v1054
  %1389 = vmatprep.subr.bf16.mxu0 %v1063
  %1390 = vmatpush1.bf16.msra.mxu0 %v1062
  %1391 = vmatprep.subr.bf16.mxu0 %v1071
  %1392 = vmatpush1.bf16.msra.mxu0 %v1070
  %1393 = vmatprep.subr.bf16.mxu0 %v1079
  %1394 = vmatpush1.bf16.msra.mxu0 %v1078
  %1395 = vmatprep.subr.bf16.mxu0 %v1087
  %1396 = vmatpush1.bf16.msra.mxu0 %v1086
  %1397 = vmatprep.subr.bf16.mxu0 %v1095
  %1398 = vmatpush1.bf16.msra.mxu0 %v1094
  %1399 = vmatprep.subr.bf16.mxu0 %v1103
  %1400 = vmatpush1.bf16.msra.mxu0 %v1102
  %1401 = vmatprep.subr.bf16.mxu0 %v1111
  %1402 = vmatpush1.bf16.msra.mxu0 %v1110
  %1403 = vmatprep.subr.bf16.mxu0 0
  %1404 = vmatpush1.bf16.msra.mxu0 0
  %1405 = vmatprep.subr.bf16.mxu0 0
  %1406 = vmatpush1.bf16.msra.mxu0 0
  %1407 = vmatprep.subr.bf16.mxu0 0
  %1408 = vmatpush1.bf16.msra.mxu0 0
  %1409 = vmatprep.subr.bf16.mxu0 0
  %1410 = vmatpush1.bf16.msra.mxu0 0
  %1411 = vmatprep.subr.bf16.mxu0 0
  %1412 = vmatpush1.bf16.msra.mxu0 0
  %1413 = vmatprep.mubr.bf16.mxu0 %v1336
  %1414 = vmatmul.mubr.bf16.gmra.mrb[0].mxu0 %v249
  %v1415 = vpop.f32.mrb[0].mxu0
  %v1416 = vadd.f32 %v1373, %v1415
  %v1417 = vpop.f32.mrb[0].mxu0
  %v1418 = vadd.f32 %v1375, %v1417
  %v1419 = vpop.f32.mrb[0].mxu0
  %v1420 = vadd.f32 %v1377, %v1419
  %v1421 = vpop.f32.mrb[0].mxu0
  %v1422 = vadd.f32 %v1379, %v1421
  %1423 = vdwg.mxu0
  %1424 = vmatprep.subr.bf16.mxu0 %v905
  %1425 = vmatpush1.bf16.msra.mxu0 %v904
  %1426 = vmatprep.subr.bf16.mxu0 %v913
  %1427 = vmatpush1.bf16.msra.mxu0 %v912
  %1428 = vmatprep.subr.bf16.mxu0 %v921
  %1429 = vmatpush1.bf16.msra.mxu0 %v920
  %1430 = vmatprep.subr.bf16.mxu0 %v929
  %1431 = vmatpush1.bf16.msra.mxu0 %v928
  %1432 = vmatprep.subr.bf16.mxu0 %v937
  %1433 = vmatpush1.bf16.msra.mxu0 %v936
  %1434 = vmatprep.subr.bf16.mxu0 %v945
  %1435 = vmatpush1.bf16.msra.mxu0 %v944
  %1436 = vmatprep.subr.bf16.mxu0 %v953
  %1437 = vmatpush1.bf16.msra.mxu0 %v952
  %1438 = vmatprep.subr.bf16.mxu0 %v961
  %1439 = vmatpush1.bf16.msra.mxu0 %v960
  %1440 = vmatprep.subr.bf16.mxu0 %v969
  %1441 = vmatpush1.bf16.msra.mxu0 %v968
  %1442 = vmatprep.subr.bf16.mxu0 %v977
  %1443 = vmatpush1.bf16.msra.mxu0 %v976
  %1444 = vmatprep.subr.bf16.mxu0 %v985
  %1445 = vmatpush1.bf16.msra.mxu0 %v984
  %1446 = vmatprep.subr.bf16.mxu0 %v993
  %1447 = vmatpush1.bf16.msra.mxu0 %v992
  %1448 = vmatprep.subr.bf16.mxu0 %v1001
  %1449 = vmatpush1.bf16.msra.mxu0 %v1000
  %1450 = vmatprep.subr.bf16.mxu0 %v1009
  %1451 = vmatpush1.bf16.msra.mxu0 %v1008
  %1452 = vmatprep.subr.bf16.mxu0 %v1017
  %1453 = vmatpush1.bf16.msra.mxu0 %v1016
  %1454 = vmatprep.subr.bf16.mxu0 %v1025
  %1455 = vmatpush1.bf16.msra.mxu0 %v1024
  %1456 = vmatprep.mubr.bf16.mxu0 %v248
  %1457 = vmatmul.mubr.bf16.gmra.mrb[0].mxu0 %v247
  %v1458 = vpop.f32.mrb[0].mxu0
  %v1459 = vadd.f32 0.0, %v1458
  %v1460 = vpop.f32.mrb[0].mxu0
  %v1461 = vadd.f32 0.0, %v1460
  %v1462 = vpop.f32.mrb[0].mxu0
  %v1463 = vadd.f32 0.0, %v1462
  %v1464 = vpop.f32.mrb[0].mxu0
  %v1465 = vadd.f32 0.0, %v1464
  %1466 = vdwg.mxu0
  %1467 = vmatprep.subr.bf16.mxu0 %v1033
  %1468 = vmatpush1.bf16.msra.mxu0 %v1032
  %1469 = vmatprep.subr.bf16.mxu0 %v1041
  %1470 = vmatpush1.bf16.msra.mxu0 %v1040
  %1471 = vmatprep.subr.bf16.mxu0 %v1049
  %1472 = vmatpush1.bf16.msra.mxu0 %v1048
  %1473 = vmatprep.subr.bf16.mxu0 %v1057
  %1474 = vmatpush1.bf16.msra.mxu0 %v1056
  %1475 = vmatprep.subr.bf16.mxu0 %v1065
  %1476 = vmatpush1.bf16.msra.mxu0 %v1064
  %1477 = vmatprep.subr.bf16.mxu0 %v1073
  %1478 = vmatpush1.bf16.msra.mxu0 %v1072
  %1479 = vmatprep.subr.bf16.mxu0 %v1081
  %1480 = vmatpush1.bf16.msra.mxu0 %v1080
  %1481 = vmatprep.subr.bf16.mxu0 %v1089
  %1482 = vmatpush1.bf16.msra.mxu0 %v1088
  %1483 = vmatprep.subr.bf16.mxu0 %v1097
  %1484 = vmatpush1.bf16.msra.mxu0 %v1096
  %1485 = vmatprep.subr.bf16.mxu0 %v1105
  %1486 = vmatpush1.bf16.msra.mxu0 %v1104
  %1487 = vmatprep.subr.bf16.mxu0 %v1113
  %1488 = vmatpush1.bf16.msra.mxu0 %v1112
  %1489 = vmatprep.subr.bf16.mxu0 0
  %1490 = vmatpush1.bf16.msra.mxu0 0
  %1491 = vmatprep.subr.bf16.mxu0 0
  %1492 = vmatpush1.bf16.msra.mxu0 0
  %1493 = vmatprep.subr.bf16.mxu0 0
  %1494 = vmatpush1.bf16.msra.mxu0 0
  %1495 = vmatprep.subr.bf16.mxu0 0
  %1496 = vmatpush1.bf16.msra.mxu0 0
  %1497 = vmatprep.subr.bf16.mxu0 0
  %1498 = vmatpush1.bf16.msra.mxu0 0
  %1499 = vmatprep.mubr.bf16.mxu0 %v1336
  %1500 = vmatmul.mubr.bf16.gmra.mrb[0].mxu0 %v249
  %v1501 = vpop.f32.mrb[0].mxu0
  %v1502 = vadd.f32 %v1459, %v1501
  %v1503 = vpop.f32.mrb[0].mxu0
  %v1504 = vadd.f32 %v1461, %v1503
  %v1505 = vpop.f32.mrb[0].mxu0
  %v1506 = vadd.f32 %v1463, %v1505
  %v1507 = vpop.f32.mrb[0].mxu0
  %v1508 = vadd.f32 %v1465, %v1507
  %1509 = vdwg.mxu0
  %1510 = vmatprep.subr.bf16.mxu0 %v907
  %1511 = vmatpush1.bf16.msra.mxu0 %v906
  %1512 = vmatprep.subr.bf16.mxu0 %v915
  %1513 = vmatpush1.bf16.msra.mxu0 %v914
  %1514 = vmatprep.subr.bf16.mxu0 %v923
  %1515 = vmatpush1.bf16.msra.mxu0 %v922
  %1516 = vmatprep.subr.bf16.mxu0 %v931
  %1517 = vmatpush1.bf16.msra.mxu0 %v930
  %1518 = vmatprep.subr.bf16.mxu0 %v939
  %1519 = vmatpush1.bf16.msra.mxu0 %v938
  %1520 = vmatprep.subr.bf16.mxu0 %v947
  %1521 = vmatpush1.bf16.msra.mxu0 %v946
  %1522 = vmatprep.subr.bf16.mxu0 %v955
  %1523 = vmatpush1.bf16.msra.mxu0 %v954
  %1524 = vmatprep.subr.bf16.mxu0 %v963
  %1525 = vmatpush1.bf16.msra.mxu0 %v962
  %1526 = vmatprep.subr.bf16.mxu0 %v971
  %1527 = vmatpush1.bf16.msra.mxu0 %v970
  %1528 = vmatprep.subr.bf16.mxu0 %v979
  %1529 = vmatpush1.bf16.msra.mxu0 %v978
  %1530 = vmatprep.subr.bf16.mxu0 %v987
  %1531 = vmatpush1.bf16.msra.mxu0 %v986
  %1532 = vmatprep.subr.bf16.mxu0 %v995
  %1533 = vmatpush1.bf16.msra.mxu0 %v994
  %1534 = vmatprep.subr.bf16.mxu0 %v1003
  %1535 = vmatpush1.bf16.msra.mxu0 %v1002
  %1536 = vmatprep.subr.bf16.mxu0 %v1011
  %1537 = vmatpush1.bf16.msra.mxu0 %v1010
  %1538 = vmatprep.subr.bf16.mxu0 %v1019
  %1539 = vmatpush1.bf16.msra.mxu0 %v1018
  %1540 = vmatprep.subr.bf16.mxu0 %v1027
  %1541 = vmatpush1.bf16.msra.mxu0 %v1026
  %1542 = vmatprep.mubr.bf16.mxu0 %v248
  %1543 = vmatmul.mubr.bf16.gmra.mrb[0].mxu0 %v247
  %v1544 = vpop.f32.mrb[0].mxu0
  %v1545 = vadd.f32 0.0, %v1544
  %v1546 = vpop.f32.mrb[0].mxu0
  %v1547 = vadd.f32 0.0, %v1546
  %v1548 = vpop.f32.mrb[0].mxu0
  %v1549 = vadd.f32 0.0, %v1548
  %v1550 = vpop.f32.mrb[0].mxu0
  %v1551 = vadd.f32 0.0, %v1550
  %1552 = vdwg.mxu0
  %1553 = vmatprep.subr.bf16.mxu0 %v1035
  %1554 = vmatpush1.bf16.msra.mxu0 %v1034
  %1555 = vmatprep.subr.bf16.mxu0 %v1043
  %1556 = vmatpush1.bf16.msra.mxu0 %v1042
  %1557 = vmatprep.subr.bf16.mxu0 %v1051
  %1558 = vmatpush1.bf16.msra.mxu0 %v1050
  %1559 = vmatprep.subr.bf16.mxu0 %v1059
  %1560 = vmatpush1.bf16.msra.mxu0 %v1058
  %1561 = vmatprep.subr.bf16.mxu0 %v1067
  %1562 = vmatpush1.bf16.msra.mxu0 %v1066
  %1563 = vmatprep.subr.bf16.mxu0 %v1075
  %1564 = vmatpush1.bf16.msra.mxu0 %v1074
  %1565 = vmatprep.subr.bf16.mxu0 %v1083
  %1566 = vmatpush1.bf16.msra.mxu0 %v1082
  %1567 = vmatprep.subr.bf16.mxu0 %v1091
  %1568 = vmatpush1.bf16.msra.mxu0 %v1090
  %1569 = vmatprep.subr.bf16.mxu0 %v1099
  %1570 = vmatpush1.bf16.msra.mxu0 %v1098
  %1571 = vmatprep.subr.bf16.mxu0 %v1107
  %1572 = vmatpush1.bf16.msra.mxu0 %v1106
  %1573 = vmatprep.subr.bf16.mxu0 %v1115
  %1574 = vmatpush1.bf16.msra.mxu0 %v1114
  %1575 = vmatprep.subr.bf16.mxu0 0
  %1576 = vmatpush1.bf16.msra.mxu0 0
  %1577 = vmatprep.subr.bf16.mxu0 0
  %1578 = vmatpush1.bf16.msra.mxu0 0
  %1579 = vmatprep.subr.bf16.mxu0 0
  %1580 = vmatpush1.bf16.msra.mxu0 0
  %1581 = vmatprep.subr.bf16.mxu0 0
  %1582 = vmatpush1.bf16.msra.mxu0 0
  %1583 = vmatprep.subr.bf16.mxu0 0
  %1584 = vmatpush1.bf16.msra.mxu0 0
  %1585 = vmatprep.mubr.bf16.mxu0 %v1336
  %1586 = vmatmul.mubr.bf16.gmra.mrb[0].mxu0 %v249
  %v1587 = vpop.f32.mrb[0].mxu0
  %v1588 = vadd.f32 %v1545, %v1587
  %v1589 = vpop.f32.mrb[0].mxu0
  %v1590 = vadd.f32 %v1547, %v1589
  %v1591 = vpop.f32.mrb[0].mxu0
  %v1592 = vadd.f32 %v1549, %v1591
  %v1593 = vpop.f32.mrb[0].mxu0
  %v1594 = vadd.f32 %v1551, %v1593
  %1595 = vdwg.mxu0
  %1596 = vmatprep.subr.bf16.mxu0 %v909
  %1597 = vmatpush1.bf16.msra.mxu0 %v908
  %1598 = vmatprep.subr.bf16.mxu0 %v917
  %1599 = vmatpush1.bf16.msra.mxu0 %v916
  %1600 = vmatprep.subr.bf16.mxu0 %v925
  %1601 = vmatpush1.bf16.msra.mxu0 %v924
  %1602 = vmatprep.subr.bf16.mxu0 %v933
  %1603 = vmatpush1.bf16.msra.mxu0 %v932
  %1604 = vmatprep.subr.bf16.mxu0 %v941
  %1605 = vmatpush1.bf16.msra.mxu0 %v940
  %1606 = vmatprep.subr.bf16.mxu0 %v949
  %1607 = vmatpush1.bf16.msra.mxu0 %v948
  %1608 = vmatprep.subr.bf16.mxu0 %v957
  %1609 = vmatpush1.bf16.msra.mxu0 %v956
  %1610 = vmatprep.subr.bf16.mxu0 %v965
  %1611 = vmatpush1.bf16.msra.mxu0 %v964
  %1612 = vmatprep.subr.bf16.mxu0 %v973
  %1613 = vmatpush1.bf16.msra.mxu0 %v972
  %1614 = vmatprep.subr.bf16.mxu0 %v981
  %1615 = vmatpush1.bf16.msra.mxu0 %v980
  %1616 = vmatprep.subr.bf16.mxu0 %v989
  %1617 = vmatpush1.bf16.msra.mxu0 %v988
  %1618 = vmatprep.subr.bf16.mxu0 %v997
  %1619 = vmatpush1.bf16.msra.mxu0 %v996
  %1620 = vmatprep.subr.bf16.mxu0 %v1005
  %1621 = vmatpush1.bf16.msra.mxu0 %v1004
  %1622 = vmatprep.subr.bf16.mxu0 %v1013
  %1623 = vmatpush1.bf16.msra.mxu0 %v1012
  %1624 = vmatprep.subr.bf16.mxu0 %v1021
  %1625 = vmatpush1.bf16.msra.mxu0 %v1020
  %1626 = vmatprep.subr.bf16.mxu0 %v1029
  %1627 = vmatpush1.bf16.msra.mxu0 %v1028
  %1628 = vmatprep.mubr.bf16.mxu0 %v248
  %1629 = vmatmul.mubr.bf16.gmra.mrb[0].mxu0 %v247
  %v1630 = vpop.f32.mrb[0].mxu0
  %v1631 = vadd.f32 0.0, %v1630
  %v1632 = vpop.f32.mrb[0].mxu0
  %v1633 = vadd.f32 0.0, %v1632
  %v1634 = vpop.f32.mrb[0].mxu0
  %v1635 = vadd.f32 0.0, %v1634
  %v1636 = vpop.f32.mrb[0].mxu0
  %v1637 = vadd.f32 0.0, %v1636
  %1638 = vdwg.mxu0
  %1639 = vmatprep.subr.bf16.mxu0 %v1037
  %1640 = vmatpush1.bf16.msra.mxu0 %v1036
  %1641 = vmatprep.subr.bf16.mxu0 %v1045
  %1642 = vmatpush1.bf16.msra.mxu0 %v1044
  %1643 = vmatprep.subr.bf16.mxu0 %v1053
  %1644 = vmatpush1.bf16.msra.mxu0 %v1052
  %1645 = vmatprep.subr.bf16.mxu0 %v1061
  %1646 = vmatpush1.bf16.msra.mxu0 %v1060
  %1647 = vmatprep.subr.bf16.mxu0 %v1069
  %1648 = vmatpush1.bf16.msra.mxu0 %v1068
  %1649 = vmatprep.subr.bf16.mxu0 %v1077
  %1650 = vmatpush1.bf16.msra.mxu0 %v1076
  %1651 = vmatprep.subr.bf16.mxu0 %v1085
  %1652 = vmatpush1.bf16.msra.mxu0 %v1084
  %1653 = vmatprep.subr.bf16.mxu0 %v1093
  %1654 = vmatpush1.bf16.msra.mxu0 %v1092
  %1655 = vmatprep.subr.bf16.mxu0 %v1101
  %1656 = vmatpush1.bf16.msra.mxu0 %v1100
  %1657 = vmatprep.subr.bf16.mxu0 %v1109
  %1658 = vmatpush1.bf16.msra.mxu0 %v1108
  %1659 = vmatprep.subr.bf16.mxu0 %v1117
  %1660 = vmatpush1.bf16.msra.mxu0 %v1116
  %1661 = vmatprep.subr.bf16.mxu0 0
  %1662 = vmatpush1.bf16.msra.mxu0 0
  %1663 = vmatprep.subr.bf16.mxu0 0
  %1664 = vmatpush1.bf16.msra.mxu0 0
  %1665 = vmatprep.subr.bf16.mxu0 0
  %1666 = vmatpush1.bf16.msra.mxu0 0
  %1667 = vmatprep.subr.bf16.mxu0 0
  %1668 = vmatpush1.bf16.msra.mxu0 0
  %1669 = vmatprep.subr.bf16.mxu0 0
  %1670 = vmatpush1.bf16.msra.mxu0 0
  %1671 = vmatprep.mubr.bf16.mxu0 %v1336
  %1672 = vmatmul.mubr.bf16.gmra.mrb[0].mxu0 %v249
  %v1673 = vpop.f32.mrb[0].mxu0
  %v1674 = vadd.f32 %v1631, %v1673
  %v1675 = vpop.f32.mrb[0].mxu0
  %v1676 = vadd.f32 %v1633, %v1675
  %v1677 = vpop.f32.mrb[0].mxu0
  %v1678 = vadd.f32 %v1635, %v1677
  %v1679 = vpop.f32.mrb[0].mxu0
  %v1680 = vadd.f32 %v1637, %v1679
  %1681 = vdwg.mxu0
  %v1682 = vld [vmem:[%s2] sm:$0xff]
  %v1683 = vld [vmem:[%s2 + $0x8] sm:$0xff]
  %1685 = vset.pattern.permute.xlu0 0
  %1686 = vperm.xlu0 %1685, %v1682
  %v1687 = vpop.permute.xlu0 %1686
  %1690 = vset.pattern.permute.xlu0 0
  %1691 = vperm.xlu0 %1690, %v1683
  %v1692 = vpop.permute.xlu0 %1691
  %v1694 = vmul.f32 %v1416, %v1687
  %v1695 = vmul.f32 %v1418, %v1687
  %v1696 = vmul.f32 %v1502, %v1687
  %v1697 = vmul.f32 %v1504, %v1687
  %v1698 = vmul.f32 %v1588, %v1687
  %v1699 = vmul.f32 %v1590, %v1687
  %v1700 = vmul.f32 %v1674, %v1687
  %v1701 = vmul.f32 %v1676, %v1687
  %v1702 = vmul.f32 %v1420, %v1692
  %v1703 = vmul.f32 %v1422, %v1692
  %v1704 = vmul.f32 %v1506, %v1692
  %v1705 = vmul.f32 %v1508, %v1692
  %v1706 = vmul.f32 %v1592, %v1692
  %v1707 = vmul.f32 %v1594, %v1692
  %v1708 = vmul.f32 %v1678, %v1692
  %v1709 = vmul.f32 %v1680, %v1692
  %s1710 = scalar_lea.vmem %s2, 16
  %v1711 = vld [vmem:[%s1710] sm:$0xff]
  %v1712 = vld [vmem:[%s1710 + $0x8] sm:$0xff]
  %1714 = vset.pattern.permute.xlu0 0
  %1715 = vperm.xlu0 %1714, %v1711
  %v1716 = vpop.permute.xlu0 %1715
  %1719 = vset.pattern.permute.xlu0 0
  %1720 = vperm.xlu0 %1719, %v1712
  %v1721 = vpop.permute.xlu0 %1720
  %v1723 = vadd.f32 %v1694, %v1716
  %v1724 = vadd.f32 %v1695, %v1716
  %v1725 = vadd.f32 %v1696, %v1716
  %v1726 = vadd.f32 %v1697, %v1716
  %v1727 = vadd.f32 %v1698, %v1716
  %v1728 = vadd.f32 %v1699, %v1716
  %v1729 = vadd.f32 %v1700, %v1716
  %v1730 = vadd.f32 %v1701, %v1716
  %v1731 = vadd.f32 %v1702, %v1721
  %v1732 = vadd.f32 %v1703, %v1721
  %v1733 = vadd.f32 %v1704, %v1721
  %v1734 = vadd.f32 %v1705, %v1721
  %v1735 = vadd.f32 %v1706, %v1721
  %v1736 = vadd.f32 %v1707, %v1721
  %v1737 = vadd.f32 %v1708, %v1721
  %v1738 = vadd.f32 %v1709, %v1721
  %v1739 = vmax.f32 %v1723, 0.0
  %v1740 = vmax.f32 %v1724, 0.0
  %v1741 = vmax.f32 %v1725, 0.0
  %v1742 = vmax.f32 %v1726, 0.0
  %v1743 = vmax.f32 %v1727, 0.0
  %v1744 = vmax.f32 %v1728, 0.0
  %v1745 = vmax.f32 %v1729, 0.0
  %v1746 = vmax.f32 %v1730, 0.0
  %v1747 = vmax.f32 %v1731, 0.0
  %v1748 = vmax.f32 %v1732, 0.0
  %v1749 = vmax.f32 %v1733, 0.0
  %v1750 = vmax.f32 %v1734, 0.0
  %v1751 = vmax.f32 %v1735, 0.0
  %v1752 = vmax.f32 %v1736, 0.0
  %v1753 = vmax.f32 %v1737, 0.0
  %v1754 = vmax.f32 %v1738, 0.0
  %v1755 = vpack.c.bf16 %v1747, %v1739
  %v1756 = vpack.c.bf16 %v1748, %v1740
  %v1757 = vpack.c.bf16 %v1749, %v1741
  %v1758 = vpack.c.bf16 %v1750, %v1742
  %v1759 = vpack.c.bf16 %v1751, %v1743
  %v1760 = vpack.c.bf16 %v1752, %v1744
  %v1761 = vpack.c.bf16 %v1753, %v1745
  %v1762 = vpack.c.bf16 %v1754, %v1746
  %v1771 = vunpack.c.l.b16 %v1755
  %v1772 = vunpack.c.l.b16 %v1756
  %v1773 = vunpack.c.l.b16 %v1757
  %v1774 = vunpack.c.l.b16 %v1758
  %v1775 = vunpack.c.l.b16 %v1759
  %v1776 = vunpack.c.l.b16 %v1760
  %v1777 = vunpack.c.l.b16 %v1761
  %v1778 = vunpack.c.l.b16 %v1762
  %v1779 = vunpack.c.h.b16 %v1755
  %v1780 = vunpack.c.h.b16 %v1756
  %v1781 = vunpack.c.h.b16 %v1757
  %v1782 = vunpack.c.h.b16 %v1758
  %v1783 = vunpack.c.h.b16 %v1759
  %v1784 = vunpack.c.h.b16 %v1760
  %v1785 = vunpack.c.h.b16 %v1761
  %v1786 = vunpack.c.h.b16 %v1762
  %v1787 = vpack.c.b16 %v1772, %v1771
  %v1788 = vpack.c.b16 %v1774, %v1773
  %v1789 = vpack.c.b16 %v1776, %v1775
  %v1790 = vpack.c.b16 %v1778, %v1777
  %v1791 = vpack.c.b16 %v1780, %v1779
  %v1792 = vpack.c.b16 %v1782, %v1781
  %v1793 = vpack.c.b16 %v1784, %v1783
  %v1794 = vpack.c.b16 %v1786, %v1785
  %1803 = vst [vmem:[%s3] sm:$0xff] %v1787
  %1804 = vst [vmem:[%s3 + $0x8] sm:$0xff] %v1788
  %1805 = vst [vmem:[%s3 + $0x10] sm:$0xff] %v1789
  %1806 = vst [vmem:[%s3 + $0x18] sm:$0xff] %v1790
  %1807 = vst [vmem:[%s3 + $0x20] sm:$0xff] %v1791
  %1808 = vst [vmem:[%s3 + $0x28] sm:$0xff] %v1792
  %1809 = vst [vmem:[%s3 + $0x30] sm:$0xff] %v1793
  %1810 = vst [vmem:[%s3 + $0x38] sm:$0xff] %v1794
  // Predicated region
  $region14: #{net_forward.9} parent=0 // pred_check
    _
  $region15: #{net_forward.9} parent=0 // pred_check_branch
    %1812 = sbr.rel (0) target = $region17
  $region16: #{net_forward.9} parent=0 // pred_region
    _
  $region17: #{net_forward.9} parent=0 // pred_fallthru
    _
  // Predicated region
  $region18: #{net_forward.9} parent=0 // pred_check
    _
  $region19: #{net_forward.9} parent=0 // pred_check_branch
    %1814 = sbr.rel (0) target = $region21
  $region20: #{net_forward.9} parent=0 // pred_region
    _
  $region21: #{net_forward.9} parent=0 // pred_fallthru
    _

// kernel: net_forward.10
$region0: #{net_forward.10}
  #allocation0 [shape = 'u32[]', space=smem, size = 0x4, offset = 0x4, fixed_abs, tag = 'smem constant byte address 0x4 - core index']
  #allocation1 [shape = 'u32[144,128]{1,0:T(1,128)}', space=vmem, size = 0x12000, scoped, tag = 'internal scratch']
  %s0 = inlined_call_operand.vmem [shape: bf16[16,144], index: 0, kind: input, shape index: {}]
  %s1 = inlined_call_operand.vmem [shape: bf16[144,1024], index: 1, kind: input, shape index: {}]
  %s2 = inlined_call_operand.vmem [shape: f32[16,1024], index: 2, kind: input, shape index: {}]
  %s3 = inlined_call_operand.vmem [shape: bf16[16,1024], index: 3, kind: output, shape index: {}]
  %s4 = sld [smem:[#allocation0]]
  $region22: #{net_forward.10} parent=0
    _
  %s6 = ssub.s32 1, %s4
  %s7 = scalar_select 0, %s6, %s4
  // Predicated region
  $region2: #{net_forward.10} parent=0 // pred_check
    _
  $region3: #{net_forward.10} parent=0 // pred_check_branch
    %9 = sbr.rel (0) target = $region5
  $region4: #{net_forward.10} parent=0 // pred_region
    _
  $region5: #{net_forward.10} parent=0 // pred_fallthru
    _
  // Predicated region
  $region6: #{net_forward.10} parent=0 // pred_check
    _
  $region7: #{net_forward.10} parent=0 // pred_check_branch
    %11 = sbr.rel (0) target = $region9
  $region8: #{net_forward.10} parent=0 // pred_region
    _
  $region9: #{net_forward.10} parent=0 // pred_fallthru
    _
  // Predicated region
  $region10: #{net_forward.10} parent=0 // pred_check
    _
  $region11: #{net_forward.10} parent=0 // pred_check_branch
    %13 = sbr.rel (0) target = $region13
  $region12: #{net_forward.10} parent=0 // pred_region
    _
  $region13: #{net_forward.10} parent=0 // pred_fallthru
    _
  %v15 = vld [vmem:[%s0] sm:$0xff]
  %v16 = vld [vmem:[%s0 + $0x8] sm:$0xff]
  %v17 = vld [vmem:[%s1] sm:$0xff]
  %v18 = vld [vmem:[%s1 + $0x8] sm:$0xff]
  %v19 = vld [vmem:[%s1 + $0x10] sm:$0xff]
  %v20 = vld [vmem:[%s1 + $0x18] sm:$0xff]
  %v21 = vld [vmem:[%s1 + $0x20] sm:$0xff]
  %v22 = vld [vmem:[%s1 + $0x28] sm:$0xff]
  %v23 = vld [vmem:[%s1 + $0x30] sm:$0xff]
  %v24 = vld [vmem:[%s1 + $0x38] sm:$0xff]
  %v25 = vld [vmem:[%s1 + $0x40] sm:$0xff]
  %v26 = vld [vmem:[%s1 + $0x48] sm:$0xff]
  %v27 = vld [vmem:[%s1 + $0x50] sm:$0xff]
  %v28 = vld [vmem:[%s1 + $0x58] sm:$0xff]
  %v29 = vld [vmem:[%s1 + $0x60] sm:$0xff]
  %v30 = vld [vmem:[%s1 + $0x68] sm:$0xff]
  %v31 = vld [vmem:[%s1 + $0x70] sm:$0xff]
  %v32 = vld [vmem:[%s1 + $0x78] sm:$0xff]
  %v33 = vld [vmem:[%s1 + $0x80] sm:$0xff]
  %v34 = vld [vmem:[%s1 + $0x88] sm:$0xff]
  %v35 = vld [vmem:[%s1 + $0x90] sm:$0xff]
  %v36 = vld [vmem:[%s1 + $0x98] sm:$0xff]
  %v37 = vld [vmem:[%s1 + $0xa0] sm:$0xff]
  %v38 = vld [vmem:[%s1 + $0xa8] sm:$0xff]
  %v39 = vld [vmem:[%s1 + $0xb0] sm:$0xff]
  %v40 = vld [vmem:[%s1 + $0xb8] sm:$0xff]
  %v41 = vld [vmem:[%s1 + $0xc0] sm:$0xff]
  %v42 = vld [vmem:[%s1 + $0xc8] sm:$0xff]
  %v43 = vld [vmem:[%s1 + $0xd0] sm:$0xff]
  %v44 = vld [vmem:[%s1 + $0xd8] sm:$0xff]
  %v45 = vld [vmem:[%s1 + $0xe0] sm:$0xff]
  %v46 = vld [vmem:[%s1 + $0xe8] sm:$0xff]
  %v47 = vld [vmem:[%s1 + $0xf0] sm:$0xff]
  %v48 = vld [vmem:[%s1 + $0xf8] sm:$0xff]
  %v49 = vld [vmem:[%s1 + $0x100] sm:$0xff]
  %v50 = vld [vmem:[%s1 + $0x108] sm:$0xff]
  %v51 = vld [vmem:[%s1 + $0x110] sm:$0xff]
  %v52 = vld [vmem:[%s1 + $0x118] sm:$0xff]
  %v53 = vld [vmem:[%s1 + $0x120] sm:$0xff]
  %v54 = vld [vmem:[%s1 + $0x128] sm:$0xff]
  %v55 = vld [vmem:[%s1 + $0x130] sm:$0xff]
  %v56 = vld [vmem:[%s1 + $0x138] sm:$0xff]
  %v57 = vld [vmem:[%s1 + $0x140] sm:$0xff]
  %v58 = vld [vmem:[%s1 + $0x148] sm:$0xff]
  %v59 = vld [vmem:[%s1 + $0x150] sm:$0xff]
  %v60 = vld [vmem:[%s1 + $0x158] sm:$0xff]
  %v61 = vld [vmem:[%s1 + $0x160] sm:$0xff]
  %v62 = vld [vmem:[%s1 + $0x168] sm:$0xff]
  %v63 = vld [vmem:[%s1 + $0x170] sm:$0xff]
  %v64 = vld [vmem:[%s1 + $0x178] sm:$0xff]
  %v65 = vld [vmem:[%s1 + $0x180] sm:$0xff]
  %v66 = vld [vmem:[%s1 + $0x188] sm:$0xff]
  %v67 = vld [vmem:[%s1 + $0x190] sm:$0xff]
  %v68 = vld [vmem:[%s1 + $0x198] sm:$0xff]
  %v69 = vld [vmem:[%s1 + $0x1a0] sm:$0xff]
  %v70 = vld [vmem:[%s1 + $0x1a8] sm:$0xff]
  %v71 = vld [vmem:[%s1 + $0x1b0] sm:$0xff]
  %v72 = vld [vmem:[%s1 + $0x1b8] sm:$0xff]
  %v73 = vld [vmem:[%s1 + $0x1c0] sm:$0xff]
  %v74 = vld [vmem:[%s1 + $0x1c8] sm:$0xff]
  %v75 = vld [vmem:[%s1 + $0x1d0] sm:$0xff]
  %v76 = vld [vmem:[%s1 + $0x1d8] sm:$0xff]
  %v77 = vld [vmem:[%s1 + $0x1e0] sm:$0xff]
  %v78 = vld [vmem:[%s1 + $0x1e8] sm:$0xff]
  %v79 = vld [vmem:[%s1 + $0x1f0] sm:$0xff]
  %v80 = vld [vmem:[%s1 + $0x1f8] sm:$0xff]
  %v81 = vld [vmem:[%s1 + $0x200] sm:$0xff]
  %v82 = vld [vmem:[%s1 + $0x208] sm:$0xff]
  %v83 = vld [vmem:[%s1 + $0x210] sm:$0xff]
  %v84 = vld [vmem:[%s1 + $0x218] sm:$0xff]
  %v85 = vld [vmem:[%s1 + $0x220] sm:$0xff]
  %v86 = vld [vmem:[%s1 + $0x228] sm:$0xff]
  %v87 = vld [vmem:[%s1 + $0x230] sm:$0xff]
  %v88 = vld [vmem:[%s1 + $0x238] sm:$0xff]
  %v89 = vld [vmem:[%s2] sm:$0xff]
  %v90 = vld [vmem:[%s2 + $0x8] sm:$0xff]
  %v91 = vld [vmem:[%s2 + $0x10] sm:$0xff]
  %v92 = vld [vmem:[%s2 + $0x18] sm:$0xff]
  %v93 = vld [vmem:[%s2 + $0x20] sm:$0xff]
  %v94 = vld [vmem:[%s2 + $0x28] sm:$0xff]
  %v95 = vld [vmem:[%s2 + $0x30] sm:$0xff]
  %v96 = vld [vmem:[%s2 + $0x38] sm:$0xff]
  %v97 = vld [vmem:[%s2 + $0x40] sm:$0xff]
  %v98 = vld [vmem:[%s2 + $0x48] sm:$0xff]
  %v99 = vld [vmem:[%s2 + $0x50] sm:$0xff]
  %v100 = vld [vmem:[%s2 + $0x58] sm:$0xff]
  %v101 = vld [vmem:[%s2 + $0x60] sm:$0xff]
  %v102 = vld [vmem:[%s2 + $0x68] sm:$0xff]
  %v103 = vld [vmem:[%s2 + $0x70] sm:$0xff]
  %v104 = vld [vmem:[%s2 + $0x78] sm:$0xff]
  %v107 = vunpack.c.l.b16 %v15
  %v108 = vunpack.c.h.b16 %v15
  %v109 = vunpack.c.l.b16 %v16
  %v110 = vunpack.c.h.b16 %v16
  %v111 = vpack.c.b16 %v109, %v107
  %v112 = vpack.c.b16 %v110, %v108
  %v186 = vunpack.c.l.b16 %v17
  %v187 = vunpack.c.h.b16 %v17
  %v188 = vunpack.c.l.b16 %v18
  %v189 = vunpack.c.h.b16 %v18
  %v190 = vunpack.c.l.b16 %v19
  %v191 = vunpack.c.h.b16 %v19
  %v192 = vunpack.c.l.b16 %v20
  %v193 = vunpack.c.h.b16 %v20
  %v194 = vunpack.c.l.b16 %v21
  %v195 = vunpack.c.h.b16 %v21
  %v196 = vunpack.c.l.b16 %v22
  %v197 = vunpack.c.h.b16 %v22
  %v198 = vunpack.c.l.b16 %v23
  %v199 = vunpack.c.h.b16 %v23
  %v200 = vunpack.c.l.b16 %v24
  %v201 = vunpack.c.h.b16 %v24
  %v202 = vunpack.c.l.b16 %v25
  %v203 = vunpack.c.h.b16 %v25
  %v204 = vunpack.c.l.b16 %v26
  %v205 = vunpack.c.h.b16 %v26
  %v206 = vunpack.c.l.b16 %v27
  %v207 = vunpack.c.h.b16 %v27
  %v208 = vunpack.c.l.b16 %v28
  %v209 = vunpack.c.h.b16 %v28
  %v210 = vunpack.c.l.b16 %v29
  %v211 = vunpack.c.h.b16 %v29
  %v212 = vunpack.c.l.b16 %v30
  %v213 = vunpack.c.h.b16 %v30
  %v214 = vunpack.c.l.b16 %v31
  %v215 = vunpack.c.h.b16 %v31
  %v216 = vunpack.c.l.b16 %v32
  %v217 = vunpack.c.h.b16 %v32
  %v218 = vunpack.c.l.b16 %v33
  %v219 = vunpack.c.h.b16 %v33
  %v220 = vunpack.c.l.b16 %v34
  %v221 = vunpack.c.h.b16 %v34
  %v222 = vunpack.c.l.b16 %v35
  %v223 = vunpack.c.h.b16 %v35
  %v224 = vunpack.c.l.b16 %v36
  %v225 = vunpack.c.h.b16 %v36
  %v226 = vunpack.c.l.b16 %v37
  %v227 = vunpack.c.h.b16 %v37
  %v228 = vunpack.c.l.b16 %v38
  %v229 = vunpack.c.h.b16 %v38
  %v230 = vunpack.c.l.b16 %v39
  %v231 = vunpack.c.h.b16 %v39
  %v232 = vunpack.c.l.b16 %v40
  %v233 = vunpack.c.h.b16 %v40
  %v234 = vunpack.c.l.b16 %v41
  %v235 = vunpack.c.h.b16 %v41
  %v236 = vunpack.c.l.b16 %v42
  %v237 = vunpack.c.h.b16 %v42
  %v238 = vunpack.c.l.b16 %v43
  %v239 = vunpack.c.h.b16 %v43
  %v240 = vunpack.c.l.b16 %v44
  %v241 = vunpack.c.h.b16 %v44
  %v242 = vunpack.c.l.b16 %v45
  %v243 = vunpack.c.h.b16 %v45
  %v244 = vunpack.c.l.b16 %v46
  %v245 = vunpack.c.h.b16 %v46
  %v246 = vunpack.c.l.b16 %v47
  %v247 = vunpack.c.h.b16 %v47
  %v248 = vunpack.c.l.b16 %v48
  %v249 = vunpack.c.h.b16 %v48
  %v250 = vunpack.c.l.b16 %v49
  %v251 = vunpack.c.h.b16 %v49
  %v252 = vunpack.c.l.b16 %v50
  %v253 = vunpack.c.h.b16 %v50
  %v254 = vunpack.c.l.b16 %v51
  %v255 = vunpack.c.h.b16 %v51
  %v256 = vunpack.c.l.b16 %v52
  %v257 = vunpack.c.h.b16 %v52
  %v258 = vunpack.c.l.b16 %v53
  %v259 = vunpack.c.h.b16 %v53
  %v260 = vunpack.c.l.b16 %v54
  %v261 = vunpack.c.h.b16 %v54
  %v262 = vunpack.c.l.b16 %v55
  %v263 = vunpack.c.h.b16 %v55
  %v264 = vunpack.c.l.b16 %v56
  %v265 = vunpack.c.h.b16 %v56
  %v266 = vunpack.c.l.b16 %v57
  %v267 = vunpack.c.h.b16 %v57
  %v268 = vunpack.c.l.b16 %v58
  %v269 = vunpack.c.h.b16 %v58
  %v270 = vunpack.c.l.b16 %v59
  %v271 = vunpack.c.h.b16 %v59
  %v272 = vunpack.c.l.b16 %v60
  %v273 = vunpack.c.h.b16 %v60
  %v274 = vunpack.c.l.b16 %v61
  %v275 = vunpack.c.h.b16 %v61
  %v276 = vunpack.c.l.b16 %v62
  %v277 = vunpack.c.h.b16 %v62
  %v278 = vunpack.c.l.b16 %v63
  %v279 = vunpack.c.h.b16 %v63
  %v280 = vunpack.c.l.b16 %v64
  %v281 = vunpack.c.h.b16 %v64
  %v282 = vunpack.c.l.b16 %v65
  %v283 = vunpack.c.h.b16 %v65
  %v284 = vunpack.c.l.b16 %v66
  %v285 = vunpack.c.h.b16 %v66
  %v286 = vunpack.c.l.b16 %v67
  %v287 = vunpack.c.h.b16 %v67
  %v288 = vunpack.c.l.b16 %v68
  %v289 = vunpack.c.h.b16 %v68
  %v290 = vunpack.c.l.b16 %v69
  %v291 = vunpack.c.h.b16 %v69
  %v292 = vunpack.c.l.b16 %v70
  %v293 = vunpack.c.h.b16 %v70
  %v294 = vunpack.c.l.b16 %v71
  %v295 = vunpack.c.h.b16 %v71
  %v296 = vunpack.c.l.b16 %v72
  %v297 = vunpack.c.h.b16 %v72
  %v298 = vunpack.c.l.b16 %v73
  %v299 = vunpack.c.h.b16 %v73
  %v300 = vunpack.c.l.b16 %v74
  %v301 = vunpack.c.h.b16 %v74
  %v302 = vunpack.c.l.b16 %v75
  %v303 = vunpack.c.h.b16 %v75
  %v304 = vunpack.c.l.b16 %v76
  %v305 = vunpack.c.h.b16 %v76
  %v306 = vunpack.c.l.b16 %v77
  %v307 = vunpack.c.h.b16 %v77
  %v308 = vunpack.c.l.b16 %v78
  %v309 = vunpack.c.h.b16 %v78
  %v310 = vunpack.c.l.b16 %v79
  %v311 = vunpack.c.h.b16 %v79
  %v312 = vunpack.c.l.b16 %v80
  %v313 = vunpack.c.h.b16 %v80
  %v314 = vunpack.c.l.b16 %v81
  %v315 = vunpack.c.h.b16 %v81
  %v316 = vunpack.c.l.b16 %v82
  %v317 = vunpack.c.h.b16 %v82
  %v318 = vunpack.c.l.b16 %v83
  %v319 = vunpack.c.h.b16 %v83
  %v320 = vunpack.c.l.b16 %v84
  %v321 = vunpack.c.h.b16 %v84
  %v322 = vunpack.c.l.b16 %v85
  %v323 = vunpack.c.h.b16 %v85
  %v324 = vunpack.c.l.b16 %v86
  %v325 = vunpack.c.h.b16 %v86
  %v326 = vunpack.c.l.b16 %v87
  %v327 = vunpack.c.h.b16 %v87
  %v328 = vunpack.c.l.b16 %v88
  %v329 = vunpack.c.h.b16 %v88
  %v330 = vpack.c.b16 %v194, %v186
  %v331 = vpack.c.b16 %v195, %v187
  %v332 = vpack.c.b16 %v196, %v188
  %v333 = vpack.c.b16 %v197, %v189
  %v334 = vpack.c.b16 %v198, %v190
  %v335 = vpack.c.b16 %v199, %v191
  %v336 = vpack.c.b16 %v200, %v192
  %v337 = vpack.c.b16 %v201, %v193
  %v338 = vpack.c.b16 %v210, %v202
  %v339 = vpack.c.b16 %v211, %v203
  %v340 = vpack.c.b16 %v212, %v204
  %v341 = vpack.c.b16 %v213, %v205
  %v342 = vpack.c.b16 %v214, %v206
  %v343 = vpack.c.b16 %v215, %v207
  %v344 = vpack.c.b16 %v216, %v208
  %v345 = vpack.c.b16 %v217, %v209
  %v346 = vpack.c.b16 %v226, %v218
  %v347 = vpack.c.b16 %v227, %v219
  %v348 = vpack.c.b16 %v228, %v220
  %v349 = vpack.c.b16 %v229, %v221
  %v350 = vpack.c.b16 %v230, %v222
  %v351 = vpack.c.b16 %v231, %v223
  %v352 = vpack.c.b16 %v232, %v224
  %v353 = vpack.c.b16 %v233, %v225
  %v354 = vpack.c.b16 %v242, %v234
  %v355 = vpack.c.b16 %v243, %v235
  %v356 = vpack.c.b16 %v244, %v236
  %v357 = vpack.c.b16 %v245, %v237
  %v358 = vpack.c.b16 %v246, %v238
  %v359 = vpack.c.b16 %v247, %v239
  %v360 = vpack.c.b16 %v248, %v240
  %v361 = vpack.c.b16 %v249, %v241
  %v362 = vpack.c.b16 %v258, %v250
  %v363 = vpack.c.b16 %v259, %v251
  %v364 = vpack.c.b16 %v260, %v252
  %v365 = vpack.c.b16 %v261, %v253
  %v366 = vpack.c.b16 %v262, %v254
  %v367 = vpack.c.b16 %v263, %v255
  %v368 = vpack.c.b16 %v264, %v256
  %v369 = vpack.c.b16 %v265, %v257
  %v370 = vpack.c.b16 %v274, %v266
  %v371 = vpack.c.b16 %v275, %v267
  %v372 = vpack.c.b16 %v276, %v268
  %v373 = vpack.c.b16 %v277, %v269
  %v374 = vpack.c.b16 %v278, %v270
  %v375 = vpack.c.b16 %v279, %v271
  %v376 = vpack.c.b16 %v280, %v272
  %v377 = vpack.c.b16 %v281, %v273
  %v378 = vpack.c.b16 %v290, %v282
  %v379 = vpack.c.b16 %v291, %v283
  %v380 = vpack.c.b16 %v292, %v284
  %v381 = vpack.c.b16 %v293, %v285
  %v382 = vpack.c.b16 %v294, %v286
  %v383 = vpack.c.b16 %v295, %v287
  %v384 = vpack.c.b16 %v296, %v288
  %v385 = vpack.c.b16 %v297, %v289
  %v386 = vpack.c.b16 %v306, %v298
  %v387 = vpack.c.b16 %v307, %v299
  %v388 = vpack.c.b16 %v308, %v300
  %v389 = vpack.c.b16 %v309, %v301
  %v390 = vpack.c.b16 %v310, %v302
  %v391 = vpack.c.b16 %v311, %v303
  %v392 = vpack.c.b16 %v312, %v304
  %v393 = vpack.c.b16 %v313, %v305
  %v394 = vpack.c.b16 %v322, %v314
  %v395 = vpack.c.b16 %v323, %v315
  %v396 = vpack.c.b16 %v324, %v316
  %v397 = vpack.c.b16 %v325, %v317
  %v398 = vpack.c.b16 %v326, %v318
  %v399 = vpack.c.b16 %v327, %v319
  %v400 = vpack.c.b16 %v328, %v320
  %v401 = vpack.c.b16 %v329, %v321
  %vm474 = vcmask 130048
  %v476 = vsel %vm474, %v112, 0
  %478 = vmatprep.subr.bf16.mxu0 %v331
  %479 = vmatpush1.bf16.msra.mxu0 %v330
  %480 = vmatprep.subr.bf16.mxu0 %v339
  %481 = vmatpush1.bf16.msra.mxu0 %v338
  %482 = vmatprep.subr.bf16.mxu0 %v347
  %483 = vmatpush1.bf16.msra.mxu0 %v346
  %484 = vmatprep.subr.bf16.mxu0 %v355
  %485 = vmatpush1.bf16.msra.mxu0 %v354
  %486 = vmatprep.subr.bf16.mxu0 %v363
  %487 = vmatpush1.bf16.msra.mxu0 %v362
  %488 = vmatprep.subr.bf16.mxu0 %v371
  %489 = vmatpush1.bf16.msra.mxu0 %v370
  %490 = vmatprep.subr.bf16.mxu0 %v379
  %491 = vmatpush1.bf16.msra.mxu0 %v378
  %492 = vmatprep.subr.bf16.mxu0 %v387
  %493 = vmatpush1.bf16.msra.mxu0 %v386
  %494 = vmatprep.subr.bf16.mxu0 %v395
  %495 = vmatpush1.bf16.msra.mxu0 %v394
  %496 = vmatprep.subr.bf16.mxu0 0
  %497 = vmatpush1.bf16.msra.mxu0 0
  %498 = vmatprep.subr.bf16.mxu0 0
  %499 = vmatpush1.bf16.msra.mxu0 0
  %500 = vmatprep.subr.bf16.mxu0 0
  %501 = vmatpush1.bf16.msra.mxu0 0
  %502 = vmatprep.subr.bf16.mxu0 0
  %503 = vmatpush1.bf16.msra.mxu0 0
  %504 = vmatprep.subr.bf16.mxu0 0
  %505 = vmatpush1.bf16.msra.mxu0 0
  %506 = vmatprep.subr.bf16.mxu0 0
  %507 = vmatpush1.bf16.msra.mxu0 0
  %508 = vmatprep.subr.bf16.mxu0 0
  %509 = vmatpush1.bf16.msra.mxu0 0
  %510 = vmatprep.mubr.bf16.mxu0 %v476
  %511 = vmatmul.mubr.bf16.gmra.mrb[0].mxu0 %v111
  %v512 = vpop.f32.mrb[0].mxu0
  %v513 = vadd.f32 %v89, %v512
  %v514 = vpop.f32.mrb[0].mxu0
  %v515 = vadd.f32 %v90, %v514
  %v516 = vpop.f32.mrb[0].mxu0
  %v517 = vadd.f32 %v97, %v516
  %v518 = vpop.f32.mrb[0].mxu0
  %v519 = vadd.f32 %v98, %v518
  %520 = vdwg.mxu0
  %521 = vmatprep.subr.bf16.mxu0 %v333
  %522 = vmatpush1.bf16.msra.mxu0 %v332
  %523 = vmatprep.subr.bf16.mxu0 %v341
  %524 = vmatpush1.bf16.msra.mxu0 %v340
  %525 = vmatprep.subr.bf16.mxu0 %v349
  %526 = vmatpush1.bf16.msra.mxu0 %v348
  %527 = vmatprep.subr.bf16.mxu0 %v357
  %528 = vmatpush1.bf16.msra.mxu0 %v356
  %529 = vmatprep.subr.bf16.mxu0 %v365
  %530 = vmatpush1.bf16.msra.mxu0 %v364
  %531 = vmatprep.subr.bf16.mxu0 %v373
  %532 = vmatpush1.bf16.msra.mxu0 %v372
  %533 = vmatprep.subr.bf16.mxu0 %v381
  %534 = vmatpush1.bf16.msra.mxu0 %v380
  %535 = vmatprep.subr.bf16.mxu0 %v389
  %536 = vmatpush1.bf16.msra.mxu0 %v388
  %537 = vmatprep.subr.bf16.mxu0 %v397
  %538 = vmatpush1.bf16.msra.mxu0 %v396
  %539 = vmatprep.subr.bf16.mxu0 0
  %540 = vmatpush1.bf16.msra.mxu0 0
  %541 = vmatprep.subr.bf16.mxu0 0
  %542 = vmatpush1.bf16.msra.mxu0 0
  %543 = vmatprep.subr.bf16.mxu0 0
  %544 = vmatpush1.bf16.msra.mxu0 0
  %545 = vmatprep.subr.bf16.mxu0 0
  %546 = vmatpush1.bf16.msra.mxu0 0
  %547 = vmatprep.subr.bf16.mxu0 0
  %548 = vmatpush1.bf16.msra.mxu0 0
  %549 = vmatprep.subr.bf16.mxu0 0
  %550 = vmatpush1.bf16.msra.mxu0 0
  %551 = vmatprep.subr.bf16.mxu0 0
  %552 = vmatpush1.bf16.msra.mxu0 0
  %553 = vmatprep.mubr.bf16.mxu0 %v476
  %554 = vmatmul.mubr.bf16.gmra.mrb[0].mxu0 %v111
  %v555 = vpop.f32.mrb[0].mxu0
  %v556 = vadd.f32 %v91, %v555
  %v557 = vpop.f32.mrb[0].mxu0
  %v558 = vadd.f32 %v92, %v557
  %v559 = vpop.f32.mrb[0].mxu0
  %v560 = vadd.f32 %v99, %v559
  %v561 = vpop.f32.mrb[0].mxu0
  %v562 = vadd.f32 %v100, %v561
  %563 = vdwg.mxu0
  %564 = vmatprep.subr.bf16.mxu0 %v335
  %565 = vmatpush1.bf16.msra.mxu0 %v334
  %566 = vmatprep.subr.bf16.mxu0 %v343
  %567 = vmatpush1.bf16.msra.mxu0 %v342
  %568 = vmatprep.subr.bf16.mxu0 %v351
  %569 = vmatpush1.bf16.msra.mxu0 %v350
  %570 = vmatprep.subr.bf16.mxu0 %v359
  %571 = vmatpush1.bf16.msra.mxu0 %v358
  %572 = vmatprep.subr.bf16.mxu0 %v367
  %573 = vmatpush1.bf16.msra.mxu0 %v366
  %574 = vmatprep.subr.bf16.mxu0 %v375
  %575 = vmatpush1.bf16.msra.mxu0 %v374
  %576 = vmatprep.subr.bf16.mxu0 %v383
  %577 = vmatpush1.bf16.msra.mxu0 %v382
  %578 = vmatprep.subr.bf16.mxu0 %v391
  %579 = vmatpush1.bf16.msra.mxu0 %v390
  %580 = vmatprep.subr.bf16.mxu0 %v399
  %581 = vmatpush1.bf16.msra.mxu0 %v398
  %582 = vmatprep.subr.bf16.mxu0 0
  %583 = vmatpush1.bf16.msra.mxu0 0
  %584 = vmatprep.subr.bf16.mxu0 0
  %585 = vmatpush1.bf16.msra.mxu0 0
  %586 = vmatprep.subr.bf16.mxu0 0
  %587 = vmatpush1.bf16.msra.mxu0 0
  %588 = vmatprep.subr.bf16.mxu0 0
  %589 = vmatpush1.bf16.msra.mxu0 0
  %590 = vmatprep.subr.bf16.mxu0 0
  %591 = vmatpush1.bf16.msra.mxu0 0
  %592 = vmatprep.subr.bf16.mxu0 0
  %593 = vmatpush1.bf16.msra.mxu0 0
  %594 = vmatprep.subr.bf16.mxu0 0
  %595 = vmatpush1.bf16.msra.mxu0 0
  %596 = vmatprep.mubr.bf16.mxu0 %v476
  %597 = vmatmul.mubr.bf16.gmra.mrb[0].mxu0 %v111
  %v598 = vpop.f32.mrb[0].mxu0
  %v599 = vadd.f32 %v93, %v598
  %v600 = vpop.f32.mrb[0].mxu0
  %v601 = vadd.f32 %v94, %v600
  %v602 = vpop.f32.mrb[0].mxu0
  %v603 = vadd.f32 %v101, %v602
  %v604 = vpop.f32.mrb[0].mxu0
  %v605 = vadd.f32 %v102, %v604
  %606 = vdwg.mxu0
  %607 = vmatprep.subr.bf16.mxu0 %v337
  %608 = vmatpush1.bf16.msra.mxu0 %v336
  %609 = vmatprep.subr.bf16.mxu0 %v345
  %610 = vmatpush1.bf16.msra.mxu0 %v344
  %611 = vmatprep.subr.bf16.mxu0 %v353
  %612 = vmatpush1.bf16.msra.mxu0 %v352
  %613 = vmatprep.subr.bf16.mxu0 %v361
  %614 = vmatpush1.bf16.msra.mxu0 %v360
  %615 = vmatprep.subr.bf16.mxu0 %v369
  %616 = vmatpush1.bf16.msra.mxu0 %v368
  %617 = vmatprep.subr.bf16.mxu0 %v377
  %618 = vmatpush1.bf16.msra.mxu0 %v376
  %619 = vmatprep.subr.bf16.mxu0 %v385
  %620 = vmatpush1.bf16.msra.mxu0 %v384
  %621 = vmatprep.subr.bf16.mxu0 %v393
  %622 = vmatpush1.bf16.msra.mxu0 %v392
  %623 = vmatprep.subr.bf16.mxu0 %v401
  %624 = vmatpush1.bf16.msra.mxu0 %v400
  %625 = vmatprep.subr.bf16.mxu0 0
  %626 = vmatpush1.bf16.msra.mxu0 0
  %627 = vmatprep.subr.bf16.mxu0 0
  %628 = vmatpush1.bf16.msra.mxu0 0
  %629 = vmatprep.subr.bf16.mxu0 0
  %630 = vmatpush1.bf16.msra.mxu0 0
  %631 = vmatprep.subr.bf16.mxu0 0
  %632 = vmatpush1.bf16.msra.mxu0 0
  %633 = vmatprep.subr.bf16.mxu0 0
  %634 = vmatpush1.bf16.msra.mxu0 0
  %635 = vmatprep.subr.bf16.mxu0 0
  %636 = vmatpush1.bf16.msra.mxu0 0
  %637 = vmatprep.subr.bf16.mxu0 0
  %638 = vmatpush1.bf16.msra.mxu0 0
  %639 = vmatprep.mubr.bf16.mxu0 %v476
  %640 = vmatmul.mubr.bf16.gmra.mrb[0].mxu0 %v111
  %v641 = vpop.f32.mrb[0].mxu0
  %v642 = vadd.f32 %v95, %v641
  %v643 = vpop.f32.mrb[0].mxu0
  %v644 = vadd.f32 %v96, %v643
  %v645 = vpop.f32.mrb[0].mxu0
  %v646 = vadd.f32 %v103, %v645
  %v647 = vpop.f32.mrb[0].mxu0
  %v648 = vadd.f32 %v104, %v647
  %649 = vdwg.mxu0
  %v650 = vpack.c.bf16 %v517, %v513
  %v651 = vpack.c.bf16 %v519, %v515
  %v652 = vpack.c.bf16 %v560, %v556
  %v653 = vpack.c.bf16 %v562, %v558
  %v654 = vpack.c.bf16 %v603, %v599
  %v655 = vpack.c.bf16 %v605, %v601
  %v656 = vpack.c.bf16 %v646, %v642
  %v657 = vpack.c.bf16 %v648, %v644
  %v666 = vunpack.c.l.b16 %v650
  %v667 = vunpack.c.l.b16 %v651
  %v668 = vunpack.c.l.b16 %v652
  %v669 = vunpack.c.l.b16 %v653
  %v670 = vunpack.c.l.b16 %v654
  %v671 = vunpack.c.l.b16 %v655
  %v672 = vunpack.c.l.b16 %v656
  %v673 = vunpack.c.l.b16 %v657
  %v674 = vunpack.c.h.b16 %v650
  %v675 = vunpack.c.h.b16 %v651
  %v676 = vunpack.c.h.b16 %v652
  %v677 = vunpack.c.h.b16 %v653
  %v678 = vunpack.c.h.b16 %v654
  %v679 = vunpack.c.h.b16 %v655
  %v680 = vunpack.c.h.b16 %v656
  %v681 = vunpack.c.h.b16 %v657
  %v682 = vpack.c.b16 %v667, %v666
  %v683 = vpack.c.b16 %v669, %v668
  %v684 = vpack.c.b16 %v671, %v670
  %v685 = vpack.c.b16 %v673, %v672
  %v686 = vpack.c.b16 %v675, %v674
  %v687 = vpack.c.b16 %v677, %v676
  %v688 = vpack.c.b16 %v679, %v678
  %v689 = vpack.c.b16 %v681, %v680
  %698 = vst [vmem:[%s3] sm:$0xff] %v682
  %699 = vst [vmem:[%s3 + $0x8] sm:$0xff] %v683
  %700 = vst [vmem:[%s3 + $0x10] sm:$0xff] %v684
  %701 = vst [vmem:[%s3 + $0x18] sm:$0xff] %v685
  %702 = vst [vmem:[%s3 + $0x20] sm:$0xff] %v686
  %703 = vst [vmem:[%s3 + $0x28] sm:$0xff] %v687
  %704 = vst [vmem:[%s3 + $0x30] sm:$0xff] %v688
  %705 = vst [vmem:[%s3 + $0x38] sm:$0xff] %v689
  // Predicated region
  $region14: #{net_forward.10} parent=0 // pred_check
    _
  $region15: #{net_forward.10} parent=0 // pred_check_branch
    %707 = sbr.rel (0) target = $region17
  $region16: #{net_forward.10} parent=0 // pred_region
    _
  $region17: #{net_forward.10} parent=0 // pred_fallthru
    _
  // Predicated region
  $region18: #{net_forward.10} parent=0 // pred_check
    _
  $region19: #{net_forward.10} parent=0 // pred_check_branch
    %709 = sbr.rel (0) target = $region21
  $region20: #{net_forward.10} parent=0 // pred_region
    _
  $region21: #{net_forward.10} parent=0 // pred_fallthru
    _

// kernel: net_forward.11
$region0: #{net_forward.11}
  #allocation0 [shape = 'u32[]', space=smem, size = 0x4, offset = 0x4, fixed_abs, tag = 'smem constant byte address 0x4 - core index']
  #allocation1 [shape = 'u32[144,128]{1,0:T(1,128)}', space=vmem, size = 0x12000, scoped, tag = 'internal scratch']
  %s0 = inlined_call_operand.vmem [shape: bf16[2,16], index: 0, kind: input, shape index: {}]
  %s1 = inlined_call_operand.vmem [shape: bf16[16,8192], index: 1, kind: input, shape index: {}]
  %s2 = inlined_call_operand.vmem [shape: f32[2,8192], index: 2, kind: output, shape index: {}]
  %s3 = sld [smem:[#allocation0]]
  $region18: #{net_forward.11} parent=0
    _
  %s5 = ssub.s32 1, %s3
  %s6 = scalar_select 0, %s5, %s3
  // Predicated region
  $region2: #{net_forward.11} parent=0 // pred_check
    _
  $region3: #{net_forward.11} parent=0 // pred_check_branch
    %8 = sbr.rel (0) target = $region5
  $region4: #{net_forward.11} parent=0 // pred_region
    _
  $region5: #{net_forward.11} parent=0 // pred_fallthru
    _
  // Predicated region
  $region6: #{net_forward.11} parent=0 // pred_check
    _
  $region7: #{net_forward.11} parent=0 // pred_check_branch
    %10 = sbr.rel (0) target = $region9
  $region8: #{net_forward.11} parent=0 // pred_region
    _
  $region9: #{net_forward.11} parent=0 // pred_fallthru
    _
  %v12 = vld [vmem:[%s0] sm:$0x1]
  %v13 = vld [vmem:[%s1] sm:$0xff]
  %v14 = vld [vmem:[%s1 + $0x8] sm:$0xff]
  %v15 = vld [vmem:[%s1 + $0x10] sm:$0xff]
  %v16 = vld [vmem:[%s1 + $0x18] sm:$0xff]
  %v17 = vld [vmem:[%s1 + $0x20] sm:$0xff]
  %v18 = vld [vmem:[%s1 + $0x28] sm:$0xff]
  %v19 = vld [vmem:[%s1 + $0x30] sm:$0xff]
  %v20 = vld [vmem:[%s1 + $0x38] sm:$0xff]
  %v21 = vld [vmem:[%s1 + $0x40] sm:$0xff]
  %v22 = vld [vmem:[%s1 + $0x48] sm:$0xff]
  %v23 = vld [vmem:[%s1 + $0x50] sm:$0xff]
  %v24 = vld [vmem:[%s1 + $0x58] sm:$0xff]
  %v25 = vld [vmem:[%s1 + $0x60] sm:$0xff]
  %v26 = vld [vmem:[%s1 + $0x68] sm:$0xff]
  %v27 = vld [vmem:[%s1 + $0x70] sm:$0xff]
  %v28 = vld [vmem:[%s1 + $0x78] sm:$0xff]
  %v29 = vld [vmem:[%s1 + $0x80] sm:$0xff]
  %v30 = vld [vmem:[%s1 + $0x88] sm:$0xff]
  %v31 = vld [vmem:[%s1 + $0x90] sm:$0xff]
  %v32 = vld [vmem:[%s1 + $0x98] sm:$0xff]
  %v33 = vld [vmem:[%s1 + $0xa0] sm:$0xff]
  %v34 = vld [vmem:[%s1 + $0xa8] sm:$0xff]
  %v35 = vld [vmem:[%s1 + $0xb0] sm:$0xff]
  %v36 = vld [vmem:[%s1 + $0xb8] sm:$0xff]
  %v37 = vld [vmem:[%s1 + $0xc0] sm:$0xff]
  %v38 = vld [vmem:[%s1 + $0xc8] sm:$0xff]
  %v39 = vld [vmem:[%s1 + $0xd0] sm:$0xff]
  %v40 = vld [vmem:[%s1 + $0xd8] sm:$0xff]
  %v41 = vld [vmem:[%s1 + $0xe0] sm:$0xff]
  %v42 = vld [vmem:[%s1 + $0xe8] sm:$0xff]
  %v43 = vld [vmem:[%s1 + $0xf0] sm:$0xff]
  %v44 = vld [vmem:[%s1 + $0xf8] sm:$0xff]
  %v45 = vld [vmem:[%s1 + $0x100] sm:$0xff]
  %v46 = vld [vmem:[%s1 + $0x108] sm:$0xff]
  %v47 = vld [vmem:[%s1 + $0x110] sm:$0xff]
  %v48 = vld [vmem:[%s1 + $0x118] sm:$0xff]
  %v49 = vld [vmem:[%s1 + $0x120] sm:$0xff]
  %v50 = vld [vmem:[%s1 + $0x128] sm:$0xff]
  %v51 = vld [vmem:[%s1 + $0x130] sm:$0xff]
  %v52 = vld [vmem:[%s1 + $0x138] sm:$0xff]
  %v53 = vld [vmem:[%s1 + $0x140] sm:$0xff]
  %v54 = vld [vmem:[%s1 + $0x148] sm:$0xff]
  %v55 = vld [vmem:[%s1 + $0x150] sm:$0xff]
  %v56 = vld [vmem:[%s1 + $0x158] sm:$0xff]
  %v57 = vld [vmem:[%s1 + $0x160] sm:$0xff]
  %v58 = vld [vmem:[%s1 + $0x168] sm:$0xff]
  %v59 = vld [vmem:[%s1 + $0x170] sm:$0xff]
  %v60 = vld [vmem:[%s1 + $0x178] sm:$0xff]
  %v61 = vld [vmem:[%s1 + $0x180] sm:$0xff]
  %v62 = vld [vmem:[%s1 + $0x188] sm:$0xff]
  %v63 = vld [vmem:[%s1 + $0x190] sm:$0xff]
  %v64 = vld [vmem:[%s1 + $0x198] sm:$0xff]
  %v65 = vld [vmem:[%s1 + $0x1a0] sm:$0xff]
  %v66 = vld [vmem:[%s1 + $0x1a8] sm:$0xff]
  %v67 = vld [vmem:[%s1 + $0x1b0] sm:$0xff]
  %v68 = vld [vmem:[%s1 + $0x1b8] sm:$0xff]
  %v69 = vld [vmem:[%s1 + $0x1c0] sm:$0xff]
  %v70 = vld [vmem:[%s1 + $0x1c8] sm:$0xff]
  %v71 = vld [vmem:[%s1 + $0x1d0] sm:$0xff]
  %v72 = vld [vmem:[%s1 + $0x1d8] sm:$0xff]
  %v73 = vld [vmem:[%s1 + $0x1e0] sm:$0xff]
  %v74 = vld [vmem:[%s1 + $0x1e8] sm:$0xff]
  %v75 = vld [vmem:[%s1 + $0x1f0] sm:$0xff]
  %v76 = vld [vmem:[%s1 + $0x1f8] sm:$0xff]
  %v141 = vunpack.c.l.b16 %v13
  %v142 = vunpack.c.h.b16 %v13
  %v143 = vunpack.c.l.b16 %v14
  %v144 = vunpack.c.h.b16 %v14
  %v145 = vunpack.c.l.b16 %v15
  %v146 = vunpack.c.h.b16 %v15
  %v147 = vunpack.c.l.b16 %v16
  %v148 = vunpack.c.h.b16 %v16
  %v149 = vunpack.c.l.b16 %v17
  %v150 = vunpack.c.h.b16 %v17
  %v151 = vunpack.c.l.b16 %v18
  %v152 = vunpack.c.h.b16 %v18
  %v153 = vunpack.c.l.b16 %v19
  %v154 = vunpack.c.h.b16 %v19
  %v155 = vunpack.c.l.b16 %v20
  %v156 = vunpack.c.h.b16 %v20
  %v157 = vunpack.c.l.b16 %v21
  %v158 = vunpack.c.h.b16 %v21
  %v159 = vunpack.c.l.b16 %v22
  %v160 = vunpack.c.h.b16 %v22
  %v161 = vunpack.c.l.b16 %v23
  %v162 = vunpack.c.h.b16 %v23
  %v163 = vunpack.c.l.b16 %v24
  %v164 = vunpack.c.h.b16 %v24
  %v165 = vunpack.c.l.b16 %v25
  %v166 = vunpack.c.h.b16 %v25
  %v167 = vunpack.c.l.b16 %v26
  %v168 = vunpack.c.h.b16 %v26
  %v169 = vunpack.c.l.b16 %v27
  %v170 = vunpack.c.h.b16 %v27
  %v171 = vunpack.c.l.b16 %v28
  %v172 = vunpack.c.h.b16 %v28
  %v173 = vunpack.c.l.b16 %v29
  %v174 = vunpack.c.h.b16 %v29
  %v175 = vunpack.c.l.b16 %v30
  %v176 = vunpack.c.h.b16 %v30
  %v177 = vunpack.c.l.b16 %v31
  %v178 = vunpack.c.h.b16 %v31
  %v179 = vunpack.c.l.b16 %v32
  %v180 = vunpack.c.h.b16 %v32
  %v181 = vunpack.c.l.b16 %v33
  %v182 = vunpack.c.h.b16 %v33
  %v183 = vunpack.c.l.b16 %v34
  %v184 = vunpack.c.h.b16 %v34
  %v185 = vunpack.c.l.b16 %v35
  %v186 = vunpack.c.h.b16 %v35
  %v187 = vunpack.c.l.b16 %v36
  %v188 = vunpack.c.h.b16 %v36
  %v189 = vunpack.c.l.b16 %v37
  %v190 = vunpack.c.h.b16 %v37
  %v191 = vunpack.c.l.b16 %v38
  %v192 = vunpack.c.h.b16 %v38
  %v193 = vunpack.c.l.b16 %v39
  %v194 = vunpack.c.h.b16 %v39
  %v195 = vunpack.c.l.b16 %v40
  %v196 = vunpack.c.h.b16 %v40
  %v197 = vunpack.c.l.b16 %v41
  %v198 = vunpack.c.h.b16 %v41
  %v199 = vunpack.c.l.b16 %v42
  %v200 = vunpack.c.h.b16 %v42
  %v201 = vunpack.c.l.b16 %v43
  %v202 = vunpack.c.h.b16 %v43
  %v203 = vunpack.c.l.b16 %v44
  %v204 = vunpack.c.h.b16 %v44
  %v205 = vunpack.c.l.b16 %v45
  %v206 = vunpack.c.h.b16 %v45
  %v207 = vunpack.c.l.b16 %v46
  %v208 = vunpack.c.h.b16 %v46
  %v209 = vunpack.c.l.b16 %v47
  %v210 = vunpack.c.h.b16 %v47
  %v211 = vunpack.c.l.b16 %v48
  %v212 = vunpack.c.h.b16 %v48
  %v213 = vunpack.c.l.b16 %v49
  %v214 = vunpack.c.h.b16 %v49
  %v215 = vunpack.c.l.b16 %v50
  %v216 = vunpack.c.h.b16 %v50
  %v217 = vunpack.c.l.b16 %v51
  %v218 = vunpack.c.h.b16 %v51
  %v219 = vunpack.c.l.b16 %v52
  %v220 = vunpack.c.h.b16 %v52
  %v221 = vunpack.c.l.b16 %v53
  %v222 = vunpack.c.h.b16 %v53
  %v223 = vunpack.c.l.b16 %v54
  %v224 = vunpack.c.h.b16 %v54
  %v225 = vunpack.c.l.b16 %v55
  %v226 = vunpack.c.h.b16 %v55
  %v227 = vunpack.c.l.b16 %v56
  %v228 = vunpack.c.h.b16 %v56
  %v229 = vunpack.c.l.b16 %v57
  %v230 = vunpack.c.h.b16 %v57
  %v231 = vunpack.c.l.b16 %v58
  %v232 = vunpack.c.h.b16 %v58
  %v233 = vunpack.c.l.b16 %v59
  %v234 = vunpack.c.h.b16 %v59
  %v235 = vunpack.c.l.b16 %v60
  %v236 = vunpack.c.h.b16 %v60
  %v237 = vunpack.c.l.b16 %v61
  %v238 = vunpack.c.h.b16 %v61
  %v239 = vunpack.c.l.b16 %v62
  %v240 = vunpack.c.h.b16 %v62
  %v241 = vunpack.c.l.b16 %v63
  %v242 = vunpack.c.h.b16 %v63
  %v243 = vunpack.c.l.b16 %v64
  %v244 = vunpack.c.h.b16 %v64
  %v245 = vunpack.c.l.b16 %v65
  %v246 = vunpack.c.h.b16 %v65
  %v247 = vunpack.c.l.b16 %v66
  %v248 = vunpack.c.h.b16 %v66
  %v249 = vunpack.c.l.b16 %v67
  %v250 = vunpack.c.h.b16 %v67
  %v251 = vunpack.c.l.b16 %v68
  %v252 = vunpack.c.h.b16 %v68
  %v253 = vunpack.c.l.b16 %v69
  %v254 = vunpack.c.h.b16 %v69
  %v255 = vunpack.c.l.b16 %v70
  %v256 = vunpack.c.h.b16 %v70
  %v257 = vunpack.c.l.b16 %v71
  %v258 = vunpack.c.h.b16 %v71
  %v259 = vunpack.c.l.b16 %v72
  %v260 = vunpack.c.h.b16 %v72
  %v261 = vunpack.c.l.b16 %v73
  %v262 = vunpack.c.h.b16 %v73
  %v263 = vunpack.c.l.b16 %v74
  %v264 = vunpack.c.h.b16 %v74
  %v265 = vunpack.c.l.b16 %v75
  %v266 = vunpack.c.h.b16 %v75
  %v267 = vunpack.c.l.b16 %v76
  %v268 = vunpack.c.h.b16 %v76
  %v269 = vpack.c.b16 %v205, %v141
  %v270 = vpack.c.b16 %v206, %v142
  %v271 = vpack.c.b16 %v207, %v143
  %v272 = vpack.c.b16 %v208, %v144
  %v273 = vpack.c.b16 %v209, %v145
  %v274 = vpack.c.b16 %v210, %v146
  %v275 = vpack.c.b16 %v211, %v147
  %v276 = vpack.c.b16 %v212, %v148
  %v277 = vpack.c.b16 %v213, %v149
  %v278 = vpack.c.b16 %v214, %v150
  %v279 = vpack.c.b16 %v215, %v151
  %v280 = vpack.c.b16 %v216, %v152
  %v281 = vpack.c.b16 %v217, %v153
  %v282 = vpack.c.b16 %v218, %v154
  %v283 = vpack.c.b16 %v219, %v155
  %v284 = vpack.c.b16 %v220, %v156
  %v285 = vpack.c.b16 %v221, %v157
  %v286 = vpack.c.b16 %v222, %v158
  %v287 = vpack.c.b16 %v223, %v159
  %v288 = vpack.c.b16 %v224, %v160
  %v289 = vpack.c.b16 %v225, %v161
  %v290 = vpack.c.b16 %v226, %v162
  %v291 = vpack.c.b16 %v227, %v163
  %v292 = vpack.c.b16 %v228, %v164
  %v293 = vpack.c.b16 %v229, %v165
  %v294 = vpack.c.b16 %v230, %v166
  %v295 = vpack.c.b16 %v231, %v167
  %v296 = vpack.c.b16 %v232, %v168
  %v297 = vpack.c.b16 %v233, %v169
  %v298 = vpack.c.b16 %v234, %v170
  %v299 = vpack.c.b16 %v235, %v171
  %v300 = vpack.c.b16 %v236, %v172
  %v301 = vpack.c.b16 %v237, %v173
  %v302 = vpack.c.b16 %v238, %v174
  %v303 = vpack.c.b16 %v239, %v175
  %v304 = vpack.c.b16 %v240, %v176
  %v305 = vpack.c.b16 %v241, %v177
  %v306 = vpack.c.b16 %v242, %v178
  %v307 = vpack.c.b16 %v243, %v179
  %v308 = vpack.c.b16 %v244, %v180
  %v309 = vpack.c.b16 %v245, %v181
  %v310 = vpack.c.b16 %v246, %v182
  %v311 = vpack.c.b16 %v247, %v183
  %v312 = vpack.c.b16 %v248, %v184
  %v313 = vpack.c.b16 %v249, %v185
  %v314 = vpack.c.b16 %v250, %v186
  %v315 = vpack.c.b16 %v251, %v187
  %v316 = vpack.c.b16 %v252, %v188
  %v317 = vpack.c.b16 %v253, %v189
  %v318 = vpack.c.b16 %v254, %v190
  %v319 = vpack.c.b16 %v255, %v191
  %v320 = vpack.c.b16 %v256, %v192
  %v321 = vpack.c.b16 %v257, %v193
  %v322 = vpack.c.b16 %v258, %v194
  %v323 = vpack.c.b16 %v259, %v195
  %v324 = vpack.c.b16 %v260, %v196
  %v325 = vpack.c.b16 %v261, %v197
  %v326 = vpack.c.b16 %v262, %v198
  %v327 = vpack.c.b16 %v263, %v199
  %v328 = vpack.c.b16 %v264, %v200
  %v329 = vpack.c.b16 %v265, %v201
  %v330 = vpack.c.b16 %v266, %v202
  %v331 = vpack.c.b16 %v267, %v203
  %v332 = vpack.c.b16 %v268, %v204
  %vm397 = vcmask 130048
  %v399 = vsel %vm397, %v12, 0
  %401 = vmatprep.subr.bf16.mxu0 %v270
  %402 = vmatpush1.bf16.msra.mxu0 %v269
  %403 = vmatprep.subr.bf16.mxu0 0
  %404 = vmatpush1.bf16.msra.mxu0 0
  %405 = vmatprep.subr.bf16.mxu0 0
  %406 = vmatpush1.bf16.msra.mxu0 0
  %407 = vmatprep.subr.bf16.mxu0 0
  %408 = vmatpush1.bf16.msra.mxu0 0
  %409 = vmatprep.subr.bf16.mxu0 0
  %410 = vmatpush1.bf16.msra.mxu0 0
  %411 = vmatprep.subr.bf16.mxu0 0
  %412 = vmatpush1.bf16.msra.mxu0 0
  %413 = vmatprep.subr.bf16.mxu0 0
  %414 = vmatpush1.bf16.msra.mxu0 0
  %415 = vmatprep.subr.bf16.mxu0 0
  %416 = vmatpush1.bf16.msra.mxu0 0
  %417 = vmatprep.subr.bf16.mxu0 0
  %418 = vmatpush1.bf16.msra.mxu0 0
  %419 = vmatprep.subr.bf16.mxu0 0
  %420 = vmatpush1.bf16.msra.mxu0 0
  %421 = vmatprep.subr.bf16.mxu0 0
  %422 = vmatpush1.bf16.msra.mxu0 0
  %423 = vmatprep.subr.bf16.mxu0 0
  %424 = vmatpush1.bf16.msra.mxu0 0
  %425 = vmatprep.subr.bf16.mxu0 0
  %426 = vmatpush1.bf16.msra.mxu0 0
  %427 = vmatprep.subr.bf16.mxu0 0
  %428 = vmatpush1.bf16.msra.mxu0 0
  %429 = vmatprep.subr.bf16.mxu0 0
  %430 = vmatpush1.bf16.msra.mxu0 0
  %431 = vmatprep.subr.bf16.mxu0 0
  %432 = vmatpush1.bf16.msra.mxu0 0
  %433 = vmatprep.mubr.bf16.mxu0 0
  %434 = vmatmul.mubr.bf16.gmra.mrb[0].mxu0 %v399
  %v435 = vpop.f32.mrb[0].mxu0
  %v436 = vadd.f32 0.0, %v435
  %v437 = vpop.f32.mrb[0].mxu0
  %v438 = vadd.f32 0.0, %v437
  %v439 = vpop.f32.mrb[0].mxu0
  %v440 = vpop.f32.mrb[0].mxu0
  %441 = vdwg.mxu0
  %442 = vmatprep.subr.bf16.mxu0 %v272
  %443 = vmatpush1.bf16.msra.mxu0 %v271
  %444 = vmatprep.subr.bf16.mxu0 0
  %445 = vmatpush1.bf16.msra.mxu0 0
  %446 = vmatprep.subr.bf16.mxu0 0
  %447 = vmatpush1.bf16.msra.mxu0 0
  %448 = vmatprep.subr.bf16.mxu0 0
  %449 = vmatpush1.bf16.msra.mxu0 0
  %450 = vmatprep.subr.bf16.mxu0 0
  %451 = vmatpush1.bf16.msra.mxu0 0
  %452 = vmatprep.subr.bf16.mxu0 0
  %453 = vmatpush1.bf16.msra.mxu0 0
  %454 = vmatprep.subr.bf16.mxu0 0
  %455 = vmatpush1.bf16.msra.mxu0 0
  %456 = vmatprep.subr.bf16.mxu0 0
  %457 = vmatpush1.bf16.msra.mxu0 0
  %458 = vmatprep.subr.bf16.mxu0 0
  %459 = vmatpush1.bf16.msra.mxu0 0
  %460 = vmatprep.subr.bf16.mxu0 0
  %461 = vmatpush1.bf16.msra.mxu0 0
  %462 = vmatprep.subr.bf16.mxu0 0
  %463 = vmatpush1.bf16.msra.mxu0 0
  %464 = vmatprep.subr.bf16.mxu0 0
  %465 = vmatpush1.bf16.msra.mxu0 0
  %466 = vmatprep.subr.bf16.mxu0 0
  %467 = vmatpush1.bf16.msra.mxu0 0
  %468 = vmatprep.subr.bf16.mxu0 0
  %469 = vmatpush1.bf16.msra.mxu0 0
  %470 = vmatprep.subr.bf16.mxu0 0
  %471 = vmatpush1.bf16.msra.mxu0 0
  %472 = vmatprep.subr.bf16.mxu0 0
  %473 = vmatpush1.bf16.msra.mxu0 0
  %474 = vmatprep.mubr.bf16.mxu0 0
  %475 = vmatmul.mubr.bf16.gmra.mrb[0].mxu0 %v399
  %v476 = vpop.f32.mrb[0].mxu0
  %v477 = vadd.f32 0.0, %v476
  %v478 = vpop.f32.mrb[0].mxu0
  %v479 = vadd.f32 0.0, %v478
  %v480 = vpop.f32.mrb[0].mxu0
  %v481 = vpop.f32.mrb[0].mxu0
  %482 = vdwg.mxu0
  %483 = vmatprep.subr.bf16.mxu0 %v274
  %484 = vmatpush1.bf16.msra.mxu0 %v273
  %485 = vmatprep.subr.bf16.mxu0 0
  %486 = vmatpush1.bf16.msra.mxu0 0
  %487 = vmatprep.subr.bf16.mxu0 0
  %488 = vmatpush1.bf16.msra.mxu0 0
  %489 = vmatprep.subr.bf16.mxu0 0
  %490 = vmatpush1.bf16.msra.mxu0 0
  %491 = vmatprep.subr.bf16.mxu0 0
  %492 = vmatpush1.bf16.msra.mxu0 0
  %493 = vmatprep.subr.bf16.mxu0 0
  %494 = vmatpush1.bf16.msra.mxu0 0
  %495 = vmatprep.subr.bf16.mxu0 0
  %496 = vmatpush1.bf16.msra.mxu0 0
  %497 = vmatprep.subr.bf16.mxu0 0
  %498 = vmatpush1.bf16.msra.mxu0 0
  %499 = vmatprep.subr.bf16.mxu0 0
  %500 = vmatpush1.bf16.msra.mxu0 0
  %501 = vmatprep.subr.bf16.mxu0 0
  %502 = vmatpush1.bf16.msra.mxu0 0
  %503 = vmatprep.subr.bf16.mxu0 0
  %504 = vmatpush1.bf16.msra.mxu0 0
  %505 = vmatprep.subr.bf16.mxu0 0
  %506 = vmatpush1.bf16.msra.mxu0 0
  %507 = vmatprep.subr.bf16.mxu0 0
  %508 = vmatpush1.bf16.msra.mxu0 0
  %509 = vmatprep.subr.bf16.mxu0 0
  %510 = vmatpush1.bf16.msra.mxu0 0
  %511 = vmatprep.subr.bf16.mxu0 0
  %512 = vmatpush1.bf16.msra.mxu0 0
  %513 = vmatprep.subr.bf16.mxu0 0
  %514 = vmatpush1.bf16.msra.mxu0 0
  %515 = vmatprep.mubr.bf16.mxu0 0
  %516 = vmatmul.mubr.bf16.gmra.mrb[0].mxu0 %v399
  %v517 = vpop.f32.mrb[0].mxu0
  %v518 = vadd.f32 0.0, %v517
  %v519 = vpop.f32.mrb[0].mxu0
  %v520 = vadd.f32 0.0, %v519
  %v521 = vpop.f32.mrb[0].mxu0
  %v522 = vpop.f32.mrb[0].mxu0
  %523 = vdwg.mxu0
  %524 = vmatprep.subr.bf16.mxu0 %v276
  %525 = vmatpush1.bf16.msra.mxu0 %v275
  %526 = vmatprep.subr.bf16.mxu0 0
  %527 = vmatpush1.bf16.msra.mxu0 0
  %528 = vmatprep.subr.bf16.mxu0 0
  %529 = vmatpush1.bf16.msra.mxu0 0
  %530 = vmatprep.subr.bf16.mxu0 0
  %531 = vmatpush1.bf16.msra.mxu0 0
  %532 = vmatprep.subr.bf16.mxu0 0
  %533 = vmatpush1.bf16.msra.mxu0 0
  %534 = vmatprep.subr.bf16.mxu0 0
  %535 = vmatpush1.bf16.msra.mxu0 0
  %536 = vmatprep.subr.bf16.mxu0 0
  %537 = vmatpush1.bf16.msra.mxu0 0
  %538 = vmatprep.subr.bf16.mxu0 0
  %539 = vmatpush1.bf16.msra.mxu0 0
  %540 = vmatprep.subr.bf16.mxu0 0
  %541 = vmatpush1.bf16.msra.mxu0 0
  %542 = vmatprep.subr.bf16.mxu0 0
  %543 = vmatpush1.bf16.msra.mxu0 0
  %544 = vmatprep.subr.bf16.mxu0 0
  %545 = vmatpush1.bf16.msra.mxu0 0
  %546 = vmatprep.subr.bf16.mxu0 0
  %547 = vmatpush1.bf16.msra.mxu0 0
  %548 = vmatprep.subr.bf16.mxu0 0
  %549 = vmatpush1.bf16.msra.mxu0 0
  %550 = vmatprep.subr.bf16.mxu0 0
  %551 = vmatpush1.bf16.msra.mxu0 0
  %552 = vmatprep.subr.bf16.mxu0 0
  %553 = vmatpush1.bf16.msra.mxu0 0
  %554 = vmatprep.subr.bf16.mxu0 0
  %555 = vmatpush1.bf16.msra.mxu0 0
  %556 = vmatprep.mubr.bf16.mxu0 0
  %557 = vmatmul.mubr.bf16.gmra.mrb[0].mxu0 %v399
  %v558 = vpop.f32.mrb[0].mxu0
  %v559 = vadd.f32 0.0, %v558
  %v560 = vpop.f32.mrb[0].mxu0
  %v561 = vadd.f32 0.0, %v560
  %v562 = vpop.f32.mrb[0].mxu0
  %v563 = vpop.f32.mrb[0].mxu0
  %564 = vdwg.mxu0
  %565 = vmatprep.subr.bf16.mxu0 %v278
  %566 = vmatpush1.bf16.msra.mxu0 %v277
  %567 = vmatprep.subr.bf16.mxu0 0
  %568 = vmatpush1.bf16.msra.mxu0 0
  %569 = vmatprep.subr.bf16.mxu0 0
  %570 = vmatpush1.bf16.msra.mxu0 0
  %571 = vmatprep.subr.bf16.mxu0 0
  %572 = vmatpush1.bf16.msra.mxu0 0
  %573 = vmatprep.subr.bf16.mxu0 0
  %574 = vmatpush1.bf16.msra.mxu0 0
  %575 = vmatprep.subr.bf16.mxu0 0
  %576 = vmatpush1.bf16.msra.mxu0 0
  %577 = vmatprep.subr.bf16.mxu0 0
  %578 = vmatpush1.bf16.msra.mxu0 0
  %579 = vmatprep.subr.bf16.mxu0 0
  %580 = vmatpush1.bf16.msra.mxu0 0
  %581 = vmatprep.subr.bf16.mxu0 0
  %582 = vmatpush1.bf16.msra.mxu0 0
  %583 = vmatprep.subr.bf16.mxu0 0
  %584 = vmatpush1.bf16.msra.mxu0 0
  %585 = vmatprep.subr.bf16.mxu0 0
  %586 = vmatpush1.bf16.msra.mxu0 0
  %587 = vmatprep.subr.bf16.mxu0 0
  %588 = vmatpush1.bf16.msra.mxu0 0
  %589 = vmatprep.subr.bf16.mxu0 0
  %590 = vmatpush1.bf16.msra.mxu0 0
  %591 = vmatprep.subr.bf16.mxu0 0
  %592 = vmatpush1.bf16.msra.mxu0 0
  %593 = vmatprep.subr.bf16.mxu0 0
  %594 = vmatpush1.bf16.msra.mxu0 0
  %595 = vmatprep.subr.bf16.mxu0 0
  %596 = vmatpush1.bf16.msra.mxu0 0
  %597 = vmatprep.mubr.bf16.mxu0 0
  %598 = vmatmul.mubr.bf16.gmra.mrb[0].mxu0 %v399
  %v599 = vpop.f32.mrb[0].mxu0
  %v600 = vadd.f32 0.0, %v599
  %v601 = vpop.f32.mrb[0].mxu0
  %v602 = vadd.f32 0.0, %v601
  %v603 = vpop.f32.mrb[0].mxu0
  %v604 = vpop.f32.mrb[0].mxu0
  %605 = vdwg.mxu0
  %606 = vmatprep.subr.bf16.mxu0 %v280
  %607 = vmatpush1.bf16.msra.mxu0 %v279
  %608 = vmatprep.subr.bf16.mxu0 0
  %609 = vmatpush1.bf16.msra.mxu0 0
  %610 = vmatprep.subr.bf16.mxu0 0
  %611 = vmatpush1.bf16.msra.mxu0 0
  %612 = vmatprep.subr.bf16.mxu0 0
  %613 = vmatpush1.bf16.msra.mxu0 0
  %614 = vmatprep.subr.bf16.mxu0 0
  %615 = vmatpush1.bf16.msra.mxu0 0
  %616 = vmatprep.subr.bf16.mxu0 0
  %617 = vmatpush1.bf16.msra.mxu0 0
  %618 = vmatprep.subr.bf16.mxu0 0
  %619 = vmatpush1.bf16.msra.mxu0 0
  %620 = vmatprep.subr.bf16.mxu0 0
  %621 = vmatpush1.bf16.msra.mxu0 0
  %622 = vmatprep.subr.bf16.mxu0 0
  %623 = vmatpush1.bf16.msra.mxu0 0
  %624 = vmatprep.subr.bf16.mxu0 0
  %625 = vmatpush1.bf16.msra.mxu0 0
  %626 = vmatprep.subr.bf16.mxu0 0
  %627 = vmatpush1.bf16.msra.mxu0 0
  %628 = vmatprep.subr.bf16.mxu0 0
  %629 = vmatpush1.bf16.msra.mxu0 0
  %630 = vmatprep.subr.bf16.mxu0 0
  %631 = vmatpush1.bf16.msra.mxu0 0
  %632 = vmatprep.subr.bf16.mxu0 0
  %633 = vmatpush1.bf16.msra.mxu0 0
  %634 = vmatprep.subr.bf16.mxu0 0
  %635 = vmatpush1.bf16.msra.mxu0 0
  %636 = vmatprep.subr.bf16.mxu0 0
  %637 = vmatpush1.bf16.msra.mxu0 0
  %638 = vmatprep.mubr.bf16.mxu0 0
  %639 = vmatmul.mubr.bf16.gmra.mrb[0].mxu0 %v399
  %v640 = vpop.f32.mrb[0].mxu0
  %v641 = vadd.f32 0.0, %v640
  %v642 = vpop.f32.mrb[0].mxu0
  %v643 = vadd.f32 0.0, %v642
  %v644 = vpop.f32.mrb[0].mxu0
  %v645 = vpop.f32.mrb[0].mxu0
  %646 = vdwg.mxu0
  %647 = vmatprep.subr.bf16.mxu0 %v282
  %648 = vmatpush1.bf16.msra.mxu0 %v281
  %649 = vmatprep.subr.bf16.mxu0 0
  %650 = vmatpush1.bf16.msra.mxu0 0
  %651 = vmatprep.subr.bf16.mxu0 0
  %652 = vmatpush1.bf16.msra.mxu0 0
  %653 = vmatprep.subr.bf16.mxu0 0
  %654 = vmatpush1.bf16.msra.mxu0 0
  %655 = vmatprep.subr.bf16.mxu0 0
  %656 = vmatpush1.bf16.msra.mxu0 0
  %657 = vmatprep.subr.bf16.mxu0 0
  %658 = vmatpush1.bf16.msra.mxu0 0
  %659 = vmatprep.subr.bf16.mxu0 0
  %660 = vmatpush1.bf16.msra.mxu0 0
  %661 = vmatprep.subr.bf16.mxu0 0
  %662 = vmatpush1.bf16.msra.mxu0 0
  %663 = vmatprep.subr.bf16.mxu0 0
  %664 = vmatpush1.bf16.msra.mxu0 0
  %665 = vmatprep.subr.bf16.mxu0 0
  %666 = vmatpush1.bf16.msra.mxu0 0
  %667 = vmatprep.subr.bf16.mxu0 0
  %668 = vmatpush1.bf16.msra.mxu0 0
  %669 = vmatprep.subr.bf16.mxu0 0
  %670 = vmatpush1.bf16.msra.mxu0 0
  %671 = vmatprep.subr.bf16.mxu0 0
  %672 = vmatpush1.bf16.msra.mxu0 0
  %673 = vmatprep.subr.bf16.mxu0 0
  %674 = vmatpush1.bf16.msra.mxu0 0
  %675 = vmatprep.subr.bf16.mxu0 0
  %676 = vmatpush1.bf16.msra.mxu0 0
  %677 = vmatprep.subr.bf16.mxu0 0
  %678 = vmatpush1.bf16.msra.mxu0 0
  %679 = vmatprep.mubr.bf16.mxu0 0
  %680 = vmatmul.mubr.bf16.gmra.mrb[0].mxu0 %v399
  %v681 = vpop.f32.mrb[0].mxu0
  %v682 = vadd.f32 0.0, %v681
  %v683 = vpop.f32.mrb[0].mxu0
  %v684 = vadd.f32 0.0, %v683
  %v685 = vpop.f32.mrb[0].mxu0
  %v686 = vpop.f32.mrb[0].mxu0
  %687 = vdwg.mxu0
  %688 = vmatprep.subr.bf16.mxu0 %v284
  %689 = vmatpush1.bf16.msra.mxu0 %v283
  %690 = vmatprep.subr.bf16.mxu0 0
  %691 = vmatpush1.bf16.msra.mxu0 0
  %692 = vmatprep.subr.bf16.mxu0 0
  %693 = vmatpush1.bf16.msra.mxu0 0
  %694 = vmatprep.subr.bf16.mxu0 0
  %695 = vmatpush1.bf16.msra.mxu0 0
  %696 = vmatprep.subr.bf16.mxu0 0
  %697 = vmatpush1.bf16.msra.mxu0 0
  %698 = vmatprep.subr.bf16.mxu0 0
  %699 = vmatpush1.bf16.msra.mxu0 0
  %700 = vmatprep.subr.bf16.mxu0 0
  %701 = vmatpush1.bf16.msra.mxu0 0
  %702 = vmatprep.subr.bf16.mxu0 0
  %703 = vmatpush1.bf16.msra.mxu0 0
  %704 = vmatprep.subr.bf16.mxu0 0
  %705 = vmatpush1.bf16.msra.mxu0 0
  %706 = vmatprep.subr.bf16.mxu0 0
  %707 = vmatpush1.bf16.msra.mxu0 0
  %708 = vmatprep.subr.bf16.mxu0 0
  %709 = vmatpush1.bf16.msra.mxu0 0
  %710 = vmatprep.subr.bf16.mxu0 0
  %711 = vmatpush1.bf16.msra.mxu0 0
  %712 = vmatprep.subr.bf16.mxu0 0
  %713 = vmatpush1.bf16.msra.mxu0 0
  %714 = vmatprep.subr.bf16.mxu0 0
  %715 = vmatpush1.bf16.msra.mxu0 0
  %716 = vmatprep.subr.bf16.mxu0 0
  %717 = vmatpush1.bf16.msra.mxu0 0
  %718 = vmatprep.subr.bf16.mxu0 0
  %719 = vmatpush1.bf16.msra.mxu0 0
  %720 = vmatprep.mubr.bf16.mxu0 0
  %721 = vmatmul.mubr.bf16.gmra.mrb[0].mxu0 %v399
  %v722 = vpop.f32.mrb[0].mxu0
  %v723 = vadd.f32 0.0, %v722
  %v724 = vpop.f32.mrb[0].mxu0
  %v725 = vadd.f32 0.0, %v724
  %v726 = vpop.f32.mrb[0].mxu0
  %v727 = vpop.f32.mrb[0].mxu0
  %728 = vdwg.mxu0
  %729 = vmatprep.subr.bf16.mxu0 %v286
  %730 = vmatpush1.bf16.msra.mxu0 %v285
  %731 = vmatprep.subr.bf16.mxu0 0
  %732 = vmatpush1.bf16.msra.mxu0 0
  %733 = vmatprep.subr.bf16.mxu0 0
  %734 = vmatpush1.bf16.msra.mxu0 0
  %735 = vmatprep.subr.bf16.mxu0 0
  %736 = vmatpush1.bf16.msra.mxu0 0
  %737 = vmatprep.subr.bf16.mxu0 0
  %738 = vmatpush1.bf16.msra.mxu0 0
  %739 = vmatprep.subr.bf16.mxu0 0
  %740 = vmatpush1.bf16.msra.mxu0 0
  %741 = vmatprep.subr.bf16.mxu0 0
  %742 = vmatpush1.bf16.msra.mxu0 0
  %743 = vmatprep.subr.bf16.mxu0 0
  %744 = vmatpush1.bf16.msra.mxu0 0
  %745 = vmatprep.subr.bf16.mxu0 0
  %746 = vmatpush1.bf16.msra.mxu0 0
  %747 = vmatprep.subr.bf16.mxu0 0
  %748 = vmatpush1.bf16.msra.mxu0 0
  %749 = vmatprep.subr.bf16.mxu0 0
  %750 = vmatpush1.bf16.msra.mxu0 0
  %751 = vmatprep.subr.bf16.mxu0 0
  %752 = vmatpush1.bf16.msra.mxu0 0
  %753 = vmatprep.subr.bf16.mxu0 0
  %754 = vmatpush1.bf16.msra.mxu0 0
  %755 = vmatprep.subr.bf16.mxu0 0
  %756 = vmatpush1.bf16.msra.mxu0 0
  %757 = vmatprep.subr.bf16.mxu0 0
  %758 = vmatpush1.bf16.msra.mxu0 0
  %759 = vmatprep.subr.bf16.mxu0 0
  %760 = vmatpush1.bf16.msra.mxu0 0
  %761 = vmatprep.mubr.bf16.mxu0 0
  %762 = vmatmul.mubr.bf16.gmra.mrb[0].mxu0 %v399
  %v763 = vpop.f32.mrb[0].mxu0
  %v764 = vadd.f32 0.0, %v763
  %v765 = vpop.f32.mrb[0].mxu0
  %v766 = vadd.f32 0.0, %v765
  %v767 = vpop.f32.mrb[0].mxu0
  %v768 = vpop.f32.mrb[0].mxu0
  %769 = vdwg.mxu0
  %770 = vmatprep.subr.bf16.mxu0 %v288
  %771 = vmatpush1.bf16.msra.mxu0 %v287
  %772 = vmatprep.subr.bf16.mxu0 0
  %773 = vmatpush1.bf16.msra.mxu0 0
  %774 = vmatprep.subr.bf16.mxu0 0
  %775 = vmatpush1.bf16.msra.mxu0 0
  %776 = vmatprep.subr.bf16.mxu0 0
  %777 = vmatpush1.bf16.msra.mxu0 0
  %778 = vmatprep.subr.bf16.mxu0 0
  %779 = vmatpush1.bf16.msra.mxu0 0
  %780 = vmatprep.subr.bf16.mxu0 0
  %781 = vmatpush1.bf16.msra.mxu0 0
  %782 = vmatprep.subr.bf16.mxu0 0
  %783 = vmatpush1.bf16.msra.mxu0 0
  %784 = vmatprep.subr.bf16.mxu0 0
  %785 = vmatpush1.bf16.msra.mxu0 0
  %786 = vmatprep.subr.bf16.mxu0 0
  %787 = vmatpush1.bf16.msra.mxu0 0
  %788 = vmatprep.subr.bf16.mxu0 0
  %789 = vmatpush1.bf16.msra.mxu0 0
  %790 = vmatprep.subr.bf16.mxu0 0
  %791 = vmatpush1.bf16.msra.mxu0 0
  %792 = vmatprep.subr.bf16.mxu0 0
  %793 = vmatpush1.bf16.msra.mxu0 0
  %794 = vmatprep.subr.bf16.mxu0 0
  %795 = vmatpush1.bf16.msra.mxu0 0
  %796 = vmatprep.subr.bf16.mxu0 0
  %797 = vmatpush1.bf16.msra.mxu0 0
  %798 = vmatprep.subr.bf16.mxu0 0
  %799 = vmatpush1.bf16.msra.mxu0 0
  %800 = vmatprep.subr.bf16.mxu0 0
  %801 = vmatpush1.bf16.msra.mxu0 0
  %802 = vmatprep.mubr.bf16.mxu0 0
  %803 = vmatmul.mubr.bf16.gmra.mrb[0].mxu0 %v399
  %v804 = vpop.f32.mrb[0].mxu0
  %v805 = vadd.f32 0.0, %v804
  %v806 = vpop.f32.mrb[0].mxu0
  %v807 = vadd.f32 0.0, %v806
  %v808 = vpop.f32.mrb[0].mxu0
  %v809 = vpop.f32.mrb[0].mxu0
  %810 = vdwg.mxu0
  %811 = vmatprep.subr.bf16.mxu0 %v290
  %812 = vmatpush1.bf16.msra.mxu0 %v289
  %813 = vmatprep.subr.bf16.mxu0 0
  %814 = vmatpush1.bf16.msra.mxu0 0
  %815 = vmatprep.subr.bf16.mxu0 0
  %816 = vmatpush1.bf16.msra.mxu0 0
  %817 = vmatprep.subr.bf16.mxu0 0
  %818 = vmatpush1.bf16.msra.mxu0 0
  %819 = vmatprep.subr.bf16.mxu0 0
  %820 = vmatpush1.bf16.msra.mxu0 0
  %821 = vmatprep.subr.bf16.mxu0 0
  %822 = vmatpush1.bf16.msra.mxu0 0
  %823 = vmatprep.subr.bf16.mxu0 0
  %824 = vmatpush1.bf16.msra.mxu0 0
  %825 = vmatprep.subr.bf16.mxu0 0
  %826 = vmatpush1.bf16.msra.mxu0 0
  %827 = vmatprep.subr.bf16.mxu0 0
  %828 = vmatpush1.bf16.msra.mxu0 0
  %829 = vmatprep.subr.bf16.mxu0 0
  %830 = vmatpush1.bf16.msra.mxu0 0
  %831 = vmatprep.subr.bf16.mxu0 0
  %832 = vmatpush1.bf16.msra.mxu0 0
  %833 = vmatprep.subr.bf16.mxu0 0
  %834 = vmatpush1.bf16.msra.mxu0 0
  %835 = vmatprep.subr.bf16.mxu0 0
  %836 = vmatpush1.bf16.msra.mxu0 0
  %837 = vmatprep.subr.bf16.mxu0 0
  %838 = vmatpush1.bf16.msra.mxu0 0
  %839 = vmatprep.subr.bf16.mxu0 0
  %840 = vmatpush1.bf16.msra.mxu0 0
  %841 = vmatprep.subr.bf16.mxu0 0
  %842 = vmatpush1.bf16.msra.mxu0 0
  %843 = vmatprep.mubr.bf16.mxu0 0
  %844 = vmatmul.mubr.bf16.gmra.mrb[0].mxu0 %v399
  %v845 = vpop.f32.mrb[0].mxu0
  %v846 = vadd.f32 0.0, %v845
  %v847 = vpop.f32.mrb[0].mxu0
  %v848 = vadd.f32 0.0, %v847
  %v849 = vpop.f32.mrb[0].mxu0
  %v850 = vpop.f32.mrb[0].mxu0
  %851 = vdwg.mxu0
  %852 = vmatprep.subr.bf16.mxu0 %v292
  %853 = vmatpush1.bf16.msra.mxu0 %v291
  %854 = vmatprep.subr.bf16.mxu0 0
  %855 = vmatpush1.bf16.msra.mxu0 0
  %856 = vmatprep.subr.bf16.mxu0 0
  %857 = vmatpush1.bf16.msra.mxu0 0
  %858 = vmatprep.subr.bf16.mxu0 0
  %859 = vmatpush1.bf16.msra.mxu0 0
  %860 = vmatprep.subr.bf16.mxu0 0
  %861 = vmatpush1.bf16.msra.mxu0 0
  %862 = vmatprep.subr.bf16.mxu0 0
  %863 = vmatpush1.bf16.msra.mxu0 0
  %864 = vmatprep.subr.bf16.mxu0 0
  %865 = vmatpush1.bf16.msra.mxu0 0
  %866 = vmatprep.subr.bf16.mxu0 0
  %867 = vmatpush1.bf16.msra.mxu0 0
  %868 = vmatprep.subr.bf16.mxu0 0
  %869 = vmatpush1.bf16.msra.mxu0 0
  %870 = vmatprep.subr.bf16.mxu0 0
  %871 = vmatpush1.bf16.msra.mxu0 0
  %872 = vmatprep.subr.bf16.mxu0 0
  %873 = vmatpush1.bf16.msra.mxu0 0
  %874 = vmatprep.subr.bf16.mxu0 0
  %875 = vmatpush1.bf16.msra.mxu0 0
  %876 = vmatprep.subr.bf16.mxu0 0
  %877 = vmatpush1.bf16.msra.mxu0 0
  %878 = vmatprep.subr.bf16.mxu0 0
  %879 = vmatpush1.bf16.msra.mxu0 0
  %880 = vmatprep.subr.bf16.mxu0 0
  %881 = vmatpush1.bf16.msra.mxu0 0
  %882 = vmatprep.subr.bf16.mxu0 0
  %883 = vmatpush1.bf16.msra.mxu0 0
  %884 = vmatprep.mubr.bf16.mxu0 0
  %885 = vmatmul.mubr.bf16.gmra.mrb[0].mxu0 %v399
  %v886 = vpop.f32.mrb[0].mxu0
  %v887 = vadd.f32 0.0, %v886
  %v888 = vpop.f32.mrb[0].mxu0
  %v889 = vadd.f32 0.0, %v888
  %v890 = vpop.f32.mrb[0].mxu0
  %v891 = vpop.f32.mrb[0].mxu0
  %892 = vdwg.mxu0
  %893 = vmatprep.subr.bf16.mxu0 %v294
  %894 = vmatpush1.bf16.msra.mxu0 %v293
  %895 = vmatprep.subr.bf16.mxu0 0
  %896 = vmatpush1.bf16.msra.mxu0 0
  %897 = vmatprep.subr.bf16.mxu0 0
  %898 = vmatpush1.bf16.msra.mxu0 0
  %899 = vmatprep.subr.bf16.mxu0 0
  %900 = vmatpush1.bf16.msra.mxu0 0
  %901 = vmatprep.subr.bf16.mxu0 0
  %902 = vmatpush1.bf16.msra.mxu0 0
  %903 = vmatprep.subr.bf16.mxu0 0
  %904 = vmatpush1.bf16.msra.mxu0 0
  %905 = vmatprep.subr.bf16.mxu0 0
  %906 = vmatpush1.bf16.msra.mxu0 0
  %907 = vmatprep.subr.bf16.mxu0 0
  %908 = vmatpush1.bf16.msra.mxu0 0
  %909 = vmatprep.subr.bf16.mxu0 0
  %910 = vmatpush1.bf16.msra.mxu0 0
  %911 = vmatprep.subr.bf16.mxu0 0
  %912 = vmatpush1.bf16.msra.mxu0 0
  %913 = vmatprep.subr.bf16.mxu0 0
  %914 = vmatpush1.bf16.msra.mxu0 0
  %915 = vmatprep.subr.bf16.mxu0 0
  %916 = vmatpush1.bf16.msra.mxu0 0
  %917 = vmatprep.subr.bf16.mxu0 0
  %918 = vmatpush1.bf16.msra.mxu0 0
  %919 = vmatprep.subr.bf16.mxu0 0
  %920 = vmatpush1.bf16.msra.mxu0 0
  %921 = vmatprep.subr.bf16.mxu0 0
  %922 = vmatpush1.bf16.msra.mxu0 0
  %923 = vmatprep.subr.bf16.mxu0 0
  %924 = vmatpush1.bf16.msra.mxu0 0
  %925 = vmatprep.mubr.bf16.mxu0 0
  %926 = vmatmul.mubr.bf16.gmra.mrb[0].mxu0 %v399
  %v927 = vpop.f32.mrb[0].mxu0
  %v928 = vadd.f32 0.0, %v927
  %v929 = vpop.f32.mrb[0].mxu0
  %v930 = vadd.f32 0.0, %v929
  %v931 = vpop.f32.mrb[0].mxu0
  %v932 = vpop.f32.mrb[0].mxu0
  %933 = vdwg.mxu0
  %934 = vmatprep.subr.bf16.mxu0 %v296
  %935 = vmatpush1.bf16.msra.mxu0 %v295
  %936 = vmatprep.subr.bf16.mxu0 0
  %937 = vmatpush1.bf16.msra.mxu0 0
  %938 = vmatprep.subr.bf16.mxu0 0
  %939 = vmatpush1.bf16.msra.mxu0 0
  %940 = vmatprep.subr.bf16.mxu0 0
  %941 = vmatpush1.bf16.msra.mxu0 0
  %942 = vmatprep.subr.bf16.mxu0 0
  %943 = vmatpush1.bf16.msra.mxu0 0
  %944 = vmatprep.subr.bf16.mxu0 0
  %945 = vmatpush1.bf16.msra.mxu0 0
  %946 = vmatprep.subr.bf16.mxu0 0
  %947 = vmatpush1.bf16.msra.mxu0 0
  %948 = vmatprep.subr.bf16.mxu0 0
  %949 = vmatpush1.bf16.msra.mxu0 0
  %950 = vmatprep.subr.bf16.mxu0 0
  %951 = vmatpush1.bf16.msra.mxu0 0
  %952 = vmatprep.subr.bf16.mxu0 0
  %953 = vmatpush1.bf16.msra.mxu0 0
  %954 = vmatprep.subr.bf16.mxu0 0
  %955 = vmatpush1.bf16.msra.mxu0 0
  %956 = vmatprep.subr.bf16.mxu0 0
  %957 = vmatpush1.bf16.msra.mxu0 0
  %958 = vmatprep.subr.bf16.mxu0 0
  %959 = vmatpush1.bf16.msra.mxu0 0
  %960 = vmatprep.subr.bf16.mxu0 0
  %961 = vmatpush1.bf16.msra.mxu0 0
  %962 = vmatprep.subr.bf16.mxu0 0
  %963 = vmatpush1.bf16.msra.mxu0 0
  %964 = vmatprep.subr.bf16.mxu0 0
  %965 = vmatpush1.bf16.msra.mxu0 0
  %966 = vmatprep.mubr.bf16.mxu0 0
  %967 = vmatmul.mubr.bf16.gmra.mrb[0].mxu0 %v399
  %v968 = vpop.f32.mrb[0].mxu0
  %v969 = vadd.f32 0.0, %v968
  %v970 = vpop.f32.mrb[0].mxu0
  %v971 = vadd.f32 0.0, %v970
  %v972 = vpop.f32.mrb[0].mxu0
  %v973 = vpop.f32.mrb[0].mxu0
  %974 = vdwg.mxu0
  %975 = vmatprep.subr.bf16.mxu0 %v298
  %976 = vmatpush1.bf16.msra.mxu0 %v297
  %977 = vmatprep.subr.bf16.mxu0 0
  %978 = vmatpush1.bf16.msra.mxu0 0
  %979 = vmatprep.subr.bf16.mxu0 0
  %980 = vmatpush1.bf16.msra.mxu0 0
  %981 = vmatprep.subr.bf16.mxu0 0
  %982 = vmatpush1.bf16.msra.mxu0 0
  %983 = vmatprep.subr.bf16.mxu0 0
  %984 = vmatpush1.bf16.msra.mxu0 0
  %985 = vmatprep.subr.bf16.mxu0 0
  %986 = vmatpush1.bf16.msra.mxu0 0
  %987 = vmatprep.subr.bf16.mxu0 0
  %988 = vmatpush1.bf16.msra.mxu0 0
  %989 = vmatprep.subr.bf16.mxu0 0
  %990 = vmatpush1.bf16.msra.mxu0 0
  %991 = vmatprep.subr.bf16.mxu0 0
  %992 = vmatpush1.bf16.msra.mxu0 0
  %993 = vmatprep.subr.bf16.mxu0 0
  %994 = vmatpush1.bf16.msra.mxu0 0
  %995 = vmatprep.subr.bf16.mxu0 0
  %996 = vmatpush1.bf16.msra.mxu0 0
  %997 = vmatprep.subr.bf16.mxu0 0
  %998 = vmatpush1.bf16.msra.mxu0 0
  %999 = vmatprep.subr.bf16.mxu0 0
  %1000 = vmatpush1.bf16.msra.mxu0 0
  %1001 = vmatprep.subr.bf16.mxu0 0
  %1002 = vmatpush1.bf16.msra.mxu0 0
  %1003 = vmatprep.subr.bf16.mxu0 0
  %1004 = vmatpush1.bf16.msra.mxu0 0
  %1005 = vmatprep.subr.bf16.mxu0 0
  %1006 = vmatpush1.bf16.msra.mxu0 0
  %1007 = vmatprep.mubr.bf16.mxu0 0
  %1008 = vmatmul.mubr.bf16.gmra.mrb[0].mxu0 %v399
  %v1009 = vpop.f32.mrb[0].mxu0
  %v1010 = vadd.f32 0.0, %v1009
  %v1011 = vpop.f32.mrb[0].mxu0
  %v1012 = vadd.f32 0.0, %v1011
  %v1013 = vpop.f32.mrb[0].mxu0
  %v1014 = vpop.f32.mrb[0].mxu0
  %1015 = vdwg.mxu0
  %1016 = vmatprep.subr.bf16.mxu0 %v300
  %1017 = vmatpush1.bf16.msra.mxu0 %v299
  %1018 = vmatprep.subr.bf16.mxu0 0
  %1019 = vmatpush1.bf16.msra.mxu0 0
  %1020 = vmatprep.subr.bf16.mxu0 0
  %1021 = vmatpush1.bf16.msra.mxu0 0
  %1022 = vmatprep.subr.bf16.mxu0 0
  %1023 = vmatpush1.bf16.msra.mxu0 0
  %1024 = vmatprep.subr.bf16.mxu0 0
  %1025 = vmatpush1.bf16.msra.mxu0 0
  %1026 = vmatprep.subr.bf16.mxu0 0
  %1027 = vmatpush1.bf16.msra.mxu0 0
  %1028 = vmatprep.subr.bf16.mxu0 0
  %1029 = vmatpush1.bf16.msra.mxu0 0
  %1030 = vmatprep.subr.bf16.mxu0 0
  %1031 = vmatpush1.bf16.msra.mxu0 0
  %1032 = vmatprep.subr.bf16.mxu0 0
  %1033 = vmatpush1.bf16.msra.mxu0 0
  %1034 = vmatprep.subr.bf16.mxu0 0
  %1035 = vmatpush1.bf16.msra.mxu0 0
  %1036 = vmatprep.subr.bf16.mxu0 0
  %1037 = vmatpush1.bf16.msra.mxu0 0
  %1038 = vmatprep.subr.bf16.mxu0 0
  %1039 = vmatpush1.bf16.msra.mxu0 0
  %1040 = vmatprep.subr.bf16.mxu0 0
  %1041 = vmatpush1.bf16.msra.mxu0 0
  %1042 = vmatprep.subr.bf16.mxu0 0
  %1043 = vmatpush1.bf16.msra.mxu0 0
  %1044 = vmatprep.subr.bf16.mxu0 0
  %1045 = vmatpush1.bf16.msra.mxu0 0
  %1046 = vmatprep.subr.bf16.mxu0 0
  %1047 = vmatpush1.bf16.msra.mxu0 0
  %1048 = vmatprep.mubr.bf16.mxu0 0
  %1049 = vmatmul.mubr.bf16.gmra.mrb[0].mxu0 %v399
  %v1050 = vpop.f32.mrb[0].mxu0
  %v1051 = vadd.f32 0.0, %v1050
  %v1052 = vpop.f32.mrb[0].mxu0
  %v1053 = vadd.f32 0.0, %v1052
  %v1054 = vpop.f32.mrb[0].mxu0
  %v1055 = vpop.f32.mrb[0].mxu0
  %1056 = vdwg.mxu0
  %1057 = vmatprep.subr.bf16.mxu0 %v302
  %1058 = vmatpush1.bf16.msra.mxu0 %v301
  %1059 = vmatprep.subr.bf16.mxu0 0
  %1060 = vmatpush1.bf16.msra.mxu0 0
  %1061 = vmatprep.subr.bf16.mxu0 0
  %1062 = vmatpush1.bf16.msra.mxu0 0
  %1063 = vmatprep.subr.bf16.mxu0 0
  %1064 = vmatpush1.bf16.msra.mxu0 0
  %1065 = vmatprep.subr.bf16.mxu0 0
  %1066 = vmatpush1.bf16.msra.mxu0 0
  %1067 = vmatprep.subr.bf16.mxu0 0
  %1068 = vmatpush1.bf16.msra.mxu0 0
  %1069 = vmatprep.subr.bf16.mxu0 0
  %1070 = vmatpush1.bf16.msra.mxu0 0
  %1071 = vmatprep.subr.bf16.mxu0 0
  %1072 = vmatpush1.bf16.msra.mxu0 0
  %1073 = vmatprep.subr.bf16.mxu0 0
  %1074 = vmatpush1.bf16.msra.mxu0 0
  %1075 = vmatprep.subr.bf16.mxu0 0
  %1076 = vmatpush1.bf16.msra.mxu0 0
  %1077 = vmatprep.subr.bf16.mxu0 0
  %1078 = vmatpush1.bf16.msra.mxu0 0
  %1079 = vmatprep.subr.bf16.mxu0 0
  %1080 = vmatpush1.bf16.msra.mxu0 0
  %1081 = vmatprep.subr.bf16.mxu0 0
  %1082 = vmatpush1.bf16.msra.mxu0 0
  %1083 = vmatprep.subr.bf16.mxu0 0
  %1084 = vmatpush1.bf16.msra.mxu0 0
  %1085 = vmatprep.subr.bf16.mxu0 0
  %1086 = vmatpush1.bf16.msra.mxu0 0
  %1087 = vmatprep.subr.bf16.mxu0 0
  %1088 = vmatpush1.bf16.msra.mxu0 0
  %1089 = vmatprep.mubr.bf16.mxu0 0
  %1090 = vmatmul.mubr.bf16.gmra.mrb[0].mxu0 %v399
  %v1091 = vpop.f32.mrb[0].mxu0
  %v1092 = vadd.f32 0.0, %v1091
  %v1093 = vpop.f32.mrb[0].mxu0
  %v1094 = vadd.f32 0.0, %v1093
  %v1095 = vpop.f32.mrb[0].mxu0
  %v1096 = vpop.f32.mrb[0].mxu0
  %1097 = vdwg.mxu0
  %1098 = vmatprep.subr.bf16.mxu0 %v304
  %1099 = vmatpush1.bf16.msra.mxu0 %v303
  %1100 = vmatprep.subr.bf16.mxu0 0
  %1101 = vmatpush1.bf16.msra.mxu0 0
  %1102 = vmatprep.subr.bf16.mxu0 0
  %1103 = vmatpush1.bf16.msra.mxu0 0
  %1104 = vmatprep.subr.bf16.mxu0 0
  %1105 = vmatpush1.bf16.msra.mxu0 0
  %1106 = vmatprep.subr.bf16.mxu0 0
  %1107 = vmatpush1.bf16.msra.mxu0 0
  %1108 = vmatprep.subr.bf16.mxu0 0
  %1109 = vmatpush1.bf16.msra.mxu0 0
  %1110 = vmatprep.subr.bf16.mxu0 0
  %1111 = vmatpush1.bf16.msra.mxu0 0
  %1112 = vmatprep.subr.bf16.mxu0 0
  %1113 = vmatpush1.bf16.msra.mxu0 0
  %1114 = vmatprep.subr.bf16.mxu0 0
  %1115 = vmatpush1.bf16.msra.mxu0 0
  %1116 = vmatprep.subr.bf16.mxu0 0
  %1117 = vmatpush1.bf16.msra.mxu0 0
  %1118 = vmatprep.subr.bf16.mxu0 0
  %1119 = vmatpush1.bf16.msra.mxu0 0
  %1120 = vmatprep.subr.bf16.mxu0 0
  %1121 = vmatpush1.bf16.msra.mxu0 0
  %1122 = vmatprep.subr.bf16.mxu0 0
  %1123 = vmatpush1.bf16.msra.mxu0 0
  %1124 = vmatprep.subr.bf16.mxu0 0
  %1125 = vmatpush1.bf16.msra.mxu0 0
  %1126 = vmatprep.subr.bf16.mxu0 0
  %1127 = vmatpush1.bf16.msra.mxu0 0
  %1128 = vmatprep.subr.bf16.mxu0 0
  %1129 = vmatpush1.bf16.msra.mxu0 0
  %1130 = vmatprep.mubr.bf16.mxu0 0
  %1131 = vmatmul.mubr.bf16.gmra.mrb[0].mxu0 %v399
  %v1132 = vpop.f32.mrb[0].mxu0
  %v1133 = vadd.f32 0.0, %v1132
  %v1134 = vpop.f32.mrb[0].mxu0
  %v1135 = vadd.f32 0.0, %v1134
  %v1136 = vpop.f32.mrb[0].mxu0
  %v1137 = vpop.f32.mrb[0].mxu0
  %1138 = vdwg.mxu0
  %1139 = vmatprep.subr.bf16.mxu0 %v306
  %1140 = vmatpush1.bf16.msra.mxu0 %v305
  %1141 = vmatprep.subr.bf16.mxu0 0
  %1142 = vmatpush1.bf16.msra.mxu0 0
  %1143 = vmatprep.subr.bf16.mxu0 0
  %1144 = vmatpush1.bf16.msra.mxu0 0
  %1145 = vmatprep.subr.bf16.mxu0 0
  %1146 = vmatpush1.bf16.msra.mxu0 0
  %1147 = vmatprep.subr.bf16.mxu0 0
  %1148 = vmatpush1.bf16.msra.mxu0 0
  %1149 = vmatprep.subr.bf16.mxu0 0
  %1150 = vmatpush1.bf16.msra.mxu0 0
  %1151 = vmatprep.subr.bf16.mxu0 0
  %1152 = vmatpush1.bf16.msra.mxu0 0
  %1153 = vmatprep.subr.bf16.mxu0 0
  %1154 = vmatpush1.bf16.msra.mxu0 0
  %1155 = vmatprep.subr.bf16.mxu0 0
  %1156 = vmatpush1.bf16.msra.mxu0 0
  %1157 = vmatprep.subr.bf16.mxu0 0
  %1158 = vmatpush1.bf16.msra.mxu0 0
  %1159 = vmatprep.subr.bf16.mxu0 0
  %1160 = vmatpush1.bf16.msra.mxu0 0
  %1161 = vmatprep.subr.bf16.mxu0 0
  %1162 = vmatpush1.bf16.msra.mxu0 0
  %1163 = vmatprep.subr.bf16.mxu0 0
  %1164 = vmatpush1.bf16.msra.mxu0 0
  %1165 = vmatprep.subr.bf16.mxu0 0
  %1166 = vmatpush1.bf16.msra.mxu0 0
  %1167 = vmatprep.subr.bf16.mxu0 0
  %1168 = vmatpush1.bf16.msra.mxu0 0
  %1169 = vmatprep.subr.bf16.mxu0 0
  %1170 = vmatpush1.bf16.msra.mxu0 0
  %1171 = vmatprep.mubr.bf16.mxu0 0
  %1172 = vmatmul.mubr.bf16.gmra.mrb[0].mxu0 %v399
  %v1173 = vpop.f32.mrb[0].mxu0
  %v1174 = vadd.f32 0.0, %v1173
  %v1175 = vpop.f32.mrb[0].mxu0
  %v1176 = vadd.f32 0.0, %v1175
  %v1177 = vpop.f32.mrb[0].mxu0
  %v1178 = vpop.f32.mrb[0].mxu0
  %1179 = vdwg.mxu0
  %1180 = vmatprep.subr.bf16.mxu0 %v308
  %1181 = vmatpush1.bf16.msra.mxu0 %v307
  %1182 = vmatprep.subr.bf16.mxu0 0
  %1183 = vmatpush1.bf16.msra.mxu0 0
  %1184 = vmatprep.subr.bf16.mxu0 0
  %1185 = vmatpush1.bf16.msra.mxu0 0
  %1186 = vmatprep.subr.bf16.mxu0 0
  %1187 = vmatpush1.bf16.msra.mxu0 0
  %1188 = vmatprep.subr.bf16.mxu0 0
  %1189 = vmatpush1.bf16.msra.mxu0 0
  %1190 = vmatprep.subr.bf16.mxu0 0
  %1191 = vmatpush1.bf16.msra.mxu0 0
  %1192 = vmatprep.subr.bf16.mxu0 0
  %1193 = vmatpush1.bf16.msra.mxu0 0
  %1194 = vmatprep.subr.bf16.mxu0 0
  %1195 = vmatpush1.bf16.msra.mxu0 0
  %1196 = vmatprep.subr.bf16.mxu0 0
  %1197 = vmatpush1.bf16.msra.mxu0 0
  %1198 = vmatprep.subr.bf16.mxu0 0
  %1199 = vmatpush1.bf16.msra.mxu0 0
  %1200 = vmatprep.subr.bf16.mxu0 0
  %1201 = vmatpush1.bf16.msra.mxu0 0
  %1202 = vmatprep.subr.bf16.mxu0 0
  %1203 = vmatpush1.bf16.msra.mxu0 0
  %1204 = vmatprep.subr.bf16.mxu0 0
  %1205 = vmatpush1.bf16.msra.mxu0 0
  %1206 = vmatprep.subr.bf16.mxu0 0
  %1207 = vmatpush1.bf16.msra.mxu0 0
  %1208 = vmatprep.subr.bf16.mxu0 0
  %1209 = vmatpush1.bf16.msra.mxu0 0
  %1210 = vmatprep.subr.bf16.mxu0 0
  %1211 = vmatpush1.bf16.msra.mxu0 0
  %1212 = vmatprep.mubr.bf16.mxu0 0
  %1213 = vmatmul.mubr.bf16.gmra.mrb[0].mxu0 %v399
  %v1214 = vpop.f32.mrb[0].mxu0
  %v1215 = vadd.f32 0.0, %v1214
  %v1216 = vpop.f32.mrb[0].mxu0
  %v1217 = vadd.f32 0.0, %v1216
  %v1218 = vpop.f32.mrb[0].mxu0
  %v1219 = vpop.f32.mrb[0].mxu0
  %1220 = vdwg.mxu0
  %1221 = vmatprep.subr.bf16.mxu0 %v310
  %1222 = vmatpush1.bf16.msra.mxu0 %v309
  %1223 = vmatprep.subr.bf16.mxu0 0
  %1224 = vmatpush1.bf16.msra.mxu0 0
  %1225 = vmatprep.subr.bf16.mxu0 0
  %1226 = vmatpush1.bf16.msra.mxu0 0
  %1227 = vmatprep.subr.bf16.mxu0 0
  %1228 = vmatpush1.bf16.msra.mxu0 0
  %1229 = vmatprep.subr.bf16.mxu0 0
  %1230 = vmatpush1.bf16.msra.mxu0 0
  %1231 = vmatprep.subr.bf16.mxu0 0
  %1232 = vmatpush1.bf16.msra.mxu0 0
  %1233 = vmatprep.subr.bf16.mxu0 0
  %1234 = vmatpush1.bf16.msra.mxu0 0
  %1235 = vmatprep.subr.bf16.mxu0 0
  %1236 = vmatpush1.bf16.msra.mxu0 0
  %1237 = vmatprep.subr.bf16.mxu0 0
  %1238 = vmatpush1.bf16.msra.mxu0 0
  %1239 = vmatprep.subr.bf16.mxu0 0
  %1240 = vmatpush1.bf16.msra.mxu0 0
  %1241 = vmatprep.subr.bf16.mxu0 0
  %1242 = vmatpush1.bf16.msra.mxu0 0
  %1243 = vmatprep.subr.bf16.mxu0 0
  %1244 = vmatpush1.bf16.msra.mxu0 0
  %1245 = vmatprep.subr.bf16.mxu0 0
  %1246 = vmatpush1.bf16.msra.mxu0 0
  %1247 = vmatprep.subr.bf16.mxu0 0
  %1248 = vmatpush1.bf16.msra.mxu0 0
  %1249 = vmatprep.subr.bf16.mxu0 0
  %1250 = vmatpush1.bf16.msra.mxu0 0
  %1251 = vmatprep.subr.bf16.mxu0 0
  %1252 = vmatpush1.bf16.msra.mxu0 0
  %1253 = vmatprep.mubr.bf16.mxu0 0
  %1254 = vmatmul.mubr.bf16.gmra.mrb[0].mxu0 %v399
  %v1255 = vpop.f32.mrb[0].mxu0
  %v1256 = vadd.f32 0.0, %v1255
  %v1257 = vpop.f32.mrb[0].mxu0
  %v1258 = vadd.f32 0.0, %v1257
  %v1259 = vpop.f32.mrb[0].mxu0
  %v1260 = vpop.f32.mrb[0].mxu0
  %1261 = vdwg.mxu0
  %1262 = vmatprep.subr.bf16.mxu0 %v312
  %1263 = vmatpush1.bf16.msra.mxu0 %v311
  %1264 = vmatprep.subr.bf16.mxu0 0
  %1265 = vmatpush1.bf16.msra.mxu0 0
  %1266 = vmatprep.subr.bf16.mxu0 0
  %1267 = vmatpush1.bf16.msra.mxu0 0
  %1268 = vmatprep.subr.bf16.mxu0 0
  %1269 = vmatpush1.bf16.msra.mxu0 0
  %1270 = vmatprep.subr.bf16.mxu0 0
  %1271 = vmatpush1.bf16.msra.mxu0 0
  %1272 = vmatprep.subr.bf16.mxu0 0
  %1273 = vmatpush1.bf16.msra.mxu0 0
  %1274 = vmatprep.subr.bf16.mxu0 0
  %1275 = vmatpush1.bf16.msra.mxu0 0
  %1276 = vmatprep.subr.bf16.mxu0 0
  %1277 = vmatpush1.bf16.msra.mxu0 0
  %1278 = vmatprep.subr.bf16.mxu0 0
  %1279 = vmatpush1.bf16.msra.mxu0 0
  %1280 = vmatprep.subr.bf16.mxu0 0
  %1281 = vmatpush1.bf16.msra.mxu0 0
  %1282 = vmatprep.subr.bf16.mxu0 0
  %1283 = vmatpush1.bf16.msra.mxu0 0
  %1284 = vmatprep.subr.bf16.mxu0 0
  %1285 = vmatpush1.bf16.msra.mxu0 0
  %1286 = vmatprep.subr.bf16.mxu0 0
  %1287 = vmatpush1.bf16.msra.mxu0 0
  %1288 = vmatprep.subr.bf16.mxu0 0
  %1289 = vmatpush1.bf16.msra.mxu0 0
  %1290 = vmatprep.subr.bf16.mxu0 0
  %1291 = vmatpush1.bf16.msra.mxu0 0
  %1292 = vmatprep.subr.bf16.mxu0 0
  %1293 = vmatpush1.bf16.msra.mxu0 0
  %1294 = vmatprep.mubr.bf16.mxu0 0
  %1295 = vmatmul.mubr.bf16.gmra.mrb[0].mxu0 %v399
  %v1296 = vpop.f32.mrb[0].mxu0
  %v1297 = vadd.f32 0.0, %v1296
  %v1298 = vpop.f32.mrb[0].mxu0
  %v1299 = vadd.f32 0.0, %v1298
  %v1300 = vpop.f32.mrb[0].mxu0
  %v1301 = vpop.f32.mrb[0].mxu0
  %1302 = vdwg.mxu0
  %1303 = vmatprep.subr.bf16.mxu0 %v314
  %1304 = vmatpush1.bf16.msra.mxu0 %v313
  %1305 = vmatprep.subr.bf16.mxu0 0
  %1306 = vmatpush1.bf16.msra.mxu0 0
  %1307 = vmatprep.subr.bf16.mxu0 0
  %1308 = vmatpush1.bf16.msra.mxu0 0
  %1309 = vmatprep.subr.bf16.mxu0 0
  %1310 = vmatpush1.bf16.msra.mxu0 0
  %1311 = vmatprep.subr.bf16.mxu0 0
  %1312 = vmatpush1.bf16.msra.mxu0 0
  %1313 = vmatprep.subr.bf16.mxu0 0
  %1314 = vmatpush1.bf16.msra.mxu0 0
  %1315 = vmatprep.subr.bf16.mxu0 0
  %1316 = vmatpush1.bf16.msra.mxu0 0
  %1317 = vmatprep.subr.bf16.mxu0 0
  %1318 = vmatpush1.bf16.msra.mxu0 0
  %1319 = vmatprep.subr.bf16.mxu0 0
  %1320 = vmatpush1.bf16.msra.mxu0 0
  %1321 = vmatprep.subr.bf16.mxu0 0
  %1322 = vmatpush1.bf16.msra.mxu0 0
  %1323 = vmatprep.subr.bf16.mxu0 0
  %1324 = vmatpush1.bf16.msra.mxu0 0
  %1325 = vmatprep.subr.bf16.mxu0 0
  %1326 = vmatpush1.bf16.msra.mxu0 0
  %1327 = vmatprep.subr.bf16.mxu0 0
  %1328 = vmatpush1.bf16.msra.mxu0 0
  %1329 = vmatprep.subr.bf16.mxu0 0
  %1330 = vmatpush1.bf16.msra.mxu0 0
  %1331 = vmatprep.subr.bf16.mxu0 0
  %1332 = vmatpush1.bf16.msra.mxu0 0
  %1333 = vmatprep.subr.bf16.mxu0 0
  %1334 = vmatpush1.bf16.msra.mxu0 0
  %1335 = vmatprep.mubr.bf16.mxu0 0
  %1336 = vmatmul.mubr.bf16.gmra.mrb[0].mxu0 %v399
  %v1337 = vpop.f32.mrb[0].mxu0
  %v1338 = vadd.f32 0.0, %v1337
  %v1339 = vpop.f32.mrb[0].mxu0
  %v1340 = vadd.f32 0.0, %v1339
  %v1341 = vpop.f32.mrb[0].mxu0
  %v1342 = vpop.f32.mrb[0].mxu0
  %1343 = vdwg.mxu0
  %1344 = vmatprep.subr.bf16.mxu0 %v316
  %1345 = vmatpush1.bf16.msra.mxu0 %v315
  %1346 = vmatprep.subr.bf16.mxu0 0
  %1347 = vmatpush1.bf16.msra.mxu0 0
  %1348 = vmatprep.subr.bf16.mxu0 0
  %1349 = vmatpush1.bf16.msra.mxu0 0
  %1350 = vmatprep.subr.bf16.mxu0 0
  %1351 = vmatpush1.bf16.msra.mxu0 0
  %1352 = vmatprep.subr.bf16.mxu0 0
  %1353 = vmatpush1.bf16.msra.mxu0 0
  %1354 = vmatprep.subr.bf16.mxu0 0
  %1355 = vmatpush1.bf16.msra.mxu0 0
  %1356 = vmatprep.subr.bf16.mxu0 0
  %1357 = vmatpush1.bf16.msra.mxu0 0
  %1358 = vmatprep.subr.bf16.mxu0 0
  %1359 = vmatpush1.bf16.msra.mxu0 0
  %1360 = vmatprep.subr.bf16.mxu0 0
  %1361 = vmatpush1.bf16.msra.mxu0 0
  %1362 = vmatprep.subr.bf16.mxu0 0
  %1363 = vmatpush1.bf16.msra.mxu0 0
  %1364 = vmatprep.subr.bf16.mxu0 0
  %1365 = vmatpush1.bf16.msra.mxu0 0
  %1366 = vmatprep.subr.bf16.mxu0 0
  %1367 = vmatpush1.bf16.msra.mxu0 0
  %1368 = vmatprep.subr.bf16.mxu0 0
  %1369 = vmatpush1.bf16.msra.mxu0 0
  %1370 = vmatprep.subr.bf16.mxu0 0
  %1371 = vmatpush1.bf16.msra.mxu0 0
  %1372 = vmatprep.subr.bf16.mxu0 0
  %1373 = vmatpush1.bf16.msra.mxu0 0
  %1374 = vmatprep.subr.bf16.mxu0 0
  %1375 = vmatpush1.bf16.msra.mxu0 0
  %1376 = vmatprep.mubr.bf16.mxu0 0
  %1377 = vmatmul.mubr.bf16.gmra.mrb[0].mxu0 %v399
  %v1378 = vpop.f32.mrb[0].mxu0
  %v1379 = vadd.f32 0.0, %v1378
  %v1380 = vpop.f32.mrb[0].mxu0
  %v1381 = vadd.f32 0.0, %v1380
  %v1382 = vpop.f32.mrb[0].mxu0
  %v1383 = vpop.f32.mrb[0].mxu0
  %1384 = vdwg.mxu0
  %1385 = vmatprep.subr.bf16.mxu0 %v318
  %1386 = vmatpush1.bf16.msra.mxu0 %v317
  %1387 = vmatprep.subr.bf16.mxu0 0
  %1388 = vmatpush1.bf16.msra.mxu0 0
  %1389 = vmatprep.subr.bf16.mxu0 0
  %1390 = vmatpush1.bf16.msra.mxu0 0
  %1391 = vmatprep.subr.bf16.mxu0 0
  %1392 = vmatpush1.bf16.msra.mxu0 0
  %1393 = vmatprep.subr.bf16.mxu0 0
  %1394 = vmatpush1.bf16.msra.mxu0 0
  %1395 = vmatprep.subr.bf16.mxu0 0
  %1396 = vmatpush1.bf16.msra.mxu0 0
  %1397 = vmatprep.subr.bf16.mxu0 0
  %1398 = vmatpush1.bf16.msra.mxu0 0
  %1399 = vmatprep.subr.bf16.mxu0 0
  %1400 = vmatpush1.bf16.msra.mxu0 0
  %1401 = vmatprep.subr.bf16.mxu0 0
  %1402 = vmatpush1.bf16.msra.mxu0 0
  %1403 = vmatprep.subr.bf16.mxu0 0
  %1404 = vmatpush1.bf16.msra.mxu0 0
  %1405 = vmatprep.subr.bf16.mxu0 0
  %1406 = vmatpush1.bf16.msra.mxu0 0
  %1407 = vmatprep.subr.bf16.mxu0 0
  %1408 = vmatpush1.bf16.msra.mxu0 0
  %1409 = vmatprep.subr.bf16.mxu0 0
  %1410 = vmatpush1.bf16.msra.mxu0 0
  %1411 = vmatprep.subr.bf16.mxu0 0
  %1412 = vmatpush1.bf16.msra.mxu0 0
  %1413 = vmatprep.subr.bf16.mxu0 0
  %1414 = vmatpush1.bf16.msra.mxu0 0
  %1415 = vmatprep.subr.bf16.mxu0 0
  %1416 = vmatpush1.bf16.msra.mxu0 0
  %1417 = vmatprep.mubr.bf16.mxu0 0
  %1418 = vmatmul.mubr.bf16.gmra.mrb[0].mxu0 %v399
  %v1419 = vpop.f32.mrb[0].mxu0
  %v1420 = vadd.f32 0.0, %v1419
  %v1421 = vpop.f32.mrb[0].mxu0
  %v1422 = vadd.f32 0.0, %v1421
  %v1423 = vpop.f32.mrb[0].mxu0
  %v1424 = vpop.f32.mrb[0].mxu0
  %1425 = vdwg.mxu0
  %1426 = vmatprep.subr.bf16.mxu0 %v320
  %1427 = vmatpush1.bf16.msra.mxu0 %v319
  %1428 = vmatprep.subr.bf16.mxu0 0
  %1429 = vmatpush1.bf16.msra.mxu0 0
  %1430 = vmatprep.subr.bf16.mxu0 0
  %1431 = vmatpush1.bf16.msra.mxu0 0
  %1432 = vmatprep.subr.bf16.mxu0 0
  %1433 = vmatpush1.bf16.msra.mxu0 0
  %1434 = vmatprep.subr.bf16.mxu0 0
  %1435 = vmatpush1.bf16.msra.mxu0 0
  %1436 = vmatprep.subr.bf16.mxu0 0
  %1437 = vmatpush1.bf16.msra.mxu0 0
  %1438 = vmatprep.subr.bf16.mxu0 0
  %1439 = vmatpush1.bf16.msra.mxu0 0
  %1440 = vmatprep.subr.bf16.mxu0 0
  %1441 = vmatpush1.bf16.msra.mxu0 0
  %1442 = vmatprep.subr.bf16.mxu0 0
  %1443 = vmatpush1.bf16.msra.mxu0 0
  %1444 = vmatprep.subr.bf16.mxu0 0
  %1445 = vmatpush1.bf16.msra.mxu0 0
  %1446 = vmatprep.subr.bf16.mxu0 0
  %1447 = vmatpush1.bf16.msra.mxu0 0
  %1448 = vmatprep.subr.bf16.mxu0 0
  %1449 = vmatpush1.bf16.msra.mxu0 0
  %1450 = vmatprep.subr.bf16.mxu0 0
  %1451 = vmatpush1.bf16.msra.mxu0 0
  %1452 = vmatprep.subr.bf16.mxu0 0
  %1453 = vmatpush1.bf16.msra.mxu0 0
  %1454 = vmatprep.subr.bf16.mxu0 0
  %1455 = vmatpush1.bf16.msra.mxu0 0
  %1456 = vmatprep.subr.bf16.mxu0 0
  %1457 = vmatpush1.bf16.msra.mxu0 0
  %1458 = vmatprep.mubr.bf16.mxu0 0
  %1459 = vmatmul.mubr.bf16.gmra.mrb[0].mxu0 %v399
  %v1460 = vpop.f32.mrb[0].mxu0
  %v1461 = vadd.f32 0.0, %v1460
  %v1462 = vpop.f32.mrb[0].mxu0
  %v1463 = vadd.f32 0.0, %v1462
  %v1464 = vpop.f32.mrb[0].mxu0
  %v1465 = vpop.f32.mrb[0].mxu0
  %1466 = vdwg.mxu0
  %1467 = vmatprep.subr.bf16.mxu0 %v322
  %1468 = vmatpush1.bf16.msra.mxu0 %v321
  %1469 = vmatprep.subr.bf16.mxu0 0
  %1470 = vmatpush1.bf16.msra.mxu0 0
  %1471 = vmatprep.subr.bf16.mxu0 0
  %1472 = vmatpush1.bf16.msra.mxu0 0
  %1473 = vmatprep.subr.bf16.mxu0 0
  %1474 = vmatpush1.bf16.msra.mxu0 0
  %1475 = vmatprep.subr.bf16.mxu0 0
  %1476 = vmatpush1.bf16.msra.mxu0 0
  %1477 = vmatprep.subr.bf16.mxu0 0
  %1478 = vmatpush1.bf16.msra.mxu0 0
  %1479 = vmatprep.subr.bf16.mxu0 0
  %1480 = vmatpush1.bf16.msra.mxu0 0
  %1481 = vmatprep.subr.bf16.mxu0 0
  %1482 = vmatpush1.bf16.msra.mxu0 0
  %1483 = vmatprep.subr.bf16.mxu0 0
  %1484 = vmatpush1.bf16.msra.mxu0 0
  %1485 = vmatprep.subr.bf16.mxu0 0
  %1486 = vmatpush1.bf16.msra.mxu0 0
  %1487 = vmatprep.subr.bf16.mxu0 0
  %1488 = vmatpush1.bf16.msra.mxu0 0
  %1489 = vmatprep.subr.bf16.mxu0 0
  %1490 = vmatpush1.bf16.msra.mxu0 0
  %1491 = vmatprep.subr.bf16.mxu0 0
  %1492 = vmatpush1.bf16.msra.mxu0 0
  %1493 = vmatprep.subr.bf16.mxu0 0
  %1494 = vmatpush1.bf16.msra.mxu0 0
  %1495 = vmatprep.subr.bf16.mxu0 0
  %1496 = vmatpush1.bf16.msra.mxu0 0
  %1497 = vmatprep.subr.bf16.mxu0 0
  %1498 = vmatpush1.bf16.msra.mxu0 0
  %1499 = vmatprep.mubr.bf16.mxu0 0
  %1500 = vmatmul.mubr.bf16.gmra.mrb[0].mxu0 %v399
  %v1501 = vpop.f32.mrb[0].mxu0
  %v1502 = vadd.f32 0.0, %v1501
  %v1503 = vpop.f32.mrb[0].mxu0
  %v1504 = vadd.f32 0.0, %v1503
  %v1505 = vpop.f32.mrb[0].mxu0
  %v1506 = vpop.f32.mrb[0].mxu0
  %1507 = vdwg.mxu0
  %1508 = vmatprep.subr.bf16.mxu0 %v324
  %1509 = vmatpush1.bf16.msra.mxu0 %v323
  %1510 = vmatprep.subr.bf16.mxu0 0
  %1511 = vmatpush1.bf16.msra.mxu0 0
  %1512 = vmatprep.subr.bf16.mxu0 0
  %1513 = vmatpush1.bf16.msra.mxu0 0
  %1514 = vmatprep.subr.bf16.mxu0 0
  %1515 = vmatpush1.bf16.msra.mxu0 0
  %1516 = vmatprep.subr.bf16.mxu0 0
  %1517 = vmatpush1.bf16.msra.mxu0 0
  %1518 = vmatprep.subr.bf16.mxu0 0
  %1519 = vmatpush1.bf16.msra.mxu0 0
  %1520 = vmatprep.subr.bf16.mxu0 0
  %1521 = vmatpush1.bf16.msra.mxu0 0
  %1522 = vmatprep.subr.bf16.mxu0 0
  %1523 = vmatpush1.bf16.msra.mxu0 0
  %1524 = vmatprep.subr.bf16.mxu0 0
  %1525 = vmatpush1.bf16.msra.mxu0 0
  %1526 = vmatprep.subr.bf16.mxu0 0
  %1527 = vmatpush1.bf16.msra.mxu0 0
  %1528 = vmatprep.subr.bf16.mxu0 0
  %1529 = vmatpush1.bf16.msra.mxu0 0
  %1530 = vmatprep.subr.bf16.mxu0 0
  %1531 = vmatpush1.bf16.msra.mxu0 0
  %1532 = vmatprep.subr.bf16.mxu0 0
  %1533 = vmatpush1.bf16.msra.mxu0 0
  %1534 = vmatprep.subr.bf16.mxu0 0
  %1535 = vmatpush1.bf16.msra.mxu0 0
  %1536 = vmatprep.subr.bf16.mxu0 0
  %1537 = vmatpush1.bf16.msra.mxu0 0
  %1538 = vmatprep.subr.bf16.mxu0 0
  %1539 = vmatpush1.bf16.msra.mxu0 0
  %1540 = vmatprep.mubr.bf16.mxu0 0
  %1541 = vmatmul.mubr.bf16.gmra.mrb[0].mxu0 %v399
  %v1542 = vpop.f32.mrb[0].mxu0
  %v1543 = vadd.f32 0.0, %v1542
  %v1544 = vpop.f32.mrb[0].mxu0
  %v1545 = vadd.f32 0.0, %v1544
  %v1546 = vpop.f32.mrb[0].mxu0
  %v1547 = vpop.f32.mrb[0].mxu0
  %1548 = vdwg.mxu0
  %1549 = vmatprep.subr.bf16.mxu0 %v326
  %1550 = vmatpush1.bf16.msra.mxu0 %v325
  %1551 = vmatprep.subr.bf16.mxu0 0
  %1552 = vmatpush1.bf16.msra.mxu0 0
  %1553 = vmatprep.subr.bf16.mxu0 0
  %1554 = vmatpush1.bf16.msra.mxu0 0
  %1555 = vmatprep.subr.bf16.mxu0 0
  %1556 = vmatpush1.bf16.msra.mxu0 0
  %1557 = vmatprep.subr.bf16.mxu0 0
  %1558 = vmatpush1.bf16.msra.mxu0 0
  %1559 = vmatprep.subr.bf16.mxu0 0
  %1560 = vmatpush1.bf16.msra.mxu0 0
  %1561 = vmatprep.subr.bf16.mxu0 0
  %1562 = vmatpush1.bf16.msra.mxu0 0
  %1563 = vmatprep.subr.bf16.mxu0 0
  %1564 = vmatpush1.bf16.msra.mxu0 0
  %1565 = vmatprep.subr.bf16.mxu0 0
  %1566 = vmatpush1.bf16.msra.mxu0 0
  %1567 = vmatprep.subr.bf16.mxu0 0
  %1568 = vmatpush1.bf16.msra.mxu0 0
  %1569 = vmatprep.subr.bf16.mxu0 0
  %1570 = vmatpush1.bf16.msra.mxu0 0
  %1571 = vmatprep.subr.bf16.mxu0 0
  %1572 = vmatpush1.bf16.msra.mxu0 0
  %1573 = vmatprep.subr.bf16.mxu0 0
  %1574 = vmatpush1.bf16.msra.mxu0 0
  %1575 = vmatprep.subr.bf16.mxu0 0
  %1576 = vmatpush1.bf16.msra.mxu0 0
  %1577 = vmatprep.subr.bf16.mxu0 0
  %1578 = vmatpush1.bf16.msra.mxu0 0
  %1579 = vmatprep.subr.bf16.mxu0 0
  %1580 = vmatpush1.bf16.msra.mxu0 0
  %1581 = vmatprep.mubr.bf16.mxu0 0
  %1582 = vmatmul.mubr.bf16.gmra.mrb[0].mxu0 %v399
  %v1583 = vpop.f32.mrb[0].mxu0
  %v1584 = vadd.f32 0.0, %v1583
  %v1585 = vpop.f32.mrb[0].mxu0
  %v1586 = vadd.f32 0.0, %v1585
  %v1587 = vpop.f32.mrb[0].mxu0
  %v1588 = vpop.f32.mrb[0].mxu0
  %1589 = vdwg.mxu0
  %1590 = vmatprep.subr.bf16.mxu0 %v328
  %1591 = vmatpush1.bf16.msra.mxu0 %v327
  %1592 = vmatprep.subr.bf16.mxu0 0
  %1593 = vmatpush1.bf16.msra.mxu0 0
  %1594 = vmatprep.subr.bf16.mxu0 0
  %1595 = vmatpush1.bf16.msra.mxu0 0
  %1596 = vmatprep.subr.bf16.mxu0 0
  %1597 = vmatpush1.bf16.msra.mxu0 0
  %1598 = vmatprep.subr.bf16.mxu0 0
  %1599 = vmatpush1.bf16.msra.mxu0 0
  %1600 = vmatprep.subr.bf16.mxu0 0
  %1601 = vmatpush1.bf16.msra.mxu0 0
  %1602 = vmatprep.subr.bf16.mxu0 0
  %1603 = vmatpush1.bf16.msra.mxu0 0
  %1604 = vmatprep.subr.bf16.mxu0 0
  %1605 = vmatpush1.bf16.msra.mxu0 0
  %1606 = vmatprep.subr.bf16.mxu0 0
  %1607 = vmatpush1.bf16.msra.mxu0 0
  %1608 = vmatprep.subr.bf16.mxu0 0
  %1609 = vmatpush1.bf16.msra.mxu0 0
  %1610 = vmatprep.subr.bf16.mxu0 0
  %1611 = vmatpush1.bf16.msra.mxu0 0
  %1612 = vmatprep.subr.bf16.mxu0 0
  %1613 = vmatpush1.bf16.msra.mxu0 0
  %1614 = vmatprep.subr.bf16.mxu0 0
  %1615 = vmatpush1.bf16.msra.mxu0 0
  %1616 = vmatprep.subr.bf16.mxu0 0
  %1617 = vmatpush1.bf16.msra.mxu0 0
  %1618 = vmatprep.subr.bf16.mxu0 0
  %1619 = vmatpush1.bf16.msra.mxu0 0
  %1620 = vmatprep.subr.bf16.mxu0 0
  %1621 = vmatpush1.bf16.msra.mxu0 0
  %1622 = vmatprep.mubr.bf16.mxu0 0
  %1623 = vmatmul.mubr.bf16.gmra.mrb[0].mxu0 %v399
  %v1624 = vpop.f32.mrb[0].mxu0
  %v1625 = vadd.f32 0.0, %v1624
  %v1626 = vpop.f32.mrb[0].mxu0
  %v1627 = vadd.f32 0.0, %v1626
  %v1628 = vpop.f32.mrb[0].mxu0
  %v1629 = vpop.f32.mrb[0].mxu0
  %1630 = vdwg.mxu0
  %1631 = vmatprep.subr.bf16.mxu0 %v330
  %1632 = vmatpush1.bf16.msra.mxu0 %v329
  %1633 = vmatprep.subr.bf16.mxu0 0
  %1634 = vmatpush1.bf16.msra.mxu0 0
  %1635 = vmatprep.subr.bf16.mxu0 0
  %1636 = vmatpush1.bf16.msra.mxu0 0
  %1637 = vmatprep.subr.bf16.mxu0 0
  %1638 = vmatpush1.bf16.msra.mxu0 0
  %1639 = vmatprep.subr.bf16.mxu0 0
  %1640 = vmatpush1.bf16.msra.mxu0 0
  %1641 = vmatprep.subr.bf16.mxu0 0
  %1642 = vmatpush1.bf16.msra.mxu0 0
  %1643 = vmatprep.subr.bf16.mxu0 0
  %1644 = vmatpush1.bf16.msra.mxu0 0
  %1645 = vmatprep.subr.bf16.mxu0 0
  %1646 = vmatpush1.bf16.msra.mxu0 0
  %1647 = vmatprep.subr.bf16.mxu0 0
  %1648 = vmatpush1.bf16.msra.mxu0 0
  %1649 = vmatprep.subr.bf16.mxu0 0
  %1650 = vmatpush1.bf16.msra.mxu0 0
  %1651 = vmatprep.subr.bf16.mxu0 0
  %1652 = vmatpush1.bf16.msra.mxu0 0
  %1653 = vmatprep.subr.bf16.mxu0 0
  %1654 = vmatpush1.bf16.msra.mxu0 0
  %1655 = vmatprep.subr.bf16.mxu0 0
  %1656 = vmatpush1.bf16.msra.mxu0 0
  %1657 = vmatprep.subr.bf16.mxu0 0
  %1658 = vmatpush1.bf16.msra.mxu0 0
  %1659 = vmatprep.subr.bf16.mxu0 0
  %1660 = vmatpush1.bf16.msra.mxu0 0
  %1661 = vmatprep.subr.bf16.mxu0 0
  %1662 = vmatpush1.bf16.msra.mxu0 0
  %1663 = vmatprep.mubr.bf16.mxu0 0
  %1664 = vmatmul.mubr.bf16.gmra.mrb[0].mxu0 %v399
  %v1665 = vpop.f32.mrb[0].mxu0
  %v1666 = vadd.f32 0.0, %v1665
  %v1667 = vpop.f32.mrb[0].mxu0
  %v1668 = vadd.f32 0.0, %v1667
  %v1669 = vpop.f32.mrb[0].mxu0
  %v1670 = vpop.f32.mrb[0].mxu0
  %1671 = vdwg.mxu0
  %1672 = vmatprep.subr.bf16.mxu0 %v332
  %1673 = vmatpush1.bf16.msra.mxu0 %v331
  %1674 = vmatprep.subr.bf16.mxu0 0
  %1675 = vmatpush1.bf16.msra.mxu0 0
  %1676 = vmatprep.subr.bf16.mxu0 0
  %1677 = vmatpush1.bf16.msra.mxu0 0
  %1678 = vmatprep.subr.bf16.mxu0 0
  %1679 = vmatpush1.bf16.msra.mxu0 0
  %1680 = vmatprep.subr.bf16.mxu0 0
  %1681 = vmatpush1.bf16.msra.mxu0 0
  %1682 = vmatprep.subr.bf16.mxu0 0
  %1683 = vmatpush1.bf16.msra.mxu0 0
  %1684 = vmatprep.subr.bf16.mxu0 0
  %1685 = vmatpush1.bf16.msra.mxu0 0
  %1686 = vmatprep.subr.bf16.mxu0 0
  %1687 = vmatpush1.bf16.msra.mxu0 0
  %1688 = vmatprep.subr.bf16.mxu0 0
  %1689 = vmatpush1.bf16.msra.mxu0 0
  %1690 = vmatprep.subr.bf16.mxu0 0
  %1691 = vmatpush1.bf16.msra.mxu0 0
  %1692 = vmatprep.subr.bf16.mxu0 0
  %1693 = vmatpush1.bf16.msra.mxu0 0
  %1694 = vmatprep.subr.bf16.mxu0 0
  %1695 = vmatpush1.bf16.msra.mxu0 0
  %1696 = vmatprep.subr.bf16.mxu0 0
  %1697 = vmatpush1.bf16.msra.mxu0 0
  %1698 = vmatprep.subr.bf16.mxu0 0
  %1699 = vmatpush1.bf16.msra.mxu0 0
  %1700 = vmatprep.subr.bf16.mxu0 0
  %1701 = vmatpush1.bf16.msra.mxu0 0
  %1702 = vmatprep.subr.bf16.mxu0 0
  %1703 = vmatpush1.bf16.msra.mxu0 0
  %1704 = vmatprep.mubr.bf16.mxu0 0
  %1705 = vmatmul.mubr.bf16.gmra.mrb[0].mxu0 %v399
  %v1706 = vpop.f32.mrb[0].mxu0
  %v1707 = vadd.f32 0.0, %v1706
  %v1708 = vpop.f32.mrb[0].mxu0
  %v1709 = vadd.f32 0.0, %v1708
  %v1710 = vpop.f32.mrb[0].mxu0
  %v1711 = vpop.f32.mrb[0].mxu0
  %1712 = vdwg.mxu0
  %vm1713 = vcmask 1041408
  %v1714 = vsel %vm1713, %v436, -inf
  %v1715 = vrot.slane %v1714, 4
  %v1716 = vmax.f32 %v1714, %v1715
  %v1717 = vrot.slane %v1716, 2
  %v1718 = vmax.f32 %v1716, %v1717
  %v1719 = vrot.slane %v1718, 1
  %v1720 = vmax.f32 %v1718, %v1719
  %v1721 = vsel %vm1713, %v438, -inf
  %v1722 = vrot.slane %v1721, 4
  %v1723 = vmax.f32 %v1721, %v1722
  %v1724 = vrot.slane %v1723, 2
  %v1725 = vmax.f32 %v1723, %v1724
  %v1726 = vrot.slane %v1725, 1
  %v1727 = vmax.f32 %v1725, %v1726
  %v1728 = vsel %vm1713, %v477, -inf
  %v1729 = vrot.slane %v1728, 4
  %v1730 = vmax.f32 %v1728, %v1729
  %v1731 = vrot.slane %v1730, 2
  %v1732 = vmax.f32 %v1730, %v1731
  %v1733 = vrot.slane %v1732, 1
  %v1734 = vmax.f32 %v1732, %v1733
  %v1735 = vsel %vm1713, %v479, -inf
  %v1736 = vrot.slane %v1735, 4
  %v1737 = vmax.f32 %v1735, %v1736
  %v1738 = vrot.slane %v1737, 2
  %v1739 = vmax.f32 %v1737, %v1738
  %v1740 = vrot.slane %v1739, 1
  %v1741 = vmax.f32 %v1739, %v1740
  %v1742 = vsel %vm1713, %v518, -inf
  %v1743 = vrot.slane %v1742, 4
  %v1744 = vmax.f32 %v1742, %v1743
  %v1745 = vrot.slane %v1744, 2
  %v1746 = vmax.f32 %v1744, %v1745
  %v1747 = vrot.slane %v1746, 1
  %v1748 = vmax.f32 %v1746, %v1747
  %v1749 = vsel %vm1713, %v520, -inf
  %v1750 = vrot.slane %v1749, 4
  %v1751 = vmax.f32 %v1749, %v1750
  %v1752 = vrot.slane %v1751, 2
  %v1753 = vmax.f32 %v1751, %v1752
  %v1754 = vrot.slane %v1753, 1
  %v1755 = vmax.f32 %v1753, %v1754
  %v1756 = vsel %vm1713, %v559, -inf
  %v1757 = vrot.slane %v1756, 4
  %v1758 = vmax.f32 %v1756, %v1757
  %v1759 = vrot.slane %v1758, 2
  %v1760 = vmax.f32 %v1758, %v1759
  %v1761 = vrot.slane %v1760, 1
  %v1762 = vmax.f32 %v1760, %v1761
  %v1763 = vsel %vm1713, %v561, -inf
  %v1764 = vrot.slane %v1763, 4
  %v1765 = vmax.f32 %v1763, %v1764
  %v1766 = vrot.slane %v1765, 2
  %v1767 = vmax.f32 %v1765, %v1766
  %v1768 = vrot.slane %v1767, 1
  %v1769 = vmax.f32 %v1767, %v1768
  %v1770 = vsel %vm1713, %v600, -inf
  %v1771 = vrot.slane %v1770, 4
  %v1772 = vmax.f32 %v1770, %v1771
  %v1773 = vrot.slane %v1772, 2
  %v1774 = vmax.f32 %v1772, %v1773
  %v1775 = vrot.slane %v1774, 1
  %v1776 = vmax.f32 %v1774, %v1775
  %v1777 = vsel %vm1713, %v602, -inf
  %v1778 = vrot.slane %v1777, 4
  %v1779 = vmax.f32 %v1777, %v1778
  %v1780 = vrot.slane %v1779, 2
  %v1781 = vmax.f32 %v1779, %v1780
  %v1782 = vrot.slane %v1781, 1
  %v1783 = vmax.f32 %v1781, %v1782
  %v1784 = vsel %vm1713, %v641, -inf
  %v1785 = vrot.slane %v1784, 4
  %v1786 = vmax.f32 %v1784, %v1785
  %v1787 = vrot.slane %v1786, 2
  %v1788 = vmax.f32 %v1786, %v1787
  %v1789 = vrot.slane %v1788, 1
  %v1790 = vmax.f32 %v1788, %v1789
  %v1791 = vsel %vm1713, %v643, -inf
  %v1792 = vrot.slane %v1791, 4
  %v1793 = vmax.f32 %v1791, %v1792
  %v1794 = vrot.slane %v1793, 2
  %v1795 = vmax.f32 %v1793, %v1794
  %v1796 = vrot.slane %v1795, 1
  %v1797 = vmax.f32 %v1795, %v1796
  %v1798 = vsel %vm1713, %v682, -inf
  %v1799 = vrot.slane %v1798, 4
  %v1800 = vmax.f32 %v1798, %v1799
  %v1801 = vrot.slane %v1800, 2
  %v1802 = vmax.f32 %v1800, %v1801
  %v1803 = vrot.slane %v1802, 1
  %v1804 = vmax.f32 %v1802, %v1803
  %v1805 = vsel %vm1713, %v684, -inf
  %v1806 = vrot.slane %v1805, 4
  %v1807 = vmax.f32 %v1805, %v1806
  %v1808 = vrot.slane %v1807, 2
  %v1809 = vmax.f32 %v1807, %v1808
  %v1810 = vrot.slane %v1809, 1
  %v1811 = vmax.f32 %v1809, %v1810
  %v1812 = vsel %vm1713, %v723, -inf
  %v1813 = vrot.slane %v1812, 4
  %v1814 = vmax.f32 %v1812, %v1813
  %v1815 = vrot.slane %v1814, 2
  %v1816 = vmax.f32 %v1814, %v1815
  %v1817 = vrot.slane %v1816, 1
  %v1818 = vmax.f32 %v1816, %v1817
  %v1819 = vsel %vm1713, %v725, -inf
  %v1820 = vrot.slane %v1819, 4
  %v1821 = vmax.f32 %v1819, %v1820
  %v1822 = vrot.slane %v1821, 2
  %v1823 = vmax.f32 %v1821, %v1822
  %v1824 = vrot.slane %v1823, 1
  %v1825 = vmax.f32 %v1823, %v1824
  %v1826 = vsel %vm1713, %v764, -inf
  %v1827 = vrot.slane %v1826, 4
  %v1828 = vmax.f32 %v1826, %v1827
  %v1829 = vrot.slane %v1828, 2
  %v1830 = vmax.f32 %v1828, %v1829
  %v1831 = vrot.slane %v1830, 1
  %v1832 = vmax.f32 %v1830, %v1831
  %v1833 = vsel %vm1713, %v766, -inf
  %v1834 = vrot.slane %v1833, 4
  %v1835 = vmax.f32 %v1833, %v1834
  %v1836 = vrot.slane %v1835, 2
  %v1837 = vmax.f32 %v1835, %v1836
  %v1838 = vrot.slane %v1837, 1
  %v1839 = vmax.f32 %v1837, %v1838
  %v1840 = vsel %vm1713, %v805, -inf
  %v1841 = vrot.slane %v1840, 4
  %v1842 = vmax.f32 %v1840, %v1841
  %v1843 = vrot.slane %v1842, 2
  %v1844 = vmax.f32 %v1842, %v1843
  %v1845 = vrot.slane %v1844, 1
  %v1846 = vmax.f32 %v1844, %v1845
  %v1847 = vsel %vm1713, %v807, -inf
  %v1848 = vrot.slane %v1847, 4
  %v1849 = vmax.f32 %v1847, %v1848
  %v1850 = vrot.slane %v1849, 2
  %v1851 = vmax.f32 %v1849, %v1850
  %v1852 = vrot.slane %v1851, 1
  %v1853 = vmax.f32 %v1851, %v1852
  %v1854 = vsel %vm1713, %v846, -inf
  %v1855 = vrot.slane %v1854, 4
  %v1856 = vmax.f32 %v1854, %v1855
  %v1857 = vrot.slane %v1856, 2
  %v1858 = vmax.f32 %v1856, %v1857
  %v1859 = vrot.slane %v1858, 1
  %v1860 = vmax.f32 %v1858, %v1859
  %v1861 = vsel %vm1713, %v848, -inf
  %v1862 = vrot.slane %v1861, 4
  %v1863 = vmax.f32 %v1861, %v1862
  %v1864 = vrot.slane %v1863, 2
  %v1865 = vmax.f32 %v1863, %v1864
  %v1866 = vrot.slane %v1865, 1
  %v1867 = vmax.f32 %v1865, %v1866
  %v1868 = vsel %vm1713, %v887, -inf
  %v1869 = vrot.slane %v1868, 4
  %v1870 = vmax.f32 %v1868, %v1869
  %v1871 = vrot.slane %v1870, 2
  %v1872 = vmax.f32 %v1870, %v1871
  %v1873 = vrot.slane %v1872, 1
  %v1874 = vmax.f32 %v1872, %v1873
  %v1875 = vsel %vm1713, %v889, -inf
  %v1876 = vrot.slane %v1875, 4
  %v1877 = vmax.f32 %v1875, %v1876
  %v1878 = vrot.slane %v1877, 2
  %v1879 = vmax.f32 %v1877, %v1878
  %v1880 = vrot.slane %v1879, 1
  %v1881 = vmax.f32 %v1879, %v1880
  %v1882 = vsel %vm1713, %v928, -inf
  %v1883 = vrot.slane %v1882, 4
  %v1884 = vmax.f32 %v1882, %v1883
  %v1885 = vrot.slane %v1884, 2
  %v1886 = vmax.f32 %v1884, %v1885
  %v1887 = vrot.slane %v1886, 1
  %v1888 = vmax.f32 %v1886, %v1887
  %v1889 = vsel %vm1713, %v930, -inf
  %v1890 = vrot.slane %v1889, 4
  %v1891 = vmax.f32 %v1889, %v1890
  %v1892 = vrot.slane %v1891, 2
  %v1893 = vmax.f32 %v1891, %v1892
  %v1894 = vrot.slane %v1893, 1
  %v1895 = vmax.f32 %v1893, %v1894
  %v1896 = vsel %vm1713, %v969, -inf
  %v1897 = vrot.slane %v1896, 4
  %v1898 = vmax.f32 %v1896, %v1897
  %v1899 = vrot.slane %v1898, 2
  %v1900 = vmax.f32 %v1898, %v1899
  %v1901 = vrot.slane %v1900, 1
  %v1902 = vmax.f32 %v1900, %v1901
  %v1903 = vsel %vm1713, %v971, -inf
  %v1904 = vrot.slane %v1903, 4
  %v1905 = vmax.f32 %v1903, %v1904
  %v1906 = vrot.slane %v1905, 2
  %v1907 = vmax.f32 %v1905, %v1906
  %v1908 = vrot.slane %v1907, 1
  %v1909 = vmax.f32 %v1907, %v1908
  %v1910 = vsel %vm1713, %v1010, -inf
  %v1911 = vrot.slane %v1910, 4
  %v1912 = vmax.f32 %v1910, %v1911
  %v1913 = vrot.slane %v1912, 2
  %v1914 = vmax.f32 %v1912, %v1913
  %v1915 = vrot.slane %v1914, 1
  %v1916 = vmax.f32 %v1914, %v1915
  %v1917 = vsel %vm1713, %v1012, -inf
  %v1918 = vrot.slane %v1917, 4
  %v1919 = vmax.f32 %v1917, %v1918
  %v1920 = vrot.slane %v1919, 2
  %v1921 = vmax.f32 %v1919, %v1920
  %v1922 = vrot.slane %v1921, 1
  %v1923 = vmax.f32 %v1921, %v1922
  %v1924 = vsel %vm1713, %v1051, -inf
  %v1925 = vrot.slane %v1924, 4
  %v1926 = vmax.f32 %v1924, %v1925
  %v1927 = vrot.slane %v1926, 2
  %v1928 = vmax.f32 %v1926, %v1927
  %v1929 = vrot.slane %v1928, 1
  %v1930 = vmax.f32 %v1928, %v1929
  %v1931 = vsel %vm1713, %v1053, -inf
  %v1932 = vrot.slane %v1931, 4
  %v1933 = vmax.f32 %v1931, %v1932
  %v1934 = vrot.slane %v1933, 2
  %v1935 = vmax.f32 %v1933, %v1934
  %v1936 = vrot.slane %v1935, 1
  %v1937 = vmax.f32 %v1935, %v1936
  %v1938 = vsel %vm1713, %v1092, -inf
  %v1939 = vrot.slane %v1938, 4
  %v1940 = vmax.f32 %v1938, %v1939
  %v1941 = vrot.slane %v1940, 2
  %v1942 = vmax.f32 %v1940, %v1941
  %v1943 = vrot.slane %v1942, 1
  %v1944 = vmax.f32 %v1942, %v1943
  %v1945 = vsel %vm1713, %v1094, -inf
  %v1946 = vrot.slane %v1945, 4
  %v1947 = vmax.f32 %v1945, %v1946
  %v1948 = vrot.slane %v1947, 2
  %v1949 = vmax.f32 %v1947, %v1948
  %v1950 = vrot.slane %v1949, 1
  %v1951 = vmax.f32 %v1949, %v1950
  %v1952 = vsel %vm1713, %v1133, -inf
  %v1953 = vrot.slane %v1952, 4
  %v1954 = vmax.f32 %v1952, %v1953
  %v1955 = vrot.slane %v1954, 2
  %v1956 = vmax.f32 %v1954, %v1955
  %v1957 = vrot.slane %v1956, 1
  %v1958 = vmax.f32 %v1956, %v1957
  %v1959 = vsel %vm1713, %v1135, -inf
  %v1960 = vrot.slane %v1959, 4
  %v1961 = vmax.f32 %v1959, %v1960
  %v1962 = vrot.slane %v1961, 2
  %v1963 = vmax.f32 %v1961, %v1962
  %v1964 = vrot.slane %v1963, 1
  %v1965 = vmax.f32 %v1963, %v1964
  %v1966 = vsel %vm1713, %v1174, -inf
  %v1967 = vrot.slane %v1966, 4
  %v1968 = vmax.f32 %v1966, %v1967
  %v1969 = vrot.slane %v1968, 2
  %v1970 = vmax.f32 %v1968, %v1969
  %v1971 = vrot.slane %v1970, 1
  %v1972 = vmax.f32 %v1970, %v1971
  %v1973 = vsel %vm1713, %v1176, -inf
  %v1974 = vrot.slane %v1973, 4
  %v1975 = vmax.f32 %v1973, %v1974
  %v1976 = vrot.slane %v1975, 2
  %v1977 = vmax.f32 %v1975, %v1976
  %v1978 = vrot.slane %v1977, 1
  %v1979 = vmax.f32 %v1977, %v1978
  %v1980 = vsel %vm1713, %v1215, -inf
  %v1981 = vrot.slane %v1980, 4
  %v1982 = vmax.f32 %v1980, %v1981
  %v1983 = vrot.slane %v1982, 2
  %v1984 = vmax.f32 %v1982, %v1983
  %v1985 = vrot.slane %v1984, 1
  %v1986 = vmax.f32 %v1984, %v1985
  %v1987 = vsel %vm1713, %v1217, -inf
  %v1988 = vrot.slane %v1987, 4
  %v1989 = vmax.f32 %v1987, %v1988
  %v1990 = vrot.slane %v1989, 2
  %v1991 = vmax.f32 %v1989, %v1990
  %v1992 = vrot.slane %v1991, 1
  %v1993 = vmax.f32 %v1991, %v1992
  %v1994 = vsel %vm1713, %v1256, -inf
  %v1995 = vrot.slane %v1994, 4
  %v1996 = vmax.f32 %v1994, %v1995
  %v1997 = vrot.slane %v1996, 2
  %v1998 = vmax.f32 %v1996, %v1997
  %v1999 = vrot.slane %v1998, 1
  %v2000 = vmax.f32 %v1998, %v1999
  %v2001 = vsel %vm1713, %v1258, -inf
  %v2002 = vrot.slane %v2001, 4
  %v2003 = vmax.f32 %v2001, %v2002
  %v2004 = vrot.slane %v2003, 2
  %v2005 = vmax.f32 %v2003, %v2004
  %v2006 = vrot.slane %v2005, 1
  %v2007 = vmax.f32 %v2005, %v2006
  %v2008 = vsel %vm1713, %v1297, -inf
  %v2009 = vrot.slane %v2008, 4
  %v2010 = vmax.f32 %v2008, %v2009
  %v2011 = vrot.slane %v2010, 2
  %v2012 = vmax.f32 %v2010, %v2011
  %v2013 = vrot.slane %v2012, 1
  %v2014 = vmax.f32 %v2012, %v2013
  %v2015 = vsel %vm1713, %v1299, -inf
  %v2016 = vrot.slane %v2015, 4
  %v2017 = vmax.f32 %v2015, %v2016
  %v2018 = vrot.slane %v2017, 2
  %v2019 = vmax.f32 %v2017, %v2018
  %v2020 = vrot.slane %v2019, 1
  %v2021 = vmax.f32 %v2019, %v2020
  %v2022 = vsel %vm1713, %v1338, -inf
  %v2023 = vrot.slane %v2022, 4
  %v2024 = vmax.f32 %v2022, %v2023
  %v2025 = vrot.slane %v2024, 2
  %v2026 = vmax.f32 %v2024, %v2025
  %v2027 = vrot.slane %v2026, 1
  %v2028 = vmax.f32 %v2026, %v2027
  %v2029 = vsel %vm1713, %v1340, -inf
  %v2030 = vrot.slane %v2029, 4
  %v2031 = vmax.f32 %v2029, %v2030
  %v2032 = vrot.slane %v2031, 2
  %v2033 = vmax.f32 %v2031, %v2032
  %v2034 = vrot.slane %v2033, 1
  %v2035 = vmax.f32 %v2033, %v2034
  %v2036 = vsel %vm1713, %v1379, -inf
  %v2037 = vrot.slane %v2036, 4
  %v2038 = vmax.f32 %v2036, %v2037
  %v2039 = vrot.slane %v2038, 2
  %v2040 = vmax.f32 %v2038, %v2039
  %v2041 = vrot.slane %v2040, 1
  %v2042 = vmax.f32 %v2040, %v2041
  %v2043 = vsel %vm1713, %v1381, -inf
  %v2044 = vrot.slane %v2043, 4
  %v2045 = vmax.f32 %v2043, %v2044
  %v2046 = vrot.slane %v2045, 2
  %v2047 = vmax.f32 %v2045, %v2046
  %v2048 = vrot.slane %v2047, 1
  %v2049 = vmax.f32 %v2047, %v2048
  %v2050 = vsel %vm1713, %v1420, -inf
  %v2051 = vrot.slane %v2050, 4
  %v2052 = vmax.f32 %v2050, %v2051
  %v2053 = vrot.slane %v2052, 2
  %v2054 = vmax.f32 %v2052, %v2053
  %v2055 = vrot.slane %v2054, 1
  %v2056 = vmax.f32 %v2054, %v2055
  %v2057 = vsel %vm1713, %v1422, -inf
  %v2058 = vrot.slane %v2057, 4
  %v2059 = vmax.f32 %v2057, %v2058
  %v2060 = vrot.slane %v2059, 2
  %v2061 = vmax.f32 %v2059, %v2060
  %v2062 = vrot.slane %v2061, 1
  %v2063 = vmax.f32 %v2061, %v2062
  %v2064 = vsel %vm1713, %v1461, -inf
  %v2065 = vrot.slane %v2064, 4
  %v2066 = vmax.f32 %v2064, %v2065
  %v2067 = vrot.slane %v2066, 2
  %v2068 = vmax.f32 %v2066, %v2067
  %v2069 = vrot.slane %v2068, 1
  %v2070 = vmax.f32 %v2068, %v2069
  %v2071 = vsel %vm1713, %v1463, -inf
  %v2072 = vrot.slane %v2071, 4
  %v2073 = vmax.f32 %v2071, %v2072
  %v2074 = vrot.slane %v2073, 2
  %v2075 = vmax.f32 %v2073, %v2074
  %v2076 = vrot.slane %v2075, 1
  %v2077 = vmax.f32 %v2075, %v2076
  %v2078 = vsel %vm1713, %v1502, -inf
  %v2079 = vrot.slane %v2078, 4
  %v2080 = vmax.f32 %v2078, %v2079
  %v2081 = vrot.slane %v2080, 2
  %v2082 = vmax.f32 %v2080, %v2081
  %v2083 = vrot.slane %v2082, 1
  %v2084 = vmax.f32 %v2082, %v2083
  %v2085 = vsel %vm1713, %v1504, -inf
  %v2086 = vrot.slane %v2085, 4
  %v2087 = vmax.f32 %v2085, %v2086
  %v2088 = vrot.slane %v2087, 2
  %v2089 = vmax.f32 %v2087, %v2088
  %v2090 = vrot.slane %v2089, 1
  %v2091 = vmax.f32 %v2089, %v2090
  %v2092 = vsel %vm1713, %v1543, -inf
  %v2093 = vrot.slane %v2092, 4
  %v2094 = vmax.f32 %v2092, %v2093
  %v2095 = vrot.slane %v2094, 2
  %v2096 = vmax.f32 %v2094, %v2095
  %v2097 = vrot.slane %v2096, 1
  %v2098 = vmax.f32 %v2096, %v2097
  %v2099 = vsel %vm1713, %v1545, -inf
  %v2100 = vrot.slane %v2099, 4
  %v2101 = vmax.f32 %v2099, %v2100
  %v2102 = vrot.slane %v2101, 2
  %v2103 = vmax.f32 %v2101, %v2102
  %v2104 = vrot.slane %v2103, 1
  %v2105 = vmax.f32 %v2103, %v2104
  %v2106 = vsel %vm1713, %v1584, -inf
  %v2107 = vrot.slane %v2106, 4
  %v2108 = vmax.f32 %v2106, %v2107
  %v2109 = vrot.slane %v2108, 2
  %v2110 = vmax.f32 %v2108, %v2109
  %v2111 = vrot.slane %v2110, 1
  %v2112 = vmax.f32 %v2110, %v2111
  %v2113 = vsel %vm1713, %v1586, -inf
  %v2114 = vrot.slane %v2113, 4
  %v2115 = vmax.f32 %v2113, %v2114
  %v2116 = vrot.slane %v2115, 2
  %v2117 = vmax.f32 %v2115, %v2116
  %v2118 = vrot.slane %v2117, 1
  %v2119 = vmax.f32 %v2117, %v2118
  %v2120 = vsel %vm1713, %v1625, -inf
  %v2121 = vrot.slane %v2120, 4
  %v2122 = vmax.f32 %v2120, %v2121
  %v2123 = vrot.slane %v2122, 2
  %v2124 = vmax.f32 %v2122, %v2123
  %v2125 = vrot.slane %v2124, 1
  %v2126 = vmax.f32 %v2124, %v2125
  %v2127 = vsel %vm1713, %v1627, -inf
  %v2128 = vrot.slane %v2127, 4
  %v2129 = vmax.f32 %v2127, %v2128
  %v2130 = vrot.slane %v2129, 2
  %v2131 = vmax.f32 %v2129, %v2130
  %v2132 = vrot.slane %v2131, 1
  %v2133 = vmax.f32 %v2131, %v2132
  %v2134 = vsel %vm1713, %v1666, -inf
  %v2135 = vrot.slane %v2134, 4
  %v2136 = vmax.f32 %v2134, %v2135
  %v2137 = vrot.slane %v2136, 2
  %v2138 = vmax.f32 %v2136, %v2137
  %v2139 = vrot.slane %v2138, 1
  %v2140 = vmax.f32 %v2138, %v2139
  %v2141 = vsel %vm1713, %v1668, -inf
  %v2142 = vrot.slane %v2141, 4
  %v2143 = vmax.f32 %v2141, %v2142
  %v2144 = vrot.slane %v2143, 2
  %v2145 = vmax.f32 %v2143, %v2144
  %v2146 = vrot.slane %v2145, 1
  %v2147 = vmax.f32 %v2145, %v2146
  %v2148 = vsel %vm1713, %v1707, -inf
  %v2149 = vrot.slane %v2148, 4
  %v2150 = vmax.f32 %v2148, %v2149
  %v2151 = vrot.slane %v2150, 2
  %v2152 = vmax.f32 %v2150, %v2151
  %v2153 = vrot.slane %v2152, 1
  %v2154 = vmax.f32 %v2152, %v2153
  %v2155 = vsel %vm1713, %v1709, -inf
  %v2156 = vrot.slane %v2155, 4
  %v2157 = vmax.f32 %v2155, %v2156
  %v2158 = vrot.slane %v2157, 2
  %v2159 = vmax.f32 %v2157, %v2158
  %v2160 = vrot.slane %v2159, 1
  %v2161 = vmax.f32 %v2159, %v2160
  %v2162 = vsub.f32 %v436, %v1720
  %v2163 = vsub.f32 %v438, %v1727
  %v2164 = vsub.f32 %v477, %v1734
  %v2165 = vsub.f32 %v479, %v1741
  %v2166 = vsub.f32 %v518, %v1748
  %v2167 = vsub.f32 %v520, %v1755
  %v2168 = vsub.f32 %v559, %v1762
  %v2169 = vsub.f32 %v561, %v1769
  %v2170 = vsub.f32 %v600, %v1776
  %v2171 = vsub.f32 %v602, %v1783
  %v2172 = vsub.f32 %v641, %v1790
  %v2173 = vsub.f32 %v643, %v1797
  %v2174 = vsub.f32 %v682, %v1804
  %v2175 = vsub.f32 %v684, %v1811
  %v2176 = vsub.f32 %v723, %v1818
  %v2177 = vsub.f32 %v725, %v1825
  %v2178 = vsub.f32 %v764, %v1832
  %v2179 = vsub.f32 %v766, %v1839
  %v2180 = vsub.f32 %v805, %v1846
  %v2181 = vsub.f32 %v807, %v1853
  %v2182 = vsub.f32 %v846, %v1860
  %v2183 = vsub.f32 %v848, %v1867
  %v2184 = vsub.f32 %v887, %v1874
  %v2185 = vsub.f32 %v889, %v1881
  %v2186 = vsub.f32 %v928, %v1888
  %v2187 = vsub.f32 %v930, %v1895
  %v2188 = vsub.f32 %v969, %v1902
  %v2189 = vsub.f32 %v971, %v1909
  %v2190 = vsub.f32 %v1010, %v1916
  %v2191 = vsub.f32 %v1012, %v1923
  %v2192 = vsub.f32 %v1051, %v1930
  %v2193 = vsub.f32 %v1053, %v1937
  %v2194 = vsub.f32 %v1092, %v1944
  %v2195 = vsub.f32 %v1094, %v1951
  %v2196 = vsub.f32 %v1133, %v1958
  %v2197 = vsub.f32 %v1135, %v1965
  %v2198 = vsub.f32 %v1174, %v1972
  %v2199 = vsub.f32 %v1176, %v1979
  %v2200 = vsub.f32 %v1215, %v1986
  %v2201 = vsub.f32 %v1217, %v1993
  %v2202 = vsub.f32 %v1256, %v2000
  %v2203 = vsub.f32 %v1258, %v2007
  %v2204 = vsub.f32 %v1297, %v2014
  %v2205 = vsub.f32 %v1299, %v2021
  %v2206 = vsub.f32 %v1338, %v2028
  %v2207 = vsub.f32 %v1340, %v2035
  %v2208 = vsub.f32 %v1379, %v2042
  %v2209 = vsub.f32 %v1381, %v2049
  %v2210 = vsub.f32 %v1420, %v2056
  %v2211 = vsub.f32 %v1422, %v2063
  %v2212 = vsub.f32 %v1461, %v2070
  %v2213 = vsub.f32 %v1463, %v2077
  %v2214 = vsub.f32 %v1502, %v2084
  %v2215 = vsub.f32 %v1504, %v2091
  %v2216 = vsub.f32 %v1543, %v2098
  %v2217 = vsub.f32 %v1545, %v2105
  %v2218 = vsub.f32 %v1584, %v2112
  %v2219 = vsub.f32 %v1586, %v2119
  %v2220 = vsub.f32 %v1625, %v2126
  %v2221 = vsub.f32 %v1627, %v2133
  %v2222 = vsub.f32 %v1666, %v2140
  %v2223 = vsub.f32 %v1668, %v2147
  %v2224 = vsub.f32 %v1707, %v2154
  %v2225 = vsub.f32 %v1709, %v2161
  %v2226 = vmul.f32 %v2162, 1.442695
  %v2227 = vpow.pop %v2226
  %v2228 = vmul.f32 %v2163, 1.442695
  %v2229 = vpow.pop %v2228
  %v2230 = vmul.f32 %v2164, 1.442695
  %v2231 = vpow.pop %v2230
  %v2232 = vmul.f32 %v2165, 1.442695
  %v2233 = vpow.pop %v2232
  %v2234 = vmul.f32 %v2166, 1.442695
  %v2235 = vpow.pop %v2234
  %v2236 = vmul.f32 %v2167, 1.442695
  %v2237 = vpow.pop %v2236
  %v2238 = vmul.f32 %v2168, 1.442695
  %v2239 = vpow.pop %v2238
  %v2240 = vmul.f32 %v2169, 1.442695
  %v2241 = vpow.pop %v2240
  %v2242 = vmul.f32 %v2170, 1.442695
  %v2243 = vpow.pop %v2242
  %v2244 = vmul.f32 %v2171, 1.442695
  %v2245 = vpow.pop %v2244
  %v2246 = vmul.f32 %v2172, 1.442695
  %v2247 = vpow.pop %v2246
  %v2248 = vmul.f32 %v2173, 1.442695
  %v2249 = vpow.pop %v2248
  %v2250 = vmul.f32 %v2174, 1.442695
  %v2251 = vpow.pop %v2250
  %v2252 = vmul.f32 %v2175, 1.442695
  %v2253 = vpow.pop %v2252
  %v2254 = vmul.f32 %v2176, 1.442695
  %v2255 = vpow.pop %v2254
  %v2256 = vmul.f32 %v2177, 1.442695
  %v2257 = vpow.pop %v2256
  %v2258 = vmul.f32 %v2178, 1.442695
  %v2259 = vpow.pop %v2258
  %v2260 = vmul.f32 %v2179, 1.442695
  %v2261 = vpow.pop %v2260
  %v2262 = vmul.f32 %v2180, 1.442695
  %v2263 = vpow.pop %v2262
  %v2264 = vmul.f32 %v2181, 1.442695
  %v2265 = vpow.pop %v2264
  %v2266 = vmul.f32 %v2182, 1.442695
  %v2267 = vpow.pop %v2266
  %v2268 = vmul.f32 %v2183, 1.442695
  %v2269 = vpow.pop %v2268
  %v2270 = vmul.f32 %v2184, 1.442695
  %v2271 = vpow.pop %v2270
  %v2272 = vmul.f32 %v2185, 1.442695
  %v2273 = vpow.pop %v2272
  %v2274 = vmul.f32 %v2186, 1.442695
  %v2275 = vpow.pop %v2274
  %v2276 = vmul.f32 %v2187, 1.442695
  %v2277 = vpow.pop %v2276
  %v2278 = vmul.f32 %v2188, 1.442695
  %v2279 = vpow.pop %v2278
  %v2280 = vmul.f32 %v2189, 1.442695
  %v2281 = vpow.pop %v2280
  %v2282 = vmul.f32 %v2190, 1.442695
  %v2283 = vpow.pop %v2282
  %v2284 = vmul.f32 %v2191, 1.442695
  %v2285 = vpow.pop %v2284
  %v2286 = vmul.f32 %v2192, 1.442695
  %v2287 = vpow.pop %v2286
  %v2288 = vmul.f32 %v2193, 1.442695
  %v2289 = vpow.pop %v2288
  %v2290 = vmul.f32 %v2194, 1.442695
  %v2291 = vpow.pop %v2290
  %v2292 = vmul.f32 %v2195, 1.442695
  %v2293 = vpow.pop %v2292
  %v2294 = vmul.f32 %v2196, 1.442695
  %v2295 = vpow.pop %v2294
  %v2296 = vmul.f32 %v2197, 1.442695
  %v2297 = vpow.pop %v2296
  %v2298 = vmul.f32 %v2198, 1.442695
  %v2299 = vpow.pop %v2298
  %v2300 = vmul.f32 %v2199, 1.442695
  %v2301 = vpow.pop %v2300
  %v2302 = vmul.f32 %v2200, 1.442695
  %v2303 = vpow.pop %v2302
  %v2304 = vmul.f32 %v2201, 1.442695
  %v2305 = vpow.pop %v2304
  %v2306 = vmul.f32 %v2202, 1.442695
  %v2307 = vpow.pop %v2306
  %v2308 = vmul.f32 %v2203, 1.442695
  %v2309 = vpow.pop %v2308
  %v2310 = vmul.f32 %v2204, 1.442695
  %v2311 = vpow.pop %v2310
  %v2312 = vmul.f32 %v2205, 1.442695
  %v2313 = vpow.pop %v2312
  %v2314 = vmul.f32 %v2206, 1.442695
  %v2315 = vpow.pop %v2314
  %v2316 = vmul.f32 %v2207, 1.442695
  %v2317 = vpow.pop %v2316
  %v2318 = vmul.f32 %v2208, 1.442695
  %v2319 = vpow.pop %v2318
  %v2320 = vmul.f32 %v2209, 1.442695
  %v2321 = vpow.pop %v2320
  %v2322 = vmul.f32 %v2210, 1.442695
  %v2323 = vpow.pop %v2322
  %v2324 = vmul.f32 %v2211, 1.442695
  %v2325 = vpow.pop %v2324
  %v2326 = vmul.f32 %v2212, 1.442695
  %v2327 = vpow.pop %v2326
  %v2328 = vmul.f32 %v2213, 1.442695
  %v2329 = vpow.pop %v2328
  %v2330 = vmul.f32 %v2214, 1.442695
  %v2331 = vpow.pop %v2330
  %v2332 = vmul.f32 %v2215, 1.442695
  %v2333 = vpow.pop %v2332
  %v2334 = vmul.f32 %v2216, 1.442695
  %v2335 = vpow.pop %v2334
  %v2336 = vmul.f32 %v2217, 1.442695
  %v2337 = vpow.pop %v2336
  %v2338 = vmul.f32 %v2218, 1.442695
  %v2339 = vpow.pop %v2338
  %v2340 = vmul.f32 %v2219, 1.442695
  %v2341 = vpow.pop %v2340
  %v2342 = vmul.f32 %v2220, 1.442695
  %v2343 = vpow.pop %v2342
  %v2344 = vmul.f32 %v2221, 1.442695
  %v2345 = vpow.pop %v2344
  %v2346 = vmul.f32 %v2222, 1.442695
  %v2347 = vpow.pop %v2346
  %v2348 = vmul.f32 %v2223, 1.442695
  %v2349 = vpow.pop %v2348
  %v2350 = vmul.f32 %v2224, 1.442695
  %v2351 = vpow.pop %v2350
  %v2352 = vmul.f32 %v2225, 1.442695
  %v2353 = vpow.pop %v2352
  %v2354 = vsel %vm1713, %v2227, 0.0
  %v2355 = vrot.slane %v2354, 4
  %v2356 = vadd.f32 %v2354, %v2355
  %v2357 = vrot.slane %v2356, 2
  %v2358 = vadd.f32 %v2356, %v2357
  %v2359 = vrot.slane %v2358, 1
  %v2360 = vadd.f32 %v2358, %v2359
  %v2361 = vsel %vm1713, %v2229, 0.0
  %v2362 = vrot.slane %v2361, 4
  %v2363 = vadd.f32 %v2361, %v2362
  %v2364 = vrot.slane %v2363, 2
  %v2365 = vadd.f32 %v2363, %v2364
  %v2366 = vrot.slane %v2365, 1
  %v2367 = vadd.f32 %v2365, %v2366
  %v2368 = vsel %vm1713, %v2231, 0.0
  %v2369 = vrot.slane %v2368, 4
  %v2370 = vadd.f32 %v2368, %v2369
  %v2371 = vrot.slane %v2370, 2
  %v2372 = vadd.f32 %v2370, %v2371
  %v2373 = vrot.slane %v2372, 1
  %v2374 = vadd.f32 %v2372, %v2373
  %v2375 = vsel %vm1713, %v2233, 0.0
  %v2376 = vrot.slane %v2375, 4
  %v2377 = vadd.f32 %v2375, %v2376
  %v2378 = vrot.slane %v2377, 2
  %v2379 = vadd.f32 %v2377, %v2378
  %v2380 = vrot.slane %v2379, 1
  %v2381 = vadd.f32 %v2379, %v2380
  %v2382 = vsel %vm1713, %v2235, 0.0
  %v2383 = vrot.slane %v2382, 4
  %v2384 = vadd.f32 %v2382, %v2383
  %v2385 = vrot.slane %v2384, 2
  %v2386 = vadd.f32 %v2384, %v2385
  %v2387 = vrot.slane %v2386, 1
  %v2388 = vadd.f32 %v2386, %v2387
  %v2389 = vsel %vm1713, %v2237, 0.0
  %v2390 = vrot.slane %v2389, 4
  %v2391 = vadd.f32 %v2389, %v2390
  %v2392 = vrot.slane %v2391, 2
  %v2393 = vadd.f32 %v2391, %v2392
  %v2394 = vrot.slane %v2393, 1
  %v2395 = vadd.f32 %v2393, %v2394
  %v2396 = vsel %vm1713, %v2239, 0.0
  %v2397 = vrot.slane %v2396, 4
  %v2398 = vadd.f32 %v2396, %v2397
  %v2399 = vrot.slane %v2398, 2
  %v2400 = vadd.f32 %v2398, %v2399
  %v2401 = vrot.slane %v2400, 1
  %v2402 = vadd.f32 %v2400, %v2401
  %v2403 = vsel %vm1713, %v2241, 0.0
  %v2404 = vrot.slane %v2403, 4
  %v2405 = vadd.f32 %v2403, %v2404
  %v2406 = vrot.slane %v2405, 2
  %v2407 = vadd.f32 %v2405, %v2406
  %v2408 = vrot.slane %v2407, 1
  %v2409 = vadd.f32 %v2407, %v2408
  %v2410 = vsel %vm1713, %v2243, 0.0
  %v2411 = vrot.slane %v2410, 4
  %v2412 = vadd.f32 %v2410, %v2411
  %v2413 = vrot.slane %v2412, 2
  %v2414 = vadd.f32 %v2412, %v2413
  %v2415 = vrot.slane %v2414, 1
  %v2416 = vadd.f32 %v2414, %v2415
  %v2417 = vsel %vm1713, %v2245, 0.0
  %v2418 = vrot.slane %v2417, 4
  %v2419 = vadd.f32 %v2417, %v2418
  %v2420 = vrot.slane %v2419, 2
  %v2421 = vadd.f32 %v2419, %v2420
  %v2422 = vrot.slane %v2421, 1
  %v2423 = vadd.f32 %v2421, %v2422
  %v2424 = vsel %vm1713, %v2247, 0.0
  %v2425 = vrot.slane %v2424, 4
  %v2426 = vadd.f32 %v2424, %v2425
  %v2427 = vrot.slane %v2426, 2
  %v2428 = vadd.f32 %v2426, %v2427
  %v2429 = vrot.slane %v2428, 1
  %v2430 = vadd.f32 %v2428, %v2429
  %v2431 = vsel %vm1713, %v2249, 0.0
  %v2432 = vrot.slane %v2431, 4
  %v2433 = vadd.f32 %v2431, %v2432
  %v2434 = vrot.slane %v2433, 2
  %v2435 = vadd.f32 %v2433, %v2434
  %v2436 = vrot.slane %v2435, 1
  %v2437 = vadd.f32 %v2435, %v2436
  %v2438 = vsel %vm1713, %v2251, 0.0
  %v2439 = vrot.slane %v2438, 4
  %v2440 = vadd.f32 %v2438, %v2439
  %v2441 = vrot.slane %v2440, 2
  %v2442 = vadd.f32 %v2440, %v2441
  %v2443 = vrot.slane %v2442, 1
  %v2444 = vadd.f32 %v2442, %v2443
  %v2445 = vsel %vm1713, %v2253, 0.0
  %v2446 = vrot.slane %v2445, 4
  %v2447 = vadd.f32 %v2445, %v2446
  %v2448 = vrot.slane %v2447, 2
  %v2449 = vadd.f32 %v2447, %v2448
  %v2450 = vrot.slane %v2449, 1
  %v2451 = vadd.f32 %v2449, %v2450
  %v2452 = vsel %vm1713, %v2255, 0.0
  %v2453 = vrot.slane %v2452, 4
  %v2454 = vadd.f32 %v2452, %v2453
  %v2455 = vrot.slane %v2454, 2
  %v2456 = vadd.f32 %v2454, %v2455
  %v2457 = vrot.slane %v2456, 1
  %v2458 = vadd.f32 %v2456, %v2457
  %v2459 = vsel %vm1713, %v2257, 0.0
  %v2460 = vrot.slane %v2459, 4
  %v2461 = vadd.f32 %v2459, %v2460
  %v2462 = vrot.slane %v2461, 2
  %v2463 = vadd.f32 %v2461, %v2462
  %v2464 = vrot.slane %v2463, 1
  %v2465 = vadd.f32 %v2463, %v2464
  %v2466 = vsel %vm1713, %v2259, 0.0
  %v2467 = vrot.slane %v2466, 4
  %v2468 = vadd.f32 %v2466, %v2467
  %v2469 = vrot.slane %v2468, 2
  %v2470 = vadd.f32 %v2468, %v2469
  %v2471 = vrot.slane %v2470, 1
  %v2472 = vadd.f32 %v2470, %v2471
  %v2473 = vsel %vm1713, %v2261, 0.0
  %v2474 = vrot.slane %v2473, 4
  %v2475 = vadd.f32 %v2473, %v2474
  %v2476 = vrot.slane %v2475, 2
  %v2477 = vadd.f32 %v2475, %v2476
  %v2478 = vrot.slane %v2477, 1
  %v2479 = vadd.f32 %v2477, %v2478
  %v2480 = vsel %vm1713, %v2263, 0.0
  %v2481 = vrot.slane %v2480, 4
  %v2482 = vadd.f32 %v2480, %v2481
  %v2483 = vrot.slane %v2482, 2
  %v2484 = vadd.f32 %v2482, %v2483
  %v2485 = vrot.slane %v2484, 1
  %v2486 = vadd.f32 %v2484, %v2485
  %v2487 = vsel %vm1713, %v2265, 0.0
  %v2488 = vrot.slane %v2487, 4
  %v2489 = vadd.f32 %v2487, %v2488
  %v2490 = vrot.slane %v2489, 2
  %v2491 = vadd.f32 %v2489, %v2490
  %v2492 = vrot.slane %v2491, 1
  %v2493 = vadd.f32 %v2491, %v2492
  %v2494 = vsel %vm1713, %v2267, 0.0
  %v2495 = vrot.slane %v2494, 4
  %v2496 = vadd.f32 %v2494, %v2495
  %v2497 = vrot.slane %v2496, 2
  %v2498 = vadd.f32 %v2496, %v2497
  %v2499 = vrot.slane %v2498, 1
  %v2500 = vadd.f32 %v2498, %v2499
  %v2501 = vsel %vm1713, %v2269, 0.0
  %v2502 = vrot.slane %v2501, 4
  %v2503 = vadd.f32 %v2501, %v2502
  %v2504 = vrot.slane %v2503, 2
  %v2505 = vadd.f32 %v2503, %v2504
  %v2506 = vrot.slane %v2505, 1
  %v2507 = vadd.f32 %v2505, %v2506
  %v2508 = vsel %vm1713, %v2271, 0.0
  %v2509 = vrot.slane %v2508, 4
  %v2510 = vadd.f32 %v2508, %v2509
  %v2511 = vrot.slane %v2510, 2
  %v2512 = vadd.f32 %v2510, %v2511
  %v2513 = vrot.slane %v2512, 1
  %v2514 = vadd.f32 %v2512, %v2513
  %v2515 = vsel %vm1713, %v2273, 0.0
  %v2516 = vrot.slane %v2515, 4
  %v2517 = vadd.f32 %v2515, %v2516
  %v2518 = vrot.slane %v2517, 2
  %v2519 = vadd.f32 %v2517, %v2518
  %v2520 = vrot.slane %v2519, 1
  %v2521 = vadd.f32 %v2519, %v2520
  %v2522 = vsel %vm1713, %v2275, 0.0
  %v2523 = vrot.slane %v2522, 4
  %v2524 = vadd.f32 %v2522, %v2523
  %v2525 = vrot.slane %v2524, 2
  %v2526 = vadd.f32 %v2524, %v2525
  %v2527 = vrot.slane %v2526, 1
  %v2528 = vadd.f32 %v2526, %v2527
  %v2529 = vsel %vm1713, %v2277, 0.0
  %v2530 = vrot.slane %v2529, 4
  %v2531 = vadd.f32 %v2529, %v2530
  %v2532 = vrot.slane %v2531, 2
  %v2533 = vadd.f32 %v2531, %v2532
  %v2534 = vrot.slane %v2533, 1
  %v2535 = vadd.f32 %v2533, %v2534
  %v2536 = vsel %vm1713, %v2279, 0.0
  %v2537 = vrot.slane %v2536, 4
  %v2538 = vadd.f32 %v2536, %v2537
  %v2539 = vrot.slane %v2538, 2
  %v2540 = vadd.f32 %v2538, %v2539
  %v2541 = vrot.slane %v2540, 1
  %v2542 = vadd.f32 %v2540, %v2541
  %v2543 = vsel %vm1713, %v2281, 0.0
  %v2544 = vrot.slane %v2543, 4
  %v2545 = vadd.f32 %v2543, %v2544
  %v2546 = vrot.slane %v2545, 2
  %v2547 = vadd.f32 %v2545, %v2546
  %v2548 = vrot.slane %v2547, 1
  %v2549 = vadd.f32 %v2547, %v2548
  %v2550 = vsel %vm1713, %v2283, 0.0
  %v2551 = vrot.slane %v2550, 4
  %v2552 = vadd.f32 %v2550, %v2551
  %v2553 = vrot.slane %v2552, 2
  %v2554 = vadd.f32 %v2552, %v2553
  %v2555 = vrot.slane %v2554, 1
  %v2556 = vadd.f32 %v2554, %v2555
  %v2557 = vsel %vm1713, %v2285, 0.0
  %v2558 = vrot.slane %v2557, 4
  %v2559 = vadd.f32 %v2557, %v2558
  %v2560 = vrot.slane %v2559, 2
  %v2561 = vadd.f32 %v2559, %v2560
  %v2562 = vrot.slane %v2561, 1
  %v2563 = vadd.f32 %v2561, %v2562
  %v2564 = vsel %vm1713, %v2287, 0.0
  %v2565 = vrot.slane %v2564, 4
  %v2566 = vadd.f32 %v2564, %v2565
  %v2567 = vrot.slane %v2566, 2
  %v2568 = vadd.f32 %v2566, %v2567
  %v2569 = vrot.slane %v2568, 1
  %v2570 = vadd.f32 %v2568, %v2569
  %v2571 = vsel %vm1713, %v2289, 0.0
  %v2572 = vrot.slane %v2571, 4
  %v2573 = vadd.f32 %v2571, %v2572
  %v2574 = vrot.slane %v2573, 2
  %v2575 = vadd.f32 %v2573, %v2574
  %v2576 = vrot.slane %v2575, 1
  %v2577 = vadd.f32 %v2575, %v2576
  %v2578 = vsel %vm1713, %v2291, 0.0
  %v2579 = vrot.slane %v2578, 4
  %v2580 = vadd.f32 %v2578, %v2579
  %v2581 = vrot.slane %v2580, 2
  %v2582 = vadd.f32 %v2580, %v2581
  %v2583 = vrot.slane %v2582, 1
  %v2584 = vadd.f32 %v2582, %v2583
  %v2585 = vsel %vm1713, %v2293, 0.0
  %v2586 = vrot.slane %v2585, 4
  %v2587 = vadd.f32 %v2585, %v2586
  %v2588 = vrot.slane %v2587, 2
  %v2589 = vadd.f32 %v2587, %v2588
  %v2590 = vrot.slane %v2589, 1
  %v2591 = vadd.f32 %v2589, %v2590
  %v2592 = vsel %vm1713, %v2295, 0.0
  %v2593 = vrot.slane %v2592, 4
  %v2594 = vadd.f32 %v2592, %v2593
  %v2595 = vrot.slane %v2594, 2
  %v2596 = vadd.f32 %v2594, %v2595
  %v2597 = vrot.slane %v2596, 1
  %v2598 = vadd.f32 %v2596, %v2597
  %v2599 = vsel %vm1713, %v2297, 0.0
  %v2600 = vrot.slane %v2599, 4
  %v2601 = vadd.f32 %v2599, %v2600
  %v2602 = vrot.slane %v2601, 2
  %v2603 = vadd.f32 %v2601, %v2602
  %v2604 = vrot.slane %v2603, 1
  %v2605 = vadd.f32 %v2603, %v2604
  %v2606 = vsel %vm1713, %v2299, 0.0
  %v2607 = vrot.slane %v2606, 4
  %v2608 = vadd.f32 %v2606, %v2607
  %v2609 = vrot.slane %v2608, 2
  %v2610 = vadd.f32 %v2608, %v2609
  %v2611 = vrot.slane %v2610, 1
  %v2612 = vadd.f32 %v2610, %v2611
  %v2613 = vsel %vm1713, %v2301, 0.0
  %v2614 = vrot.slane %v2613, 4
  %v2615 = vadd.f32 %v2613, %v2614
  %v2616 = vrot.slane %v2615, 2
  %v2617 = vadd.f32 %v2615, %v2616
  %v2618 = vrot.slane %v2617, 1
  %v2619 = vadd.f32 %v2617, %v2618
  %v2620 = vsel %vm1713, %v2303, 0.0
  %v2621 = vrot.slane %v2620, 4
  %v2622 = vadd.f32 %v2620, %v2621
  %v2623 = vrot.slane %v2622, 2
  %v2624 = vadd.f32 %v2622, %v2623
  %v2625 = vrot.slane %v2624, 1
  %v2626 = vadd.f32 %v2624, %v2625
  %v2627 = vsel %vm1713, %v2305, 0.0
  %v2628 = vrot.slane %v2627, 4
  %v2629 = vadd.f32 %v2627, %v2628
  %v2630 = vrot.slane %v2629, 2
  %v2631 = vadd.f32 %v2629, %v2630
  %v2632 = vrot.slane %v2631, 1
  %v2633 = vadd.f32 %v2631, %v2632
  %v2634 = vsel %vm1713, %v2307, 0.0
  %v2635 = vrot.slane %v2634, 4
  %v2636 = vadd.f32 %v2634, %v2635
  %v2637 = vrot.slane %v2636, 2
  %v2638 = vadd.f32 %v2636, %v2637
  %v2639 = vrot.slane %v2638, 1
  %v2640 = vadd.f32 %v2638, %v2639
  %v2641 = vsel %vm1713, %v2309, 0.0
  %v2642 = vrot.slane %v2641, 4
  %v2643 = vadd.f32 %v2641, %v2642
  %v2644 = vrot.slane %v2643, 2
  %v2645 = vadd.f32 %v2643, %v2644
  %v2646 = vrot.slane %v2645, 1
  %v2647 = vadd.f32 %v2645, %v2646
  %v2648 = vsel %vm1713, %v2311, 0.0
  %v2649 = vrot.slane %v2648, 4
  %v2650 = vadd.f32 %v2648, %v2649
  %v2651 = vrot.slane %v2650, 2
  %v2652 = vadd.f32 %v2650, %v2651
  %v2653 = vrot.slane %v2652, 1
  %v2654 = vadd.f32 %v2652, %v2653
  %v2655 = vsel %vm1713, %v2313, 0.0
  %v2656 = vrot.slane %v2655, 4
  %v2657 = vadd.f32 %v2655, %v2656
  %v2658 = vrot.slane %v2657, 2
  %v2659 = vadd.f32 %v2657, %v2658
  %v2660 = vrot.slane %v2659, 1
  %v2661 = vadd.f32 %v2659, %v2660
  %v2662 = vsel %vm1713, %v2315, 0.0
  %v2663 = vrot.slane %v2662, 4
  %v2664 = vadd.f32 %v2662, %v2663
  %v2665 = vrot.slane %v2664, 2
  %v2666 = vadd.f32 %v2664, %v2665
  %v2667 = vrot.slane %v2666, 1
  %v2668 = vadd.f32 %v2666, %v2667
  %v2669 = vsel %vm1713, %v2317, 0.0
  %v2670 = vrot.slane %v2669, 4
  %v2671 = vadd.f32 %v2669, %v2670
  %v2672 = vrot.slane %v2671, 2
  %v2673 = vadd.f32 %v2671, %v2672
  %v2674 = vrot.slane %v2673, 1
  %v2675 = vadd.f32 %v2673, %v2674
  %v2676 = vsel %vm1713, %v2319, 0.0
  %v2677 = vrot.slane %v2676, 4
  %v2678 = vadd.f32 %v2676, %v2677
  %v2679 = vrot.slane %v2678, 2
  %v2680 = vadd.f32 %v2678, %v2679
  %v2681 = vrot.slane %v2680, 1
  %v2682 = vadd.f32 %v2680, %v2681
  %v2683 = vsel %vm1713, %v2321, 0.0
  %v2684 = vrot.slane %v2683, 4
  %v2685 = vadd.f32 %v2683, %v2684
  %v2686 = vrot.slane %v2685, 2
  %v2687 = vadd.f32 %v2685, %v2686
  %v2688 = vrot.slane %v2687, 1
  %v2689 = vadd.f32 %v2687, %v2688
  %v2690 = vsel %vm1713, %v2323, 0.0
  %v2691 = vrot.slane %v2690, 4
  %v2692 = vadd.f32 %v2690, %v2691
  %v2693 = vrot.slane %v2692, 2
  %v2694 = vadd.f32 %v2692, %v2693
  %v2695 = vrot.slane %v2694, 1
  %v2696 = vadd.f32 %v2694, %v2695
  %v2697 = vsel %vm1713, %v2325, 0.0
  %v2698 = vrot.slane %v2697, 4
  %v2699 = vadd.f32 %v2697, %v2698
  %v2700 = vrot.slane %v2699, 2
  %v2701 = vadd.f32 %v2699, %v2700
  %v2702 = vrot.slane %v2701, 1
  %v2703 = vadd.f32 %v2701, %v2702
  %v2704 = vsel %vm1713, %v2327, 0.0
  %v2705 = vrot.slane %v2704, 4
  %v2706 = vadd.f32 %v2704, %v2705
  %v2707 = vrot.slane %v2706, 2
  %v2708 = vadd.f32 %v2706, %v2707
  %v2709 = vrot.slane %v2708, 1
  %v2710 = vadd.f32 %v2708, %v2709
  %v2711 = vsel %vm1713, %v2329, 0.0
  %v2712 = vrot.slane %v2711, 4
  %v2713 = vadd.f32 %v2711, %v2712
  %v2714 = vrot.slane %v2713, 2
  %v2715 = vadd.f32 %v2713, %v2714
  %v2716 = vrot.slane %v2715, 1
  %v2717 = vadd.f32 %v2715, %v2716
  %v2718 = vsel %vm1713, %v2331, 0.0
  %v2719 = vrot.slane %v2718, 4
  %v2720 = vadd.f32 %v2718, %v2719
  %v2721 = vrot.slane %v2720, 2
  %v2722 = vadd.f32 %v2720, %v2721
  %v2723 = vrot.slane %v2722, 1
  %v2724 = vadd.f32 %v2722, %v2723
  %v2725 = vsel %vm1713, %v2333, 0.0
  %v2726 = vrot.slane %v2725, 4
  %v2727 = vadd.f32 %v2725, %v2726
  %v2728 = vrot.slane %v2727, 2
  %v2729 = vadd.f32 %v2727, %v2728
  %v2730 = vrot.slane %v2729, 1
  %v2731 = vadd.f32 %v2729, %v2730
  %v2732 = vsel %vm1713, %v2335, 0.0
  %v2733 = vrot.slane %v2732, 4
  %v2734 = vadd.f32 %v2732, %v2733
  %v2735 = vrot.slane %v2734, 2
  %v2736 = vadd.f32 %v2734, %v2735
  %v2737 = vrot.slane %v2736, 1
  %v2738 = vadd.f32 %v2736, %v2737
  %v2739 = vsel %vm1713, %v2337, 0.0
  %v2740 = vrot.slane %v2739, 4
  %v2741 = vadd.f32 %v2739, %v2740
  %v2742 = vrot.slane %v2741, 2
  %v2743 = vadd.f32 %v2741, %v2742
  %v2744 = vrot.slane %v2743, 1
  %v2745 = vadd.f32 %v2743, %v2744
  %v2746 = vsel %vm1713, %v2339, 0.0
  %v2747 = vrot.slane %v2746, 4
  %v2748 = vadd.f32 %v2746, %v2747
  %v2749 = vrot.slane %v2748, 2
  %v2750 = vadd.f32 %v2748, %v2749
  %v2751 = vrot.slane %v2750, 1
  %v2752 = vadd.f32 %v2750, %v2751
  %v2753 = vsel %vm1713, %v2341, 0.0
  %v2754 = vrot.slane %v2753, 4
  %v2755 = vadd.f32 %v2753, %v2754
  %v2756 = vrot.slane %v2755, 2
  %v2757 = vadd.f32 %v2755, %v2756
  %v2758 = vrot.slane %v2757, 1
  %v2759 = vadd.f32 %v2757, %v2758
  %v2760 = vsel %vm1713, %v2343, 0.0
  %v2761 = vrot.slane %v2760, 4
  %v2762 = vadd.f32 %v2760, %v2761
  %v2763 = vrot.slane %v2762, 2
  %v2764 = vadd.f32 %v2762, %v2763
  %v2765 = vrot.slane %v2764, 1
  %v2766 = vadd.f32 %v2764, %v2765
  %v2767 = vsel %vm1713, %v2345, 0.0
  %v2768 = vrot.slane %v2767, 4
  %v2769 = vadd.f32 %v2767, %v2768
  %v2770 = vrot.slane %v2769, 2
  %v2771 = vadd.f32 %v2769, %v2770
  %v2772 = vrot.slane %v2771, 1
  %v2773 = vadd.f32 %v2771, %v2772
  %v2774 = vsel %vm1713, %v2347, 0.0
  %v2775 = vrot.slane %v2774, 4
  %v2776 = vadd.f32 %v2774, %v2775
  %v2777 = vrot.slane %v2776, 2
  %v2778 = vadd.f32 %v2776, %v2777
  %v2779 = vrot.slane %v2778, 1
  %v2780 = vadd.f32 %v2778, %v2779
  %v2781 = vsel %vm1713, %v2349, 0.0
  %v2782 = vrot.slane %v2781, 4
  %v2783 = vadd.f32 %v2781, %v2782
  %v2784 = vrot.slane %v2783, 2
  %v2785 = vadd.f32 %v2783, %v2784
  %v2786 = vrot.slane %v2785, 1
  %v2787 = vadd.f32 %v2785, %v2786
  %v2788 = vsel %vm1713, %v2351, 0.0
  %v2789 = vrot.slane %v2788, 4
  %v2790 = vadd.f32 %v2788, %v2789
  %v2791 = vrot.slane %v2790, 2
  %v2792 = vadd.f32 %v2790, %v2791
  %v2793 = vrot.slane %v2792, 1
  %v2794 = vadd.f32 %v2792, %v2793
  %v2795 = vsel %vm1713, %v2353, 0.0
  %v2796 = vrot.slane %v2795, 4
  %v2797 = vadd.f32 %v2795, %v2796
  %v2798 = vrot.slane %v2797, 2
  %v2799 = vadd.f32 %v2797, %v2798
  %v2800 = vrot.slane %v2799, 1
  %v2801 = vadd.f32 %v2799, %v2800
  %v2802 = vrcp.pop %v2360
  %v2803 = vmul.f32 %v2227, %v2802
  %v2804 = vrcp.pop %v2367
  %v2805 = vmul.f32 %v2229, %v2804
  %v2806 = vrcp.pop %v2374
  %v2807 = vmul.f32 %v2231, %v2806
  %v2808 = vrcp.pop %v2381
  %v2809 = vmul.f32 %v2233, %v2808
  %v2810 = vrcp.pop %v2388
  %v2811 = vmul.f32 %v2235, %v2810
  %v2812 = vrcp.pop %v2395
  %v2813 = vmul.f32 %v2237, %v2812
  %v2814 = vrcp.pop %v2402
  %v2815 = vmul.f32 %v2239, %v2814
  %v2816 = vrcp.pop %v2409
  %v2817 = vmul.f32 %v2241, %v2816
  %v2818 = vrcp.pop %v2416
  %v2819 = vmul.f32 %v2243, %v2818
  %v2820 = vrcp.pop %v2423
  %v2821 = vmul.f32 %v2245, %v2820
  %v2822 = vrcp.pop %v2430
  %v2823 = vmul.f32 %v2247, %v2822
  %v2824 = vrcp.pop %v2437
  %v2825 = vmul.f32 %v2249, %v2824
  %v2826 = vrcp.pop %v2444
  %v2827 = vmul.f32 %v2251, %v2826
  %v2828 = vrcp.pop %v2451
  %v2829 = vmul.f32 %v2253, %v2828
  %v2830 = vrcp.pop %v2458
  %v2831 = vmul.f32 %v2255, %v2830
  %v2832 = vrcp.pop %v2465
  %v2833 = vmul.f32 %v2257, %v2832
  %v2834 = vrcp.pop %v2472
  %v2835 = vmul.f32 %v2259, %v2834
  %v2836 = vrcp.pop %v2479
  %v2837 = vmul.f32 %v2261, %v2836
  %v2838 = vrcp.pop %v2486
  %v2839 = vmul.f32 %v2263, %v2838
  %v2840 = vrcp.pop %v2493
  %v2841 = vmul.f32 %v2265, %v2840
  %v2842 = vrcp.pop %v2500
  %v2843 = vmul.f32 %v2267, %v2842
  %v2844 = vrcp.pop %v2507
  %v2845 = vmul.f32 %v2269, %v2844
  %v2846 = vrcp.pop %v2514
  %v2847 = vmul.f32 %v2271, %v2846
  %v2848 = vrcp.pop %v2521
  %v2849 = vmul.f32 %v2273, %v2848
  %v2850 = vrcp.pop %v2528
  %v2851 = vmul.f32 %v2275, %v2850
  %v2852 = vrcp.pop %v2535
  %v2853 = vmul.f32 %v2277, %v2852
  %v2854 = vrcp.pop %v2542
  %v2855 = vmul.f32 %v2279, %v2854
  %v2856 = vrcp.pop %v2549
  %v2857 = vmul.f32 %v2281, %v2856
  %v2858 = vrcp.pop %v2556
  %v2859 = vmul.f32 %v2283, %v2858
  %v2860 = vrcp.pop %v2563
  %v2861 = vmul.f32 %v2285, %v2860
  %v2862 = vrcp.pop %v2570
  %v2863 = vmul.f32 %v2287, %v2862
  %v2864 = vrcp.pop %v2577
  %v2865 = vmul.f32 %v2289, %v2864
  %v2866 = vrcp.pop %v2584
  %v2867 = vmul.f32 %v2291, %v2866
  %v2868 = vrcp.pop %v2591
  %v2869 = vmul.f32 %v2293, %v2868
  %v2870 = vrcp.pop %v2598
  %v2871 = vmul.f32 %v2295, %v2870
  %v2872 = vrcp.pop %v2605
  %v2873 = vmul.f32 %v2297, %v2872
  %v2874 = vrcp.pop %v2612
  %v2875 = vmul.f32 %v2299, %v2874
  %v2876 = vrcp.pop %v2619
  %v2877 = vmul.f32 %v2301, %v2876
  %v2878 = vrcp.pop %v2626
  %v2879 = vmul.f32 %v2303, %v2878
  %v2880 = vrcp.pop %v2633
  %v2881 = vmul.f32 %v2305, %v2880
  %v2882 = vrcp.pop %v2640
  %v2883 = vmul.f32 %v2307, %v2882
  %v2884 = vrcp.pop %v2647
  %v2885 = vmul.f32 %v2309, %v2884
  %v2886 = vrcp.pop %v2654
  %v2887 = vmul.f32 %v2311, %v2886
  %v2888 = vrcp.pop %v2661
  %v2889 = vmul.f32 %v2313, %v2888
  %v2890 = vrcp.pop %v2668
  %v2891 = vmul.f32 %v2315, %v2890
  %v2892 = vrcp.pop %v2675
  %v2893 = vmul.f32 %v2317, %v2892
  %v2894 = vrcp.pop %v2682
  %v2895 = vmul.f32 %v2319, %v2894
  %v2896 = vrcp.pop %v2689
  %v2897 = vmul.f32 %v2321, %v2896
  %v2898 = vrcp.pop %v2696
  %v2899 = vmul.f32 %v2323, %v2898
  %v2900 = vrcp.pop %v2703
  %v2901 = vmul.f32 %v2325, %v2900
  %v2902 = vrcp.pop %v2710
  %v2903 = vmul.f32 %v2327, %v2902
  %v2904 = vrcp.pop %v2717
  %v2905 = vmul.f32 %v2329, %v2904
  %v2906 = vrcp.pop %v2724
  %v2907 = vmul.f32 %v2331, %v2906
  %v2908 = vrcp.pop %v2731
  %v2909 = vmul.f32 %v2333, %v2908
  %v2910 = vrcp.pop %v2738
  %v2911 = vmul.f32 %v2335, %v2910
  %v2912 = vrcp.pop %v2745
  %v2913 = vmul.f32 %v2337, %v2912
  %v2914 = vrcp.pop %v2752
  %v2915 = vmul.f32 %v2339, %v2914
  %v2916 = vrcp.pop %v2759
  %v2917 = vmul.f32 %v2341, %v2916
  %v2918 = vrcp.pop %v2766
  %v2919 = vmul.f32 %v2343, %v2918
  %v2920 = vrcp.pop %v2773
  %v2921 = vmul.f32 %v2345, %v2920
  %v2922 = vrcp.pop %v2780
  %v2923 = vmul.f32 %v2347, %v2922
  %v2924 = vrcp.pop %v2787
  %v2925 = vmul.f32 %v2349, %v2924
  %v2926 = vrcp.pop %v2794
  %v2927 = vmul.f32 %v2351, %v2926
  %v2928 = vrcp.pop %v2801
  %v2929 = vmul.f32 %v2353, %v2928
  %v2994 = vcombine.low %v2803, %v2805
  %v2995 = vcombine.low %v2807, %v2809
  %v2997 = vunpack.c.l.s4 1983009808
  %v2998 = vunpack.c.0.s8 %v2997
  %v2999 = vlaneseq
  %v3000 = vshrl.u32 %v2999, 7
  %v3001 = vsub.s32 %v2998, %v3000
  %v3002 = vrot.slane %v2994, %v3001
  %v3004 = vunpack.c.l.s4 1983009808
  %v3005 = vunpack.c.0.s8 %v3004
  %v3006 = vlaneseq
  %v3007 = vshrl.u32 %v3006, 7
  %v3008 = vsub.s32 %v3005, %v3007
  %v3009 = vrot.slane %v2995, %v3008
  %v3010 = vcombine.low %v3002, %v3009
  %v3011 = vcombine.low %v2811, %v2813
  %v3012 = vcombine.low %v2815, %v2817
  %v3014 = vunpack.c.l.s4 1983009808
  %v3015 = vunpack.c.0.s8 %v3014
  %v3016 = vlaneseq
  %v3017 = vshrl.u32 %v3016, 7
  %v3018 = vsub.s32 %v3015, %v3017
  %v3019 = vrot.slane %v3011, %v3018
  %v3021 = vunpack.c.l.s4 1983009808
  %v3022 = vunpack.c.0.s8 %v3021
  %v3023 = vlaneseq
  %v3024 = vshrl.u32 %v3023, 7
  %v3025 = vsub.s32 %v3022, %v3024
  %v3026 = vrot.slane %v3012, %v3025
  %v3027 = vcombine.low %v3019, %v3026
  %v3028 = vcombine.low %v2819, %v2821
  %v3029 = vcombine.low %v2823, %v2825
  %v3031 = vunpack.c.l.s4 1983009808
  %v3032 = vunpack.c.0.s8 %v3031
  %v3033 = vlaneseq
  %v3034 = vshrl.u32 %v3033, 7
  %v3035 = vsub.s32 %v3032, %v3034
  %v3036 = vrot.slane %v3028, %v3035
  %v3038 = vunpack.c.l.s4 1983009808
  %v3039 = vunpack.c.0.s8 %v3038
  %v3040 = vlaneseq
  %v3041 = vshrl.u32 %v3040, 7
  %v3042 = vsub.s32 %v3039, %v3041
  %v3043 = vrot.slane %v3029, %v3042
  %v3044 = vcombine.low %v3036, %v3043
  %v3045 = vcombine.low %v2827, %v2829
  %v3046 = vcombine.low %v2831, %v2833
  %v3048 = vunpack.c.l.s4 1983009808
  %v3049 = vunpack.c.0.s8 %v3048
  %v3050 = vlaneseq
  %v3051 = vshrl.u32 %v3050, 7
  %v3052 = vsub.s32 %v3049, %v3051
  %v3053 = vrot.slane %v3045, %v3052
  %v3055 = vunpack.c.l.s4 1983009808
  %v3056 = vunpack.c.0.s8 %v3055
  %v3057 = vlaneseq
  %v3058 = vshrl.u32 %v3057, 7
  %v3059 = vsub.s32 %v3056, %v3058
  %v3060 = vrot.slane %v3046, %v3059
  %v3061 = vcombine.low %v3053, %v3060
  %v3062 = vcombine.low %v2835, %v2837
  %v3063 = vcombine.low %v2839, %v2841
  %v3065 = vunpack.c.l.s4 1983009808
  %v3066 = vunpack.c.0.s8 %v3065
  %v3067 = vlaneseq
  %v3068 = vshrl.u32 %v3067, 7
  %v3069 = vsub.s32 %v3066, %v3068
  %v3070 = vrot.slane %v3062, %v3069
  %v3072 = vunpack.c.l.s4 1983009808
  %v3073 = vunpack.c.0.s8 %v3072
  %v3074 = vlaneseq
  %v3075 = vshrl.u32 %v3074, 7
  %v3076 = vsub.s32 %v3073, %v3075
  %v3077 = vrot.slane %v3063, %v3076
  %v3078 = vcombine.low %v3070, %v3077
  %v3079 = vcombine.low %v2843, %v2845
  %v3080 = vcombine.low %v2847, %v2849
  %v3082 = vunpack.c.l.s4 1983009808
  %v3083 = vunpack.c.0.s8 %v3082
  %v3084 = vlaneseq
  %v3085 = vshrl.u32 %v3084, 7
  %v3086 = vsub.s32 %v3083, %v3085
  %v3087 = vrot.slane %v3079, %v3086
  %v3089 = vunpack.c.l.s4 1983009808
  %v3090 = vunpack.c.0.s8 %v3089
  %v3091 = vlaneseq
  %v3092 = vshrl.u32 %v3091, 7
  %v3093 = vsub.s32 %v3090, %v3092
  %v3094 = vrot.slane %v3080, %v3093
  %v3095 = vcombine.low %v3087, %v3094
  %v3096 = vcombine.low %v2851, %v2853
  %v3097 = vcombine.low %v2855, %v2857
  %v3099 = vunpack.c.l.s4 1983009808
  %v3100 = vunpack.c.0.s8 %v3099
  %v3101 = vlaneseq
  %v3102 = vshrl.u32 %v3101, 7
  %v3103 = vsub.s32 %v3100, %v3102
  %v3104 = vrot.slane %v3096, %v3103
  %v3106 = vunpack.c.l.s4 1983009808
  %v3107 = vunpack.c.0.s8 %v3106
  %v3108 = vlaneseq
  %v3109 = vshrl.u32 %v3108, 7
  %v3110 = vsub.s32 %v3107, %v3109
  %v3111 = vrot.slane %v3097, %v3110
  %v3112 = vcombine.low %v3104, %v3111
  %v3113 = vcombine.low %v2859, %v2861
  %v3114 = vcombine.low %v2863, %v2865
  %v3116 = vunpack.c.l.s4 1983009808
  %v3117 = vunpack.c.0.s8 %v3116
  %v3118 = vlaneseq
  %v3119 = vshrl.u32 %v3118, 7
  %v3120 = vsub.s32 %v3117, %v3119
  %v3121 = vrot.slane %v3113, %v3120
  %v3123 = vunpack.c.l.s4 1983009808
  %v3124 = vunpack.c.0.s8 %v3123
  %v3125 = vlaneseq
  %v3126 = vshrl.u32 %v3125, 7
  %v3127 = vsub.s32 %v3124, %v3126
  %v3128 = vrot.slane %v3114, %v3127
  %v3129 = vcombine.low %v3121, %v3128
  %v3130 = vcombine.low %v2867, %v2869
  %v3131 = vcombine.low %v2871, %v2873
  %v3133 = vunpack.c.l.s4 1983009808
  %v3134 = vunpack.c.0.s8 %v3133
  %v3135 = vlaneseq
  %v3136 = vshrl.u32 %v3135, 7
  %v3137 = vsub.s32 %v3134, %v3136
  %v3138 = vrot.slane %v3130, %v3137
  %v3140 = vunpack.c.l.s4 1983009808
  %v3141 = vunpack.c.0.s8 %v3140
  %v3142 = vlaneseq
  %v3143 = vshrl.u32 %v3142, 7
  %v3144 = vsub.s32 %v3141, %v3143
  %v3145 = vrot.slane %v3131, %v3144
  %v3146 = vcombine.low %v3138, %v3145
  %v3147 = vcombine.low %v2875, %v2877
  %v3148 = vcombine.low %v2879, %v2881
  %v3150 = vunpack.c.l.s4 1983009808
  %v3151 = vunpack.c.0.s8 %v3150
  %v3152 = vlaneseq
  %v3153 = vshrl.u32 %v3152, 7
  %v3154 = vsub.s32 %v3151, %v3153
  %v3155 = vrot.slane %v3147, %v3154
  %v3157 = vunpack.c.l.s4 1983009808
  %v3158 = vunpack.c.0.s8 %v3157
  %v3159 = vlaneseq
  %v3160 = vshrl.u32 %v3159, 7
  %v3161 = vsub.s32 %v3158, %v3160
  %v3162 = vrot.slane %v3148, %v3161
  %v3163 = vcombine.low %v3155, %v3162
  %v3164 = vcombine.low %v2883, %v2885
  %v3165 = vcombine.low %v2887, %v2889
  %v3167 = vunpack.c.l.s4 1983009808
  %v3168 = vunpack.c.0.s8 %v3167
  %v3169 = vlaneseq
  %v3170 = vshrl.u32 %v3169, 7
  %v3171 = vsub.s32 %v3168, %v3170
  %v3172 = vrot.slane %v3164, %v3171
  %v3174 = vunpack.c.l.s4 1983009808
  %v3175 = vunpack.c.0.s8 %v3174
  %v3176 = vlaneseq
  %v3177 = vshrl.u32 %v3176, 7
  %v3178 = vsub.s32 %v3175, %v3177
  %v3179 = vrot.slane %v3165, %v3178
  %v3180 = vcombine.low %v3172, %v3179
  %v3181 = vcombine.low %v2891, %v2893
  %v3182 = vcombine.low %v2895, %v2897
  %v3184 = vunpack.c.l.s4 1983009808
  %v3185 = vunpack.c.0.s8 %v3184
  %v3186 = vlaneseq
  %v3187 = vshrl.u32 %v3186, 7
  %v3188 = vsub.s32 %v3185, %v3187
  %v3189 = vrot.slane %v3181, %v3188
  %v3191 = vunpack.c.l.s4 1983009808
  %v3192 = vunpack.c.0.s8 %v3191
  %v3193 = vlaneseq
  %v3194 = vshrl.u32 %v3193, 7
  %v3195 = vsub.s32 %v3192, %v3194
  %v3196 = vrot.slane %v3182, %v3195
  %v3197 = vcombine.low %v3189, %v3196
  %v3198 = vcombine.low %v2899, %v2901
  %v3199 = vcombine.low %v2903, %v2905
  %v3201 = vunpack.c.l.s4 1983009808
  %v3202 = vunpack.c.0.s8 %v3201
  %v3203 = vlaneseq
  %v3204 = vshrl.u32 %v3203, 7
  %v3205 = vsub.s32 %v3202, %v3204
  %v3206 = vrot.slane %v3198, %v3205
  %v3208 = vunpack.c.l.s4 1983009808
  %v3209 = vunpack.c.0.s8 %v3208
  %v3210 = vlaneseq
  %v3211 = vshrl.u32 %v3210, 7
  %v3212 = vsub.s32 %v3209, %v3211
  %v3213 = vrot.slane %v3199, %v3212
  %v3214 = vcombine.low %v3206, %v3213
  %v3215 = vcombine.low %v2907, %v2909
  %v3216 = vcombine.low %v2911, %v2913
  %v3218 = vunpack.c.l.s4 1983009808
  %v3219 = vunpack.c.0.s8 %v3218
  %v3220 = vlaneseq
  %v3221 = vshrl.u32 %v3220, 7
  %v3222 = vsub.s32 %v3219, %v3221
  %v3223 = vrot.slane %v3215, %v3222
  %v3225 = vunpack.c.l.s4 1983009808
  %v3226 = vunpack.c.0.s8 %v3225
  %v3227 = vlaneseq
  %v3228 = vshrl.u32 %v3227, 7
  %v3229 = vsub.s32 %v3226, %v3228
  %v3230 = vrot.slane %v3216, %v3229
  %v3231 = vcombine.low %v3223, %v3230
  %v3232 = vcombine.low %v2915, %v2917
  %v3233 = vcombine.low %v2919, %v2921
  %v3235 = vunpack.c.l.s4 1983009808
  %v3236 = vunpack.c.0.s8 %v3235
  %v3237 = vlaneseq
  %v3238 = vshrl.u32 %v3237, 7
  %v3239 = vsub.s32 %v3236, %v3238
  %v3240 = vrot.slane %v3232, %v3239
  %v3242 = vunpack.c.l.s4 1983009808
  %v3243 = vunpack.c.0.s8 %v3242
  %v3244 = vlaneseq
  %v3245 = vshrl.u32 %v3244, 7
  %v3246 = vsub.s32 %v3243, %v3245
  %v3247 = vrot.slane %v3233, %v3246
  %v3248 = vcombine.low %v3240, %v3247
  %v3249 = vcombine.low %v2923, %v2925
  %v3250 = vcombine.low %v2927, %v2929
  %v3252 = vunpack.c.l.s4 1983009808
  %v3253 = vunpack.c.0.s8 %v3252
  %v3254 = vlaneseq
  %v3255 = vshrl.u32 %v3254, 7
  %v3256 = vsub.s32 %v3253, %v3255
  %v3257 = vrot.slane %v3249, %v3256
  %v3259 = vunpack.c.l.s4 1983009808
  %v3260 = vunpack.c.0.s8 %v3259
  %v3261 = vlaneseq
  %v3262 = vshrl.u32 %v3261, 7
  %v3263 = vsub.s32 %v3260, %v3262
  %v3264 = vrot.slane %v3250, %v3263
  %v3265 = vcombine.low %v3257, %v3264
  %3282 = vst [vmem:[%s2] sm:$0xff] %v3010
  %3283 = vst [vmem:[%s2 + $0x8] sm:$0xff] %v3027
  %3284 = vst [vmem:[%s2 + $0x10] sm:$0xff] %v3044
  %3285 = vst [vmem:[%s2 + $0x18] sm:$0xff] %v3061
  %3286 = vst [vmem:[%s2 + $0x20] sm:$0xff] %v3078
  %3287 = vst [vmem:[%s2 + $0x28] sm:$0xff] %v3095
  %3288 = vst [vmem:[%s2 + $0x30] sm:$0xff] %v3112
  %3289 = vst [vmem:[%s2 + $0x38] sm:$0xff] %v3129
  %3290 = vst [vmem:[%s2 + $0x40] sm:$0xff] %v3146
  %3291 = vst [vmem:[%s2 + $0x48] sm:$0xff] %v3163
  %3292 = vst [vmem:[%s2 + $0x50] sm:$0xff] %v3180
  %3293 = vst [vmem:[%s2 + $0x58] sm:$0xff] %v3197
  %3294 = vst [vmem:[%s2 + $0x60] sm:$0xff] %v3214
  %3295 = vst [vmem:[%s2 + $0x68] sm:$0xff] %v3231
  %3296 = vst [vmem:[%s2 + $0x70] sm:$0xff] %v3248
  %3297 = vst [vmem:[%s2 + $0x78] sm:$0xff] %v3265
  // Predicated region
  $region10: #{net_forward.11} parent=0 // pred_check
    _
  $region11: #{net_forward.11} parent=0 // pred_check_branch
    %3299 = sbr.rel (0) target = $region13
  $region12: #{net_forward.11} parent=0 // pred_region
    _
  $region13: #{net_forward.11} parent=0 // pred_fallthru
    _
  // Predicated region
  $region14: #{net_forward.11} parent=0 // pred_check
    _
  $region15: #{net_forward.11} parent=0 // pred_check_branch
    %3301 = sbr.rel (0) target = $region17
  $region16: #{net_forward.11} parent=0 // pred_region
    _
  $region17: #{net_forward.11} parent=0 // pred_fallthru
    _

</llo_original>
